<compile_context>
chip_gen: v5e
topology: v5e:2x2
jax: 0.10.0
libtpu: 0.0.40
codegen_flags: <defaults>
</compile_context>

<pallas_src>
import functools

import numpy as np
import jax
import jax.numpy as jnp
from jax.experimental import pallas as pl
from jax.experimental.pallas import tpu as pltpu

NEG_SLOPE = 0.01                  # nn.LeakyReLU() default
BN_EPS = 1e-5                     # nn.BatchNorm2d default
VMEM_LIMIT = 48 * 1024 * 1024     # safe on v5e/v6e (128 MiB) and v7x (64 MiB)


def _compiler_params():
    return pltpu.CompilerParams(
        dimension_semantics=("parallel",),
        vmem_limit_bytes=VMEM_LIMIT,
    )


def _pick_batch_block(n, target=128):
    """Largest divisor of n that is <= target and a multiple of 8 (else n)."""
    if n <= target:
        return n
    for d in range(target, 7, -1):
        if d % 8 == 0 and n % d == 0:
            return d
    return n                      # fall back to the whole batch (always legal)


# ----------------------------------------------------------------------------
# Pallas kernels
# ----------------------------------------------------------------------------
def _conv_row_kernel(*refs, prologue, bias_act, stats, row_mul, row_off,
                     p_lo, p_hi, hp_out, in_lo, in_hi):
    """One 3x3 conv layer on the (H_pad, NB, W_pad*C) layout.

    refs order: x, w_band[, scale, shift][, bias], out[, s1, s2]
    """
    idx = 0
    x_ref = refs[idx]; idx += 1
    w_ref = refs[idx]; idx += 1
    if prologue:
        scale_ref = refs[idx]; shift_ref = refs[idx + 1]; idx += 2
    if bias_act:
        bias_ref = refs[idx]; idx += 1
    out_ref = refs[idx]; idx += 1
    if stats:
        s1_ref = refs[idx]; s2_ref = refs[idx + 1]

    nb = out_ref.shape[1]
    n_out = out_ref.shape[2]

    # Rows outside [p_lo, p_hi) are this layer's stored spatial padding.
    zero_row = jnp.zeros((nb, n_out), out_ref.dtype)
    for p in range(p_lo):
        out_ref[p] = zero_row
    for p in range(p_hi, hp_out):
        out_ref[p] = zero_row

    def compute_row(p):
        acc = jnp.zeros((nb, n_out), jnp.float32)
        for i in range(3):                      # three kernel rows (implicit GEMM)
            r = row_mul * p + i + row_off
            xi = x_ref[r]                       # (NB, W_in*Cin), lane-dense
            if prologue:
                # previous layer's BatchNorm + LeakyReLU, fused as a prologue
                y = xi.astype(jnp.float32) * scale_ref[...] + shift_ref[...]
                y = jnp.where(y >= 0, y, NEG_SLOPE * y)
                # taps that land on the producer's zero-padding rows stay zero
                ok = jnp.logical_and(r >= in_lo, r <= in_hi)
                y = y * ok.astype(jnp.float32)
                xi = y.astype(jnp.bfloat16)
            acc = acc + jnp.dot(xi, w_ref[i],
                                preferred_element_type=jnp.float32)
        if bias_act:                            # conv1: bias + LeakyReLU
            acc = acc + bias_ref[...]
            acc = jnp.where(acc >= 0, acc, NEG_SLOPE * acc)
        return acc

    if stats:
        def body(p, carry):
            s1, s2 = carry
            acc = compute_row(p)
            out_ref[p] = acc.astype(out_ref.dtype)
            return (s1 + jnp.sum(acc, axis=0, keepdims=True),
                    s2 + jnp.sum(acc * acc, axis=0, keepdims=True))

        init = (jnp.zeros((1, n_out), jnp.float32),
                jnp.zeros((1, n_out), jnp.float32))
        s1, s2 = jax.lax.fori_loop(p_lo, p_hi, body, init)
        s1_ref[0] = s1
        s2_ref[0] = s2
    else:
        def body(p, carry):
            out_ref[p] = compute_row(p).astype(out_ref.dtype)
            return carry

        jax.lax.fori_loop(p_lo, p_hi, body, 0)


def _fc_kernel(x_ref, w_ref, scale_ref, shift_ref, bias_ref, out_ref):
    """BN4 + LeakyReLU + Linear(64*7*7, 1) + Sigmoid, fused."""
    nb = out_ref.shape[0]
    acc = jnp.zeros((nb, 1), jnp.float32)
    for p in range(x_ref.shape[0]):             # 8 stored image rows
        y = x_ref[p].astype(jnp.float32) * scale_ref[...] + shift_ref[...]
        y = jnp.where(y >= 0, y, NEG_SLOPE * y)
        acc = acc + jnp.dot(y.astype(jnp.bfloat16), w_ref[p],
                            preferred_element_type=jnp.float32)
    acc = acc + bias_ref[...]
    out_ref[...] = 1.0 / (1.0 + jnp.exp(-acc))  # sigmoid, f32


# ----------------------------------------------------------------------------
# Pallas wrappers
# ----------------------------------------------------------------------------
def conv_layer(x, w_band, *, scale=None, shift=None, bias=None, stats=False,
               row_mul, row_off, p_lo, p_hi, hp_out, in_valid=(None, None),
               nb, out_dtype=jnp.bfloat16):
    hp_in, n, k_in = x.shape
    n_out = w_band.shape[2]
    grid = (n // nb,)
    prologue = scale is not None

    in_specs = [pl.BlockSpec((hp_in, nb, k_in), lambda g: (0, g, 0)),
                pl.BlockSpec(w_band.shape, lambda g: (0, 0, 0))]
    args = [x, w_band]
    if prologue:
        in_specs += [pl.BlockSpec((1, k_in), lambda g: (0, 0)),
                     pl.BlockSpec((1, k_in), lambda g: (0, 0))]
        args += [scale.reshape(1, k_in).astype(jnp.float32),
                 shift.reshape(1, k_in).astype(jnp.float32)]
    if bias is not None:
        in_specs.append(pl.BlockSpec((1, n_out), lambda g: (0, 0)))
        args.append(bias.reshape(1, n_out).astype(jnp.float32))

    out_shape = [jax.ShapeDtypeStruct((hp_out, n, n_out), out_dtype)]
    out_specs = [pl.BlockSpec((hp_out, nb, n_out), lambda g: (0, g, 0))]
    if stats:
        out_shape += [jax.ShapeDtypeStruct((grid[0], 1, n_out), jnp.float32)] * 2
        out_specs += [pl.BlockSpec((1, 1, n_out), lambda g: (g, 0, 0))] * 2

    kernel = functools.partial(
        _conv_row_kernel, prologue=prologue, bias_act=bias is not None,
        stats=stats, row_mul=row_mul, row_off=row_off, p_lo=p_lo, p_hi=p_hi,
        hp_out=hp_out, in_lo=in_valid[0], in_hi=in_valid[1])

    return pl.pallas_call(
        kernel, grid=grid, in_specs=in_specs, out_specs=tuple(out_specs),
        out_shape=tuple(out_shape), compiler_params=_compiler_params())(*args)


def fc_layer(x, w_fc, scale_vec, shift_vec, bias, *, nb):
    hp, n, k = x.shape
    grid = (n // nb,)
    return pl.pallas_call(
        _fc_kernel, grid=grid,
        in_specs=[pl.BlockSpec((hp, nb, k), lambda g: (0, g, 0)),
                  pl.BlockSpec(w_fc.shape, lambda g: (0, 0, 0)),
                  pl.BlockSpec((1, k), lambda g: (0, 0)),
                  pl.BlockSpec((1, k), lambda g: (0, 0)),
                  pl.BlockSpec((1, 1), lambda g: (0, 0))],
        out_specs=pl.BlockSpec((nb, 1), lambda g: (g, 0)),
        out_shape=jax.ShapeDtypeStruct((n, 1), jnp.float32),
        compiler_params=_compiler_params(),
    )(x, w_fc, scale_vec.astype(jnp.float32), shift_vec.astype(jnp.float32),
      bias.astype(jnp.float32))


# ----------------------------------------------------------------------------
# Glue: BN statistics -> scale/shift, per-lane vectors, banded weights
# ----------------------------------------------------------------------------
def _bn_scale_shift(s1, s2, count, gamma, beta, w_blocks, cout):
    s1 = jnp.sum(s1, axis=(0, 1)).reshape(w_blocks, cout).sum(axis=0)
    s2 = jnp.sum(s2, axis=(0, 1)).reshape(w_blocks, cout).sum(axis=0)
    mean = s1 / count
    # TODO(synk): single-pass E[x^2]-E[x]^2 in f32; a shifted/Welford pass
    # would track PyTorch's training-mode variance more tightly.
    var = jnp.maximum(s2 / count - mean * mean, 0.0)
    inv = jax.lax.rsqrt(var + BN_EPS)
    scale = gamma.astype(jnp.float32) * inv
    shift = beta.astype(jnp.float32) - mean * scale
    return scale, shift


def _lane_vec(per_channel, w_blocks, q_lo, q_hi):
    """Tile a per-channel vector over width blocks; zero at pad columns."""
    q = np.arange(w_blocks)
    mask = jnp.asarray(((q >= q_lo) & (q <= q_hi)).astype(np.float32))
    return (mask[:, None] * per_channel.astype(jnp.float32)[None, :]).reshape(1, -1)


def _band_weight(w_conv, w_in, w_out, stride, j_off, q_lo, q_hi):
    """Banded (W_in*Cin, W_out*Cout) matrix per kernel row (implicit GEMM)."""
    o, c, _, _ = w_conv.shape
    sel = np.zeros((w_in, 3, w_out), np.float32)
    for qo in range(q_lo, q_hi + 1):
        for j in range(3):
            qi = stride * qo + j + j_off
            if 0 <= qi < w_in:
                sel[qi, j, qo] = 1.0
    sel = jnp.asarray(sel)
    taps = []
    for i in range(3):
        big = jnp.einsum('qjp,ocj->qcpo', sel, w_conv[:, :, i, :])
        taps.append(big.reshape(w_in * c, w_out * o))
    return jnp.stack(taps, axis=0).astype(jnp.bfloat16)


def _fc_weight(w_fc):
    """PyTorch (1, 64*7*7) NCHW-flatten weight -> (8, 8*64, 1) stored layout."""
    w = w_fc.reshape(64, 7, 7)                  # (cout, h, w)
    w = jnp.transpose(w, (1, 2, 0))             # (h, w, cout)
    w = jnp.pad(w, ((0, 1), (0, 1), (0, 0)))    # stored 8x8 geometry
    return w.reshape(8, 8 * 64, 1).astype(jnp.bfloat16)


# ----------------------------------------------------------------------------
# Parameter init (deterministic, mirrors the module's __init__)
# ----------------------------------------------------------------------------
def init_params(key):
    ks = jax.random.split(key, 5)

    def kaiming(k, shape, fan_in):
        return jax.random.normal(k, shape, jnp.float32) * (2.0 / fan_in) ** 0.5

    w1 = kaiming(ks[0], (8, 1, 3, 3), 9)
    b1 = jnp.zeros((8,), jnp.float32)
    w2 = kaiming(ks[1], (16, 8, 3, 3), 72)
    w3 = kaiming(ks[2], (32, 16, 3, 3), 144)
    w4 = kaiming(ks[3], (64, 32, 3, 3), 288)
    w_fc = kaiming(ks[4], (1, 64 * 7 * 7), 64 * 7 * 7)
    b_fc = jnp.zeros((1,), jnp.float32)

    return {
        "W1": _band_weight(w1, 32, 32, 1, -1, 2, 29),
        "W2": _band_weight(w2, 32, 16, 2, -1, 1, 14),
        "W3": _band_weight(w3, 16, 16, 1, -1, 1, 14),
        "W4": _band_weight(w4, 16, 8, 2, 0, 0, 6),
        "b1v": _lane_vec(b1, 32, 2, 29),
        "Wfc": _fc_weight(w_fc),
        "bfc": b_fc.reshape(1, 1),
        # conv2/3/4 biases dropped: PyTorch inits them to 0 and a constant
        # per-channel bias is cancelled exactly by train-mode BN.
        "g2": jnp.ones((16,), jnp.float32), "be2": jnp.zeros((16,), jnp.float32),
        "g3": jnp.ones((32,), jnp.float32), "be3": jnp.zeros((32,), jnp.float32),
        "g4": jnp.ones((64,), jnp.float32), "be4": jnp.zeros((64,), jnp.float32),
    }


# ----------------------------------------------------------------------------
# Forward pass
# ----------------------------------------------------------------------------
def discriminator_forward(x_nchw, params, nb_target=128):
    n = x_nchw.shape[0]
    nb = _pick_batch_block(n, nb_target)

    # NCHW -> (H_pad=32, N, W_pad*C=32) padded row-major layout, bf16.
    a0 = jnp.transpose(x_nchw[:, 0], (1, 0, 2))          # (28, N, 28)
    a0 = jnp.pad(a0, ((2, 2), (0, 0), (2, 2))).astype(jnp.bfloat16)

    # conv1 (1->8, s1) + bias + LeakyReLU                  -> (32, N, 256)
    a1 = conv_layer(a0, params["W1"], bias=params["b1v"],
                    row_mul=1, row_off=-1, p_lo=2, p_hi=30, hp_out=32,
                    nb=nb)[0]

    # conv2 (8->16, s2), raw pre-BN output + BN2 stats     -> (16, N, 256)
    a2, s1, s2 = conv_layer(a1, params["W2"], stats=True,
                            row_mul=2, row_off=-1, p_lo=1, p_hi=15, hp_out=16,
                            nb=nb)
    sc2, sh2 = _bn_scale_shift(s1, s2, n * 14 * 14,
                               params["g2"], params["be2"], 16, 16)

    # conv3 (16->32, s1); BN2 + LeakyReLU fused as prologue -> (16, N, 512)
    a3, s1, s2 = conv_layer(a2, params["W3"],
                            scale=_lane_vec(sc2, 16, 1, 14),
                            shift=_lane_vec(sh2, 16, 1, 14),
                            stats=True, row_mul=1, row_off=-1,
                            p_lo=1, p_hi=15, hp_out=16, in_valid=(1, 14),
                            nb=nb)
    sc3, sh3 = _bn_scale_shift(s1, s2, n * 14 * 14,
                               params["g3"], params["be3"], 16, 32)

    # conv4 (32->64, s2); BN3 + LeakyReLU fused as prologue -> (8, N, 512)
    a4, s1, s2 = conv_layer(a3, params["W4"],
                            scale=_lane_vec(sc3, 16, 1, 14),
                            shift=_lane_vec(sh3, 16, 1, 14),
                            stats=True, row_mul=2, row_off=0,
                            p_lo=0, p_hi=7, hp_out=8, in_valid=(1, 14),
                            nb=nb)
    sc4, sh4 = _bn_scale_shift(s1, s2, n * 7 * 7,
                               params["g4"], params["be4"], 8, 64)

    # fc: BN4 + LeakyReLU + Linear(64*7*7, 1) + Sigmoid, fused.
    # TODO(synk): PyTorch hard-codes batch_size=512 in the .view; we use the
    # actual batch size (identical semantics whenever the batch matches).
    out = fc_layer(a4, params["Wfc"],
                   _lane_vec(sc4, 8, 0, 6), _lane_vec(sh4, 8, 0, 6),
                   params["bfc"], nb=nb)
    return out                                           # (N, 1) in (0, 1)


if __name__ == "__main__":
    key = jax.random.PRNGKey(0)
    pkey, xkey = jax.random.split(key)
    params = init_params(pkey)

    # small batch; spatial size must be 28 so the fc sees 64*7*7 features.
    x = jax.random.normal(xkey, (2, 1, 28, 28), jnp.float32)

    fwd = jax.jit(discriminator_forward)
    out = jax.block_until_ready(fwd(x, params))
    assert out.shape == (2, 1)
    assert bool(jnp.all((out >= 0.0) & (out <= 1.0)))
    print("KERNEL_OK")
</pallas_src>

<mosaic_0001>
module attributes {stable_mosaic.version = 11 : i64} {
  func.func @_conv_row_kernel(%arg0: i32, %arg1: memref<32x2x256xbf16, #tpu.memory_space<vmem>>, %arg2: memref<3x256x256xbf16, #tpu.memory_space<vmem>>, %arg3: memref<16x2x256xbf16, #tpu.memory_space<vmem>>, %arg4: memref<1x1x256xf32, #tpu.memory_space<vmem>>, %arg5: memref<1x1x256xf32, #tpu.memory_space<vmem>>) attributes {dimension_semantics = [#tpu.dimension_semantics<parallel>], iteration_bounds = array<i64: 1>, scalar_prefetch = 0 : i64, scratch_operands = 0 : i64, tpu.core_type = #tpu.core_type<tc>, window_params = [{transform_indices = @transform_0, window_bounds = array<i64: 32, 2, 256>}, {pipeline_mode = #tpu.pipeline_mode<synchronous>, transform_indices = @transform_1, window_bounds = array<i64: 3, 256, 256>}, {transform_indices = @transform_2, window_bounds = array<i64: 16, 2, 256>}, {transform_indices = @transform_3, window_bounds = array<i64: 1, 1, 256>}, {transform_indices = @transform_4, window_bounds = array<i64: 1, 1, 256>}]} {
    %cst = arith.constant 0.000000e+00 : bf16
    %0 = vector.broadcast %cst : bf16 to vector<2x256xbf16>
    %c0 = arith.constant 0 : index
    %c0_0 = arith.constant 0 : index
    %c0_1 = arith.constant 0 : index
    %1 = vector.load %arg3[%c0, %c0_0, %c0_1] : memref<16x2x256xbf16, #tpu.memory_space<vmem>>, vector<1x2x256xbf16>
    %2 = vector.shape_cast %1 : vector<1x2x256xbf16> to vector<2x256xbf16>
    %3 = vector.shape_cast %0 : vector<2x256xbf16> to vector<1x2x256xbf16>
    tpu.vector_store %arg3[%c0, %c0_0, %c0_1], %3 {strides = array<i32>} : memref<16x2x256xbf16, #tpu.memory_space<vmem>>, vector<1x2x256xbf16>,
    %c15 = arith.constant 15 : index
    %c0_2 = arith.constant 0 : index
    %c0_3 = arith.constant 0 : index
    %4 = vector.load %arg3[%c15, %c0_2, %c0_3] : memref<16x2x256xbf16, #tpu.memory_space<vmem>>, vector<1x2x256xbf16>
    %5 = vector.shape_cast %4 : vector<1x2x256xbf16> to vector<2x256xbf16>
    %6 = vector.shape_cast %0 : vector<2x256xbf16> to vector<1x2x256xbf16>
    tpu.vector_store %arg3[%c15, %c0_2, %c0_3], %6 {strides = array<i32>} : memref<16x2x256xbf16, #tpu.memory_space<vmem>>, vector<1x2x256xbf16>,
    %cst_4 = arith.constant 0.000000e+00 : f32
    %7 = vector.broadcast %cst_4 : f32 to vector<1x256xf32>
    %cst_5 = arith.constant 0.000000e+00 : f32
    %8 = vector.broadcast %cst_5 : f32 to vector<1x256xf32>
    %c1_i32 = arith.constant 1 : i32
    %c14_i32 = arith.constant 14 : i32
    %9 = arith.addi %c1_i32, %c14_i32 : i32
    %c1_i32_6 = arith.constant 1 : i32
    %10:2 = scf.for %arg6 = %c1_i32 to %9 step %c1_i32_6 iter_args(%arg7 = %7, %arg8 = %8) -> (vector<1x256xf32>, vector<1x256xf32>)  : i32 {
      %cst_14 = arith.constant 0.000000e+00 : f32
      %17 = vector.broadcast %cst_14 : f32 to vector<2x256xf32>
      %c2_i32 = arith.constant 2 : i32
      %18 = arith.muli %c2_i32, %arg6 : i32
      %c0_i32 = arith.constant 0 : i32
      %19 = arith.addi %18, %c0_i32 : i32
      %c-1_i32 = arith.constant -1 : i32
      %20 = arith.addi %19, %c-1_i32 : i32
      %21 = arith.index_cast %20 : i32 to index
      %c0_15 = arith.constant 0 : index
      %c0_16 = arith.constant 0 : index
      %22 = vector.load %arg1[%21, %c0_15, %c0_16] : memref<32x2x256xbf16, #tpu.memory_space<vmem>>, vector<1x2x256xbf16>
      %23 = vector.shape_cast %22 : vector<1x2x256xbf16> to vector<2x256xbf16>
      %c0_17 = arith.constant 0 : index
      %c0_18 = arith.constant 0 : index
      %c0_19 = arith.constant 0 : index
      %24 = vector.load %arg2[%c0_17, %c0_18, %c0_19] : memref<3x256x256xbf16, #tpu.memory_space<vmem>>, vector<1x256x256xbf16>
      %25 = vector.shape_cast %24 : vector<1x256x256xbf16> to vector<256x256xbf16>
      %cst_20 = arith.constant dense<0.000000e+00> : vector<2x256xf32>
      %26 = tpu.matmul %23, %25, %cst_20 {dimension_numbers = #tpu.dot_dimension_numbers<[1], [0], [0], [1], [0, 0, 1, 1], [], []>} : vector<2x256xbf16>, vector<256x256xbf16>, vector<2x256xf32> -> vector<2x256xf32>
      %27 = arith.addf %17, %26 : vector<2x256xf32>
      %c2_i32_21 = arith.constant 2 : i32
      %28 = arith.muli %c2_i32_21, %arg6 : i32
      %c1_i32_22 = arith.constant 1 : i32
      %29 = arith.addi %28, %c1_i32_22 : i32
      %c-1_i32_23 = arith.constant -1 : i32
      %30 = arith.addi %29, %c-1_i32_23 : i32
      %31 = arith.index_cast %30 : i32 to index
      %c0_24 = arith.constant 0 : index
      %c0_25 = arith.constant 0 : index
      %32 = vector.load %arg1[%31, %c0_24, %c0_25] : memref<32x2x256xbf16, #tpu.memory_space<vmem>>, vector<1x2x256xbf16>
      %33 = vector.shape_cast %32 : vector<1x2x256xbf16> to vector<2x256xbf16>
      %c1 = arith.constant 1 : index
      %c0_26 = arith.constant 0 : index
      %c0_27 = arith.constant 0 : index
      %34 = vector.load %arg2[%c1, %c0_26, %c0_27] : memref<3x256x256xbf16, #tpu.memory_space<vmem>>, vector<1x256x256xbf16>
      %35 = vector.shape_cast %34 : vector<1x256x256xbf16> to vector<256x256xbf16>
      %cst_28 = arith.constant dense<0.000000e+00> : vector<2x256xf32>
      %36 = tpu.matmul %33, %35, %cst_28 {dimension_numbers = #tpu.dot_dimension_numbers<[1], [0], [0], [1], [0, 0, 1, 1], [], []>} : vector<2x256xbf16>, vector<256x256xbf16>, vector<2x256xf32> -> vector<2x256xf32>
      %37 = arith.addf %27, %36 : vector<2x256xf32>
      %c2_i32_29 = arith.constant 2 : i32
      %38 = arith.muli %c2_i32_29, %arg6 : i32
      %c2_i32_30 = arith.constant 2 : i32
      %39 = arith.addi %38, %c2_i32_30 : i32
      %c-1_i32_31 = arith.constant -1 : i32
      %40 = arith.addi %39, %c-1_i32_31 : i32
      %41 = arith.index_cast %40 : i32 to index
      %c0_32 = arith.constant 0 : index
      %c0_33 = arith.constant 0 : index
      %42 = vector.load %arg1[%41, %c0_32, %c0_33] : memref<32x2x256xbf16, #tpu.memory_space<vmem>>, vector<1x2x256xbf16>
      %43 = vector.shape_cast %42 : vector<1x2x256xbf16> to vector<2x256xbf16>
      %c2 = arith.constant 2 : index
      %c0_34 = arith.constant 0 : index
      %c0_35 = arith.constant 0 : index
      %44 = vector.load %arg2[%c2, %c0_34, %c0_35] : memref<3x256x256xbf16, #tpu.memory_space<vmem>>, vector<1x256x256xbf16>
      %45 = vector.shape_cast %44 : vector<1x256x256xbf16> to vector<256x256xbf16>
      %cst_36 = arith.constant dense<0.000000e+00> : vector<2x256xf32>
      %46 = tpu.matmul %43, %45, %cst_36 {dimension_numbers = #tpu.dot_dimension_numbers<[1], [0], [0], [1], [0, 0, 1, 1], [], []>} : vector<2x256xbf16>, vector<256x256xbf16>, vector<2x256xf32> -> vector<2x256xf32>
      %47 = arith.addf %37, %46 : vector<2x256xf32>
      %48 = arith.truncf %47 : vector<2x256xf32> to vector<2x256xbf16>
      %49 = arith.index_cast %arg6 : i32 to index
      %c0_37 = arith.constant 0 : index
      %c0_38 = arith.constant 0 : index
      %50 = vector.load %arg3[%49, %c0_37, %c0_38] : memref<16x2x256xbf16, #tpu.memory_space<vmem>>, vector<1x2x256xbf16>
      %51 = vector.shape_cast %50 : vector<1x2x256xbf16> to vector<2x256xbf16>
      %52 = vector.shape_cast %48 : vector<2x256xbf16> to vector<1x2x256xbf16>
      tpu.vector_store %arg3[%49, %c0_37, %c0_38], %52 {strides = array<i32>} : memref<16x2x256xbf16, #tpu.memory_space<vmem>>, vector<1x2x256xbf16>,
      %cst_39 = arith.constant dense<0.000000e+00> : vector<256xf32>
      %53 = vector.multi_reduction <add>, %47, %cst_39 [0] : vector<2x256xf32> to vector<256xf32>
      %54 = vector.shape_cast %53 : vector<256xf32> to vector<1x256xf32>
      %55 = arith.addf %arg7, %54 : vector<1x256xf32>
      %56 = arith.mulf %47, %47 : vector<2x256xf32>
      %cst_40 = arith.constant dense<0.000000e+00> : vector<256xf32>
      %57 = vector.multi_reduction <add>, %56, %cst_40 [0] : vector<2x256xf32> to vector<256xf32>
      %58 = vector.shape_cast %57 : vector<256xf32> to vector<1x256xf32>
      %59 = arith.addf %arg8, %58 : vector<1x256xf32>
      scf.yield %55, %59 : vector<1x256xf32>, vector<1x256xf32>
    }
    %c14_i32_7 = arith.constant 14 : i32
    %c0_8 = arith.constant 0 : index
    %c0_9 = arith.constant 0 : index
    %c0_10 = arith.constant 0 : index
    %11 = vector.load %arg4[%c0_8, %c0_9, %c0_10] : memref<1x1x256xf32, #tpu.memory_space<vmem>>, vector<1x1x256xf32>
    %12 = vector.shape_cast %11 : vector<1x1x256xf32> to vector<1x256xf32>
    %13 = vector.shape_cast %10#0 : vector<1x256xf32> to vector<1x1x256xf32>
    tpu.vector_store %arg4[%c0_8, %c0_9, %c0_10], %13 {strides = array<i32>} : memref<1x1x256xf32, #tpu.memory_space<vmem>>, vector<1x1x256xf32>,
    %c0_11 = arith.constant 0 : index
    %c0_12 = arith.constant 0 : index
    %c0_13 = arith.constant 0 : index
    %14 = vector.load %arg5[%c0_11, %c0_12, %c0_13] : memref<1x1x256xf32, #tpu.memory_space<vmem>>, vector<1x1x256xf32>
    %15 = vector.shape_cast %14 : vector<1x1x256xf32> to vector<1x256xf32>
    %16 = vector.shape_cast %10#1 : vector<1x256xf32> to vector<1x1x256xf32>
    tpu.vector_store %arg5[%c0_11, %c0_12, %c0_13], %16 {strides = array<i32>} : memref<1x1x256xf32, #tpu.memory_space<vmem>>, vector<1x1x256xf32>,
    return
  }
  func.func @transform_0(%arg0: i32) -> (i32, i32, i32) {
    %c0_i32 = arith.constant 0 : i32
    %c0_i32_0 = arith.constant 0 : i32
    %c0_i32_1 = arith.constant 0 : i32
    return %c0_i32, %arg0, %c0_i32_0 : i32, i32, i32
  }
  func.func @transform_1(%arg0: i32) -> (i32, i32, i32) {
    %c0_i32 = arith.constant 0 : i32
    %c0_i32_0 = arith.constant 0 : i32
    %c0_i32_1 = arith.constant 0 : i32
    %c0_i32_2 = arith.constant 0 : i32
    return %c0_i32, %c0_i32_0, %c0_i32_1 : i32, i32, i32
  }
  func.func @transform_2(%arg0: i32) -> (i32, i32, i32) {
    %c0_i32 = arith.constant 0 : i32
    %c0_i32_0 = arith.constant 0 : i32
    %c0_i32_1 = arith.constant 0 : i32
    return %c0_i32, %arg0, %c0_i32_0 : i32, i32, i32
  }
  func.func @transform_3(%arg0: i32) -> (i32, i32, i32) {
    %c0_i32 = arith.constant 0 : i32
    %c0_i32_0 = arith.constant 0 : i32
    %c0_i32_1 = arith.constant 0 : i32
    return %arg0, %c0_i32, %c0_i32_0 : i32, i32, i32
  }
  func.func @transform_4(%arg0: i32) -> (i32, i32, i32) {
    %c0_i32 = arith.constant 0 : i32
    %c0_i32_0 = arith.constant 0 : i32
    %c0_i32_1 = arith.constant 0 : i32
    return %arg0, %c0_i32, %c0_i32_0 : i32, i32, i32
  }
}

module attributes {stable_mosaic.version = 11 : i64} {
  func.func @_conv_row_kernel(%arg0: i32, %arg1: memref<32x2x32xbf16, #tpu.memory_space<vmem>>, %arg2: memref<3x32x256xbf16, #tpu.memory_space<vmem>>, %arg3: memref<1x256xf32, #tpu.memory_space<vmem>>, %arg4: memref<32x2x256xbf16, #tpu.memory_space<vmem>>) attributes {dimension_semantics = [#tpu.dimension_semantics<parallel>], iteration_bounds = array<i64: 1>, scalar_prefetch = 0 : i64, scratch_operands = 0 : i64, tpu.core_type = #tpu.core_type<tc>, window_params = [{transform_indices = @transform_0, window_bounds = array<i64: 32, 2, 32>}, {pipeline_mode = #tpu.pipeline_mode<synchronous>, transform_indices = @transform_1, window_bounds = array<i64: 3, 32, 256>}, {pipeline_mode = #tpu.pipeline_mode<synchronous>, transform_indices = @transform_2, window_bounds = array<i64: 1, 256>}, {transform_indices = @transform_3, window_bounds = array<i64: 32, 2, 256>}]} {
    %cst = arith.constant 0.000000e+00 : bf16
    %0 = vector.broadcast %cst : bf16 to vector<2x256xbf16>
    %c0 = arith.constant 0 : index
    %c0_0 = arith.constant 0 : index
    %c0_1 = arith.constant 0 : index
    %1 = vector.load %arg4[%c0, %c0_0, %c0_1] : memref<32x2x256xbf16, #tpu.memory_space<vmem>>, vector<1x2x256xbf16>
    %2 = vector.shape_cast %1 : vector<1x2x256xbf16> to vector<2x256xbf16>
    %3 = vector.shape_cast %0 : vector<2x256xbf16> to vector<1x2x256xbf16>
    tpu.vector_store %arg4[%c0, %c0_0, %c0_1], %3 {strides = array<i32>} : memref<32x2x256xbf16, #tpu.memory_space<vmem>>, vector<1x2x256xbf16>,
    %c1 = arith.constant 1 : index
    %c0_2 = arith.constant 0 : index
    %c0_3 = arith.constant 0 : index
    %4 = vector.load %arg4[%c1, %c0_2, %c0_3] : memref<32x2x256xbf16, #tpu.memory_space<vmem>>, vector<1x2x256xbf16>
    %5 = vector.shape_cast %4 : vector<1x2x256xbf16> to vector<2x256xbf16>
    %6 = vector.shape_cast %0 : vector<2x256xbf16> to vector<1x2x256xbf16>
    tpu.vector_store %arg4[%c1, %c0_2, %c0_3], %6 {strides = array<i32>} : memref<32x2x256xbf16, #tpu.memory_space<vmem>>, vector<1x2x256xbf16>,
    %c30 = arith.constant 30 : index
    %c0_4 = arith.constant 0 : index
    %c0_5 = arith.constant 0 : index
    %7 = vector.load %arg4[%c30, %c0_4, %c0_5] : memref<32x2x256xbf16, #tpu.memory_space<vmem>>, vector<1x2x256xbf16>
    %8 = vector.shape_cast %7 : vector<1x2x256xbf16> to vector<2x256xbf16>
    %9 = vector.shape_cast %0 : vector<2x256xbf16> to vector<1x2x256xbf16>
    tpu.vector_store %arg4[%c30, %c0_4, %c0_5], %9 {strides = array<i32>} : memref<32x2x256xbf16, #tpu.memory_space<vmem>>, vector<1x2x256xbf16>,
    %c31 = arith.constant 31 : index
    %c0_6 = arith.constant 0 : index
    %c0_7 = arith.constant 0 : index
    %10 = vector.load %arg4[%c31, %c0_6, %c0_7] : memref<32x2x256xbf16, #tpu.memory_space<vmem>>, vector<1x2x256xbf16>
    %11 = vector.shape_cast %10 : vector<1x2x256xbf16> to vector<2x256xbf16>
    %12 = vector.shape_cast %0 : vector<2x256xbf16> to vector<1x2x256xbf16>
    tpu.vector_store %arg4[%c31, %c0_6, %c0_7], %12 {strides = array<i32>} : memref<32x2x256xbf16, #tpu.memory_space<vmem>>, vector<1x2x256xbf16>,
    %c2_i32 = arith.constant 2 : i32
    %c28_i32 = arith.constant 28 : i32
    %13 = arith.addi %c2_i32, %c28_i32 : i32
    %c1_i32 = arith.constant 1 : i32
    scf.for %arg5 = %c2_i32 to %13 step %c1_i32  : i32 {
      %cst_9 = arith.constant 0.000000e+00 : f32
      %14 = vector.broadcast %cst_9 : f32 to vector<2x256xf32>
      %c1_i32_10 = arith.constant 1 : i32
      %15 = arith.muli %c1_i32_10, %arg5 : i32
      %c0_i32 = arith.constant 0 : i32
      %16 = arith.addi %15, %c0_i32 : i32
      %c-1_i32 = arith.constant -1 : i32
      %17 = arith.addi %16, %c-1_i32 : i32
      %18 = arith.index_cast %17 : i32 to index
      %c0_11 = arith.constant 0 : index
      %c0_12 = arith.constant 0 : index
      %19 = vector.load %arg1[%18, %c0_11, %c0_12] : memref<32x2x32xbf16, #tpu.memory_space<vmem>>, vector<1x2x32xbf16>
      %20 = vector.shape_cast %19 : vector<1x2x32xbf16> to vector<2x32xbf16>
      %c0_13 = arith.constant 0 : index
      %c0_14 = arith.constant 0 : index
      %c0_15 = arith.constant 0 : index
      %21 = vector.load %arg2[%c0_13, %c0_14, %c0_15] : memref<3x32x256xbf16, #tpu.memory_space<vmem>>, vector<1x32x256xbf16>
      %22 = vector.shape_cast %21 : vector<1x32x256xbf16> to vector<32x256xbf16>
      %cst_16 = arith.constant dense<0.000000e+00> : vector<2x256xf32>
      %23 = tpu.matmul %20, %22, %cst_16 {dimension_numbers = #tpu.dot_dimension_numbers<[1], [0], [0], [1], [0, 0, 1, 1], [], []>} : vector<2x32xbf16>, vector<32x256xbf16>, vector<2x256xf32> -> vector<2x256xf32>
      %24 = arith.addf %14, %23 : vector<2x256xf32>
      %c1_i32_17 = arith.constant 1 : i32
      %25 = arith.muli %c1_i32_17, %arg5 : i32
      %c1_i32_18 = arith.constant 1 : i32
      %26 = arith.addi %25, %c1_i32_18 : i32
      %c-1_i32_19 = arith.constant -1 : i32
      %27 = arith.addi %26, %c-1_i32_19 : i32
      %28 = arith.index_cast %27 : i32 to index
      %c0_20 = arith.constant 0 : index
      %c0_21 = arith.constant 0 : index
      %29 = vector.load %arg1[%28, %c0_20, %c0_21] : memref<32x2x32xbf16, #tpu.memory_space<vmem>>, vector<1x2x32xbf16>
      %30 = vector.shape_cast %29 : vector<1x2x32xbf16> to vector<2x32xbf16>
      %c1_22 = arith.constant 1 : index
      %c0_23 = arith.constant 0 : index
      %c0_24 = arith.constant 0 : index
      %31 = vector.load %arg2[%c1_22, %c0_23, %c0_24] : memref<3x32x256xbf16, #tpu.memory_space<vmem>>, vector<1x32x256xbf16>
      %32 = vector.shape_cast %31 : vector<1x32x256xbf16> to vector<32x256xbf16>
      %cst_25 = arith.constant dense<0.000000e+00> : vector<2x256xf32>
      %33 = tpu.matmul %30, %32, %cst_25 {dimension_numbers = #tpu.dot_dimension_numbers<[1], [0], [0], [1], [0, 0, 1, 1], [], []>} : vector<2x32xbf16>, vector<32x256xbf16>, vector<2x256xf32> -> vector<2x256xf32>
      %34 = arith.addf %24, %33 : vector<2x256xf32>
      %c1_i32_26 = arith.constant 1 : i32
      %35 = arith.muli %c1_i32_26, %arg5 : i32
      %c2_i32_27 = arith.constant 2 : i32
      %36 = arith.addi %35, %c2_i32_27 : i32
      %c-1_i32_28 = arith.constant -1 : i32
      %37 = arith.addi %36, %c-1_i32_28 : i32
      %38 = arith.index_cast %37 : i32 to index
      %c0_29 = arith.constant 0 : index
      %c0_30 = arith.constant 0 : index
      %39 = vector.load %arg1[%38, %c0_29, %c0_30] : memref<32x2x32xbf16, #tpu.memory_space<vmem>>, vector<1x2x32xbf16>
      %40 = vector.shape_cast %39 : vector<1x2x32xbf16> to vector<2x32xbf16>
      %c2 = arith.constant 2 : index
      %c0_31 = arith.constant 0 : index
      %c0_32 = arith.constant 0 : index
      %41 = vector.load %arg2[%c2, %c0_31, %c0_32] : memref<3x32x256xbf16, #tpu.memory_space<vmem>>, vector<1x32x256xbf16>
      %42 = vector.shape_cast %41 : vector<1x32x256xbf16> to vector<32x256xbf16>
      %cst_33 = arith.constant dense<0.000000e+00> : vector<2x256xf32>
      %43 = tpu.matmul %40, %42, %cst_33 {dimension_numbers = #tpu.dot_dimension_numbers<[1], [0], [0], [1], [0, 0, 1, 1], [], []>} : vector<2x32xbf16>, vector<32x256xbf16>, vector<2x256xf32> -> vector<2x256xf32>
      %44 = arith.addf %34, %43 : vector<2x256xf32>
      %c0_34 = arith.constant 0 : index
      %c0_35 = arith.constant 0 : index
      %45 = vector.load %arg3[%c0_34, %c0_35] : memref<1x256xf32, #tpu.memory_space<vmem>>, vector<1x256xf32>
      %46 = vector.broadcast %45 : vector<1x256xf32> to vector<2x256xf32>
      %47 = arith.addf %44, %46 : vector<2x256xf32>
      %cst_36 = arith.constant 0.000000e+00 : f32
      %48 = vector.broadcast %cst_36 : f32 to vector<2x256xf32>
      %49 = arith.cmpf oge, %47, %48 : vector<2x256xf32>
      %cst_37 = arith.constant 0.00999999977 : f32
      %50 = vector.broadcast %cst_37 : f32 to vector<2x256xf32>
      %51 = arith.mulf %50, %47 : vector<2x256xf32>
      %52 = arith.select %49, %47, %51 : vector<2x256xi1>, vector<2x256xf32>
      %53 = arith.truncf %52 : vector<2x256xf32> to vector<2x256xbf16>
      %54 = arith.index_cast %arg5 : i32 to index
      %c0_38 = arith.constant 0 : index
      %c0_39 = arith.constant 0 : index
      %55 = vector.load %arg4[%54, %c0_38, %c0_39] : memref<32x2x256xbf16, #tpu.memory_space<vmem>>, vector<1x2x256xbf16>
      %56 = vector.shape_cast %55 : vector<1x2x256xbf16> to vector<2x256xbf16>
      %57 = vector.shape_cast %53 : vector<2x256xbf16> to vector<1x2x256xbf16>
      tpu.vector_store %arg4[%54, %c0_38, %c0_39], %57 {strides = array<i32>} : memref<32x2x256xbf16, #tpu.memory_space<vmem>>, vector<1x2x256xbf16>,
    }
    %c28_i32_8 = arith.constant 28 : i32
    return
  }
  func.func @transform_0(%arg0: i32) -> (i32, i32, i32) {
    %c0_i32 = arith.constant 0 : i32
    %c0_i32_0 = arith.constant 0 : i32
    %c0_i32_1 = arith.constant 0 : i32
    return %c0_i32, %arg0, %c0_i32_0 : i32, i32, i32
  }
  func.func @transform_1(%arg0: i32) -> (i32, i32, i32) {
    %c0_i32 = arith.constant 0 : i32
    %c0_i32_0 = arith.constant 0 : i32
    %c0_i32_1 = arith.constant 0 : i32
    %c0_i32_2 = arith.constant 0 : i32
    return %c0_i32, %c0_i32_0, %c0_i32_1 : i32, i32, i32
  }
  func.func @transform_2(%arg0: i32) -> (i32, i32) {
    %c0_i32 = arith.constant 0 : i32
    %c0_i32_0 = arith.constant 0 : i32
    %c0_i32_1 = arith.constant 0 : i32
    return %c0_i32, %c0_i32_0 : i32, i32
  }
  func.func @transform_3(%arg0: i32) -> (i32, i32, i32) {
    %c0_i32 = arith.constant 0 : i32
    %c0_i32_0 = arith.constant 0 : i32
    %c0_i32_1 = arith.constant 0 : i32
    return %c0_i32, %arg0, %c0_i32_0 : i32, i32, i32
  }
}

module attributes {stable_mosaic.version = 11 : i64} {
  func.func @_conv_row_kernel(%arg0: i32, %arg1: memref<16x2x256xbf16, #tpu.memory_space<vmem>>, %arg2: memref<3x256x512xbf16, #tpu.memory_space<vmem>>, %arg3: memref<1x256xf32, #tpu.memory_space<vmem>>, %arg4: memref<1x256xf32, #tpu.memory_space<vmem>>, %arg5: memref<16x2x512xbf16, #tpu.memory_space<vmem>>, %arg6: memref<1x1x512xf32, #tpu.memory_space<vmem>>, %arg7: memref<1x1x512xf32, #tpu.memory_space<vmem>>) attributes {dimension_semantics = [#tpu.dimension_semantics<parallel>], iteration_bounds = array<i64: 1>, scalar_prefetch = 0 : i64, scratch_operands = 0 : i64, tpu.core_type = #tpu.core_type<tc>, window_params = [{transform_indices = @transform_0, window_bounds = array<i64: 16, 2, 256>}, {pipeline_mode = #tpu.pipeline_mode<synchronous>, transform_indices = @transform_1, window_bounds = array<i64: 3, 256, 512>}, {pipeline_mode = #tpu.pipeline_mode<synchronous>, transform_indices = @transform_2, window_bounds = array<i64: 1, 256>}, {pipeline_mode = #tpu.pipeline_mode<synchronous>, transform_indices = @transform_3, window_bounds = array<i64: 1, 256>}, {transform_indices = @transform_4, window_bounds = array<i64: 16, 2, 512>}, {transform_indices = @transform_5, window_bounds = array<i64: 1, 1, 512>}, {transform_indices = @transform_6, window_bounds = array<i64: 1, 1, 512>}]} {
    %cst = arith.constant 0.000000e+00 : bf16
    %0 = vector.broadcast %cst : bf16 to vector<2x512xbf16>
    %c0 = arith.constant 0 : index
    %c0_0 = arith.constant 0 : index
    %c0_1 = arith.constant 0 : index
    %1 = vector.load %arg5[%c0, %c0_0, %c0_1] : memref<16x2x512xbf16, #tpu.memory_space<vmem>>, vector<1x2x512xbf16>
    %2 = vector.shape_cast %1 : vector<1x2x512xbf16> to vector<2x512xbf16>
    %3 = vector.shape_cast %0 : vector<2x512xbf16> to vector<1x2x512xbf16>
    tpu.vector_store %arg5[%c0, %c0_0, %c0_1], %3 {strides = array<i32>} : memref<16x2x512xbf16, #tpu.memory_space<vmem>>, vector<1x2x512xbf16>,
    %c15 = arith.constant 15 : index
    %c0_2 = arith.constant 0 : index
    %c0_3 = arith.constant 0 : index
    %4 = vector.load %arg5[%c15, %c0_2, %c0_3] : memref<16x2x512xbf16, #tpu.memory_space<vmem>>, vector<1x2x512xbf16>
    %5 = vector.shape_cast %4 : vector<1x2x512xbf16> to vector<2x512xbf16>
    %6 = vector.shape_cast %0 : vector<2x512xbf16> to vector<1x2x512xbf16>
    tpu.vector_store %arg5[%c15, %c0_2, %c0_3], %6 {strides = array<i32>} : memref<16x2x512xbf16, #tpu.memory_space<vmem>>, vector<1x2x512xbf16>,
    %cst_4 = arith.constant 0.000000e+00 : f32
    %7 = vector.broadcast %cst_4 : f32 to vector<1x512xf32>
    %cst_5 = arith.constant 0.000000e+00 : f32
    %8 = vector.broadcast %cst_5 : f32 to vector<1x512xf32>
    %c1_i32 = arith.constant 1 : i32
    %c14_i32 = arith.constant 14 : i32
    %9 = arith.addi %c1_i32, %c14_i32 : i32
    %c1_i32_6 = arith.constant 1 : i32
    %10:2 = scf.for %arg8 = %c1_i32 to %9 step %c1_i32_6 iter_args(%arg9 = %7, %arg10 = %8) -> (vector<1x512xf32>, vector<1x512xf32>)  : i32 {
      %cst_14 = arith.constant 0.000000e+00 : f32
      %17 = vector.broadcast %cst_14 : f32 to vector<2x512xf32>
      %c1_i32_15 = arith.constant 1 : i32
      %18 = arith.muli %c1_i32_15, %arg8 : i32
      %c0_i32 = arith.constant 0 : i32
      %19 = arith.addi %18, %c0_i32 : i32
      %c-1_i32 = arith.constant -1 : i32
      %20 = arith.addi %19, %c-1_i32 : i32
      %21 = arith.index_cast %20 : i32 to index
      %c0_16 = arith.constant 0 : index
      %c0_17 = arith.constant 0 : index
      %22 = vector.load %arg1[%21, %c0_16, %c0_17] : memref<16x2x256xbf16, #tpu.memory_space<vmem>>, vector<1x2x256xbf16>
      %23 = vector.shape_cast %22 : vector<1x2x256xbf16> to vector<2x256xbf16>
      %24 = arith.extf %23 : vector<2x256xbf16> to vector<2x256xf32>
      %c0_18 = arith.constant 0 : index
      %c0_19 = arith.constant 0 : index
      %25 = vector.load %arg3[%c0_18, %c0_19] : memref<1x256xf32, #tpu.memory_space<vmem>>, vector<1x256xf32>
      %26 = vector.broadcast %25 : vector<1x256xf32> to vector<2x256xf32>
      %27 = arith.mulf %24, %26 : vector<2x256xf32>
      %c0_20 = arith.constant 0 : index
      %c0_21 = arith.constant 0 : index
      %28 = vector.load %arg4[%c0_20, %c0_21] : memref<1x256xf32, #tpu.memory_space<vmem>>, vector<1x256xf32>
      %29 = vector.broadcast %28 : vector<1x256xf32> to vector<2x256xf32>
      %30 = arith.addf %27, %29 : vector<2x256xf32>
      %cst_22 = arith.constant 0.000000e+00 : f32
      %31 = vector.broadcast %cst_22 : f32 to vector<2x256xf32>
      %32 = arith.cmpf oge, %30, %31 : vector<2x256xf32>
      %cst_23 = arith.constant 0.00999999977 : f32
      %33 = vector.broadcast %cst_23 : f32 to vector<2x256xf32>
      %34 = arith.mulf %33, %30 : vector<2x256xf32>
      %35 = arith.select %32, %30, %34 : vector<2x256xi1>, vector<2x256xf32>
      %c1_i32_24 = arith.constant 1 : i32
      %36 = arith.cmpi sge, %20, %c1_i32_24 : i32
      %c14_i32_25 = arith.constant 14 : i32
      %37 = arith.cmpi sle, %20, %c14_i32_25 : i32
      %38 = arith.andi %36, %37 : i1
      %39 = arith.extui %38 : i1 to i32
      %40 = arith.sitofp %39 : i32 to f32
      %41 = vector.broadcast %40 : f32 to vector<2x256xf32>
      %42 = arith.mulf %35, %41 : vector<2x256xf32>
      %43 = arith.truncf %42 : vector<2x256xf32> to vector<2x256xbf16>
      %c0_26 = arith.constant 0 : index
      %c0_27 = arith.constant 0 : index
      %c0_28 = arith.constant 0 : index
      %44 = vector.load %arg2[%c0_26, %c0_27, %c0_28] : memref<3x256x512xbf16, #tpu.memory_space<vmem>>, vector<1x256x512xbf16>
      %45 = vector.shape_cast %44 : vector<1x256x512xbf16> to vector<256x512xbf16>
      %cst_29 = arith.constant dense<0.000000e+00> : vector<2x512xf32>
      %46 = tpu.matmul %43, %45, %cst_29 {dimension_numbers = #tpu.dot_dimension_numbers<[1], [0], [0], [1], [0, 0, 1, 1], [], []>} : vector<2x256xbf16>, vector<256x512xbf16>, vector<2x512xf32> -> vector<2x512xf32>
      %47 = arith.addf %17, %46 : vector<2x512xf32>
      %c1_i32_30 = arith.constant 1 : i32
      %48 = arith.muli %c1_i32_30, %arg8 : i32
      %c1_i32_31 = arith.constant 1 : i32
      %49 = arith.addi %48, %c1_i32_31 : i32
      %c-1_i32_32 = arith.constant -1 : i32
      %50 = arith.addi %49, %c-1_i32_32 : i32
      %51 = arith.index_cast %50 : i32 to index
      %c0_33 = arith.constant 0 : index
      %c0_34 = arith.constant 0 : index
      %52 = vector.load %arg1[%51, %c0_33, %c0_34] : memref<16x2x256xbf16, #tpu.memory_space<vmem>>, vector<1x2x256xbf16>
      %53 = vector.shape_cast %52 : vector<1x2x256xbf16> to vector<2x256xbf16>
      %54 = arith.extf %53 : vector<2x256xbf16> to vector<2x256xf32>
      %c0_35 = arith.constant 0 : index
      %c0_36 = arith.constant 0 : index
      %55 = vector.load %arg3[%c0_35, %c0_36] : memref<1x256xf32, #tpu.memory_space<vmem>>, vector<1x256xf32>
      %56 = vector.broadcast %55 : vector<1x256xf32> to vector<2x256xf32>
      %57 = arith.mulf %54, %56 : vector<2x256xf32>
      %c0_37 = arith.constant 0 : index
      %c0_38 = arith.constant 0 : index
      %58 = vector.load %arg4[%c0_37, %c0_38] : memref<1x256xf32, #tpu.memory_space<vmem>>, vector<1x256xf32>
      %59 = vector.broadcast %58 : vector<1x256xf32> to vector<2x256xf32>
      %60 = arith.addf %57, %59 : vector<2x256xf32>
      %cst_39 = arith.constant 0.000000e+00 : f32
      %61 = vector.broadcast %cst_39 : f32 to vector<2x256xf32>
      %62 = arith.cmpf oge, %60, %61 : vector<2x256xf32>
      %cst_40 = arith.constant 0.00999999977 : f32
      %63 = vector.broadcast %cst_40 : f32 to vector<2x256xf32>
      %64 = arith.mulf %63, %60 : vector<2x256xf32>
      %65 = arith.select %62, %60, %64 : vector<2x256xi1>, vector<2x256xf32>
      %c1_i32_41 = arith.constant 1 : i32
      %66 = arith.cmpi sge, %50, %c1_i32_41 : i32
      %c14_i32_42 = arith.constant 14 : i32
      %67 = arith.cmpi sle, %50, %c14_i32_42 : i32
      %68 = arith.andi %66, %67 : i1
      %69 = arith.extui %68 : i1 to i32
      %70 = arith.sitofp %69 : i32 to f32
      %71 = vector.broadcast %70 : f32 to vector<2x256xf32>
      %72 = arith.mulf %65, %71 : vector<2x256xf32>
      %73 = arith.truncf %72 : vector<2x256xf32> to vector<2x256xbf16>
      %c1 = arith.constant 1 : index
      %c0_43 = arith.constant 0 : index
      %c0_44 = arith.constant 0 : index
      %74 = vector.load %arg2[%c1, %c0_43, %c0_44] : memref<3x256x512xbf16, #tpu.memory_space<vmem>>, vector<1x256x512xbf16>
      %75 = vector.shape_cast %74 : vector<1x256x512xbf16> to vector<256x512xbf16>
      %cst_45 = arith.constant dense<0.000000e+00> : vector<2x512xf32>
      %76 = tpu.matmul %73, %75, %cst_45 {dimension_numbers = #tpu.dot_dimension_numbers<[1], [0], [0], [1], [0, 0, 1, 1], [], []>} : vector<2x256xbf16>, vector<256x512xbf16>, vector<2x512xf32> -> vector<2x512xf32>
      %77 = arith.addf %47, %76 : vector<2x512xf32>
      %c1_i32_46 = arith.constant 1 : i32
      %78 = arith.muli %c1_i32_46, %arg8 : i32
      %c2_i32 = arith.constant 2 : i32
      %79 = arith.addi %78, %c2_i32 : i32
      %c-1_i32_47 = arith.constant -1 : i32
      %80 = arith.addi %79, %c-1_i32_47 : i32
      %81 = arith.index_cast %80 : i32 to index
      %c0_48 = arith.constant 0 : index
      %c0_49 = arith.constant 0 : index
      %82 = vector.load %arg1[%81, %c0_48, %c0_49] : memref<16x2x256xbf16, #tpu.memory_space<vmem>>, vector<1x2x256xbf16>
      %83 = vector.shape_cast %82 : vector<1x2x256xbf16> to vector<2x256xbf16>
      %84 = arith.extf %83 : vector<2x256xbf16> to vector<2x256xf32>
      %c0_50 = arith.constant 0 : index
      %c0_51 = arith.constant 0 : index
      %85 = vector.load %arg3[%c0_50, %c0_51] : memref<1x256xf32, #tpu.memory_space<vmem>>, vector<1x256xf32>
      %86 = vector.broadcast %85 : vector<1x256xf32> to vector<2x256xf32>
      %87 = arith.mulf %84, %86 : vector<2x256xf32>
      %c0_52 = arith.constant 0 : index
      %c0_53 = arith.constant 0 : index
      %88 = vector.load %arg4[%c0_52, %c0_53] : memref<1x256xf32, #tpu.memory_space<vmem>>, vector<1x256xf32>
      %89 = vector.broadcast %88 : vector<1x256xf32> to vector<2x256xf32>
      %90 = arith.addf %87, %89 : vector<2x256xf32>
      %cst_54 = arith.constant 0.000000e+00 : f32
      %91 = vector.broadcast %cst_54 : f32 to vector<2x256xf32>
      %92 = arith.cmpf oge, %90, %91 : vector<2x256xf32>
      %cst_55 = arith.constant 0.00999999977 : f32
      %93 = vector.broadcast %cst_55 : f32 to vector<2x256xf32>
      %94 = arith.mulf %93, %90 : vector<2x256xf32>
      %95 = arith.select %92, %90, %94 : vector<2x256xi1>, vector<2x256xf32>
      %c1_i32_56 = arith.constant 1 : i32
      %96 = arith.cmpi sge, %80, %c1_i32_56 : i32
      %c14_i32_57 = arith.constant 14 : i32
      %97 = arith.cmpi sle, %80, %c14_i32_57 : i32
      %98 = arith.andi %96, %97 : i1
      %99 = arith.extui %98 : i1 to i32
      %100 = arith.sitofp %99 : i32 to f32
      %101 = vector.broadcast %100 : f32 to vector<2x256xf32>
      %102 = arith.mulf %95, %101 : vector<2x256xf32>
      %103 = arith.truncf %102 : vector<2x256xf32> to vector<2x256xbf16>
      %c2 = arith.constant 2 : index
      %c0_58 = arith.constant 0 : index
      %c0_59 = arith.constant 0 : index
      %104 = vector.load %arg2[%c2, %c0_58, %c0_59] : memref<3x256x512xbf16, #tpu.memory_space<vmem>>, vector<1x256x512xbf16>
      %105 = vector.shape_cast %104 : vector<1x256x512xbf16> to vector<256x512xbf16>
      %cst_60 = arith.constant dense<0.000000e+00> : vector<2x512xf32>
      %106 = tpu.matmul %103, %105, %cst_60 {dimension_numbers = #tpu.dot_dimension_numbers<[1], [0], [0], [1], [0, 0, 1, 1], [], []>} : vector<2x256xbf16>, vector<256x512xbf16>, vector<2x512xf32> -> vector<2x512xf32>
      %107 = arith.addf %77, %106 : vector<2x512xf32>
      %108 = arith.truncf %107 : vector<2x512xf32> to vector<2x512xbf16>
      %109 = arith.index_cast %arg8 : i32 to index
      %c0_61 = arith.constant 0 : index
      %c0_62 = arith.constant 0 : index
      %110 = vector.load %arg5[%109, %c0_61, %c0_62] : memref<16x2x512xbf16, #tpu.memory_space<vmem>>, vector<1x2x512xbf16>
      %111 = vector.shape_cast %110 : vector<1x2x512xbf16> to vector<2x512xbf16>
      %112 = vector.shape_cast %108 : vector<2x512xbf16> to vector<1x2x512xbf16>
      tpu.vector_store %arg5[%109, %c0_61, %c0_62], %112 {strides = array<i32>} : memref<16x2x512xbf16, #tpu.memory_space<vmem>>, vector<1x2x512xbf16>,
      %cst_63 = arith.constant dense<0.000000e+00> : vector<512xf32>
      %113 = vector.multi_reduction <add>, %107, %cst_63 [0] : vector<2x512xf32> to vector<512xf32>
      %114 = vector.shape_cast %113 : vector<512xf32> to vector<1x512xf32>
      %115 = arith.addf %arg9, %114 : vector<1x512xf32>
      %116 = arith.mulf %107, %107 : vector<2x512xf32>
      %cst_64 = arith.constant dense<0.000000e+00> : vector<512xf32>
      %117 = vector.multi_reduction <add>, %116, %cst_64 [0] : vector<2x512xf32> to vector<512xf32>
      %118 = vector.shape_cast %117 : vector<512xf32> to vector<1x512xf32>
      %119 = arith.addf %arg10, %118 : vector<1x512xf32>
      scf.yield %115, %119 : vector<1x512xf32>, vector<1x512xf32>
    }
    %c14_i32_7 = arith.constant 14 : i32
    %c0_8 = arith.constant 0 : index
    %c0_9 = arith.constant 0 : index
    %c0_10 = arith.constant 0 : index
    %11 = vector.load %arg6[%c0_8, %c0_9, %c0_10] : memref<1x1x512xf32, #tpu.memory_space<vmem>>, vector<1x1x512xf32>
    %12 = vector.shape_cast %11 : vector<1x1x512xf32> to vector<1x512xf32>
    %13 = vector.shape_cast %10#0 : vector<1x512xf32> to vector<1x1x512xf32>
    tpu.vector_store %arg6[%c0_8, %c0_9, %c0_10], %13 {strides = array<i32>} : memref<1x1x512xf32, #tpu.memory_space<vmem>>, vector<1x1x512xf32>,
    %c0_11 = arith.constant 0 : index
    %c0_12 = arith.constant 0 : index
    %c0_13 = arith.constant 0 : index
    %14 = vector.load %arg7[%c0_11, %c0_12, %c0_13] : memref<1x1x512xf32, #tpu.memory_space<vmem>>, vector<1x1x512xf32>
    %15 = vector.shape_cast %14 : vector<1x1x512xf32> to vector<1x512xf32>
    %16 = vector.shape_cast %10#1 : vector<1x512xf32> to vector<1x1x512xf32>
    tpu.vector_store %arg7[%c0_11, %c0_12, %c0_13], %16 {strides = array<i32>} : memref<1x1x512xf32, #tpu.memory_space<vmem>>, vector<1x1x512xf32>,
    return
  }
  func.func @transform_0(%arg0: i32) -> (i32, i32, i32) {
    %c0_i32 = arith.constant 0 : i32
    %c0_i32_0 = arith.constant 0 : i32
    %c0_i32_1 = arith.constant 0 : i32
    return %c0_i32, %arg0, %c0_i32_0 : i32, i32, i32
  }
  func.func @transform_1(%arg0: i32) -> (i32, i32, i32) {
    %c0_i32 = arith.constant 0 : i32
    %c0_i32_0 = arith.constant 0 : i32
    %c0_i32_1 = arith.constant 0 : i32
    %c0_i32_2 = arith.constant 0 : i32
    return %c0_i32, %c0_i32_0, %c0_i32_1 : i32, i32, i32
  }
  func.func @transform_2(%arg0: i32) -> (i32, i32) {
    %c0_i32 = arith.constant 0 : i32
    %c0_i32_0 = arith.constant 0 : i32
    %c0_i32_1 = arith.constant 0 : i32
    return %c0_i32, %c0_i32_0 : i32, i32
  }
  func.func @transform_3(%arg0: i32) -> (i32, i32) {
    %c0_i32 = arith.constant 0 : i32
    %c0_i32_0 = arith.constant 0 : i32
    %c0_i32_1 = arith.constant 0 : i32
    return %c0_i32, %c0_i32_0 : i32, i32
  }
  func.func @transform_4(%arg0: i32) -> (i32, i32, i32) {
    %c0_i32 = arith.constant 0 : i32
    %c0_i32_0 = arith.constant 0 : i32
    %c0_i32_1 = arith.constant 0 : i32
    return %c0_i32, %arg0, %c0_i32_0 : i32, i32, i32
  }
  func.func @transform_5(%arg0: i32) -> (i32, i32, i32) {
    %c0_i32 = arith.constant 0 : i32
    %c0_i32_0 = arith.constant 0 : i32
    %c0_i32_1 = arith.constant 0 : i32
    return %arg0, %c0_i32, %c0_i32_0 : i32, i32, i32
  }
  func.func @transform_6(%arg0: i32) -> (i32, i32, i32) {
    %c0_i32 = arith.constant 0 : i32
    %c0_i32_0 = arith.constant 0 : i32
    %c0_i32_1 = arith.constant 0 : i32
    return %arg0, %c0_i32, %c0_i32_0 : i32, i32, i32
  }
}

module attributes {stable_mosaic.version = 11 : i64} {
  func.func @_conv_row_kernel(%arg0: i32, %arg1: memref<16x2x512xbf16, #tpu.memory_space<vmem>>, %arg2: memref<3x512x512xbf16, #tpu.memory_space<vmem>>, %arg3: memref<1x512xf32, #tpu.memory_space<vmem>>, %arg4: memref<1x512xf32, #tpu.memory_space<vmem>>, %arg5: memref<8x2x512xbf16, #tpu.memory_space<vmem>>, %arg6: memref<1x1x512xf32, #tpu.memory_space<vmem>>, %arg7: memref<1x1x512xf32, #tpu.memory_space<vmem>>) attributes {dimension_semantics = [#tpu.dimension_semantics<parallel>], iteration_bounds = array<i64: 1>, scalar_prefetch = 0 : i64, scratch_operands = 0 : i64, tpu.core_type = #tpu.core_type<tc>, window_params = [{transform_indices = @transform_0, window_bounds = array<i64: 16, 2, 512>}, {pipeline_mode = #tpu.pipeline_mode<synchronous>, transform_indices = @transform_1, window_bounds = array<i64: 3, 512, 512>}, {pipeline_mode = #tpu.pipeline_mode<synchronous>, transform_indices = @transform_2, window_bounds = array<i64: 1, 512>}, {pipeline_mode = #tpu.pipeline_mode<synchronous>, transform_indices = @transform_3, window_bounds = array<i64: 1, 512>}, {transform_indices = @transform_4, window_bounds = array<i64: 8, 2, 512>}, {transform_indices = @transform_5, window_bounds = array<i64: 1, 1, 512>}, {transform_indices = @transform_6, window_bounds = array<i64: 1, 1, 512>}]} {
    %cst = arith.constant 0.000000e+00 : bf16
    %0 = vector.broadcast %cst : bf16 to vector<2x512xbf16>
    %c7 = arith.constant 7 : index
    %c0 = arith.constant 0 : index
    %c0_0 = arith.constant 0 : index
    %1 = vector.load %arg5[%c7, %c0, %c0_0] : memref<8x2x512xbf16, #tpu.memory_space<vmem>>, vector<1x2x512xbf16>
    %2 = vector.shape_cast %1 : vector<1x2x512xbf16> to vector<2x512xbf16>
    %3 = vector.shape_cast %0 : vector<2x512xbf16> to vector<1x2x512xbf16>
    tpu.vector_store %arg5[%c7, %c0, %c0_0], %3 {strides = array<i32>} : memref<8x2x512xbf16, #tpu.memory_space<vmem>>, vector<1x2x512xbf16>,
    %cst_1 = arith.constant 0.000000e+00 : f32
    %4 = vector.broadcast %cst_1 : f32 to vector<1x512xf32>
    %cst_2 = arith.constant 0.000000e+00 : f32
    %5 = vector.broadcast %cst_2 : f32 to vector<1x512xf32>
    %c0_i32 = arith.constant 0 : i32
    %c7_i32 = arith.constant 7 : i32
    %6 = arith.addi %c0_i32, %c7_i32 : i32
    %c1_i32 = arith.constant 1 : i32
    %7:2 = scf.for %arg8 = %c0_i32 to %6 step %c1_i32 iter_args(%arg9 = %4, %arg10 = %5) -> (vector<1x512xf32>, vector<1x512xf32>)  : i32 {
      %cst_10 = arith.constant 0.000000e+00 : f32
      %14 = vector.broadcast %cst_10 : f32 to vector<2x512xf32>
      %c2_i32 = arith.constant 2 : i32
      %15 = arith.muli %c2_i32, %arg8 : i32
      %c0_i32_11 = arith.constant 0 : i32
      %16 = arith.addi %15, %c0_i32_11 : i32
      %c0_i32_12 = arith.constant 0 : i32
      %17 = arith.addi %16, %c0_i32_12 : i32
      %18 = arith.index_cast %17 : i32 to index
      %c0_13 = arith.constant 0 : index
      %c0_14 = arith.constant 0 : index
      %19 = vector.load %arg1[%18, %c0_13, %c0_14] : memref<16x2x512xbf16, #tpu.memory_space<vmem>>, vector<1x2x512xbf16>
      %20 = vector.shape_cast %19 : vector<1x2x512xbf16> to vector<2x512xbf16>
      %21 = arith.extf %20 : vector<2x512xbf16> to vector<2x512xf32>
      %c0_15 = arith.constant 0 : index
      %c0_16 = arith.constant 0 : index
      %22 = vector.load %arg3[%c0_15, %c0_16] : memref<1x512xf32, #tpu.memory_space<vmem>>, vector<1x512xf32>
      %23 = vector.broadcast %22 : vector<1x512xf32> to vector<2x512xf32>
      %24 = arith.mulf %21, %23 : vector<2x512xf32>
      %c0_17 = arith.constant 0 : index
      %c0_18 = arith.constant 0 : index
      %25 = vector.load %arg4[%c0_17, %c0_18] : memref<1x512xf32, #tpu.memory_space<vmem>>, vector<1x512xf32>
      %26 = vector.broadcast %25 : vector<1x512xf32> to vector<2x512xf32>
      %27 = arith.addf %24, %26 : vector<2x512xf32>
      %cst_19 = arith.constant 0.000000e+00 : f32
      %28 = vector.broadcast %cst_19 : f32 to vector<2x512xf32>
      %29 = arith.cmpf oge, %27, %28 : vector<2x512xf32>
      %cst_20 = arith.constant 0.00999999977 : f32
      %30 = vector.broadcast %cst_20 : f32 to vector<2x512xf32>
      %31 = arith.mulf %30, %27 : vector<2x512xf32>
      %32 = arith.select %29, %27, %31 : vector<2x512xi1>, vector<2x512xf32>
      %c1_i32_21 = arith.constant 1 : i32
      %33 = arith.cmpi sge, %17, %c1_i32_21 : i32
      %c14_i32 = arith.constant 14 : i32
      %34 = arith.cmpi sle, %17, %c14_i32 : i32
      %35 = arith.andi %33, %34 : i1
      %36 = arith.extui %35 : i1 to i32
      %37 = arith.sitofp %36 : i32 to f32
      %38 = vector.broadcast %37 : f32 to vector<2x512xf32>
      %39 = arith.mulf %32, %38 : vector<2x512xf32>
      %40 = arith.truncf %39 : vector<2x512xf32> to vector<2x512xbf16>
      %c0_22 = arith.constant 0 : index
      %c0_23 = arith.constant 0 : index
      %c0_24 = arith.constant 0 : index
      %41 = vector.load %arg2[%c0_22, %c0_23, %c0_24] : memref<3x512x512xbf16, #tpu.memory_space<vmem>>, vector<1x512x512xbf16>
      %42 = vector.shape_cast %41 : vector<1x512x512xbf16> to vector<512x512xbf16>
      %cst_25 = arith.constant dense<0.000000e+00> : vector<2x512xf32>
      %43 = tpu.matmul %40, %42, %cst_25 {dimension_numbers = #tpu.dot_dimension_numbers<[1], [0], [0], [1], [0, 0, 1, 1], [], []>} : vector<2x512xbf16>, vector<512x512xbf16>, vector<2x512xf32> -> vector<2x512xf32>
      %44 = arith.addf %14, %43 : vector<2x512xf32>
      %c2_i32_26 = arith.constant 2 : i32
      %45 = arith.muli %c2_i32_26, %arg8 : i32
      %c1_i32_27 = arith.constant 1 : i32
      %46 = arith.addi %45, %c1_i32_27 : i32
      %c0_i32_28 = arith.constant 0 : i32
      %47 = arith.addi %46, %c0_i32_28 : i32
      %48 = arith.index_cast %47 : i32 to index
      %c0_29 = arith.constant 0 : index
      %c0_30 = arith.constant 0 : index
      %49 = vector.load %arg1[%48, %c0_29, %c0_30] : memref<16x2x512xbf16, #tpu.memory_space<vmem>>, vector<1x2x512xbf16>
      %50 = vector.shape_cast %49 : vector<1x2x512xbf16> to vector<2x512xbf16>
      %51 = arith.extf %50 : vector<2x512xbf16> to vector<2x512xf32>
      %c0_31 = arith.constant 0 : index
      %c0_32 = arith.constant 0 : index
      %52 = vector.load %arg3[%c0_31, %c0_32] : memref<1x512xf32, #tpu.memory_space<vmem>>, vector<1x512xf32>
      %53 = vector.broadcast %52 : vector<1x512xf32> to vector<2x512xf32>
      %54 = arith.mulf %51, %53 : vector<2x512xf32>
      %c0_33 = arith.constant 0 : index
      %c0_34 = arith.constant 0 : index
      %55 = vector.load %arg4[%c0_33, %c0_34] : memref<1x512xf32, #tpu.memory_space<vmem>>, vector<1x512xf32>
      %56 = vector.broadcast %55 : vector<1x512xf32> to vector<2x512xf32>
      %57 = arith.addf %54, %56 : vector<2x512xf32>
      %cst_35 = arith.constant 0.000000e+00 : f32
      %58 = vector.broadcast %cst_35 : f32 to vector<2x512xf32>
      %59 = arith.cmpf oge, %57, %58 : vector<2x512xf32>
      %cst_36 = arith.constant 0.00999999977 : f32
      %60 = vector.broadcast %cst_36 : f32 to vector<2x512xf32>
      %61 = arith.mulf %60, %57 : vector<2x512xf32>
      %62 = arith.select %59, %57, %61 : vector<2x512xi1>, vector<2x512xf32>
      %c1_i32_37 = arith.constant 1 : i32
      %63 = arith.cmpi sge, %47, %c1_i32_37 : i32
      %c14_i32_38 = arith.constant 14 : i32
      %64 = arith.cmpi sle, %47, %c14_i32_38 : i32
      %65 = arith.andi %63, %64 : i1
      %66 = arith.extui %65 : i1 to i32
      %67 = arith.sitofp %66 : i32 to f32
      %68 = vector.broadcast %67 : f32 to vector<2x512xf32>
      %69 = arith.mulf %62, %68 : vector<2x512xf32>
      %70 = arith.truncf %69 : vector<2x512xf32> to vector<2x512xbf16>
      %c1 = arith.constant 1 : index
      %c0_39 = arith.constant 0 : index
      %c0_40 = arith.constant 0 : index
      %71 = vector.load %arg2[%c1, %c0_39, %c0_40] : memref<3x512x512xbf16, #tpu.memory_space<vmem>>, vector<1x512x512xbf16>
      %72 = vector.shape_cast %71 : vector<1x512x512xbf16> to vector<512x512xbf16>
      %cst_41 = arith.constant dense<0.000000e+00> : vector<2x512xf32>
      %73 = tpu.matmul %70, %72, %cst_41 {dimension_numbers = #tpu.dot_dimension_numbers<[1], [0], [0], [1], [0, 0, 1, 1], [], []>} : vector<2x512xbf16>, vector<512x512xbf16>, vector<2x512xf32> -> vector<2x512xf32>
      %74 = arith.addf %44, %73 : vector<2x512xf32>
      %c2_i32_42 = arith.constant 2 : i32
      %75 = arith.muli %c2_i32_42, %arg8 : i32
      %c2_i32_43 = arith.constant 2 : i32
      %76 = arith.addi %75, %c2_i32_43 : i32
      %c0_i32_44 = arith.constant 0 : i32
      %77 = arith.addi %76, %c0_i32_44 : i32
      %78 = arith.index_cast %77 : i32 to index
      %c0_45 = arith.constant 0 : index
      %c0_46 = arith.constant 0 : index
      %79 = vector.load %arg1[%78, %c0_45, %c0_46] : memref<16x2x512xbf16, #tpu.memory_space<vmem>>, vector<1x2x512xbf16>
      %80 = vector.shape_cast %79 : vector<1x2x512xbf16> to vector<2x512xbf16>
      %81 = arith.extf %80 : vector<2x512xbf16> to vector<2x512xf32>
      %c0_47 = arith.constant 0 : index
      %c0_48 = arith.constant 0 : index
      %82 = vector.load %arg3[%c0_47, %c0_48] : memref<1x512xf32, #tpu.memory_space<vmem>>, vector<1x512xf32>
      %83 = vector.broadcast %82 : vector<1x512xf32> to vector<2x512xf32>
      %84 = arith.mulf %81, %83 : vector<2x512xf32>
      %c0_49 = arith.constant 0 : index
      %c0_50 = arith.constant 0 : index
      %85 = vector.load %arg4[%c0_49, %c0_50] : memref<1x512xf32, #tpu.memory_space<vmem>>, vector<1x512xf32>
      %86 = vector.broadcast %85 : vector<1x512xf32> to vector<2x512xf32>
      %87 = arith.addf %84, %86 : vector<2x512xf32>
      %cst_51 = arith.constant 0.000000e+00 : f32
      %88 = vector.broadcast %cst_51 : f32 to vector<2x512xf32>
      %89 = arith.cmpf oge, %87, %88 : vector<2x512xf32>
      %cst_52 = arith.constant 0.00999999977 : f32
      %90 = vector.broadcast %cst_52 : f32 to vector<2x512xf32>
      %91 = arith.mulf %90, %87 : vector<2x512xf32>
      %92 = arith.select %89, %87, %91 : vector<2x512xi1>, vector<2x512xf32>
      %c1_i32_53 = arith.constant 1 : i32
      %93 = arith.cmpi sge, %77, %c1_i32_53 : i32
      %c14_i32_54 = arith.constant 14 : i32
      %94 = arith.cmpi sle, %77, %c14_i32_54 : i32
      %95 = arith.andi %93, %94 : i1
      %96 = arith.extui %95 : i1 to i32
      %97 = arith.sitofp %96 : i32 to f32
      %98 = vector.broadcast %97 : f32 to vector<2x512xf32>
      %99 = arith.mulf %92, %98 : vector<2x512xf32>
      %100 = arith.truncf %99 : vector<2x512xf32> to vector<2x512xbf16>
      %c2 = arith.constant 2 : index
      %c0_55 = arith.constant 0 : index
      %c0_56 = arith.constant 0 : index
      %101 = vector.load %arg2[%c2, %c0_55, %c0_56] : memref<3x512x512xbf16, #tpu.memory_space<vmem>>, vector<1x512x512xbf16>
      %102 = vector.shape_cast %101 : vector<1x512x512xbf16> to vector<512x512xbf16>
      %cst_57 = arith.constant dense<0.000000e+00> : vector<2x512xf32>
      %103 = tpu.matmul %100, %102, %cst_57 {dimension_numbers = #tpu.dot_dimension_numbers<[1], [0], [0], [1], [0, 0, 1, 1], [], []>} : vector<2x512xbf16>, vector<512x512xbf16>, vector<2x512xf32> -> vector<2x512xf32>
      %104 = arith.addf %74, %103 : vector<2x512xf32>
      %105 = arith.truncf %104 : vector<2x512xf32> to vector<2x512xbf16>
      %106 = arith.index_cast %arg8 : i32 to index
      %c0_58 = arith.constant 0 : index
      %c0_59 = arith.constant 0 : index
      %107 = vector.load %arg5[%106, %c0_58, %c0_59] : memref<8x2x512xbf16, #tpu.memory_space<vmem>>, vector<1x2x512xbf16>
      %108 = vector.shape_cast %107 : vector<1x2x512xbf16> to vector<2x512xbf16>
      %109 = vector.shape_cast %105 : vector<2x512xbf16> to vector<1x2x512xbf16>
      tpu.vector_store %arg5[%106, %c0_58, %c0_59], %109 {strides = array<i32>} : memref<8x2x512xbf16, #tpu.memory_space<vmem>>, vector<1x2x512xbf16>,
      %cst_60 = arith.constant dense<0.000000e+00> : vector<512xf32>
      %110 = vector.multi_reduction <add>, %104, %cst_60 [0] : vector<2x512xf32> to vector<512xf32>
      %111 = vector.shape_cast %110 : vector<512xf32> to vector<1x512xf32>
      %112 = arith.addf %arg9, %111 : vector<1x512xf32>
      %113 = arith.mulf %104, %104 : vector<2x512xf32>
      %cst_61 = arith.constant dense<0.000000e+00> : vector<512xf32>
      %114 = vector.multi_reduction <add>, %113, %cst_61 [0] : vector<2x512xf32> to vector<512xf32>
      %115 = vector.shape_cast %114 : vector<512xf32> to vector<1x512xf32>
      %116 = arith.addf %arg10, %115 : vector<1x512xf32>
      scf.yield %112, %116 : vector<1x512xf32>, vector<1x512xf32>
    }
    %c7_i32_3 = arith.constant 7 : i32
    %c0_4 = arith.constant 0 : index
    %c0_5 = arith.constant 0 : index
    %c0_6 = arith.constant 0 : index
    %8 = vector.load %arg6[%c0_4, %c0_5, %c0_6] : memref<1x1x512xf32, #tpu.memory_space<vmem>>, vector<1x1x512xf32>
    %9 = vector.shape_cast %8 : vector<1x1x512xf32> to vector<1x512xf32>
    %10 = vector.shape_cast %7#0 : vector<1x512xf32> to vector<1x1x512xf32>
    tpu.vector_store %arg6[%c0_4, %c0_5, %c0_6], %10 {strides = array<i32>} : memref<1x1x512xf32, #tpu.memory_space<vmem>>, vector<1x1x512xf32>,
    %c0_7 = arith.constant 0 : index
    %c0_8 = arith.constant 0 : index
    %c0_9 = arith.constant 0 : index
    %11 = vector.load %arg7[%c0_7, %c0_8, %c0_9] : memref<1x1x512xf32, #tpu.memory_space<vmem>>, vector<1x1x512xf32>
    %12 = vector.shape_cast %11 : vector<1x1x512xf32> to vector<1x512xf32>
    %13 = vector.shape_cast %7#1 : vector<1x512xf32> to vector<1x1x512xf32>
    tpu.vector_store %arg7[%c0_7, %c0_8, %c0_9], %13 {strides = array<i32>} : memref<1x1x512xf32, #tpu.memory_space<vmem>>, vector<1x1x512xf32>,
    return
  }
  func.func @transform_0(%arg0: i32) -> (i32, i32, i32) {
    %c0_i32 = arith.constant 0 : i32
    %c0_i32_0 = arith.constant 0 : i32
    %c0_i32_1 = arith.constant 0 : i32
    return %c0_i32, %arg0, %c0_i32_0 : i32, i32, i32
  }
  func.func @transform_1(%arg0: i32) -> (i32, i32, i32) {
    %c0_i32 = arith.constant 0 : i32
    %c0_i32_0 = arith.constant 0 : i32
    %c0_i32_1 = arith.constant 0 : i32
    %c0_i32_2 = arith.constant 0 : i32
    return %c0_i32, %c0_i32_0, %c0_i32_1 : i32, i32, i32
  }
  func.func @transform_2(%arg0: i32) -> (i32, i32) {
    %c0_i32 = arith.constant 0 : i32
    %c0_i32_0 = arith.constant 0 : i32
    %c0_i32_1 = arith.constant 0 : i32
    return %c0_i32, %c0_i32_0 : i32, i32
  }
  func.func @transform_3(%arg0: i32) -> (i32, i32) {
    %c0_i32 = arith.constant 0 : i32
    %c0_i32_0 = arith.constant 0 : i32
    %c0_i32_1 = arith.constant 0 : i32
    return %c0_i32, %c0_i32_0 : i32, i32
  }
  func.func @transform_4(%arg0: i32) -> (i32, i32, i32) {
    %c0_i32 = arith.constant 0 : i32
    %c0_i32_0 = arith.constant 0 : i32
    %c0_i32_1 = arith.constant 0 : i32
    return %c0_i32, %arg0, %c0_i32_0 : i32, i32, i32
  }
  func.func @transform_5(%arg0: i32) -> (i32, i32, i32) {
    %c0_i32 = arith.constant 0 : i32
    %c0_i32_0 = arith.constant 0 : i32
    %c0_i32_1 = arith.constant 0 : i32
    return %arg0, %c0_i32, %c0_i32_0 : i32, i32, i32
  }
  func.func @transform_6(%arg0: i32) -> (i32, i32, i32) {
    %c0_i32 = arith.constant 0 : i32
    %c0_i32_0 = arith.constant 0 : i32
    %c0_i32_1 = arith.constant 0 : i32
    return %arg0, %c0_i32, %c0_i32_0 : i32, i32, i32
  }
}

module attributes {stable_mosaic.version = 11 : i64} {
  func.func @_fc_kernel(%arg0: i32, %arg1: memref<8x2x512xbf16, #tpu.memory_space<vmem>>, %arg2: memref<8x512x1xbf16, #tpu.memory_space<vmem>>, %arg3: memref<1x512xf32, #tpu.memory_space<vmem>>, %arg4: memref<1x512xf32, #tpu.memory_space<vmem>>, %arg5: memref<1x1xf32, #tpu.memory_space<vmem>>, %arg6: memref<2x1xf32, #tpu.memory_space<vmem>>) attributes {dimension_semantics = [#tpu.dimension_semantics<parallel>], iteration_bounds = array<i64: 1>, scalar_prefetch = 0 : i64, scratch_operands = 0 : i64, tpu.core_type = #tpu.core_type<tc>, window_params = [{transform_indices = @transform_0, window_bounds = array<i64: 8, 2, 512>}, {pipeline_mode = #tpu.pipeline_mode<synchronous>, transform_indices = @transform_1, window_bounds = array<i64: 8, 512, 1>}, {pipeline_mode = #tpu.pipeline_mode<synchronous>, transform_indices = @transform_2, window_bounds = array<i64: 1, 512>}, {pipeline_mode = #tpu.pipeline_mode<synchronous>, transform_indices = @transform_3, window_bounds = array<i64: 1, 512>}, {pipeline_mode = #tpu.pipeline_mode<synchronous>, transform_indices = @transform_4, window_bounds = array<i64: 1, 1>}, {transform_indices = @transform_5, window_bounds = array<i64: 2, 1>}]} {
    %cst = arith.constant 0.000000e+00 : f32
    %0 = vector.broadcast %cst : f32 to vector<2x1xf32>
    %c0 = arith.constant 0 : index
    %c0_0 = arith.constant 0 : index
    %c0_1 = arith.constant 0 : index
    %1 = vector.load %arg1[%c0, %c0_0, %c0_1] : memref<8x2x512xbf16, #tpu.memory_space<vmem>>, vector<1x2x512xbf16>
    %2 = vector.shape_cast %1 : vector<1x2x512xbf16> to vector<2x512xbf16>
    %3 = arith.extf %2 : vector<2x512xbf16> to vector<2x512xf32>
    %c0_2 = arith.constant 0 : index
    %c0_3 = arith.constant 0 : index
    %4 = vector.load %arg3[%c0_2, %c0_3] : memref<1x512xf32, #tpu.memory_space<vmem>>, vector<1x512xf32>
    %5 = vector.broadcast %4 : vector<1x512xf32> to vector<2x512xf32>
    %6 = arith.mulf %3, %5 : vector<2x512xf32>
    %c0_4 = arith.constant 0 : index
    %c0_5 = arith.constant 0 : index
    %7 = vector.load %arg4[%c0_4, %c0_5] : memref<1x512xf32, #tpu.memory_space<vmem>>, vector<1x512xf32>
    %8 = vector.broadcast %7 : vector<1x512xf32> to vector<2x512xf32>
    %9 = arith.addf %6, %8 : vector<2x512xf32>
    %cst_6 = arith.constant 0.000000e+00 : f32
    %10 = vector.broadcast %cst_6 : f32 to vector<2x512xf32>
    %11 = arith.cmpf oge, %9, %10 : vector<2x512xf32>
    %cst_7 = arith.constant 0.00999999977 : f32
    %12 = vector.broadcast %cst_7 : f32 to vector<2x512xf32>
    %13 = arith.mulf %12, %9 : vector<2x512xf32>
    %14 = arith.select %11, %9, %13 : vector<2x512xi1>, vector<2x512xf32>
    %15 = arith.truncf %14 : vector<2x512xf32> to vector<2x512xbf16>
    %c0_8 = arith.constant 0 : index
    %c0_9 = arith.constant 0 : index
    %c0_10 = arith.constant 0 : index
    %16 = vector.load %arg2[%c0_8, %c0_9, %c0_10] : memref<8x512x1xbf16, #tpu.memory_space<vmem>>, vector<1x512x1xbf16>
    %17 = vector.shape_cast %16 : vector<1x512x1xbf16> to vector<512x1xbf16>
    %cst_11 = arith.constant dense<0.000000e+00> : vector<2x1xf32>
    %18 = tpu.matmul %15, %17, %cst_11 {dimension_numbers = #tpu.dot_dimension_numbers<[1], [0], [0], [1], [0, 0, 1, 1], [], []>} : vector<2x512xbf16>, vector<512x1xbf16>, vector<2x1xf32> -> vector<2x1xf32>
    %19 = arith.addf %0, %18 : vector<2x1xf32>
    %c1 = arith.constant 1 : index
    %c0_12 = arith.constant 0 : index
    %c0_13 = arith.constant 0 : index
    %20 = vector.load %arg1[%c1, %c0_12, %c0_13] : memref<8x2x512xbf16, #tpu.memory_space<vmem>>, vector<1x2x512xbf16>
    %21 = vector.shape_cast %20 : vector<1x2x512xbf16> to vector<2x512xbf16>
    %22 = arith.extf %21 : vector<2x512xbf16> to vector<2x512xf32>
    %c0_14 = arith.constant 0 : index
    %c0_15 = arith.constant 0 : index
    %23 = vector.load %arg3[%c0_14, %c0_15] : memref<1x512xf32, #tpu.memory_space<vmem>>, vector<1x512xf32>
    %24 = vector.broadcast %23 : vector<1x512xf32> to vector<2x512xf32>
    %25 = arith.mulf %22, %24 : vector<2x512xf32>
    %c0_16 = arith.constant 0 : index
    %c0_17 = arith.constant 0 : index
    %26 = vector.load %arg4[%c0_16, %c0_17] : memref<1x512xf32, #tpu.memory_space<vmem>>, vector<1x512xf32>
    %27 = vector.broadcast %26 : vector<1x512xf32> to vector<2x512xf32>
    %28 = arith.addf %25, %27 : vector<2x512xf32>
    %cst_18 = arith.constant 0.000000e+00 : f32
    %29 = vector.broadcast %cst_18 : f32 to vector<2x512xf32>
    %30 = arith.cmpf oge, %28, %29 : vector<2x512xf32>
    %cst_19 = arith.constant 0.00999999977 : f32
    %31 = vector.broadcast %cst_19 : f32 to vector<2x512xf32>
    %32 = arith.mulf %31, %28 : vector<2x512xf32>
    %33 = arith.select %30, %28, %32 : vector<2x512xi1>, vector<2x512xf32>
    %34 = arith.truncf %33 : vector<2x512xf32> to vector<2x512xbf16>
    %c1_20 = arith.constant 1 : index
    %c0_21 = arith.constant 0 : index
    %c0_22 = arith.constant 0 : index
    %35 = vector.load %arg2[%c1_20, %c0_21, %c0_22] : memref<8x512x1xbf16, #tpu.memory_space<vmem>>, vector<1x512x1xbf16>
    %36 = vector.shape_cast %35 : vector<1x512x1xbf16> to vector<512x1xbf16>
    %cst_23 = arith.constant dense<0.000000e+00> : vector<2x1xf32>
    %37 = tpu.matmul %34, %36, %cst_23 {dimension_numbers = #tpu.dot_dimension_numbers<[1], [0], [0], [1], [0, 0, 1, 1], [], []>} : vector<2x512xbf16>, vector<512x1xbf16>, vector<2x1xf32> -> vector<2x1xf32>
    %38 = arith.addf %19, %37 : vector<2x1xf32>
    %c2 = arith.constant 2 : index
    %c0_24 = arith.constant 0 : index
    %c0_25 = arith.constant 0 : index
    %39 = vector.load %arg1[%c2, %c0_24, %c0_25] : memref<8x2x512xbf16, #tpu.memory_space<vmem>>, vector<1x2x512xbf16>
    %40 = vector.shape_cast %39 : vector<1x2x512xbf16> to vector<2x512xbf16>
    %41 = arith.extf %40 : vector<2x512xbf16> to vector<2x512xf32>
    %c0_26 = arith.constant 0 : index
    %c0_27 = arith.constant 0 : index
    %42 = vector.load %arg3[%c0_26, %c0_27] : memref<1x512xf32, #tpu.memory_space<vmem>>, vector<1x512xf32>
    %43 = vector.broadcast %42 : vector<1x512xf32> to vector<2x512xf32>
    %44 = arith.mulf %41, %43 : vector<2x512xf32>
    %c0_28 = arith.constant 0 : index
    %c0_29 = arith.constant 0 : index
    %45 = vector.load %arg4[%c0_28, %c0_29] : memref<1x512xf32, #tpu.memory_space<vmem>>, vector<1x512xf32>
    %46 = vector.broadcast %45 : vector<1x512xf32> to vector<2x512xf32>
    %47 = arith.addf %44, %46 : vector<2x512xf32>
    %cst_30 = arith.constant 0.000000e+00 : f32
    %48 = vector.broadcast %cst_30 : f32 to vector<2x512xf32>
    %49 = arith.cmpf oge, %47, %48 : vector<2x512xf32>
    %cst_31 = arith.constant 0.00999999977 : f32
    %50 = vector.broadcast %cst_31 : f32 to vector<2x512xf32>
    %51 = arith.mulf %50, %47 : vector<2x512xf32>
    %52 = arith.select %49, %47, %51 : vector<2x512xi1>, vector<2x512xf32>
    %53 = arith.truncf %52 : vector<2x512xf32> to vector<2x512xbf16>
    %c2_32 = arith.constant 2 : index
    %c0_33 = arith.constant 0 : index
    %c0_34 = arith.constant 0 : index
    %54 = vector.load %arg2[%c2_32, %c0_33, %c0_34] : memref<8x512x1xbf16, #tpu.memory_space<vmem>>, vector<1x512x1xbf16>
    %55 = vector.shape_cast %54 : vector<1x512x1xbf16> to vector<512x1xbf16>
    %cst_35 = arith.constant dense<0.000000e+00> : vector<2x1xf32>
    %56 = tpu.matmul %53, %55, %cst_35 {dimension_numbers = #tpu.dot_dimension_numbers<[1], [0], [0], [1], [0, 0, 1, 1], [], []>} : vector<2x512xbf16>, vector<512x1xbf16>, vector<2x1xf32> -> vector<2x1xf32>
    %57 = arith.addf %38, %56 : vector<2x1xf32>
    %c3 = arith.constant 3 : index
    %c0_36 = arith.constant 0 : index
    %c0_37 = arith.constant 0 : index
    %58 = vector.load %arg1[%c3, %c0_36, %c0_37] : memref<8x2x512xbf16, #tpu.memory_space<vmem>>, vector<1x2x512xbf16>
    %59 = vector.shape_cast %58 : vector<1x2x512xbf16> to vector<2x512xbf16>
    %60 = arith.extf %59 : vector<2x512xbf16> to vector<2x512xf32>
    %c0_38 = arith.constant 0 : index
    %c0_39 = arith.constant 0 : index
    %61 = vector.load %arg3[%c0_38, %c0_39] : memref<1x512xf32, #tpu.memory_space<vmem>>, vector<1x512xf32>
    %62 = vector.broadcast %61 : vector<1x512xf32> to vector<2x512xf32>
    %63 = arith.mulf %60, %62 : vector<2x512xf32>
    %c0_40 = arith.constant 0 : index
    %c0_41 = arith.constant 0 : index
    %64 = vector.load %arg4[%c0_40, %c0_41] : memref<1x512xf32, #tpu.memory_space<vmem>>, vector<1x512xf32>
    %65 = vector.broadcast %64 : vector<1x512xf32> to vector<2x512xf32>
    %66 = arith.addf %63, %65 : vector<2x512xf32>
    %cst_42 = arith.constant 0.000000e+00 : f32
    %67 = vector.broadcast %cst_42 : f32 to vector<2x512xf32>
    %68 = arith.cmpf oge, %66, %67 : vector<2x512xf32>
    %cst_43 = arith.constant 0.00999999977 : f32
    %69 = vector.broadcast %cst_43 : f32 to vector<2x512xf32>
    %70 = arith.mulf %69, %66 : vector<2x512xf32>
    %71 = arith.select %68, %66, %70 : vector<2x512xi1>, vector<2x512xf32>
    %72 = arith.truncf %71 : vector<2x512xf32> to vector<2x512xbf16>
    %c3_44 = arith.constant 3 : index
    %c0_45 = arith.constant 0 : index
    %c0_46 = arith.constant 0 : index
    %73 = vector.load %arg2[%c3_44, %c0_45, %c0_46] : memref<8x512x1xbf16, #tpu.memory_space<vmem>>, vector<1x512x1xbf16>
    %74 = vector.shape_cast %73 : vector<1x512x1xbf16> to vector<512x1xbf16>
    %cst_47 = arith.constant dense<0.000000e+00> : vector<2x1xf32>
    %75 = tpu.matmul %72, %74, %cst_47 {dimension_numbers = #tpu.dot_dimension_numbers<[1], [0], [0], [1], [0, 0, 1, 1], [], []>} : vector<2x512xbf16>, vector<512x1xbf16>, vector<2x1xf32> -> vector<2x1xf32>
    %76 = arith.addf %57, %75 : vector<2x1xf32>
    %c4 = arith.constant 4 : index
    %c0_48 = arith.constant 0 : index
    %c0_49 = arith.constant 0 : index
    %77 = vector.load %arg1[%c4, %c0_48, %c0_49] : memref<8x2x512xbf16, #tpu.memory_space<vmem>>, vector<1x2x512xbf16>
    %78 = vector.shape_cast %77 : vector<1x2x512xbf16> to vector<2x512xbf16>
    %79 = arith.extf %78 : vector<2x512xbf16> to vector<2x512xf32>
    %c0_50 = arith.constant 0 : index
    %c0_51 = arith.constant 0 : index
    %80 = vector.load %arg3[%c0_50, %c0_51] : memref<1x512xf32, #tpu.memory_space<vmem>>, vector<1x512xf32>
    %81 = vector.broadcast %80 : vector<1x512xf32> to vector<2x512xf32>
    %82 = arith.mulf %79, %81 : vector<2x512xf32>
    %c0_52 = arith.constant 0 : index
    %c0_53 = arith.constant 0 : index
    %83 = vector.load %arg4[%c0_52, %c0_53] : memref<1x512xf32, #tpu.memory_space<vmem>>, vector<1x512xf32>
    %84 = vector.broadcast %83 : vector<1x512xf32> to vector<2x512xf32>
    %85 = arith.addf %82, %84 : vector<2x512xf32>
    %cst_54 = arith.constant 0.000000e+00 : f32
    %86 = vector.broadcast %cst_54 : f32 to vector<2x512xf32>
    %87 = arith.cmpf oge, %85, %86 : vector<2x512xf32>
    %cst_55 = arith.constant 0.00999999977 : f32
    %88 = vector.broadcast %cst_55 : f32 to vector<2x512xf32>
    %89 = arith.mulf %88, %85 : vector<2x512xf32>
    %90 = arith.select %87, %85, %89 : vector<2x512xi1>, vector<2x512xf32>
    %91 = arith.truncf %90 : vector<2x512xf32> to vector<2x512xbf16>
    %c4_56 = arith.constant 4 : index
    %c0_57 = arith.constant 0 : index
    %c0_58 = arith.constant 0 : index
    %92 = vector.load %arg2[%c4_56, %c0_57, %c0_58] : memref<8x512x1xbf16, #tpu.memory_space<vmem>>, vector<1x512x1xbf16>
    %93 = vector.shape_cast %92 : vector<1x512x1xbf16> to vector<512x1xbf16>
    %cst_59 = arith.constant dense<0.000000e+00> : vector<2x1xf32>
    %94 = tpu.matmul %91, %93, %cst_59 {dimension_numbers = #tpu.dot_dimension_numbers<[1], [0], [0], [1], [0, 0, 1, 1], [], []>} : vector<2x512xbf16>, vector<512x1xbf16>, vector<2x1xf32> -> vector<2x1xf32>
    %95 = arith.addf %76, %94 : vector<2x1xf32>
    %c5 = arith.constant 5 : index
    %c0_60 = arith.constant 0 : index
    %c0_61 = arith.constant 0 : index
    %96 = vector.load %arg1[%c5, %c0_60, %c0_61] : memref<8x2x512xbf16, #tpu.memory_space<vmem>>, vector<1x2x512xbf16>
    %97 = vector.shape_cast %96 : vector<1x2x512xbf16> to vector<2x512xbf16>
    %98 = arith.extf %97 : vector<2x512xbf16> to vector<2x512xf32>
    %c0_62 = arith.constant 0 : index
    %c0_63 = arith.constant 0 : index
    %99 = vector.load %arg3[%c0_62, %c0_63] : memref<1x512xf32, #tpu.memory_space<vmem>>, vector<1x512xf32>
    %100 = vector.broadcast %99 : vector<1x512xf32> to vector<2x512xf32>
    %101 = arith.mulf %98, %100 : vector<2x512xf32>
    %c0_64 = arith.constant 0 : index
    %c0_65 = arith.constant 0 : index
    %102 = vector.load %arg4[%c0_64, %c0_65] : memref<1x512xf32, #tpu.memory_space<vmem>>, vector<1x512xf32>
    %103 = vector.broadcast %102 : vector<1x512xf32> to vector<2x512xf32>
    %104 = arith.addf %101, %103 : vector<2x512xf32>
    %cst_66 = arith.constant 0.000000e+00 : f32
    %105 = vector.broadcast %cst_66 : f32 to vector<2x512xf32>
    %106 = arith.cmpf oge, %104, %105 : vector<2x512xf32>
    %cst_67 = arith.constant 0.00999999977 : f32
    %107 = vector.broadcast %cst_67 : f32 to vector<2x512xf32>
    %108 = arith.mulf %107, %104 : vector<2x512xf32>
    %109 = arith.select %106, %104, %108 : vector<2x512xi1>, vector<2x512xf32>
    %110 = arith.truncf %109 : vector<2x512xf32> to vector<2x512xbf16>
    %c5_68 = arith.constant 5 : index
    %c0_69 = arith.constant 0 : index
    %c0_70 = arith.constant 0 : index
    %111 = vector.load %arg2[%c5_68, %c0_69, %c0_70] : memref<8x512x1xbf16, #tpu.memory_space<vmem>>, vector<1x512x1xbf16>
    %112 = vector.shape_cast %111 : vector<1x512x1xbf16> to vector<512x1xbf16>
    %cst_71 = arith.constant dense<0.000000e+00> : vector<2x1xf32>
    %113 = tpu.matmul %110, %112, %cst_71 {dimension_numbers = #tpu.dot_dimension_numbers<[1], [0], [0], [1], [0, 0, 1, 1], [], []>} : vector<2x512xbf16>, vector<512x1xbf16>, vector<2x1xf32> -> vector<2x1xf32>
    %114 = arith.addf %95, %113 : vector<2x1xf32>
    %c6 = arith.constant 6 : index
    %c0_72 = arith.constant 0 : index
    %c0_73 = arith.constant 0 : index
    %115 = vector.load %arg1[%c6, %c0_72, %c0_73] : memref<8x2x512xbf16, #tpu.memory_space<vmem>>, vector<1x2x512xbf16>
    %116 = vector.shape_cast %115 : vector<1x2x512xbf16> to vector<2x512xbf16>
    %117 = arith.extf %116 : vector<2x512xbf16> to vector<2x512xf32>
    %c0_74 = arith.constant 0 : index
    %c0_75 = arith.constant 0 : index
    %118 = vector.load %arg3[%c0_74, %c0_75] : memref<1x512xf32, #tpu.memory_space<vmem>>, vector<1x512xf32>
    %119 = vector.broadcast %118 : vector<1x512xf32> to vector<2x512xf32>
    %120 = arith.mulf %117, %119 : vector<2x512xf32>
    %c0_76 = arith.constant 0 : index
    %c0_77 = arith.constant 0 : index
    %121 = vector.load %arg4[%c0_76, %c0_77] : memref<1x512xf32, #tpu.memory_space<vmem>>, vector<1x512xf32>
    %122 = vector.broadcast %121 : vector<1x512xf32> to vector<2x512xf32>
    %123 = arith.addf %120, %122 : vector<2x512xf32>
    %cst_78 = arith.constant 0.000000e+00 : f32
    %124 = vector.broadcast %cst_78 : f32 to vector<2x512xf32>
    %125 = arith.cmpf oge, %123, %124 : vector<2x512xf32>
    %cst_79 = arith.constant 0.00999999977 : f32
    %126 = vector.broadcast %cst_79 : f32 to vector<2x512xf32>
    %127 = arith.mulf %126, %123 : vector<2x512xf32>
    %128 = arith.select %125, %123, %127 : vector<2x512xi1>, vector<2x512xf32>
    %129 = arith.truncf %128 : vector<2x512xf32> to vector<2x512xbf16>
    %c6_80 = arith.constant 6 : index
    %c0_81 = arith.constant 0 : index
    %c0_82 = arith.constant 0 : index
    %130 = vector.load %arg2[%c6_80, %c0_81, %c0_82] : memref<8x512x1xbf16, #tpu.memory_space<vmem>>, vector<1x512x1xbf16>
    %131 = vector.shape_cast %130 : vector<1x512x1xbf16> to vector<512x1xbf16>
    %cst_83 = arith.constant dense<0.000000e+00> : vector<2x1xf32>
    %132 = tpu.matmul %129, %131, %cst_83 {dimension_numbers = #tpu.dot_dimension_numbers<[1], [0], [0], [1], [0, 0, 1, 1], [], []>} : vector<2x512xbf16>, vector<512x1xbf16>, vector<2x1xf32> -> vector<2x1xf32>
    %133 = arith.addf %114, %132 : vector<2x1xf32>
    %c7 = arith.constant 7 : index
    %c0_84 = arith.constant 0 : index
    %c0_85 = arith.constant 0 : index
    %134 = vector.load %arg1[%c7, %c0_84, %c0_85] : memref<8x2x512xbf16, #tpu.memory_space<vmem>>, vector<1x2x512xbf16>
    %135 = vector.shape_cast %134 : vector<1x2x512xbf16> to vector<2x512xbf16>
    %136 = arith.extf %135 : vector<2x512xbf16> to vector<2x512xf32>
    %c0_86 = arith.constant 0 : index
    %c0_87 = arith.constant 0 : index
    %137 = vector.load %arg3[%c0_86, %c0_87] : memref<1x512xf32, #tpu.memory_space<vmem>>, vector<1x512xf32>
    %138 = vector.broadcast %137 : vector<1x512xf32> to vector<2x512xf32>
    %139 = arith.mulf %136, %138 : vector<2x512xf32>
    %c0_88 = arith.constant 0 : index
    %c0_89 = arith.constant 0 : index
    %140 = vector.load %arg4[%c0_88, %c0_89] : memref<1x512xf32, #tpu.memory_space<vmem>>, vector<1x512xf32>
    %141 = vector.broadcast %140 : vector<1x512xf32> to vector<2x512xf32>
    %142 = arith.addf %139, %141 : vector<2x512xf32>
    %cst_90 = arith.constant 0.000000e+00 : f32
    %143 = vector.broadcast %cst_90 : f32 to vector<2x512xf32>
    %144 = arith.cmpf oge, %142, %143 : vector<2x512xf32>
    %cst_91 = arith.constant 0.00999999977 : f32
    %145 = vector.broadcast %cst_91 : f32 to vector<2x512xf32>
    %146 = arith.mulf %145, %142 : vector<2x512xf32>
    %147 = arith.select %144, %142, %146 : vector<2x512xi1>, vector<2x512xf32>
    %148 = arith.truncf %147 : vector<2x512xf32> to vector<2x512xbf16>
    %c7_92 = arith.constant 7 : index
    %c0_93 = arith.constant 0 : index
    %c0_94 = arith.constant 0 : index
    %149 = vector.load %arg2[%c7_92, %c0_93, %c0_94] : memref<8x512x1xbf16, #tpu.memory_space<vmem>>, vector<1x512x1xbf16>
    %150 = vector.shape_cast %149 : vector<1x512x1xbf16> to vector<512x1xbf16>
    %cst_95 = arith.constant dense<0.000000e+00> : vector<2x1xf32>
    %151 = tpu.matmul %148, %150, %cst_95 {dimension_numbers = #tpu.dot_dimension_numbers<[1], [0], [0], [1], [0, 0, 1, 1], [], []>} : vector<2x512xbf16>, vector<512x1xbf16>, vector<2x1xf32> -> vector<2x1xf32>
    %152 = arith.addf %133, %151 : vector<2x1xf32>
    %c0_96 = arith.constant 0 : index
    %c0_97 = arith.constant 0 : index
    %153 = vector.load %arg5[%c0_96, %c0_97] : memref<1x1xf32, #tpu.memory_space<vmem>>, vector<1x1xf32>
    %154 = vector.broadcast %153 : vector<1x1xf32> to vector<2x1xf32>
    %155 = arith.addf %152, %154 : vector<2x1xf32>
    %cst_98 = arith.constant 0.000000e+00 : f32
    %156 = vector.broadcast %cst_98 : f32 to vector<2x1xf32>
    %157 = arith.subf %156, %155 : vector<2x1xf32>
    %158 = math.exp %157 : vector<2x1xf32>
    %cst_99 = arith.constant 1.000000e+00 : f32
    %159 = vector.broadcast %cst_99 : f32 to vector<2x1xf32>
    %160 = arith.addf %159, %158 : vector<2x1xf32>
    %cst_100 = arith.constant 1.000000e+00 : f32
    %161 = vector.broadcast %cst_100 : f32 to vector<2x1xf32>
    %162 = arith.divf %161, %160 : vector<2x1xf32>
    %c0_101 = arith.constant 0 : index
    %c0_102 = arith.constant 0 : index
    %163 = vector.load %arg6[%c0_101, %c0_102] : memref<2x1xf32, #tpu.memory_space<vmem>>, vector<2x1xf32>
    tpu.vector_store %arg6[%c0_101, %c0_102], %162 {strides = array<i32>} : memref<2x1xf32, #tpu.memory_space<vmem>>, vector<2x1xf32>,
    return
  }
  func.func @transform_0(%arg0: i32) -> (i32, i32, i32) {
    %c0_i32 = arith.constant 0 : i32
    %c0_i32_0 = arith.constant 0 : i32
    %c0_i32_1 = arith.constant 0 : i32
    return %c0_i32, %arg0, %c0_i32_0 : i32, i32, i32
  }
  func.func @transform_1(%arg0: i32) -> (i32, i32, i32) {
    %c0_i32 = arith.constant 0 : i32
    %c0_i32_0 = arith.constant 0 : i32
    %c0_i32_1 = arith.constant 0 : i32
    %c0_i32_2 = arith.constant 0 : i32
    return %c0_i32, %c0_i32_0, %c0_i32_1 : i32, i32, i32
  }
  func.func @transform_2(%arg0: i32) -> (i32, i32) {
    %c0_i32 = arith.constant 0 : i32
    %c0_i32_0 = arith.constant 0 : i32
    %c0_i32_1 = arith.constant 0 : i32
    return %c0_i32, %c0_i32_0 : i32, i32
  }
  func.func @transform_3(%arg0: i32) -> (i32, i32) {
    %c0_i32 = arith.constant 0 : i32
    %c0_i32_0 = arith.constant 0 : i32
    %c0_i32_1 = arith.constant 0 : i32
    return %c0_i32, %c0_i32_0 : i32, i32
  }
  func.func @transform_4(%arg0: i32) -> (i32, i32) {
    %c0_i32 = arith.constant 0 : i32
    %c0_i32_0 = arith.constant 0 : i32
    %c0_i32_1 = arith.constant 0 : i32
    return %c0_i32, %c0_i32_0 : i32, i32
  }
  func.func @transform_5(%arg0: i32) -> (i32, i32) {
    %c0_i32 = arith.constant 0 : i32
    %c0_i32_0 = arith.constant 0 : i32
    return %arg0, %c0_i32 : i32, i32
  }
}

</mosaic_0001>

<llo_original>
// kernel: discriminator_forward.5
$region0: #{discriminator_forward.5}
  #allocation0 [shape = 'u32[]', space=smem, size = 0x4, offset = 0x4, fixed_abs, tag = 'smem constant byte address 0x4 - core index']
  #allocation1 [shape = 'u32[72,128]{1,0:T(1,128)}', space=vmem, size = 0x9000, scoped, tag = 'internal scratch']
  %s0 = inlined_call_operand.vmem [shape: bf16[32,2,32], index: 0, kind: input, shape index: {}]
  %s1 = inlined_call_operand.hbm [shape: bf16[3,32,256], index: 1, kind: input, shape index: {}]
  %s2 = inlined_call_operand.hbm [shape: f32[1,256], index: 2, kind: input, shape index: {}]
  %s3 = inlined_call_operand.vmem [shape: bf16[32,2,256], index: 3, kind: output, shape index: {}]
  %s4 = sld [smem:[#allocation0]]
  $region37: #{discriminator_forward.5} parent=0
    _
  %s6 = ssub.s32 1, %s4
  %s7 = scalar_select 0, %s6, %s4
  $region1: #{discriminator_forward.5} parent=0
    #allocation2 [shape = 'u8[49152]{0}', space=vmem, size = 0xc000, scoped, tag = 'input window, operand 1, single buffered']
    #allocation3 [shape = 's32[1]{0}', space=sflag, size = 0x4, scoped, tag = 'scoped memory for discriminator_forward.5']
    #allocation4 [shape = 'u8[1024]{0}', space=vmem, size = 0x400, scoped, tag = 'input window, operand 2, single buffered']
    #allocation5 [shape = 's32[1]{0}', space=sflag, size = 0x4, scoped, tag = 'scoped memory for discriminator_forward.5']
    %8 = vsyncpa [#allocation3], 0
    %9 = vsyncpa [#allocation5], 0
    // Predicated region
    $region2: #{discriminator_forward.5} parent=1 // pred_check
      _
    $region3: #{discriminator_forward.5} parent=1 // pred_check_branch
      %11 = sbr.rel (0) target = $region5
    $region4: #{discriminator_forward.5} parent=1 // pred_region
      _
    $region5: #{discriminator_forward.5} parent=1 // pred_fallthru
      _
    // Predicated region
    $region6: #{discriminator_forward.5} parent=1 // pred_check
      _
    $region7: #{discriminator_forward.5} parent=1 // pred_check_branch
      %13 = sbr.rel (0) target = $region9
    $region8: #{discriminator_forward.5} parent=1 // pred_region
      %15 = vsyncadd [#allocation3], 0
      %s16 = sshll.u32 %s1, 4
      %s17 = int_to_ptr.hbm [resolvable:$true] %s16
      %s18 = sshll.u32 [#allocation2], 4
      %s19 = int_to_ptr.vmem [resolvable:$true] %s18
      %24 = dma.hbm_to_vmem [thread:$0]  %s17, 1536, %s19, [#allocation3], 128, 128, 8
    $region9: #{discriminator_forward.5} parent=1 // pred_fallthru
      _
    // Predicated region
    $region10: #{discriminator_forward.5} parent=1 // pred_check
      _
    $region11: #{discriminator_forward.5} parent=1 // pred_check_branch
      %26 = sbr.rel (0) target = $region13
    $region12: #{discriminator_forward.5} parent=1 // pred_region
      %28 = vsyncadd [#allocation5], 0
      %s30 = sshll.u32 %s2, 4
      %s31 = int_to_ptr.hbm [resolvable:$true] %s30
      %s32 = sshll.u32 [#allocation4], 4
      %s33 = int_to_ptr.vmem [resolvable:$true] %s32
      %35 = dma.hbm_to_vmem [thread:$0]  %s31, 32, %s33, [#allocation5]
    $region13: #{discriminator_forward.5} parent=1 // pred_fallthru
      _
    // Predicated region
    $region14: #{discriminator_forward.5} parent=1 // pred_check
      _
    $region15: #{discriminator_forward.5} parent=1 // pred_check_branch
      %37 = sbr.rel (0) target = $region17
    $region16: #{discriminator_forward.5} parent=1 // pred_region
      %39 = dma.done [#allocation3], 1536
    $region17: #{discriminator_forward.5} parent=1 // pred_fallthru
      _
    // Predicated region
    $region18: #{discriminator_forward.5} parent=1 // pred_check
      _
    $region19: #{discriminator_forward.5} parent=1 // pred_check_branch
      %41 = sbr.rel (0) target = $region21
    $region20: #{discriminator_forward.5} parent=1 // pred_region
      %43 = dma.done [#allocation5], 32
    $region21: #{discriminator_forward.5} parent=1 // pred_fallthru
      _
    %45 = vst [vmem:[%s3] sm:$0x3] 0
    %s46 = scalar_lea.vmem %s3, 2
    %47 = vst [vmem:[%s46] sm:$0x3] 0
    %s48 = scalar_lea.vmem %s3, 60
    %49 = vst [vmem:[%s48] sm:$0x3] 0
    %s50 = scalar_lea.vmem %s3, 62
    %51 = vst [vmem:[%s50] sm:$0x3] 0
    loop: start=2, step=1, limit=30
    $region22: #{discriminator_forward.5} parent=1 // loop_pre_header
      _
    $region23: #{discriminator_forward.5} parent=1 // loop_header
      %s53 = sphi 2, %s57
      %p54 = scmp.ge.s32.totalorder %s53, 30
    $region24: #{discriminator_forward.5} parent=1 // loop_header_branch
      %56 = sbr.rel (%p54) target = $region28
    $region25: #{discriminator_forward.5} parent=1 // loop_body
      %s58 = sadd.s32 %s53, 4294967295
      %s59 = scalar_lea.vmem %s0, %s58
      %v60 = vld [vmem:[%s59] sm:$0x1]
      %v61 = vld [vmem:[#allocation2] sm:$0xff]
      %v62 = vld [vmem:[#allocation2 + $0x8] sm:$0xff]
      %v63 = vld [vmem:[#allocation2 + $0x10] sm:$0xff]
      %v64 = vld [vmem:[#allocation2 + $0x18] sm:$0xff]
      %s65 = scalar_lea.vmem %s0, %s53
      %v66 = vld [vmem:[%s65] sm:$0x1]
      %s67 = scalar_lea.vmem [#allocation2], 32
      %v68 = vld [vmem:[%s67] sm:$0xff]
      %v69 = vld [vmem:[%s67 + $0x8] sm:$0xff]
      %v70 = vld [vmem:[%s67 + $0x10] sm:$0xff]
      %v71 = vld [vmem:[%s67 + $0x18] sm:$0xff]
      %v76 = vunpack.c.l.b16 %v68
      %v77 = vunpack.c.h.b16 %v68
      %v78 = vunpack.c.l.b16 %v69
      %v79 = vunpack.c.h.b16 %v69
      %v80 = vunpack.c.l.b16 %v70
      %v81 = vunpack.c.h.b16 %v70
      %v82 = vunpack.c.l.b16 %v71
      %v83 = vunpack.c.h.b16 %v71
      %v84 = vpack.c.b16 %v78, %v76
      %v85 = vpack.c.b16 %v79, %v77
      %v86 = vpack.c.b16 %v82, %v80
      %v87 = vpack.c.b16 %v83, %v81
      %vm92 = vcmask 261120
      %v94 = vsel %vm92, %v66, 0
      %96 = vmatpush.bf16.msra.mxu0 0
      %97 = vmatpush.bf16.msra.mxu0 0
      %98 = vmatpush.bf16.msra.mxu0 0
      %99 = vmatpush.bf16.msra.mxu0 0
      %100 = vmatpush.bf16.msra.mxu0 0
      %101 = vmatpush.bf16.msra.mxu0 0
      %102 = vmatpush.bf16.msra.mxu0 %v86
      %103 = vmatpush.bf16.msra.mxu0 %v84
      %104 = vmatmul.bf16.gmra.mxu0 %v94
      %v105 = vpop.f32.mrf.mxu0
      %v106 = vadd.f32 0.0, %v105
      %v107 = vpop.f32.mrf.mxu0
      %108 = vdwg.mxu0
      %109 = vmatpush.bf16.msra.mxu0 0
      %110 = vmatpush.bf16.msra.mxu0 0
      %111 = vmatpush.bf16.msra.mxu0 0
      %112 = vmatpush.bf16.msra.mxu0 0
      %113 = vmatpush.bf16.msra.mxu0 0
      %114 = vmatpush.bf16.msra.mxu0 0
      %115 = vmatpush.bf16.msra.mxu0 %v87
      %116 = vmatpush.bf16.msra.mxu0 %v85
      %117 = vmatmul.bf16.gmra.mxu0 %v94
      %v118 = vpop.f32.mrf.mxu0
      %v119 = vadd.f32 0.0, %v118
      %v120 = vpop.f32.mrf.mxu0
      %121 = vdwg.mxu0
      %v126 = vunpack.c.l.b16 %v61
      %v127 = vunpack.c.h.b16 %v61
      %v128 = vunpack.c.l.b16 %v62
      %v129 = vunpack.c.h.b16 %v62
      %v130 = vunpack.c.l.b16 %v63
      %v131 = vunpack.c.h.b16 %v63
      %v132 = vunpack.c.l.b16 %v64
      %v133 = vunpack.c.h.b16 %v64
      %v134 = vpack.c.b16 %v128, %v126
      %v135 = vpack.c.b16 %v129, %v127
      %v136 = vpack.c.b16 %v132, %v130
      %v137 = vpack.c.b16 %v133, %v131
      %v143 = vsel %vm92, %v60, 0
      %145 = vmatpush.bf16.msra.mxu0 0
      %146 = vmatpush.bf16.msra.mxu0 0
      %147 = vmatpush.bf16.msra.mxu0 0
      %148 = vmatpush.bf16.msra.mxu0 0
      %149 = vmatpush.bf16.msra.mxu0 0
      %150 = vmatpush.bf16.msra.mxu0 0
      %151 = vmatpush.bf16.msra.mxu0 %v136
      %152 = vmatpush.bf16.msra.mxu0 %v134
      %153 = vmatmul.bf16.gmra.mxu0 %v143
      %v154 = vpop.f32.mrf.mxu0
      %v155 = vadd.f32 %v106, %v154
      %v156 = vpop.f32.mrf.mxu0
      %157 = vdwg.mxu0
      %158 = vmatpush.bf16.msra.mxu0 0
      %159 = vmatpush.bf16.msra.mxu0 0
      %160 = vmatpush.bf16.msra.mxu0 0
      %161 = vmatpush.bf16.msra.mxu0 0
      %162 = vmatpush.bf16.msra.mxu0 0
      %163 = vmatpush.bf16.msra.mxu0 0
      %164 = vmatpush.bf16.msra.mxu0 %v137
      %165 = vmatpush.bf16.msra.mxu0 %v135
      %166 = vmatmul.bf16.gmra.mxu0 %v143
      %v167 = vpop.f32.mrf.mxu0
      %v168 = vadd.f32 %v119, %v167
      %v169 = vpop.f32.mrf.mxu0
      %170 = vdwg.mxu0
      %s171 = sadd.s32 %s53, 1
      %s172 = scalar_lea.vmem %s0, %s171
      %v173 = vld [vmem:[%s172] sm:$0x1]
      %s174 = scalar_lea.vmem [#allocation2], 64
      %v175 = vld [vmem:[%s174] sm:$0xff]
      %v176 = vld [vmem:[%s174 + $0x8] sm:$0xff]
      %v177 = vld [vmem:[%s174 + $0x10] sm:$0xff]
      %v178 = vld [vmem:[%s174 + $0x18] sm:$0xff]
      %v183 = vunpack.c.l.b16 %v175
      %v184 = vunpack.c.h.b16 %v175
      %v185 = vunpack.c.l.b16 %v176
      %v186 = vunpack.c.h.b16 %v176
      %v187 = vunpack.c.l.b16 %v177
      %v188 = vunpack.c.h.b16 %v177
      %v189 = vunpack.c.l.b16 %v178
      %v190 = vunpack.c.h.b16 %v178
      %v191 = vpack.c.b16 %v185, %v183
      %v192 = vpack.c.b16 %v186, %v184
      %v193 = vpack.c.b16 %v189, %v187
      %v194 = vpack.c.b16 %v190, %v188
      %v200 = vsel %vm92, %v173, 0
      %202 = vmatpush.bf16.msra.mxu0 0
      %203 = vmatpush.bf16.msra.mxu0 0
      %204 = vmatpush.bf16.msra.mxu0 0
      %205 = vmatpush.bf16.msra.mxu0 0
      %206 = vmatpush.bf16.msra.mxu0 0
      %207 = vmatpush.bf16.msra.mxu0 0
      %208 = vmatpush.bf16.msra.mxu0 %v193
      %209 = vmatpush.bf16.msra.mxu0 %v191
      %210 = vmatmul.bf16.gmra.mxu0 %v200
      %v211 = vpop.f32.mrf.mxu0
      %v212 = vadd.f32 0.0, %v211
      %v213 = vpop.f32.mrf.mxu0
      %214 = vdwg.mxu0
      %215 = vmatpush.bf16.msra.mxu0 0
      %216 = vmatpush.bf16.msra.mxu0 0
      %217 = vmatpush.bf16.msra.mxu0 0
      %218 = vmatpush.bf16.msra.mxu0 0
      %219 = vmatpush.bf16.msra.mxu0 0
      %220 = vmatpush.bf16.msra.mxu0 0
      %221 = vmatpush.bf16.msra.mxu0 %v194
      %222 = vmatpush.bf16.msra.mxu0 %v192
      %223 = vmatmul.bf16.gmra.mxu0 %v200
      %v224 = vpop.f32.mrf.mxu0
      %v225 = vadd.f32 0.0, %v224
      %v226 = vpop.f32.mrf.mxu0
      %227 = vdwg.mxu0
      %v228 = vadd.f32 %v155, %v212
      %v229 = vadd.f32 %v168, %v225
      %v230 = vld [vmem:[#allocation4] sm:$0x3]
      %v232 = vperm.slane %v230, 0
      %v233 = vperm.slane %v230, 1
      %v236 = vadd.f32 %v228, %v232
      %v237 = vadd.f32 %v229, %v233
      %vm238 = vcmp.ge.f32.partialorder %v236, 0.0
      %vm239 = vcmp.ge.f32.partialorder %v237, 0.0
      %v240 = vmul.f32 %v236, 0.01
      %v241 = vmul.f32 %v237, 0.01
      %v242 = vsel %vm238, %v236, %v240
      %v243 = vsel %vm239, %v237, %v241
      %v244 = vpack.c.bf16 %v243, %v242
      %v246 = vrot.slane %v244, 3
      %vm247 = vcmask 1040384
      %v250 = vsel %vm247, %v244, %v246
      %s252 = smul.u32 %s53, 2
      %s253 = scalar_lea.vmem %s3, %s252
      %254 = vst [vmem:[%s253] sm:$0x3] %v250
    $region26: #{discriminator_forward.5} parent=1 // loop_footer
      %s57 = sadd.s32 1, %s53
    $region27: #{discriminator_forward.5} parent=1 // loop_footer_branch
      %52 = sbr.rel target = $region23
    $region28: #{discriminator_forward.5} parent=1 // loop_exit
      _
    // Predicated region
    $region29: #{discriminator_forward.5} parent=1 // pred_check
      _
    $region30: #{discriminator_forward.5} parent=1 // pred_check_branch
      %256 = sbr.rel (0) target = $region32
    $region31: #{discriminator_forward.5} parent=1 // pred_region
      _
    $region32: #{discriminator_forward.5} parent=1 // pred_fallthru
      _
    // Predicated region
    $region33: #{discriminator_forward.5} parent=1 // pred_check
      _
    $region34: #{discriminator_forward.5} parent=1 // pred_check_branch
      %258 = sbr.rel (0) target = $region36
    $region35: #{discriminator_forward.5} parent=1 // pred_region
      _
    $region36: #{discriminator_forward.5} parent=1 // pred_fallthru
      _
    %259 = vsyncpa [#allocation3], 1
    %260 = vsyncpa [#allocation5], 1

// kernel: discriminator_forward.6
$region0: #{discriminator_forward.6}
  #allocation0 [shape = 'u32[]', space=smem, size = 0x4, offset = 0x4, fixed_abs, tag = 'smem constant byte address 0x4 - core index']
  #allocation1 [shape = 'u32[72,128]{1,0:T(1,128)}', space=vmem, size = 0x9000, scoped, tag = 'internal scratch']
  %s0 = inlined_call_operand.vmem [shape: bf16[32,2,256], index: 0, kind: input, shape index: {}]
  %s1 = inlined_call_operand.hbm [shape: bf16[3,256,256], index: 1, kind: input, shape index: {}]
  %s2 = inlined_call_operand.vmem [shape: bf16[16,2,256], index: 2, kind: output, shape index: {0}]
  %s3 = inlined_call_operand.vmem [shape: f32[1,1,256], index: 3, kind: output, shape index: {1}]
  %s4 = inlined_call_operand.vmem [shape: f32[1,1,256], index: 4, kind: output, shape index: {2}]
  %5 = xla_tuple %s2, %s3, %s4
  %s6 = sld [smem:[#allocation0]]
  $region45: #{discriminator_forward.6} parent=0
    _
  %s8 = ssub.s32 1, %s6
  %s9 = scalar_select 0, %s8, %s6
  $region1: #{discriminator_forward.6} parent=0
    #allocation2 [shape = 'u8[393216]{0}', space=vmem, size = 0x60000, scoped, tag = 'input window, operand 1, single buffered']
    #allocation3 [shape = 's32[1]{0}', space=sflag, size = 0x4, scoped, tag = 'scoped memory for discriminator_forward.6']
    %10 = vsyncpa [#allocation3], 0
    // Predicated region
    $region2: #{discriminator_forward.6} parent=1 // pred_check
      _
    $region3: #{discriminator_forward.6} parent=1 // pred_check_branch
      %12 = sbr.rel (0) target = $region5
    $region4: #{discriminator_forward.6} parent=1 // pred_region
      _
    $region5: #{discriminator_forward.6} parent=1 // pred_fallthru
      _
    // Predicated region
    $region6: #{discriminator_forward.6} parent=1 // pred_check
      _
    $region7: #{discriminator_forward.6} parent=1 // pred_check_branch
      %14 = sbr.rel (0) target = $region9
    $region8: #{discriminator_forward.6} parent=1 // pred_region
      %16 = vsyncadd [#allocation3], 0
      %s17 = sshll.u32 %s1, 4
      %s18 = int_to_ptr.hbm [resolvable:$true] %s17
      %s19 = sshll.u32 [#allocation2], 4
      %s20 = int_to_ptr.vmem [resolvable:$true] %s19
      %25 = dma.hbm_to_vmem [thread:$0]  %s18, 12288, %s20, [#allocation3], 128, 128, 8
    $region9: #{discriminator_forward.6} parent=1 // pred_fallthru
      _
    // Predicated region
    $region10: #{discriminator_forward.6} parent=1 // pred_check
      _
    $region11: #{discriminator_forward.6} parent=1 // pred_check_branch
      %27 = sbr.rel (0) target = $region13
    $region12: #{discriminator_forward.6} parent=1 // pred_region
      %29 = dma.done [#allocation3], 12288
    $region13: #{discriminator_forward.6} parent=1 // pred_fallthru
      _
    %31 = vst [vmem:[%s2] sm:$0x3] 0
    %s32 = scalar_lea.vmem %s2, 30
    %33 = vst [vmem:[%s32] sm:$0x3] 0
    loop: start=1, step=1, limit=15
    $region14: #{discriminator_forward.6} parent=1 // loop_pre_header
      _
    $region15: #{discriminator_forward.6} parent=1 // loop_header
      %s35 = sphi 1, %s39
      %p36 = scmp.ge.s32.totalorder %s35, 15
      %v40 = vphi 0.0, %v835
      %v41 = vphi 0.0, %v836
      %v42 = vphi 0.0, %v853
      %v43 = vphi 0.0, %v854
    $region16: #{discriminator_forward.6} parent=1 // loop_header_branch
      %38 = sbr.rel (%p36) target = $region20
    $region17: #{discriminator_forward.6} parent=1 // loop_body
      %s44 = smul.u32 %s35, 2
      %s45 = sadd.s32 %s44, 4294967295
      %s46 = smul.u32 %s45, 2
      %s47 = scalar_lea.vmem %s0, %s46
      %v48 = vld [vmem:[%s47] sm:$0x3]
      %v49 = vld [vmem:[#allocation2] sm:$0xff]
      %v50 = vld [vmem:[#allocation2 + $0x8] sm:$0xff]
      %v51 = vld [vmem:[#allocation2 + $0x10] sm:$0xff]
      %v52 = vld [vmem:[#allocation2 + $0x18] sm:$0xff]
      %v53 = vld [vmem:[#allocation2 + $0x20] sm:$0xff]
      %v54 = vld [vmem:[#allocation2 + $0x28] sm:$0xff]
      %v55 = vld [vmem:[#allocation2 + $0x30] sm:$0xff]
      %v56 = vld [vmem:[#allocation2 + $0x38] sm:$0xff]
      %v57 = vld [vmem:[#allocation2 + $0x40] sm:$0xff]
      %v58 = vld [vmem:[#allocation2 + $0x48] sm:$0xff]
      %v59 = vld [vmem:[#allocation2 + $0x50] sm:$0xff]
      %v60 = vld [vmem:[#allocation2 + $0x58] sm:$0xff]
      %v61 = vld [vmem:[#allocation2 + $0x60] sm:$0xff]
      %v62 = vld [vmem:[#allocation2 + $0x68] sm:$0xff]
      %v63 = vld [vmem:[#allocation2 + $0x70] sm:$0xff]
      %v64 = vld [vmem:[#allocation2 + $0x78] sm:$0xff]
      %v65 = vld [vmem:[#allocation2 + $0x80] sm:$0xff]
      %v66 = vld [vmem:[#allocation2 + $0x88] sm:$0xff]
      %v67 = vld [vmem:[#allocation2 + $0x90] sm:$0xff]
      %v68 = vld [vmem:[#allocation2 + $0x98] sm:$0xff]
      %v69 = vld [vmem:[#allocation2 + $0xa0] sm:$0xff]
      %v70 = vld [vmem:[#allocation2 + $0xa8] sm:$0xff]
      %v71 = vld [vmem:[#allocation2 + $0xb0] sm:$0xff]
      %v72 = vld [vmem:[#allocation2 + $0xb8] sm:$0xff]
      %v73 = vld [vmem:[#allocation2 + $0xc0] sm:$0xff]
      %v74 = vld [vmem:[#allocation2 + $0xc8] sm:$0xff]
      %v75 = vld [vmem:[#allocation2 + $0xd0] sm:$0xff]
      %v76 = vld [vmem:[#allocation2 + $0xd8] sm:$0xff]
      %v77 = vld [vmem:[#allocation2 + $0xe0] sm:$0xff]
      %v78 = vld [vmem:[#allocation2 + $0xe8] sm:$0xff]
      %v79 = vld [vmem:[#allocation2 + $0xf0] sm:$0xff]
      %v80 = vld [vmem:[#allocation2 + $0xf8] sm:$0xff]
      %s81 = smul.u32 %s44, 2
      %s82 = scalar_lea.vmem %s0, %s81
      %v83 = vld [vmem:[%s82] sm:$0x3]
      %s84 = scalar_lea.vmem [#allocation2], 256
      %v85 = vld [vmem:[%s84] sm:$0xff]
      %v86 = vld [vmem:[%s84 + $0x8] sm:$0xff]
      %v87 = vld [vmem:[%s84 + $0x10] sm:$0xff]
      %v88 = vld [vmem:[%s84 + $0x18] sm:$0xff]
      %v89 = vld [vmem:[%s84 + $0x20] sm:$0xff]
      %v90 = vld [vmem:[%s84 + $0x28] sm:$0xff]
      %v91 = vld [vmem:[%s84 + $0x30] sm:$0xff]
      %v92 = vld [vmem:[%s84 + $0x38] sm:$0xff]
      %v93 = vld [vmem:[%s84 + $0x40] sm:$0xff]
      %v94 = vld [vmem:[%s84 + $0x48] sm:$0xff]
      %v95 = vld [vmem:[%s84 + $0x50] sm:$0xff]
      %v96 = vld [vmem:[%s84 + $0x58] sm:$0xff]
      %v97 = vld [vmem:[%s84 + $0x60] sm:$0xff]
      %v98 = vld [vmem:[%s84 + $0x68] sm:$0xff]
      %v99 = vld [vmem:[%s84 + $0x70] sm:$0xff]
      %v100 = vld [vmem:[%s84 + $0x78] sm:$0xff]
      %v101 = vld [vmem:[%s84 + $0x80] sm:$0xff]
      %v102 = vld [vmem:[%s84 + $0x88] sm:$0xff]
      %v103 = vld [vmem:[%s84 + $0x90] sm:$0xff]
      %v104 = vld [vmem:[%s84 + $0x98] sm:$0xff]
      %v105 = vld [vmem:[%s84 + $0xa0] sm:$0xff]
      %v106 = vld [vmem:[%s84 + $0xa8] sm:$0xff]
      %v107 = vld [vmem:[%s84 + $0xb0] sm:$0xff]
      %v108 = vld [vmem:[%s84 + $0xb8] sm:$0xff]
      %v109 = vld [vmem:[%s84 + $0xc0] sm:$0xff]
      %v110 = vld [vmem:[%s84 + $0xc8] sm:$0xff]
      %v111 = vld [vmem:[%s84 + $0xd0] sm:$0xff]
      %v112 = vld [vmem:[%s84 + $0xd8] sm:$0xff]
      %v113 = vld [vmem:[%s84 + $0xe0] sm:$0xff]
      %v114 = vld [vmem:[%s84 + $0xe8] sm:$0xff]
      %v115 = vld [vmem:[%s84 + $0xf0] sm:$0xff]
      %v116 = vld [vmem:[%s84 + $0xf8] sm:$0xff]
      %118 = vst [vmem:[#allocation1] ss:$9 sm:$0xff] %v83
      %v119 = vld [vmem:[#allocation1] sm:$0xff]
      %v120 = vld [vmem:[#allocation1 + $0x9] sm:$0xff]
      %v155 = vunpack.c.l.b16 %v85
      %v156 = vunpack.c.h.b16 %v85
      %v157 = vunpack.c.l.b16 %v86
      %v158 = vunpack.c.h.b16 %v86
      %v159 = vunpack.c.l.b16 %v87
      %v160 = vunpack.c.h.b16 %v87
      %v161 = vunpack.c.l.b16 %v88
      %v162 = vunpack.c.h.b16 %v88
      %v163 = vunpack.c.l.b16 %v89
      %v164 = vunpack.c.h.b16 %v89
      %v165 = vunpack.c.l.b16 %v90
      %v166 = vunpack.c.h.b16 %v90
      %v167 = vunpack.c.l.b16 %v91
      %v168 = vunpack.c.h.b16 %v91
      %v169 = vunpack.c.l.b16 %v92
      %v170 = vunpack.c.h.b16 %v92
      %v171 = vunpack.c.l.b16 %v93
      %v172 = vunpack.c.h.b16 %v93
      %v173 = vunpack.c.l.b16 %v94
      %v174 = vunpack.c.h.b16 %v94
      %v175 = vunpack.c.l.b16 %v95
      %v176 = vunpack.c.h.b16 %v95
      %v177 = vunpack.c.l.b16 %v96
      %v178 = vunpack.c.h.b16 %v96
      %v179 = vunpack.c.l.b16 %v97
      %v180 = vunpack.c.h.b16 %v97
      %v181 = vunpack.c.l.b16 %v98
      %v182 = vunpack.c.h.b16 %v98
      %v183 = vunpack.c.l.b16 %v99
      %v184 = vunpack.c.h.b16 %v99
      %v185 = vunpack.c.l.b16 %v100
      %v186 = vunpack.c.h.b16 %v100
      %v187 = vunpack.c.l.b16 %v101
      %v188 = vunpack.c.h.b16 %v101
      %v189 = vunpack.c.l.b16 %v102
      %v190 = vunpack.c.h.b16 %v102
      %v191 = vunpack.c.l.b16 %v103
      %v192 = vunpack.c.h.b16 %v103
      %v193 = vunpack.c.l.b16 %v104
      %v194 = vunpack.c.h.b16 %v104
      %v195 = vunpack.c.l.b16 %v105
      %v196 = vunpack.c.h.b16 %v105
      %v197 = vunpack.c.l.b16 %v106
      %v198 = vunpack.c.h.b16 %v106
      %v199 = vunpack.c.l.b16 %v107
      %v200 = vunpack.c.h.b16 %v107
      %v201 = vunpack.c.l.b16 %v108
      %v202 = vunpack.c.h.b16 %v108
      %v203 = vunpack.c.l.b16 %v109
      %v204 = vunpack.c.h.b16 %v109
      %v205 = vunpack.c.l.b16 %v110
      %v206 = vunpack.c.h.b16 %v110
      %v207 = vunpack.c.l.b16 %v111
      %v208 = vunpack.c.h.b16 %v111
      %v209 = vunpack.c.l.b16 %v112
      %v210 = vunpack.c.h.b16 %v112
      %v211 = vunpack.c.l.b16 %v113
      %v212 = vunpack.c.h.b16 %v113
      %v213 = vunpack.c.l.b16 %v114
      %v214 = vunpack.c.h.b16 %v114
      %v215 = vunpack.c.l.b16 %v115
      %v216 = vunpack.c.h.b16 %v115
      %v217 = vunpack.c.l.b16 %v116
      %v218 = vunpack.c.h.b16 %v116
      %v219 = vpack.c.b16 %v157, %v155
      %v220 = vpack.c.b16 %v158, %v156
      %v221 = vpack.c.b16 %v161, %v159
      %v222 = vpack.c.b16 %v162, %v160
      %v223 = vpack.c.b16 %v165, %v163
      %v224 = vpack.c.b16 %v166, %v164
      %v225 = vpack.c.b16 %v169, %v167
      %v226 = vpack.c.b16 %v170, %v168
      %v227 = vpack.c.b16 %v173, %v171
      %v228 = vpack.c.b16 %v174, %v172
      %v229 = vpack.c.b16 %v177, %v175
      %v230 = vpack.c.b16 %v178, %v176
      %v231 = vpack.c.b16 %v181, %v179
      %v232 = vpack.c.b16 %v182, %v180
      %v233 = vpack.c.b16 %v185, %v183
      %v234 = vpack.c.b16 %v186, %v184
      %v235 = vpack.c.b16 %v189, %v187
      %v236 = vpack.c.b16 %v190, %v188
      %v237 = vpack.c.b16 %v193, %v191
      %v238 = vpack.c.b16 %v194, %v192
      %v239 = vpack.c.b16 %v197, %v195
      %v240 = vpack.c.b16 %v198, %v196
      %v241 = vpack.c.b16 %v201, %v199
      %v242 = vpack.c.b16 %v202, %v200
      %v243 = vpack.c.b16 %v205, %v203
      %v244 = vpack.c.b16 %v206, %v204
      %v245 = vpack.c.b16 %v209, %v207
      %v246 = vpack.c.b16 %v210, %v208
      %v247 = vpack.c.b16 %v213, %v211
      %v248 = vpack.c.b16 %v214, %v212
      %v249 = vpack.c.b16 %v217, %v215
      %v250 = vpack.c.b16 %v218, %v216
      %283 = vmatpush.bf16.msra.mxu0 %v233
      %284 = vmatpush.bf16.msra.mxu0 %v231
      %285 = vmatpush.bf16.msra.mxu0 %v229
      %286 = vmatpush.bf16.msra.mxu0 %v227
      %287 = vmatpush.bf16.msra.mxu0 %v225
      %288 = vmatpush.bf16.msra.mxu0 %v223
      %289 = vmatpush.bf16.msra.mxu0 %v221
      %290 = vmatpush.bf16.msra.mxu0 %v219
      %291 = vmatmul.bf16.gmra.mxu0 %v119
      %v292 = vpop.f32.mrf.mxu0
      %v293 = vadd.f32 0.0, %v292
      %v294 = vpop.f32.mrf.mxu0
      %295 = vdwg.mxu0
      %296 = vmatpush.bf16.msra.mxu0 %v249
      %297 = vmatpush.bf16.msra.mxu0 %v247
      %298 = vmatpush.bf16.msra.mxu0 %v245
      %299 = vmatpush.bf16.msra.mxu0 %v243
      %300 = vmatpush.bf16.msra.mxu0 %v241
      %301 = vmatpush.bf16.msra.mxu0 %v239
      %302 = vmatpush.bf16.msra.mxu0 %v237
      %303 = vmatpush.bf16.msra.mxu0 %v235
      %304 = vmatmul.bf16.gmra.mxu0 %v120
      %v305 = vpop.f32.mrf.mxu0
      %v306 = vadd.f32 %v293, %v305
      %v307 = vpop.f32.mrf.mxu0
      %308 = vdwg.mxu0
      %309 = vmatpush.bf16.msra.mxu0 %v234
      %310 = vmatpush.bf16.msra.mxu0 %v232
      %311 = vmatpush.bf16.msra.mxu0 %v230
      %312 = vmatpush.bf16.msra.mxu0 %v228
      %313 = vmatpush.bf16.msra.mxu0 %v226
      %314 = vmatpush.bf16.msra.mxu0 %v224
      %315 = vmatpush.bf16.msra.mxu0 %v222
      %316 = vmatpush.bf16.msra.mxu0 %v220
      %317 = vmatmul.bf16.gmra.mxu0 %v119
      %v318 = vpop.f32.mrf.mxu0
      %v319 = vadd.f32 0.0, %v318
      %v320 = vpop.f32.mrf.mxu0
      %321 = vdwg.mxu0
      %322 = vmatpush.bf16.msra.mxu0 %v250
      %323 = vmatpush.bf16.msra.mxu0 %v248
      %324 = vmatpush.bf16.msra.mxu0 %v246
      %325 = vmatpush.bf16.msra.mxu0 %v244
      %326 = vmatpush.bf16.msra.mxu0 %v242
      %327 = vmatpush.bf16.msra.mxu0 %v240
      %328 = vmatpush.bf16.msra.mxu0 %v238
      %329 = vmatpush.bf16.msra.mxu0 %v236
      %330 = vmatmul.bf16.gmra.mxu0 %v120
      %v331 = vpop.f32.mrf.mxu0
      %v332 = vadd.f32 %v319, %v331
      %v333 = vpop.f32.mrf.mxu0
      %334 = vdwg.mxu0
      %336 = vst [vmem:[#allocation1] ss:$9 sm:$0xff] %v48
      %v337 = vld [vmem:[#allocation1] sm:$0xff]
      %v338 = vld [vmem:[#allocation1 + $0x9] sm:$0xff]
      %v373 = vunpack.c.l.b16 %v49
      %v374 = vunpack.c.h.b16 %v49
      %v375 = vunpack.c.l.b16 %v50
      %v376 = vunpack.c.h.b16 %v50
      %v377 = vunpack.c.l.b16 %v51
      %v378 = vunpack.c.h.b16 %v51
      %v379 = vunpack.c.l.b16 %v52
      %v380 = vunpack.c.h.b16 %v52
      %v381 = vunpack.c.l.b16 %v53
      %v382 = vunpack.c.h.b16 %v53
      %v383 = vunpack.c.l.b16 %v54
      %v384 = vunpack.c.h.b16 %v54
      %v385 = vunpack.c.l.b16 %v55
      %v386 = vunpack.c.h.b16 %v55
      %v387 = vunpack.c.l.b16 %v56
      %v388 = vunpack.c.h.b16 %v56
      %v389 = vunpack.c.l.b16 %v57
      %v390 = vunpack.c.h.b16 %v57
      %v391 = vunpack.c.l.b16 %v58
      %v392 = vunpack.c.h.b16 %v58
      %v393 = vunpack.c.l.b16 %v59
      %v394 = vunpack.c.h.b16 %v59
      %v395 = vunpack.c.l.b16 %v60
      %v396 = vunpack.c.h.b16 %v60
      %v397 = vunpack.c.l.b16 %v61
      %v398 = vunpack.c.h.b16 %v61
      %v399 = vunpack.c.l.b16 %v62
      %v400 = vunpack.c.h.b16 %v62
      %v401 = vunpack.c.l.b16 %v63
      %v402 = vunpack.c.h.b16 %v63
      %v403 = vunpack.c.l.b16 %v64
      %v404 = vunpack.c.h.b16 %v64
      %v405 = vunpack.c.l.b16 %v65
      %v406 = vunpack.c.h.b16 %v65
      %v407 = vunpack.c.l.b16 %v66
      %v408 = vunpack.c.h.b16 %v66
      %v409 = vunpack.c.l.b16 %v67
      %v410 = vunpack.c.h.b16 %v67
      %v411 = vunpack.c.l.b16 %v68
      %v412 = vunpack.c.h.b16 %v68
      %v413 = vunpack.c.l.b16 %v69
      %v414 = vunpack.c.h.b16 %v69
      %v415 = vunpack.c.l.b16 %v70
      %v416 = vunpack.c.h.b16 %v70
      %v417 = vunpack.c.l.b16 %v71
      %v418 = vunpack.c.h.b16 %v71
      %v419 = vunpack.c.l.b16 %v72
      %v420 = vunpack.c.h.b16 %v72
      %v421 = vunpack.c.l.b16 %v73
      %v422 = vunpack.c.h.b16 %v73
      %v423 = vunpack.c.l.b16 %v74
      %v424 = vunpack.c.h.b16 %v74
      %v425 = vunpack.c.l.b16 %v75
      %v426 = vunpack.c.h.b16 %v75
      %v427 = vunpack.c.l.b16 %v76
      %v428 = vunpack.c.h.b16 %v76
      %v429 = vunpack.c.l.b16 %v77
      %v430 = vunpack.c.h.b16 %v77
      %v431 = vunpack.c.l.b16 %v78
      %v432 = vunpack.c.h.b16 %v78
      %v433 = vunpack.c.l.b16 %v79
      %v434 = vunpack.c.h.b16 %v79
      %v435 = vunpack.c.l.b16 %v80
      %v436 = vunpack.c.h.b16 %v80
      %v437 = vpack.c.b16 %v375, %v373
      %v438 = vpack.c.b16 %v376, %v374
      %v439 = vpack.c.b16 %v379, %v377
      %v440 = vpack.c.b16 %v380, %v378
      %v441 = vpack.c.b16 %v383, %v381
      %v442 = vpack.c.b16 %v384, %v382
      %v443 = vpack.c.b16 %v387, %v385
      %v444 = vpack.c.b16 %v388, %v386
      %v445 = vpack.c.b16 %v391, %v389
      %v446 = vpack.c.b16 %v392, %v390
      %v447 = vpack.c.b16 %v395, %v393
      %v448 = vpack.c.b16 %v396, %v394
      %v449 = vpack.c.b16 %v399, %v397
      %v450 = vpack.c.b16 %v400, %v398
      %v451 = vpack.c.b16 %v403, %v401
      %v452 = vpack.c.b16 %v404, %v402
      %v453 = vpack.c.b16 %v407, %v405
      %v454 = vpack.c.b16 %v408, %v406
      %v455 = vpack.c.b16 %v411, %v409
      %v456 = vpack.c.b16 %v412, %v410
      %v457 = vpack.c.b16 %v415, %v413
      %v458 = vpack.c.b16 %v416, %v414
      %v459 = vpack.c.b16 %v419, %v417
      %v460 = vpack.c.b16 %v420, %v418
      %v461 = vpack.c.b16 %v423, %v421
      %v462 = vpack.c.b16 %v424, %v422
      %v463 = vpack.c.b16 %v427, %v425
      %v464 = vpack.c.b16 %v428, %v426
      %v465 = vpack.c.b16 %v431, %v429
      %v466 = vpack.c.b16 %v432, %v430
      %v467 = vpack.c.b16 %v435, %v433
      %v468 = vpack.c.b16 %v436, %v434
      %501 = vmatpush.bf16.msra.mxu0 %v451
      %502 = vmatpush.bf16.msra.mxu0 %v449
      %503 = vmatpush.bf16.msra.mxu0 %v447
      %504 = vmatpush.bf16.msra.mxu0 %v445
      %505 = vmatpush.bf16.msra.mxu0 %v443
      %506 = vmatpush.bf16.msra.mxu0 %v441
      %507 = vmatpush.bf16.msra.mxu0 %v439
      %508 = vmatpush.bf16.msra.mxu0 %v437
      %509 = vmatmul.bf16.gmra.mxu0 %v337
      %v510 = vpop.f32.mrf.mxu0
      %v511 = vadd.f32 %v306, %v510
      %v512 = vpop.f32.mrf.mxu0
      %513 = vdwg.mxu0
      %514 = vmatpush.bf16.msra.mxu0 %v467
      %515 = vmatpush.bf16.msra.mxu0 %v465
      %516 = vmatpush.bf16.msra.mxu0 %v463
      %517 = vmatpush.bf16.msra.mxu0 %v461
      %518 = vmatpush.bf16.msra.mxu0 %v459
      %519 = vmatpush.bf16.msra.mxu0 %v457
      %520 = vmatpush.bf16.msra.mxu0 %v455
      %521 = vmatpush.bf16.msra.mxu0 %v453
      %522 = vmatmul.bf16.gmra.mxu0 %v338
      %v523 = vpop.f32.mrf.mxu0
      %v524 = vadd.f32 %v511, %v523
      %v525 = vpop.f32.mrf.mxu0
      %526 = vdwg.mxu0
      %527 = vmatpush.bf16.msra.mxu0 %v452
      %528 = vmatpush.bf16.msra.mxu0 %v450
      %529 = vmatpush.bf16.msra.mxu0 %v448
      %530 = vmatpush.bf16.msra.mxu0 %v446
      %531 = vmatpush.bf16.msra.mxu0 %v444
      %532 = vmatpush.bf16.msra.mxu0 %v442
      %533 = vmatpush.bf16.msra.mxu0 %v440
      %534 = vmatpush.bf16.msra.mxu0 %v438
      %535 = vmatmul.bf16.gmra.mxu0 %v337
      %v536 = vpop.f32.mrf.mxu0
      %v537 = vadd.f32 %v332, %v536
      %v538 = vpop.f32.mrf.mxu0
      %539 = vdwg.mxu0
      %540 = vmatpush.bf16.msra.mxu0 %v468
      %541 = vmatpush.bf16.msra.mxu0 %v466
      %542 = vmatpush.bf16.msra.mxu0 %v464
      %543 = vmatpush.bf16.msra.mxu0 %v462
      %544 = vmatpush.bf16.msra.mxu0 %v460
      %545 = vmatpush.bf16.msra.mxu0 %v458
      %546 = vmatpush.bf16.msra.mxu0 %v456
      %547 = vmatpush.bf16.msra.mxu0 %v454
      %548 = vmatmul.bf16.gmra.mxu0 %v338
      %v549 = vpop.f32.mrf.mxu0
      %v550 = vadd.f32 %v537, %v549
      %v551 = vpop.f32.mrf.mxu0
      %552 = vdwg.mxu0
      %s553 = sadd.s32 %s44, 1
      %s554 = smul.u32 %s553, 2
      %s555 = scalar_lea.vmem %s0, %s554
      %v556 = vld [vmem:[%s555] sm:$0x3]
      %s557 = scalar_lea.vmem [#allocation2], 512
      %v558 = vld [vmem:[%s557] sm:$0xff]
      %v559 = vld [vmem:[%s557 + $0x8] sm:$0xff]
      %v560 = vld [vmem:[%s557 + $0x10] sm:$0xff]
      %v561 = vld [vmem:[%s557 + $0x18] sm:$0xff]
      %v562 = vld [vmem:[%s557 + $0x20] sm:$0xff]
      %v563 = vld [vmem:[%s557 + $0x28] sm:$0xff]
      %v564 = vld [vmem:[%s557 + $0x30] sm:$0xff]
      %v565 = vld [vmem:[%s557 + $0x38] sm:$0xff]
      %v566 = vld [vmem:[%s557 + $0x40] sm:$0xff]
      %v567 = vld [vmem:[%s557 + $0x48] sm:$0xff]
      %v568 = vld [vmem:[%s557 + $0x50] sm:$0xff]
      %v569 = vld [vmem:[%s557 + $0x58] sm:$0xff]
      %v570 = vld [vmem:[%s557 + $0x60] sm:$0xff]
      %v571 = vld [vmem:[%s557 + $0x68] sm:$0xff]
      %v572 = vld [vmem:[%s557 + $0x70] sm:$0xff]
      %v573 = vld [vmem:[%s557 + $0x78] sm:$0xff]
      %v574 = vld [vmem:[%s557 + $0x80] sm:$0xff]
      %v575 = vld [vmem:[%s557 + $0x88] sm:$0xff]
      %v576 = vld [vmem:[%s557 + $0x90] sm:$0xff]
      %v577 = vld [vmem:[%s557 + $0x98] sm:$0xff]
      %v578 = vld [vmem:[%s557 + $0xa0] sm:$0xff]
      %v579 = vld [vmem:[%s557 + $0xa8] sm:$0xff]
      %v580 = vld [vmem:[%s557 + $0xb0] sm:$0xff]
      %v581 = vld [vmem:[%s557 + $0xb8] sm:$0xff]
      %v582 = vld [vmem:[%s557 + $0xc0] sm:$0xff]
      %v583 = vld [vmem:[%s557 + $0xc8] sm:$0xff]
      %v584 = vld [vmem:[%s557 + $0xd0] sm:$0xff]
      %v585 = vld [vmem:[%s557 + $0xd8] sm:$0xff]
      %v586 = vld [vmem:[%s557 + $0xe0] sm:$0xff]
      %v587 = vld [vmem:[%s557 + $0xe8] sm:$0xff]
      %v588 = vld [vmem:[%s557 + $0xf0] sm:$0xff]
      %v589 = vld [vmem:[%s557 + $0xf8] sm:$0xff]
      %591 = vst [vmem:[#allocation1] ss:$9 sm:$0xff] %v556
      %v592 = vld [vmem:[#allocation1] sm:$0xff]
      %v593 = vld [vmem:[#allocation1 + $0x9] sm:$0xff]
      %v628 = vunpack.c.l.b16 %v558
      %v629 = vunpack.c.h.b16 %v558
      %v630 = vunpack.c.l.b16 %v559
      %v631 = vunpack.c.h.b16 %v559
      %v632 = vunpack.c.l.b16 %v560
      %v633 = vunpack.c.h.b16 %v560
      %v634 = vunpack.c.l.b16 %v561
      %v635 = vunpack.c.h.b16 %v561
      %v636 = vunpack.c.l.b16 %v562
      %v637 = vunpack.c.h.b16 %v562
      %v638 = vunpack.c.l.b16 %v563
      %v639 = vunpack.c.h.b16 %v563
      %v640 = vunpack.c.l.b16 %v564
      %v641 = vunpack.c.h.b16 %v564
      %v642 = vunpack.c.l.b16 %v565
      %v643 = vunpack.c.h.b16 %v565
      %v644 = vunpack.c.l.b16 %v566
      %v645 = vunpack.c.h.b16 %v566
      %v646 = vunpack.c.l.b16 %v567
      %v647 = vunpack.c.h.b16 %v567
      %v648 = vunpack.c.l.b16 %v568
      %v649 = vunpack.c.h.b16 %v568
      %v650 = vunpack.c.l.b16 %v569
      %v651 = vunpack.c.h.b16 %v569
      %v652 = vunpack.c.l.b16 %v570
      %v653 = vunpack.c.h.b16 %v570
      %v654 = vunpack.c.l.b16 %v571
      %v655 = vunpack.c.h.b16 %v571
      %v656 = vunpack.c.l.b16 %v572
      %v657 = vunpack.c.h.b16 %v572
      %v658 = vunpack.c.l.b16 %v573
      %v659 = vunpack.c.h.b16 %v573
      %v660 = vunpack.c.l.b16 %v574
      %v661 = vunpack.c.h.b16 %v574
      %v662 = vunpack.c.l.b16 %v575
      %v663 = vunpack.c.h.b16 %v575
      %v664 = vunpack.c.l.b16 %v576
      %v665 = vunpack.c.h.b16 %v576
      %v666 = vunpack.c.l.b16 %v577
      %v667 = vunpack.c.h.b16 %v577
      %v668 = vunpack.c.l.b16 %v578
      %v669 = vunpack.c.h.b16 %v578
      %v670 = vunpack.c.l.b16 %v579
      %v671 = vunpack.c.h.b16 %v579
      %v672 = vunpack.c.l.b16 %v580
      %v673 = vunpack.c.h.b16 %v580
      %v674 = vunpack.c.l.b16 %v581
      %v675 = vunpack.c.h.b16 %v581
      %v676 = vunpack.c.l.b16 %v582
      %v677 = vunpack.c.h.b16 %v582
      %v678 = vunpack.c.l.b16 %v583
      %v679 = vunpack.c.h.b16 %v583
      %v680 = vunpack.c.l.b16 %v584
      %v681 = vunpack.c.h.b16 %v584
      %v682 = vunpack.c.l.b16 %v585
      %v683 = vunpack.c.h.b16 %v585
      %v684 = vunpack.c.l.b16 %v586
      %v685 = vunpack.c.h.b16 %v586
      %v686 = vunpack.c.l.b16 %v587
      %v687 = vunpack.c.h.b16 %v587
      %v688 = vunpack.c.l.b16 %v588
      %v689 = vunpack.c.h.b16 %v588
      %v690 = vunpack.c.l.b16 %v589
      %v691 = vunpack.c.h.b16 %v589
      %v692 = vpack.c.b16 %v630, %v628
      %v693 = vpack.c.b16 %v631, %v629
      %v694 = vpack.c.b16 %v634, %v632
      %v695 = vpack.c.b16 %v635, %v633
      %v696 = vpack.c.b16 %v638, %v636
      %v697 = vpack.c.b16 %v639, %v637
      %v698 = vpack.c.b16 %v642, %v640
      %v699 = vpack.c.b16 %v643, %v641
      %v700 = vpack.c.b16 %v646, %v644
      %v701 = vpack.c.b16 %v647, %v645
      %v702 = vpack.c.b16 %v650, %v648
      %v703 = vpack.c.b16 %v651, %v649
      %v704 = vpack.c.b16 %v654, %v652
      %v705 = vpack.c.b16 %v655, %v653
      %v706 = vpack.c.b16 %v658, %v656
      %v707 = vpack.c.b16 %v659, %v657
      %v708 = vpack.c.b16 %v662, %v660
      %v709 = vpack.c.b16 %v663, %v661
      %v710 = vpack.c.b16 %v666, %v664
      %v711 = vpack.c.b16 %v667, %v665
      %v712 = vpack.c.b16 %v670, %v668
      %v713 = vpack.c.b16 %v671, %v669
      %v714 = vpack.c.b16 %v674, %v672
      %v715 = vpack.c.b16 %v675, %v673
      %v716 = vpack.c.b16 %v678, %v676
      %v717 = vpack.c.b16 %v679, %v677
      %v718 = vpack.c.b16 %v682, %v680
      %v719 = vpack.c.b16 %v683, %v681
      %v720 = vpack.c.b16 %v686, %v684
      %v721 = vpack.c.b16 %v687, %v685
      %v722 = vpack.c.b16 %v690, %v688
      %v723 = vpack.c.b16 %v691, %v689
      %756 = vmatpush.bf16.msra.mxu0 %v706
      %757 = vmatpush.bf16.msra.mxu0 %v704
      %758 = vmatpush.bf16.msra.mxu0 %v702
      %759 = vmatpush.bf16.msra.mxu0 %v700
      %760 = vmatpush.bf16.msra.mxu0 %v698
      %761 = vmatpush.bf16.msra.mxu0 %v696
      %762 = vmatpush.bf16.msra.mxu0 %v694
      %763 = vmatpush.bf16.msra.mxu0 %v692
      %764 = vmatmul.bf16.gmra.mxu0 %v592
      %v765 = vpop.f32.mrf.mxu0
      %v766 = vadd.f32 0.0, %v765
      %v767 = vpop.f32.mrf.mxu0
      %768 = vdwg.mxu0
      %769 = vmatpush.bf16.msra.mxu0 %v722
      %770 = vmatpush.bf16.msra.mxu0 %v720
      %771 = vmatpush.bf16.msra.mxu0 %v718
      %772 = vmatpush.bf16.msra.mxu0 %v716
      %773 = vmatpush.bf16.msra.mxu0 %v714
      %774 = vmatpush.bf16.msra.mxu0 %v712
      %775 = vmatpush.bf16.msra.mxu0 %v710
      %776 = vmatpush.bf16.msra.mxu0 %v708
      %777 = vmatmul.bf16.gmra.mxu0 %v593
      %v778 = vpop.f32.mrf.mxu0
      %v779 = vadd.f32 %v766, %v778
      %v780 = vpop.f32.mrf.mxu0
      %781 = vdwg.mxu0
      %782 = vmatpush.bf16.msra.mxu0 %v707
      %783 = vmatpush.bf16.msra.mxu0 %v705
      %784 = vmatpush.bf16.msra.mxu0 %v703
      %785 = vmatpush.bf16.msra.mxu0 %v701
      %786 = vmatpush.bf16.msra.mxu0 %v699
      %787 = vmatpush.bf16.msra.mxu0 %v697
      %788 = vmatpush.bf16.msra.mxu0 %v695
      %789 = vmatpush.bf16.msra.mxu0 %v693
      %790 = vmatmul.bf16.gmra.mxu0 %v592
      %v791 = vpop.f32.mrf.mxu0
      %v792 = vadd.f32 0.0, %v791
      %v793 = vpop.f32.mrf.mxu0
      %794 = vdwg.mxu0
      %795 = vmatpush.bf16.msra.mxu0 %v723
      %796 = vmatpush.bf16.msra.mxu0 %v721
      %797 = vmatpush.bf16.msra.mxu0 %v719
      %798 = vmatpush.bf16.msra.mxu0 %v717
      %799 = vmatpush.bf16.msra.mxu0 %v715
      %800 = vmatpush.bf16.msra.mxu0 %v713
      %801 = vmatpush.bf16.msra.mxu0 %v711
      %802 = vmatpush.bf16.msra.mxu0 %v709
      %803 = vmatmul.bf16.gmra.mxu0 %v593
      %v804 = vpop.f32.mrf.mxu0
      %v805 = vadd.f32 %v792, %v804
      %v806 = vpop.f32.mrf.mxu0
      %807 = vdwg.mxu0
      %v808 = vadd.f32 %v524, %v779
      %v809 = vadd.f32 %v550, %v805
      %v810 = vpack.c.bf16 %v809, %v808
      %v812 = vrot.slane %v810, 3
      %vm813 = vcmask 1040384
      %v816 = vsel %vm813, %v810, %v812
      %s818 = scalar_lea.vmem %s2, %s44
      %819 = vst [vmem:[%s818] sm:$0x3] %v816
      %vm820 = vcmask 1041408
      %v821 = vsel %vm820, %v808, 0.0
      %v822 = vrot.slane %v821, 4
      %v823 = vadd.f32 %v821, %v822
      %v824 = vrot.slane %v823, 2
      %v825 = vadd.f32 %v823, %v824
      %v826 = vrot.slane %v825, 1
      %v827 = vadd.f32 %v825, %v826
      %v828 = vsel %vm820, %v809, 0.0
      %v829 = vrot.slane %v828, 4
      %v830 = vadd.f32 %v828, %v829
      %v831 = vrot.slane %v830, 2
      %v832 = vadd.f32 %v830, %v831
      %v833 = vrot.slane %v832, 1
      %v834 = vadd.f32 %v832, %v833
      %v835 = vadd.f32 %v40, %v827
      %v836 = vadd.f32 %v41, %v834
      %v837 = vmul.f32 %v808, %v808
      %v838 = vmul.f32 %v809, %v809
      %v839 = vsel %vm820, %v837, 0.0
      %v840 = vrot.slane %v839, 4
      %v841 = vadd.f32 %v839, %v840
      %v842 = vrot.slane %v841, 2
      %v843 = vadd.f32 %v841, %v842
      %v844 = vrot.slane %v843, 1
      %v845 = vadd.f32 %v843, %v844
      %v846 = vsel %vm820, %v838, 0.0
      %v847 = vrot.slane %v846, 4
      %v848 = vadd.f32 %v846, %v847
      %v849 = vrot.slane %v848, 2
      %v850 = vadd.f32 %v848, %v849
      %v851 = vrot.slane %v850, 1
      %v852 = vadd.f32 %v850, %v851
      %v853 = vadd.f32 %v42, %v845
      %v854 = vadd.f32 %v43, %v852
    $region18: #{discriminator_forward.6} parent=1 // loop_footer
      %s39 = sadd.s32 1, %s35
    $region19: #{discriminator_forward.6} parent=1 // loop_footer_branch
      %34 = sbr.rel target = $region15
    $region20: #{discriminator_forward.6} parent=1 // loop_exit
      _
    %v857 = vrot.slane %v41, 7
    %vm858 = vcmask 1040384
    %v859 = vsel %vm858, %v40, %v857
    %v861 = vlaneseq
    %vm862 = vcmp.ge.s32.totalorder %v861, 0
    %vm863 = vcmp.lt.s32.totalorder %v861, 256
    %vm864 = vmand %vm862, %vm863
    %865 = vst.msk [vmem:[%s3] sm:$0x3] %vm864, %v859
    %v868 = vrot.slane %v43, 7
    %v869 = vsel %vm858, %v42, %v868
    %871 = vst.msk [vmem:[%s4] sm:$0x3] %vm864, %v869
    // Predicated region
    $region21: #{discriminator_forward.6} parent=1 // pred_check
      _
    $region22: #{discriminator_forward.6} parent=1 // pred_check_branch
      %873 = sbr.rel (0) target = $region24
    $region23: #{discriminator_forward.6} parent=1 // pred_region
      _
    $region24: #{discriminator_forward.6} parent=1 // pred_fallthru
      _
    // Predicated region
    $region25: #{discriminator_forward.6} parent=1 // pred_check
      _
    $region26: #{discriminator_forward.6} parent=1 // pred_check_branch
      %875 = sbr.rel (0) target = $region28
    $region27: #{discriminator_forward.6} parent=1 // pred_region
      _
    $region28: #{discriminator_forward.6} parent=1 // pred_fallthru
      _
    // Predicated region
    $region29: #{discriminator_forward.6} parent=1 // pred_check
      _
    $region30: #{discriminator_forward.6} parent=1 // pred_check_branch
      %877 = sbr.rel (0) target = $region32
    $region31: #{discriminator_forward.6} parent=1 // pred_region
      _
    $region32: #{discriminator_forward.6} parent=1 // pred_fallthru
      _
    // Predicated region
    $region33: #{discriminator_forward.6} parent=1 // pred_check
      _
    $region34: #{discriminator_forward.6} parent=1 // pred_check_branch
      %879 = sbr.rel (0) target = $region36
    $region35: #{discriminator_forward.6} parent=1 // pred_region
      _
    $region36: #{discriminator_forward.6} parent=1 // pred_fallthru
      _
    // Predicated region
    $region37: #{discriminator_forward.6} parent=1 // pred_check
      _
    $region38: #{discriminator_forward.6} parent=1 // pred_check_branch
      %881 = sbr.rel (0) target = $region40
    $region39: #{discriminator_forward.6} parent=1 // pred_region
      _
    $region40: #{discriminator_forward.6} parent=1 // pred_fallthru
      _
    // Predicated region
    $region41: #{discriminator_forward.6} parent=1 // pred_check
      _
    $region42: #{discriminator_forward.6} parent=1 // pred_check_branch
      %883 = sbr.rel (0) target = $region44
    $region43: #{discriminator_forward.6} parent=1 // pred_region
      _
    $region44: #{discriminator_forward.6} parent=1 // pred_fallthru
      _
    %884 = vsyncpa [#allocation3], 1

// kernel: discriminator_forward.7
$region0: #{discriminator_forward.7}
  #allocation0 [shape = 'u32[]', space=smem, size = 0x4, offset = 0x4, fixed_abs, tag = 'smem constant byte address 0x4 - core index']
  #allocation1 [shape = 'u32[72,128]{1,0:T(1,128)}', space=vmem, size = 0x9000, scoped, tag = 'internal scratch']
  %s0 = inlined_call_operand.vmem [shape: bf16[16,2,256], index: 0, kind: input, shape index: {}]
  %s1 = inlined_call_operand.hbm [shape: bf16[3,256,512], index: 1, kind: input, shape index: {}]
  %s2 = inlined_call_operand.vmem [shape: f32[1,256], index: 2, kind: input, shape index: {}]
  %s3 = inlined_call_operand.vmem [shape: f32[1,256], index: 3, kind: input, shape index: {}]
  %s4 = inlined_call_operand.vmem [shape: bf16[16,2,512], index: 4, kind: output, shape index: {0}]
  %s5 = inlined_call_operand.vmem [shape: f32[1,1,512], index: 5, kind: output, shape index: {1}]
  %s6 = inlined_call_operand.vmem [shape: f32[1,1,512], index: 6, kind: output, shape index: {2}]
  %7 = xla_tuple %s4, %s5, %s6
  %s8 = sld [smem:[#allocation0]]
  $region53: #{discriminator_forward.7} parent=0
    _
  %s10 = ssub.s32 1, %s8
  %s11 = scalar_select 0, %s10, %s8
  $region1: #{discriminator_forward.7} parent=0
    #allocation2 [shape = 'u8[786432]{0}', space=vmem, size = 0xc0000, scoped, tag = 'input window, operand 1, single buffered']
    #allocation3 [shape = 's32[1]{0}', space=sflag, size = 0x4, scoped, tag = 'scoped memory for discriminator_forward.7']
    %12 = vsyncpa [#allocation3], 0
    // Predicated region
    $region2: #{discriminator_forward.7} parent=1 // pred_check
      _
    $region3: #{discriminator_forward.7} parent=1 // pred_check_branch
      %14 = sbr.rel (0) target = $region5
    $region4: #{discriminator_forward.7} parent=1 // pred_region
      _
    $region5: #{discriminator_forward.7} parent=1 // pred_fallthru
      _
    // Predicated region
    $region6: #{discriminator_forward.7} parent=1 // pred_check
      _
    $region7: #{discriminator_forward.7} parent=1 // pred_check_branch
      %16 = sbr.rel (0) target = $region9
    $region8: #{discriminator_forward.7} parent=1 // pred_region
      %18 = vsyncadd [#allocation3], 0
      %s19 = sshll.u32 %s1, 4
      %s20 = int_to_ptr.hbm [resolvable:$true] %s19
      %s21 = sshll.u32 [#allocation2], 4
      %s22 = int_to_ptr.vmem [resolvable:$true] %s21
      %27 = dma.hbm_to_vmem [thread:$0]  %s20, 24576, %s22, [#allocation3], 256, 256, 16
    $region9: #{discriminator_forward.7} parent=1 // pred_fallthru
      _
    // Predicated region
    $region10: #{discriminator_forward.7} parent=1 // pred_check
      _
    $region11: #{discriminator_forward.7} parent=1 // pred_check_branch
      %29 = sbr.rel (0) target = $region13
    $region12: #{discriminator_forward.7} parent=1 // pred_region
      _
    $region13: #{discriminator_forward.7} parent=1 // pred_fallthru
      _
    // Predicated region
    $region14: #{discriminator_forward.7} parent=1 // pred_check
      _
    $region15: #{discriminator_forward.7} parent=1 // pred_check_branch
      %31 = sbr.rel (0) target = $region17
    $region16: #{discriminator_forward.7} parent=1 // pred_region
      _
    $region17: #{discriminator_forward.7} parent=1 // pred_fallthru
      _
    // Predicated region
    $region18: #{discriminator_forward.7} parent=1 // pred_check
      _
    $region19: #{discriminator_forward.7} parent=1 // pred_check_branch
      %33 = sbr.rel (0) target = $region21
    $region20: #{discriminator_forward.7} parent=1 // pred_region
      %35 = dma.done [#allocation3], 24576
    $region21: #{discriminator_forward.7} parent=1 // pred_fallthru
      _
    %37 = vst [vmem:[%s4] sm:$0xf] 0
    %s38 = scalar_lea.vmem %s4, 60
    %39 = vst [vmem:[%s38] sm:$0xf] 0
    loop: start=1, step=1, limit=15
    $region22: #{discriminator_forward.7} parent=1 // loop_pre_header
      _
    $region23: #{discriminator_forward.7} parent=1 // loop_header
      %s41 = sphi 1, %s45
      %p42 = scmp.ge.s32.totalorder %s41, 15
      %v46 = vphi 0.0, %v1664
      %v47 = vphi 0.0, %v1665
      %v48 = vphi 0.0, %v1666
      %v49 = vphi 0.0, %v1667
      %v50 = vphi 0.0, %v1700
      %v51 = vphi 0.0, %v1701
      %v52 = vphi 0.0, %v1702
      %v53 = vphi 0.0, %v1703
    $region24: #{discriminator_forward.7} parent=1 // loop_header_branch
      %44 = sbr.rel (%p42) target = $region28
    $region25: #{discriminator_forward.7} parent=1 // loop_body
      %s54 = sadd.s32 %s41, 4294967295
      %s55 = smul.u32 %s54, 2
      %s56 = scalar_lea.vmem %s0, %s55
      %v57 = vld [vmem:[%s56] sm:$0x3]
      %v58 = vunpack.c.l.bf16 %v57
      %v59 = vld [vmem:[%s2] sm:$0x3]
      %v61 = vperm.slane %v59, 0
      %v62 = vperm.slane %v59, 1
      %v63 = vrot.slane %v62, 6
      %vm64 = vcmask 1041408
      %v65 = vsel %vm64, %v61, %v63
      %v67 = vmul.f32 %v58, %v65
      %v68 = vld [vmem:[%s3] sm:$0x3]
      %v70 = vperm.slane %v68, 0
      %v71 = vperm.slane %v68, 1
      %v72 = vrot.slane %v71, 6
      %v73 = vsel %vm64, %v70, %v72
      %v75 = vadd.f32 %v67, %v73
      %vm76 = vcmp.ge.f32.partialorder %v75, 0.0
      %v77 = vmul.f32 %v75, 0.01
      %v78 = vsel %vm76, %v75, %v77
      %p79 = scmp.ge.s32.totalorder %s54, 1
      %p80 = scmp.le.s32.totalorder %s54, 14
      %p81 = pnand %p79, %p80
      %p82 = pneg %p81
      %s83 = scalar_select %p82, 1, 0
      %s84 = scvt.s32.f32 %s83
      %v85 = vstv %s84
      %v86 = vmul.f32 %v78, %v85
      %88 = vst [vmem:[#allocation1] ss:$4 sm:$0xff] %v86
      %v89 = vld.sshfl [vmem:[#allocation1] sm:$0xff pattern:$0x73625140]
      %v90 = vld.sshfl [vmem:[#allocation1 + $0x8] sm:$0xff pattern:$0x73625140]
      %v93 = vpack.c.bf16 %v89, %v89
      %v94 = vpack.c.bf16 %v90, %v90
      %v95 = vld [vmem:[#allocation2] sm:$0xff]
      %v96 = vld [vmem:[#allocation2 + $0x8] sm:$0xff]
      %v97 = vld [vmem:[#allocation2 + $0x10] sm:$0xff]
      %v98 = vld [vmem:[#allocation2 + $0x18] sm:$0xff]
      %v99 = vld [vmem:[#allocation2 + $0x20] sm:$0xff]
      %v100 = vld [vmem:[#allocation2 + $0x28] sm:$0xff]
      %v101 = vld [vmem:[#allocation2 + $0x30] sm:$0xff]
      %v102 = vld [vmem:[#allocation2 + $0x38] sm:$0xff]
      %v103 = vld [vmem:[#allocation2 + $0x40] sm:$0xff]
      %v104 = vld [vmem:[#allocation2 + $0x48] sm:$0xff]
      %v105 = vld [vmem:[#allocation2 + $0x50] sm:$0xff]
      %v106 = vld [vmem:[#allocation2 + $0x58] sm:$0xff]
      %v107 = vld [vmem:[#allocation2 + $0x60] sm:$0xff]
      %v108 = vld [vmem:[#allocation2 + $0x68] sm:$0xff]
      %v109 = vld [vmem:[#allocation2 + $0x70] sm:$0xff]
      %v110 = vld [vmem:[#allocation2 + $0x78] sm:$0xff]
      %v111 = vld [vmem:[#allocation2 + $0x80] sm:$0xff]
      %v112 = vld [vmem:[#allocation2 + $0x88] sm:$0xff]
      %v113 = vld [vmem:[#allocation2 + $0x90] sm:$0xff]
      %v114 = vld [vmem:[#allocation2 + $0x98] sm:$0xff]
      %v115 = vld [vmem:[#allocation2 + $0xa0] sm:$0xff]
      %v116 = vld [vmem:[#allocation2 + $0xa8] sm:$0xff]
      %v117 = vld [vmem:[#allocation2 + $0xb0] sm:$0xff]
      %v118 = vld [vmem:[#allocation2 + $0xb8] sm:$0xff]
      %v119 = vld [vmem:[#allocation2 + $0xc0] sm:$0xff]
      %v120 = vld [vmem:[#allocation2 + $0xc8] sm:$0xff]
      %v121 = vld [vmem:[#allocation2 + $0xd0] sm:$0xff]
      %v122 = vld [vmem:[#allocation2 + $0xd8] sm:$0xff]
      %v123 = vld [vmem:[#allocation2 + $0xe0] sm:$0xff]
      %v124 = vld [vmem:[#allocation2 + $0xe8] sm:$0xff]
      %v125 = vld [vmem:[#allocation2 + $0xf0] sm:$0xff]
      %v126 = vld [vmem:[#allocation2 + $0xf8] sm:$0xff]
      %v127 = vld [vmem:[#allocation2 + $0x100] sm:$0xff]
      %v128 = vld [vmem:[#allocation2 + $0x108] sm:$0xff]
      %v129 = vld [vmem:[#allocation2 + $0x110] sm:$0xff]
      %v130 = vld [vmem:[#allocation2 + $0x118] sm:$0xff]
      %v131 = vld [vmem:[#allocation2 + $0x120] sm:$0xff]
      %v132 = vld [vmem:[#allocation2 + $0x128] sm:$0xff]
      %v133 = vld [vmem:[#allocation2 + $0x130] sm:$0xff]
      %v134 = vld [vmem:[#allocation2 + $0x138] sm:$0xff]
      %v135 = vld [vmem:[#allocation2 + $0x140] sm:$0xff]
      %v136 = vld [vmem:[#allocation2 + $0x148] sm:$0xff]
      %v137 = vld [vmem:[#allocation2 + $0x150] sm:$0xff]
      %v138 = vld [vmem:[#allocation2 + $0x158] sm:$0xff]
      %v139 = vld [vmem:[#allocation2 + $0x160] sm:$0xff]
      %v140 = vld [vmem:[#allocation2 + $0x168] sm:$0xff]
      %v141 = vld [vmem:[#allocation2 + $0x170] sm:$0xff]
      %v142 = vld [vmem:[#allocation2 + $0x178] sm:$0xff]
      %v143 = vld [vmem:[#allocation2 + $0x180] sm:$0xff]
      %v144 = vld [vmem:[#allocation2 + $0x188] sm:$0xff]
      %v145 = vld [vmem:[#allocation2 + $0x190] sm:$0xff]
      %v146 = vld [vmem:[#allocation2 + $0x198] sm:$0xff]
      %v147 = vld [vmem:[#allocation2 + $0x1a0] sm:$0xff]
      %v148 = vld [vmem:[#allocation2 + $0x1a8] sm:$0xff]
      %v149 = vld [vmem:[#allocation2 + $0x1b0] sm:$0xff]
      %v150 = vld [vmem:[#allocation2 + $0x1b8] sm:$0xff]
      %v151 = vld [vmem:[#allocation2 + $0x1c0] sm:$0xff]
      %v152 = vld [vmem:[#allocation2 + $0x1c8] sm:$0xff]
      %v153 = vld [vmem:[#allocation2 + $0x1d0] sm:$0xff]
      %v154 = vld [vmem:[#allocation2 + $0x1d8] sm:$0xff]
      %v155 = vld [vmem:[#allocation2 + $0x1e0] sm:$0xff]
      %v156 = vld [vmem:[#allocation2 + $0x1e8] sm:$0xff]
      %v157 = vld [vmem:[#allocation2 + $0x1f0] sm:$0xff]
      %v158 = vld [vmem:[#allocation2 + $0x1f8] sm:$0xff]
      %s159 = smul.u32 %s41, 2
      %s160 = scalar_lea.vmem %s0, %s159
      %v161 = vld [vmem:[%s160] sm:$0x3]
      %v162 = vunpack.c.l.bf16 %v161
      %v163 = vmul.f32 %v162, %v65
      %v164 = vadd.f32 %v163, %v73
      %vm165 = vcmp.ge.f32.partialorder %v164, 0.0
      %v166 = vmul.f32 %v164, 0.01
      %v167 = vsel %vm165, %v164, %v166
      %p168 = scmp.ge.s32.totalorder %s41, 1
      %p169 = scmp.le.s32.totalorder %s41, 14
      %p170 = pnand %p168, %p169
      %p171 = pneg %p170
      %s172 = scalar_select %p171, 1, 0
      %s173 = scvt.s32.f32 %s172
      %v174 = vstv %s173
      %v175 = vmul.f32 %v167, %v174
      %177 = vst [vmem:[#allocation1] ss:$4 sm:$0xff] %v175
      %v178 = vld.sshfl [vmem:[#allocation1] sm:$0xff pattern:$0x73625140]
      %v179 = vld.sshfl [vmem:[#allocation1 + $0x8] sm:$0xff pattern:$0x73625140]
      %v182 = vpack.c.bf16 %v178, %v178
      %v183 = vpack.c.bf16 %v179, %v179
      %s184 = scalar_lea.vmem [#allocation2], 512
      %v185 = vld [vmem:[%s184] sm:$0xff]
      %v186 = vld [vmem:[%s184 + $0x8] sm:$0xff]
      %v187 = vld [vmem:[%s184 + $0x10] sm:$0xff]
      %v188 = vld [vmem:[%s184 + $0x18] sm:$0xff]
      %v189 = vld [vmem:[%s184 + $0x20] sm:$0xff]
      %v190 = vld [vmem:[%s184 + $0x28] sm:$0xff]
      %v191 = vld [vmem:[%s184 + $0x30] sm:$0xff]
      %v192 = vld [vmem:[%s184 + $0x38] sm:$0xff]
      %v193 = vld [vmem:[%s184 + $0x40] sm:$0xff]
      %v194 = vld [vmem:[%s184 + $0x48] sm:$0xff]
      %v195 = vld [vmem:[%s184 + $0x50] sm:$0xff]
      %v196 = vld [vmem:[%s184 + $0x58] sm:$0xff]
      %v197 = vld [vmem:[%s184 + $0x60] sm:$0xff]
      %v198 = vld [vmem:[%s184 + $0x68] sm:$0xff]
      %v199 = vld [vmem:[%s184 + $0x70] sm:$0xff]
      %v200 = vld [vmem:[%s184 + $0x78] sm:$0xff]
      %v201 = vld [vmem:[%s184 + $0x80] sm:$0xff]
      %v202 = vld [vmem:[%s184 + $0x88] sm:$0xff]
      %v203 = vld [vmem:[%s184 + $0x90] sm:$0xff]
      %v204 = vld [vmem:[%s184 + $0x98] sm:$0xff]
      %v205 = vld [vmem:[%s184 + $0xa0] sm:$0xff]
      %v206 = vld [vmem:[%s184 + $0xa8] sm:$0xff]
      %v207 = vld [vmem:[%s184 + $0xb0] sm:$0xff]
      %v208 = vld [vmem:[%s184 + $0xb8] sm:$0xff]
      %v209 = vld [vmem:[%s184 + $0xc0] sm:$0xff]
      %v210 = vld [vmem:[%s184 + $0xc8] sm:$0xff]
      %v211 = vld [vmem:[%s184 + $0xd0] sm:$0xff]
      %v212 = vld [vmem:[%s184 + $0xd8] sm:$0xff]
      %v213 = vld [vmem:[%s184 + $0xe0] sm:$0xff]
      %v214 = vld [vmem:[%s184 + $0xe8] sm:$0xff]
      %v215 = vld [vmem:[%s184 + $0xf0] sm:$0xff]
      %v216 = vld [vmem:[%s184 + $0xf8] sm:$0xff]
      %v217 = vld [vmem:[%s184 + $0x100] sm:$0xff]
      %v218 = vld [vmem:[%s184 + $0x108] sm:$0xff]
      %v219 = vld [vmem:[%s184 + $0x110] sm:$0xff]
      %v220 = vld [vmem:[%s184 + $0x118] sm:$0xff]
      %v221 = vld [vmem:[%s184 + $0x120] sm:$0xff]
      %v222 = vld [vmem:[%s184 + $0x128] sm:$0xff]
      %v223 = vld [vmem:[%s184 + $0x130] sm:$0xff]
      %v224 = vld [vmem:[%s184 + $0x138] sm:$0xff]
      %v225 = vld [vmem:[%s184 + $0x140] sm:$0xff]
      %v226 = vld [vmem:[%s184 + $0x148] sm:$0xff]
      %v227 = vld [vmem:[%s184 + $0x150] sm:$0xff]
      %v228 = vld [vmem:[%s184 + $0x158] sm:$0xff]
      %v229 = vld [vmem:[%s184 + $0x160] sm:$0xff]
      %v230 = vld [vmem:[%s184 + $0x168] sm:$0xff]
      %v231 = vld [vmem:[%s184 + $0x170] sm:$0xff]
      %v232 = vld [vmem:[%s184 + $0x178] sm:$0xff]
      %v233 = vld [vmem:[%s184 + $0x180] sm:$0xff]
      %v234 = vld [vmem:[%s184 + $0x188] sm:$0xff]
      %v235 = vld [vmem:[%s184 + $0x190] sm:$0xff]
      %v236 = vld [vmem:[%s184 + $0x198] sm:$0xff]
      %v237 = vld [vmem:[%s184 + $0x1a0] sm:$0xff]
      %v238 = vld [vmem:[%s184 + $0x1a8] sm:$0xff]
      %v239 = vld [vmem:[%s184 + $0x1b0] sm:$0xff]
      %v240 = vld [vmem:[%s184 + $0x1b8] sm:$0xff]
      %v241 = vld [vmem:[%s184 + $0x1c0] sm:$0xff]
      %v242 = vld [vmem:[%s184 + $0x1c8] sm:$0xff]
      %v243 = vld [vmem:[%s184 + $0x1d0] sm:$0xff]
      %v244 = vld [vmem:[%s184 + $0x1d8] sm:$0xff]
      %v245 = vld [vmem:[%s184 + $0x1e0] sm:$0xff]
      %v246 = vld [vmem:[%s184 + $0x1e8] sm:$0xff]
      %v247 = vld [vmem:[%s184 + $0x1f0] sm:$0xff]
      %v248 = vld [vmem:[%s184 + $0x1f8] sm:$0xff]
      %v313 = vunpack.c.l.b16 %v185
      %v314 = vunpack.c.h.b16 %v185
      %v315 = vunpack.c.l.b16 %v186
      %v316 = vunpack.c.h.b16 %v186
      %v317 = vunpack.c.l.b16 %v187
      %v318 = vunpack.c.h.b16 %v187
      %v319 = vunpack.c.l.b16 %v188
      %v320 = vunpack.c.h.b16 %v188
      %v321 = vunpack.c.l.b16 %v189
      %v322 = vunpack.c.h.b16 %v189
      %v323 = vunpack.c.l.b16 %v190
      %v324 = vunpack.c.h.b16 %v190
      %v325 = vunpack.c.l.b16 %v191
      %v326 = vunpack.c.h.b16 %v191
      %v327 = vunpack.c.l.b16 %v192
      %v328 = vunpack.c.h.b16 %v192
      %v329 = vunpack.c.l.b16 %v193
      %v330 = vunpack.c.h.b16 %v193
      %v331 = vunpack.c.l.b16 %v194
      %v332 = vunpack.c.h.b16 %v194
      %v333 = vunpack.c.l.b16 %v195
      %v334 = vunpack.c.h.b16 %v195
      %v335 = vunpack.c.l.b16 %v196
      %v336 = vunpack.c.h.b16 %v196
      %v337 = vunpack.c.l.b16 %v197
      %v338 = vunpack.c.h.b16 %v197
      %v339 = vunpack.c.l.b16 %v198
      %v340 = vunpack.c.h.b16 %v198
      %v341 = vunpack.c.l.b16 %v199
      %v342 = vunpack.c.h.b16 %v199
      %v343 = vunpack.c.l.b16 %v200
      %v344 = vunpack.c.h.b16 %v200
      %v345 = vunpack.c.l.b16 %v201
      %v346 = vunpack.c.h.b16 %v201
      %v347 = vunpack.c.l.b16 %v202
      %v348 = vunpack.c.h.b16 %v202
      %v349 = vunpack.c.l.b16 %v203
      %v350 = vunpack.c.h.b16 %v203
      %v351 = vunpack.c.l.b16 %v204
      %v352 = vunpack.c.h.b16 %v204
      %v353 = vunpack.c.l.b16 %v205
      %v354 = vunpack.c.h.b16 %v205
      %v355 = vunpack.c.l.b16 %v206
      %v356 = vunpack.c.h.b16 %v206
      %v357 = vunpack.c.l.b16 %v207
      %v358 = vunpack.c.h.b16 %v207
      %v359 = vunpack.c.l.b16 %v208
      %v360 = vunpack.c.h.b16 %v208
      %v361 = vunpack.c.l.b16 %v209
      %v362 = vunpack.c.h.b16 %v209
      %v363 = vunpack.c.l.b16 %v210
      %v364 = vunpack.c.h.b16 %v210
      %v365 = vunpack.c.l.b16 %v211
      %v366 = vunpack.c.h.b16 %v211
      %v367 = vunpack.c.l.b16 %v212
      %v368 = vunpack.c.h.b16 %v212
      %v369 = vunpack.c.l.b16 %v213
      %v370 = vunpack.c.h.b16 %v213
      %v371 = vunpack.c.l.b16 %v214
      %v372 = vunpack.c.h.b16 %v214
      %v373 = vunpack.c.l.b16 %v215
      %v374 = vunpack.c.h.b16 %v215
      %v375 = vunpack.c.l.b16 %v216
      %v376 = vunpack.c.h.b16 %v216
      %v377 = vunpack.c.l.b16 %v217
      %v378 = vunpack.c.h.b16 %v217
      %v379 = vunpack.c.l.b16 %v218
      %v380 = vunpack.c.h.b16 %v218
      %v381 = vunpack.c.l.b16 %v219
      %v382 = vunpack.c.h.b16 %v219
      %v383 = vunpack.c.l.b16 %v220
      %v384 = vunpack.c.h.b16 %v220
      %v385 = vunpack.c.l.b16 %v221
      %v386 = vunpack.c.h.b16 %v221
      %v387 = vunpack.c.l.b16 %v222
      %v388 = vunpack.c.h.b16 %v222
      %v389 = vunpack.c.l.b16 %v223
      %v390 = vunpack.c.h.b16 %v223
      %v391 = vunpack.c.l.b16 %v224
      %v392 = vunpack.c.h.b16 %v224
      %v393 = vunpack.c.l.b16 %v225
      %v394 = vunpack.c.h.b16 %v225
      %v395 = vunpack.c.l.b16 %v226
      %v396 = vunpack.c.h.b16 %v226
      %v397 = vunpack.c.l.b16 %v227
      %v398 = vunpack.c.h.b16 %v227
      %v399 = vunpack.c.l.b16 %v228
      %v400 = vunpack.c.h.b16 %v228
      %v401 = vunpack.c.l.b16 %v229
      %v402 = vunpack.c.h.b16 %v229
      %v403 = vunpack.c.l.b16 %v230
      %v404 = vunpack.c.h.b16 %v230
      %v405 = vunpack.c.l.b16 %v231
      %v406 = vunpack.c.h.b16 %v231
      %v407 = vunpack.c.l.b16 %v232
      %v408 = vunpack.c.h.b16 %v232
      %v409 = vunpack.c.l.b16 %v233
      %v410 = vunpack.c.h.b16 %v233
      %v411 = vunpack.c.l.b16 %v234
      %v412 = vunpack.c.h.b16 %v234
      %v413 = vunpack.c.l.b16 %v235
      %v414 = vunpack.c.h.b16 %v235
      %v415 = vunpack.c.l.b16 %v236
      %v416 = vunpack.c.h.b16 %v236
      %v417 = vunpack.c.l.b16 %v237
      %v418 = vunpack.c.h.b16 %v237
      %v419 = vunpack.c.l.b16 %v238
      %v420 = vunpack.c.h.b16 %v238
      %v421 = vunpack.c.l.b16 %v239
      %v422 = vunpack.c.h.b16 %v239
      %v423 = vunpack.c.l.b16 %v240
      %v424 = vunpack.c.h.b16 %v240
      %v425 = vunpack.c.l.b16 %v241
      %v426 = vunpack.c.h.b16 %v241
      %v427 = vunpack.c.l.b16 %v242
      %v428 = vunpack.c.h.b16 %v242
      %v429 = vunpack.c.l.b16 %v243
      %v430 = vunpack.c.h.b16 %v243
      %v431 = vunpack.c.l.b16 %v244
      %v432 = vunpack.c.h.b16 %v244
      %v433 = vunpack.c.l.b16 %v245
      %v434 = vunpack.c.h.b16 %v245
      %v435 = vunpack.c.l.b16 %v246
      %v436 = vunpack.c.h.b16 %v246
      %v437 = vunpack.c.l.b16 %v247
      %v438 = vunpack.c.h.b16 %v247
      %v439 = vunpack.c.l.b16 %v248
      %v440 = vunpack.c.h.b16 %v248
      %v441 = vpack.c.b16 %v317, %v313
      %v442 = vpack.c.b16 %v318, %v314
      %v443 = vpack.c.b16 %v319, %v315
      %v444 = vpack.c.b16 %v320, %v316
      %v445 = vpack.c.b16 %v325, %v321
      %v446 = vpack.c.b16 %v326, %v322
      %v447 = vpack.c.b16 %v327, %v323
      %v448 = vpack.c.b16 %v328, %v324
      %v449 = vpack.c.b16 %v333, %v329
      %v450 = vpack.c.b16 %v334, %v330
      %v451 = vpack.c.b16 %v335, %v331
      %v452 = vpack.c.b16 %v336, %v332
      %v453 = vpack.c.b16 %v341, %v337
      %v454 = vpack.c.b16 %v342, %v338
      %v455 = vpack.c.b16 %v343, %v339
      %v456 = vpack.c.b16 %v344, %v340
      %v457 = vpack.c.b16 %v349, %v345
      %v458 = vpack.c.b16 %v350, %v346
      %v459 = vpack.c.b16 %v351, %v347
      %v460 = vpack.c.b16 %v352, %v348
      %v461 = vpack.c.b16 %v357, %v353
      %v462 = vpack.c.b16 %v358, %v354
      %v463 = vpack.c.b16 %v359, %v355
      %v464 = vpack.c.b16 %v360, %v356
      %v465 = vpack.c.b16 %v365, %v361
      %v466 = vpack.c.b16 %v366, %v362
      %v467 = vpack.c.b16 %v367, %v363
      %v468 = vpack.c.b16 %v368, %v364
      %v469 = vpack.c.b16 %v373, %v369
      %v470 = vpack.c.b16 %v374, %v370
      %v471 = vpack.c.b16 %v375, %v371
      %v472 = vpack.c.b16 %v376, %v372
      %v473 = vpack.c.b16 %v381, %v377
      %v474 = vpack.c.b16 %v382, %v378
      %v475 = vpack.c.b16 %v383, %v379
      %v476 = vpack.c.b16 %v384, %v380
      %v477 = vpack.c.b16 %v389, %v385
      %v478 = vpack.c.b16 %v390, %v386
      %v479 = vpack.c.b16 %v391, %v387
      %v480 = vpack.c.b16 %v392, %v388
      %v481 = vpack.c.b16 %v397, %v393
      %v482 = vpack.c.b16 %v398, %v394
      %v483 = vpack.c.b16 %v399, %v395
      %v484 = vpack.c.b16 %v400, %v396
      %v485 = vpack.c.b16 %v405, %v401
      %v486 = vpack.c.b16 %v406, %v402
      %v487 = vpack.c.b16 %v407, %v403
      %v488 = vpack.c.b16 %v408, %v404
      %v489 = vpack.c.b16 %v413, %v409
      %v490 = vpack.c.b16 %v414, %v410
      %v491 = vpack.c.b16 %v415, %v411
      %v492 = vpack.c.b16 %v416, %v412
      %v493 = vpack.c.b16 %v421, %v417
      %v494 = vpack.c.b16 %v422, %v418
      %v495 = vpack.c.b16 %v423, %v419
      %v496 = vpack.c.b16 %v424, %v420
      %v497 = vpack.c.b16 %v429, %v425
      %v498 = vpack.c.b16 %v430, %v426
      %v499 = vpack.c.b16 %v431, %v427
      %v500 = vpack.c.b16 %v432, %v428
      %v501 = vpack.c.b16 %v437, %v433
      %v502 = vpack.c.b16 %v438, %v434
      %v503 = vpack.c.b16 %v439, %v435
      %v504 = vpack.c.b16 %v440, %v436
      %569 = vmatpush.bf16.msra.mxu0 %v469
      %570 = vmatpush.bf16.msra.mxu0 %v465
      %571 = vmatpush.bf16.msra.mxu0 %v461
      %572 = vmatpush.bf16.msra.mxu0 %v457
      %573 = vmatpush.bf16.msra.mxu0 %v453
      %574 = vmatpush.bf16.msra.mxu0 %v449
      %575 = vmatpush.bf16.msra.mxu0 %v445
      %576 = vmatpush.bf16.msra.mxu0 %v441
      %577 = vmatmul.bf16.gmra.mxu0 %v182
      %v578 = vpop.f32.mrf.mxu0
      %v579 = vadd.f32 0.0, %v578
      %v580 = vpop.f32.mrf.mxu0
      %581 = vdwg.mxu0
      %582 = vmatpush.bf16.msra.mxu0 %v501
      %583 = vmatpush.bf16.msra.mxu0 %v497
      %584 = vmatpush.bf16.msra.mxu0 %v493
      %585 = vmatpush.bf16.msra.mxu0 %v489
      %586 = vmatpush.bf16.msra.mxu0 %v485
      %587 = vmatpush.bf16.msra.mxu0 %v481
      %588 = vmatpush.bf16.msra.mxu0 %v477
      %589 = vmatpush.bf16.msra.mxu0 %v473
      %590 = vmatmul.bf16.gmra.mxu0 %v183
      %v591 = vpop.f32.mrf.mxu0
      %v592 = vadd.f32 %v579, %v591
      %v593 = vpop.f32.mrf.mxu0
      %594 = vdwg.mxu0
      %595 = vmatpush.bf16.msra.mxu0 %v470
      %596 = vmatpush.bf16.msra.mxu0 %v466
      %597 = vmatpush.bf16.msra.mxu0 %v462
      %598 = vmatpush.bf16.msra.mxu0 %v458
      %599 = vmatpush.bf16.msra.mxu0 %v454
      %600 = vmatpush.bf16.msra.mxu0 %v450
      %601 = vmatpush.bf16.msra.mxu0 %v446
      %602 = vmatpush.bf16.msra.mxu0 %v442
      %603 = vmatmul.bf16.gmra.mxu0 %v182
      %v604 = vpop.f32.mrf.mxu0
      %v605 = vadd.f32 0.0, %v604
      %v606 = vpop.f32.mrf.mxu0
      %607 = vdwg.mxu0
      %608 = vmatpush.bf16.msra.mxu0 %v502
      %609 = vmatpush.bf16.msra.mxu0 %v498
      %610 = vmatpush.bf16.msra.mxu0 %v494
      %611 = vmatpush.bf16.msra.mxu0 %v490
      %612 = vmatpush.bf16.msra.mxu0 %v486
      %613 = vmatpush.bf16.msra.mxu0 %v482
      %614 = vmatpush.bf16.msra.mxu0 %v478
      %615 = vmatpush.bf16.msra.mxu0 %v474
      %616 = vmatmul.bf16.gmra.mxu0 %v183
      %v617 = vpop.f32.mrf.mxu0
      %v618 = vadd.f32 %v605, %v617
      %v619 = vpop.f32.mrf.mxu0
      %620 = vdwg.mxu0
      %621 = vmatpush.bf16.msra.mxu0 %v471
      %622 = vmatpush.bf16.msra.mxu0 %v467
      %623 = vmatpush.bf16.msra.mxu0 %v463
      %624 = vmatpush.bf16.msra.mxu0 %v459
      %625 = vmatpush.bf16.msra.mxu0 %v455
      %626 = vmatpush.bf16.msra.mxu0 %v451
      %627 = vmatpush.bf16.msra.mxu0 %v447
      %628 = vmatpush.bf16.msra.mxu0 %v443
      %629 = vmatmul.bf16.gmra.mxu0 %v182
      %v630 = vpop.f32.mrf.mxu0
      %v631 = vadd.f32 0.0, %v630
      %v632 = vpop.f32.mrf.mxu0
      %633 = vdwg.mxu0
      %634 = vmatpush.bf16.msra.mxu0 %v503
      %635 = vmatpush.bf16.msra.mxu0 %v499
      %636 = vmatpush.bf16.msra.mxu0 %v495
      %637 = vmatpush.bf16.msra.mxu0 %v491
      %638 = vmatpush.bf16.msra.mxu0 %v487
      %639 = vmatpush.bf16.msra.mxu0 %v483
      %640 = vmatpush.bf16.msra.mxu0 %v479
      %641 = vmatpush.bf16.msra.mxu0 %v475
      %642 = vmatmul.bf16.gmra.mxu0 %v183
      %v643 = vpop.f32.mrf.mxu0
      %v644 = vadd.f32 %v631, %v643
      %v645 = vpop.f32.mrf.mxu0
      %646 = vdwg.mxu0
      %647 = vmatpush.bf16.msra.mxu0 %v472
      %648 = vmatpush.bf16.msra.mxu0 %v468
      %649 = vmatpush.bf16.msra.mxu0 %v464
      %650 = vmatpush.bf16.msra.mxu0 %v460
      %651 = vmatpush.bf16.msra.mxu0 %v456
      %652 = vmatpush.bf16.msra.mxu0 %v452
      %653 = vmatpush.bf16.msra.mxu0 %v448
      %654 = vmatpush.bf16.msra.mxu0 %v444
      %655 = vmatmul.bf16.gmra.mxu0 %v182
      %v656 = vpop.f32.mrf.mxu0
      %v657 = vadd.f32 0.0, %v656
      %v658 = vpop.f32.mrf.mxu0
      %659 = vdwg.mxu0
      %660 = vmatpush.bf16.msra.mxu0 %v504
      %661 = vmatpush.bf16.msra.mxu0 %v500
      %662 = vmatpush.bf16.msra.mxu0 %v496
      %663 = vmatpush.bf16.msra.mxu0 %v492
      %664 = vmatpush.bf16.msra.mxu0 %v488
      %665 = vmatpush.bf16.msra.mxu0 %v484
      %666 = vmatpush.bf16.msra.mxu0 %v480
      %667 = vmatpush.bf16.msra.mxu0 %v476
      %668 = vmatmul.bf16.gmra.mxu0 %v183
      %v669 = vpop.f32.mrf.mxu0
      %v670 = vadd.f32 %v657, %v669
      %v671 = vpop.f32.mrf.mxu0
      %672 = vdwg.mxu0
      %v737 = vunpack.c.l.b16 %v95
      %v738 = vunpack.c.h.b16 %v95
      %v739 = vunpack.c.l.b16 %v96
      %v740 = vunpack.c.h.b16 %v96
      %v741 = vunpack.c.l.b16 %v97
      %v742 = vunpack.c.h.b16 %v97
      %v743 = vunpack.c.l.b16 %v98
      %v744 = vunpack.c.h.b16 %v98
      %v745 = vunpack.c.l.b16 %v99
      %v746 = vunpack.c.h.b16 %v99
      %v747 = vunpack.c.l.b16 %v100
      %v748 = vunpack.c.h.b16 %v100
      %v749 = vunpack.c.l.b16 %v101
      %v750 = vunpack.c.h.b16 %v101
      %v751 = vunpack.c.l.b16 %v102
      %v752 = vunpack.c.h.b16 %v102
      %v753 = vunpack.c.l.b16 %v103
      %v754 = vunpack.c.h.b16 %v103
      %v755 = vunpack.c.l.b16 %v104
      %v756 = vunpack.c.h.b16 %v104
      %v757 = vunpack.c.l.b16 %v105
      %v758 = vunpack.c.h.b16 %v105
      %v759 = vunpack.c.l.b16 %v106
      %v760 = vunpack.c.h.b16 %v106
      %v761 = vunpack.c.l.b16 %v107
      %v762 = vunpack.c.h.b16 %v107
      %v763 = vunpack.c.l.b16 %v108
      %v764 = vunpack.c.h.b16 %v108
      %v765 = vunpack.c.l.b16 %v109
      %v766 = vunpack.c.h.b16 %v109
      %v767 = vunpack.c.l.b16 %v110
      %v768 = vunpack.c.h.b16 %v110
      %v769 = vunpack.c.l.b16 %v111
      %v770 = vunpack.c.h.b16 %v111
      %v771 = vunpack.c.l.b16 %v112
      %v772 = vunpack.c.h.b16 %v112
      %v773 = vunpack.c.l.b16 %v113
      %v774 = vunpack.c.h.b16 %v113
      %v775 = vunpack.c.l.b16 %v114
      %v776 = vunpack.c.h.b16 %v114
      %v777 = vunpack.c.l.b16 %v115
      %v778 = vunpack.c.h.b16 %v115
      %v779 = vunpack.c.l.b16 %v116
      %v780 = vunpack.c.h.b16 %v116
      %v781 = vunpack.c.l.b16 %v117
      %v782 = vunpack.c.h.b16 %v117
      %v783 = vunpack.c.l.b16 %v118
      %v784 = vunpack.c.h.b16 %v118
      %v785 = vunpack.c.l.b16 %v119
      %v786 = vunpack.c.h.b16 %v119
      %v787 = vunpack.c.l.b16 %v120
      %v788 = vunpack.c.h.b16 %v120
      %v789 = vunpack.c.l.b16 %v121
      %v790 = vunpack.c.h.b16 %v121
      %v791 = vunpack.c.l.b16 %v122
      %v792 = vunpack.c.h.b16 %v122
      %v793 = vunpack.c.l.b16 %v123
      %v794 = vunpack.c.h.b16 %v123
      %v795 = vunpack.c.l.b16 %v124
      %v796 = vunpack.c.h.b16 %v124
      %v797 = vunpack.c.l.b16 %v125
      %v798 = vunpack.c.h.b16 %v125
      %v799 = vunpack.c.l.b16 %v126
      %v800 = vunpack.c.h.b16 %v126
      %v801 = vunpack.c.l.b16 %v127
      %v802 = vunpack.c.h.b16 %v127
      %v803 = vunpack.c.l.b16 %v128
      %v804 = vunpack.c.h.b16 %v128
      %v805 = vunpack.c.l.b16 %v129
      %v806 = vunpack.c.h.b16 %v129
      %v807 = vunpack.c.l.b16 %v130
      %v808 = vunpack.c.h.b16 %v130
      %v809 = vunpack.c.l.b16 %v131
      %v810 = vunpack.c.h.b16 %v131
      %v811 = vunpack.c.l.b16 %v132
      %v812 = vunpack.c.h.b16 %v132
      %v813 = vunpack.c.l.b16 %v133
      %v814 = vunpack.c.h.b16 %v133
      %v815 = vunpack.c.l.b16 %v134
      %v816 = vunpack.c.h.b16 %v134
      %v817 = vunpack.c.l.b16 %v135
      %v818 = vunpack.c.h.b16 %v135
      %v819 = vunpack.c.l.b16 %v136
      %v820 = vunpack.c.h.b16 %v136
      %v821 = vunpack.c.l.b16 %v137
      %v822 = vunpack.c.h.b16 %v137
      %v823 = vunpack.c.l.b16 %v138
      %v824 = vunpack.c.h.b16 %v138
      %v825 = vunpack.c.l.b16 %v139
      %v826 = vunpack.c.h.b16 %v139
      %v827 = vunpack.c.l.b16 %v140
      %v828 = vunpack.c.h.b16 %v140
      %v829 = vunpack.c.l.b16 %v141
      %v830 = vunpack.c.h.b16 %v141
      %v831 = vunpack.c.l.b16 %v142
      %v832 = vunpack.c.h.b16 %v142
      %v833 = vunpack.c.l.b16 %v143
      %v834 = vunpack.c.h.b16 %v143
      %v835 = vunpack.c.l.b16 %v144
      %v836 = vunpack.c.h.b16 %v144
      %v837 = vunpack.c.l.b16 %v145
      %v838 = vunpack.c.h.b16 %v145
      %v839 = vunpack.c.l.b16 %v146
      %v840 = vunpack.c.h.b16 %v146
      %v841 = vunpack.c.l.b16 %v147
      %v842 = vunpack.c.h.b16 %v147
      %v843 = vunpack.c.l.b16 %v148
      %v844 = vunpack.c.h.b16 %v148
      %v845 = vunpack.c.l.b16 %v149
      %v846 = vunpack.c.h.b16 %v149
      %v847 = vunpack.c.l.b16 %v150
      %v848 = vunpack.c.h.b16 %v150
      %v849 = vunpack.c.l.b16 %v151
      %v850 = vunpack.c.h.b16 %v151
      %v851 = vunpack.c.l.b16 %v152
      %v852 = vunpack.c.h.b16 %v152
      %v853 = vunpack.c.l.b16 %v153
      %v854 = vunpack.c.h.b16 %v153
      %v855 = vunpack.c.l.b16 %v154
      %v856 = vunpack.c.h.b16 %v154
      %v857 = vunpack.c.l.b16 %v155
      %v858 = vunpack.c.h.b16 %v155
      %v859 = vunpack.c.l.b16 %v156
      %v860 = vunpack.c.h.b16 %v156
      %v861 = vunpack.c.l.b16 %v157
      %v862 = vunpack.c.h.b16 %v157
      %v863 = vunpack.c.l.b16 %v158
      %v864 = vunpack.c.h.b16 %v158
      %v865 = vpack.c.b16 %v741, %v737
      %v866 = vpack.c.b16 %v742, %v738
      %v867 = vpack.c.b16 %v743, %v739
      %v868 = vpack.c.b16 %v744, %v740
      %v869 = vpack.c.b16 %v749, %v745
      %v870 = vpack.c.b16 %v750, %v746
      %v871 = vpack.c.b16 %v751, %v747
      %v872 = vpack.c.b16 %v752, %v748
      %v873 = vpack.c.b16 %v757, %v753
      %v874 = vpack.c.b16 %v758, %v754
      %v875 = vpack.c.b16 %v759, %v755
      %v876 = vpack.c.b16 %v760, %v756
      %v877 = vpack.c.b16 %v765, %v761
      %v878 = vpack.c.b16 %v766, %v762
      %v879 = vpack.c.b16 %v767, %v763
      %v880 = vpack.c.b16 %v768, %v764
      %v881 = vpack.c.b16 %v773, %v769
      %v882 = vpack.c.b16 %v774, %v770
      %v883 = vpack.c.b16 %v775, %v771
      %v884 = vpack.c.b16 %v776, %v772
      %v885 = vpack.c.b16 %v781, %v777
      %v886 = vpack.c.b16 %v782, %v778
      %v887 = vpack.c.b16 %v783, %v779
      %v888 = vpack.c.b16 %v784, %v780
      %v889 = vpack.c.b16 %v789, %v785
      %v890 = vpack.c.b16 %v790, %v786
      %v891 = vpack.c.b16 %v791, %v787
      %v892 = vpack.c.b16 %v792, %v788
      %v893 = vpack.c.b16 %v797, %v793
      %v894 = vpack.c.b16 %v798, %v794
      %v895 = vpack.c.b16 %v799, %v795
      %v896 = vpack.c.b16 %v800, %v796
      %v897 = vpack.c.b16 %v805, %v801
      %v898 = vpack.c.b16 %v806, %v802
      %v899 = vpack.c.b16 %v807, %v803
      %v900 = vpack.c.b16 %v808, %v804
      %v901 = vpack.c.b16 %v813, %v809
      %v902 = vpack.c.b16 %v814, %v810
      %v903 = vpack.c.b16 %v815, %v811
      %v904 = vpack.c.b16 %v816, %v812
      %v905 = vpack.c.b16 %v821, %v817
      %v906 = vpack.c.b16 %v822, %v818
      %v907 = vpack.c.b16 %v823, %v819
      %v908 = vpack.c.b16 %v824, %v820
      %v909 = vpack.c.b16 %v829, %v825
      %v910 = vpack.c.b16 %v830, %v826
      %v911 = vpack.c.b16 %v831, %v827
      %v912 = vpack.c.b16 %v832, %v828
      %v913 = vpack.c.b16 %v837, %v833
      %v914 = vpack.c.b16 %v838, %v834
      %v915 = vpack.c.b16 %v839, %v835
      %v916 = vpack.c.b16 %v840, %v836
      %v917 = vpack.c.b16 %v845, %v841
      %v918 = vpack.c.b16 %v846, %v842
      %v919 = vpack.c.b16 %v847, %v843
      %v920 = vpack.c.b16 %v848, %v844
      %v921 = vpack.c.b16 %v853, %v849
      %v922 = vpack.c.b16 %v854, %v850
      %v923 = vpack.c.b16 %v855, %v851
      %v924 = vpack.c.b16 %v856, %v852
      %v925 = vpack.c.b16 %v861, %v857
      %v926 = vpack.c.b16 %v862, %v858
      %v927 = vpack.c.b16 %v863, %v859
      %v928 = vpack.c.b16 %v864, %v860
      %993 = vmatpush.bf16.msra.mxu0 %v893
      %994 = vmatpush.bf16.msra.mxu0 %v889
      %995 = vmatpush.bf16.msra.mxu0 %v885
      %996 = vmatpush.bf16.msra.mxu0 %v881
      %997 = vmatpush.bf16.msra.mxu0 %v877
      %998 = vmatpush.bf16.msra.mxu0 %v873
      %999 = vmatpush.bf16.msra.mxu0 %v869
      %1000 = vmatpush.bf16.msra.mxu0 %v865
      %1001 = vmatmul.bf16.gmra.mxu0 %v93
      %v1002 = vpop.f32.mrf.mxu0
      %v1003 = vadd.f32 %v592, %v1002
      %v1004 = vpop.f32.mrf.mxu0
      %1005 = vdwg.mxu0
      %1006 = vmatpush.bf16.msra.mxu0 %v925
      %1007 = vmatpush.bf16.msra.mxu0 %v921
      %1008 = vmatpush.bf16.msra.mxu0 %v917
      %1009 = vmatpush.bf16.msra.mxu0 %v913
      %1010 = vmatpush.bf16.msra.mxu0 %v909
      %1011 = vmatpush.bf16.msra.mxu0 %v905
      %1012 = vmatpush.bf16.msra.mxu0 %v901
      %1013 = vmatpush.bf16.msra.mxu0 %v897
      %1014 = vmatmul.bf16.gmra.mxu0 %v94
      %v1015 = vpop.f32.mrf.mxu0
      %v1016 = vadd.f32 %v1003, %v1015
      %v1017 = vpop.f32.mrf.mxu0
      %1018 = vdwg.mxu0
      %1019 = vmatpush.bf16.msra.mxu0 %v894
      %1020 = vmatpush.bf16.msra.mxu0 %v890
      %1021 = vmatpush.bf16.msra.mxu0 %v886
      %1022 = vmatpush.bf16.msra.mxu0 %v882
      %1023 = vmatpush.bf16.msra.mxu0 %v878
      %1024 = vmatpush.bf16.msra.mxu0 %v874
      %1025 = vmatpush.bf16.msra.mxu0 %v870
      %1026 = vmatpush.bf16.msra.mxu0 %v866
      %1027 = vmatmul.bf16.gmra.mxu0 %v93
      %v1028 = vpop.f32.mrf.mxu0
      %v1029 = vadd.f32 %v618, %v1028
      %v1030 = vpop.f32.mrf.mxu0
      %1031 = vdwg.mxu0
      %1032 = vmatpush.bf16.msra.mxu0 %v926
      %1033 = vmatpush.bf16.msra.mxu0 %v922
      %1034 = vmatpush.bf16.msra.mxu0 %v918
      %1035 = vmatpush.bf16.msra.mxu0 %v914
      %1036 = vmatpush.bf16.msra.mxu0 %v910
      %1037 = vmatpush.bf16.msra.mxu0 %v906
      %1038 = vmatpush.bf16.msra.mxu0 %v902
      %1039 = vmatpush.bf16.msra.mxu0 %v898
      %1040 = vmatmul.bf16.gmra.mxu0 %v94
      %v1041 = vpop.f32.mrf.mxu0
      %v1042 = vadd.f32 %v1029, %v1041
      %v1043 = vpop.f32.mrf.mxu0
      %1044 = vdwg.mxu0
      %1045 = vmatpush.bf16.msra.mxu0 %v895
      %1046 = vmatpush.bf16.msra.mxu0 %v891
      %1047 = vmatpush.bf16.msra.mxu0 %v887
      %1048 = vmatpush.bf16.msra.mxu0 %v883
      %1049 = vmatpush.bf16.msra.mxu0 %v879
      %1050 = vmatpush.bf16.msra.mxu0 %v875
      %1051 = vmatpush.bf16.msra.mxu0 %v871
      %1052 = vmatpush.bf16.msra.mxu0 %v867
      %1053 = vmatmul.bf16.gmra.mxu0 %v93
      %v1054 = vpop.f32.mrf.mxu0
      %v1055 = vadd.f32 %v644, %v1054
      %v1056 = vpop.f32.mrf.mxu0
      %1057 = vdwg.mxu0
      %1058 = vmatpush.bf16.msra.mxu0 %v927
      %1059 = vmatpush.bf16.msra.mxu0 %v923
      %1060 = vmatpush.bf16.msra.mxu0 %v919
      %1061 = vmatpush.bf16.msra.mxu0 %v915
      %1062 = vmatpush.bf16.msra.mxu0 %v911
      %1063 = vmatpush.bf16.msra.mxu0 %v907
      %1064 = vmatpush.bf16.msra.mxu0 %v903
      %1065 = vmatpush.bf16.msra.mxu0 %v899
      %1066 = vmatmul.bf16.gmra.mxu0 %v94
      %v1067 = vpop.f32.mrf.mxu0
      %v1068 = vadd.f32 %v1055, %v1067
      %v1069 = vpop.f32.mrf.mxu0
      %1070 = vdwg.mxu0
      %1071 = vmatpush.bf16.msra.mxu0 %v896
      %1072 = vmatpush.bf16.msra.mxu0 %v892
      %1073 = vmatpush.bf16.msra.mxu0 %v888
      %1074 = vmatpush.bf16.msra.mxu0 %v884
      %1075 = vmatpush.bf16.msra.mxu0 %v880
      %1076 = vmatpush.bf16.msra.mxu0 %v876
      %1077 = vmatpush.bf16.msra.mxu0 %v872
      %1078 = vmatpush.bf16.msra.mxu0 %v868
      %1079 = vmatmul.bf16.gmra.mxu0 %v93
      %v1080 = vpop.f32.mrf.mxu0
      %v1081 = vadd.f32 %v670, %v1080
      %v1082 = vpop.f32.mrf.mxu0
      %1083 = vdwg.mxu0
      %1084 = vmatpush.bf16.msra.mxu0 %v928
      %1085 = vmatpush.bf16.msra.mxu0 %v924
      %1086 = vmatpush.bf16.msra.mxu0 %v920
      %1087 = vmatpush.bf16.msra.mxu0 %v916
      %1088 = vmatpush.bf16.msra.mxu0 %v912
      %1089 = vmatpush.bf16.msra.mxu0 %v908
      %1090 = vmatpush.bf16.msra.mxu0 %v904
      %1091 = vmatpush.bf16.msra.mxu0 %v900
      %1092 = vmatmul.bf16.gmra.mxu0 %v94
      %v1093 = vpop.f32.mrf.mxu0
      %v1094 = vadd.f32 %v1081, %v1093
      %v1095 = vpop.f32.mrf.mxu0
      %1096 = vdwg.mxu0
      %s1097 = sadd.s32 %s41, 1
      %s1098 = smul.u32 %s1097, 2
      %s1099 = scalar_lea.vmem %s0, %s1098
      %v1100 = vld [vmem:[%s1099] sm:$0x3]
      %v1101 = vunpack.c.l.bf16 %v1100
      %v1102 = vmul.f32 %v1101, %v65
      %v1103 = vadd.f32 %v1102, %v73
      %vm1104 = vcmp.ge.f32.partialorder %v1103, 0.0
      %v1105 = vmul.f32 %v1103, 0.01
      %v1106 = vsel %vm1104, %v1103, %v1105
      %p1107 = scmp.ge.s32.totalorder %s1097, 1
      %p1108 = scmp.le.s32.totalorder %s1097, 14
      %p1109 = pnand %p1107, %p1108
      %p1110 = pneg %p1109
      %s1111 = scalar_select %p1110, 1, 0
      %s1112 = scvt.s32.f32 %s1111
      %v1113 = vstv %s1112
      %v1114 = vmul.f32 %v1106, %v1113
      %1116 = vst [vmem:[#allocation1] ss:$4 sm:$0xff] %v1114
      %v1117 = vld.sshfl [vmem:[#allocation1] sm:$0xff pattern:$0x73625140]
      %v1118 = vld.sshfl [vmem:[#allocation1 + $0x8] sm:$0xff pattern:$0x73625140]
      %v1121 = vpack.c.bf16 %v1117, %v1117
      %v1122 = vpack.c.bf16 %v1118, %v1118
      %s1123 = scalar_lea.vmem [#allocation2], 1024
      %v1124 = vld [vmem:[%s1123] sm:$0xff]
      %v1125 = vld [vmem:[%s1123 + $0x8] sm:$0xff]
      %v1126 = vld [vmem:[%s1123 + $0x10] sm:$0xff]
      %v1127 = vld [vmem:[%s1123 + $0x18] sm:$0xff]
      %v1128 = vld [vmem:[%s1123 + $0x20] sm:$0xff]
      %v1129 = vld [vmem:[%s1123 + $0x28] sm:$0xff]
      %v1130 = vld [vmem:[%s1123 + $0x30] sm:$0xff]
      %v1131 = vld [vmem:[%s1123 + $0x38] sm:$0xff]
      %v1132 = vld [vmem:[%s1123 + $0x40] sm:$0xff]
      %v1133 = vld [vmem:[%s1123 + $0x48] sm:$0xff]
      %v1134 = vld [vmem:[%s1123 + $0x50] sm:$0xff]
      %v1135 = vld [vmem:[%s1123 + $0x58] sm:$0xff]
      %v1136 = vld [vmem:[%s1123 + $0x60] sm:$0xff]
      %v1137 = vld [vmem:[%s1123 + $0x68] sm:$0xff]
      %v1138 = vld [vmem:[%s1123 + $0x70] sm:$0xff]
      %v1139 = vld [vmem:[%s1123 + $0x78] sm:$0xff]
      %v1140 = vld [vmem:[%s1123 + $0x80] sm:$0xff]
      %v1141 = vld [vmem:[%s1123 + $0x88] sm:$0xff]
      %v1142 = vld [vmem:[%s1123 + $0x90] sm:$0xff]
      %v1143 = vld [vmem:[%s1123 + $0x98] sm:$0xff]
      %v1144 = vld [vmem:[%s1123 + $0xa0] sm:$0xff]
      %v1145 = vld [vmem:[%s1123 + $0xa8] sm:$0xff]
      %v1146 = vld [vmem:[%s1123 + $0xb0] sm:$0xff]
      %v1147 = vld [vmem:[%s1123 + $0xb8] sm:$0xff]
      %v1148 = vld [vmem:[%s1123 + $0xc0] sm:$0xff]
      %v1149 = vld [vmem:[%s1123 + $0xc8] sm:$0xff]
      %v1150 = vld [vmem:[%s1123 + $0xd0] sm:$0xff]
      %v1151 = vld [vmem:[%s1123 + $0xd8] sm:$0xff]
      %v1152 = vld [vmem:[%s1123 + $0xe0] sm:$0xff]
      %v1153 = vld [vmem:[%s1123 + $0xe8] sm:$0xff]
      %v1154 = vld [vmem:[%s1123 + $0xf0] sm:$0xff]
      %v1155 = vld [vmem:[%s1123 + $0xf8] sm:$0xff]
      %v1156 = vld [vmem:[%s1123 + $0x100] sm:$0xff]
      %v1157 = vld [vmem:[%s1123 + $0x108] sm:$0xff]
      %v1158 = vld [vmem:[%s1123 + $0x110] sm:$0xff]
      %v1159 = vld [vmem:[%s1123 + $0x118] sm:$0xff]
      %v1160 = vld [vmem:[%s1123 + $0x120] sm:$0xff]
      %v1161 = vld [vmem:[%s1123 + $0x128] sm:$0xff]
      %v1162 = vld [vmem:[%s1123 + $0x130] sm:$0xff]
      %v1163 = vld [vmem:[%s1123 + $0x138] sm:$0xff]
      %v1164 = vld [vmem:[%s1123 + $0x140] sm:$0xff]
      %v1165 = vld [vmem:[%s1123 + $0x148] sm:$0xff]
      %v1166 = vld [vmem:[%s1123 + $0x150] sm:$0xff]
      %v1167 = vld [vmem:[%s1123 + $0x158] sm:$0xff]
      %v1168 = vld [vmem:[%s1123 + $0x160] sm:$0xff]
      %v1169 = vld [vmem:[%s1123 + $0x168] sm:$0xff]
      %v1170 = vld [vmem:[%s1123 + $0x170] sm:$0xff]
      %v1171 = vld [vmem:[%s1123 + $0x178] sm:$0xff]
      %v1172 = vld [vmem:[%s1123 + $0x180] sm:$0xff]
      %v1173 = vld [vmem:[%s1123 + $0x188] sm:$0xff]
      %v1174 = vld [vmem:[%s1123 + $0x190] sm:$0xff]
      %v1175 = vld [vmem:[%s1123 + $0x198] sm:$0xff]
      %v1176 = vld [vmem:[%s1123 + $0x1a0] sm:$0xff]
      %v1177 = vld [vmem:[%s1123 + $0x1a8] sm:$0xff]
      %v1178 = vld [vmem:[%s1123 + $0x1b0] sm:$0xff]
      %v1179 = vld [vmem:[%s1123 + $0x1b8] sm:$0xff]
      %v1180 = vld [vmem:[%s1123 + $0x1c0] sm:$0xff]
      %v1181 = vld [vmem:[%s1123 + $0x1c8] sm:$0xff]
      %v1182 = vld [vmem:[%s1123 + $0x1d0] sm:$0xff]
      %v1183 = vld [vmem:[%s1123 + $0x1d8] sm:$0xff]
      %v1184 = vld [vmem:[%s1123 + $0x1e0] sm:$0xff]
      %v1185 = vld [vmem:[%s1123 + $0x1e8] sm:$0xff]
      %v1186 = vld [vmem:[%s1123 + $0x1f0] sm:$0xff]
      %v1187 = vld [vmem:[%s1123 + $0x1f8] sm:$0xff]
      %v1252 = vunpack.c.l.b16 %v1124
      %v1253 = vunpack.c.h.b16 %v1124
      %v1254 = vunpack.c.l.b16 %v1125
      %v1255 = vunpack.c.h.b16 %v1125
      %v1256 = vunpack.c.l.b16 %v1126
      %v1257 = vunpack.c.h.b16 %v1126
      %v1258 = vunpack.c.l.b16 %v1127
      %v1259 = vunpack.c.h.b16 %v1127
      %v1260 = vunpack.c.l.b16 %v1128
      %v1261 = vunpack.c.h.b16 %v1128
      %v1262 = vunpack.c.l.b16 %v1129
      %v1263 = vunpack.c.h.b16 %v1129
      %v1264 = vunpack.c.l.b16 %v1130
      %v1265 = vunpack.c.h.b16 %v1130
      %v1266 = vunpack.c.l.b16 %v1131
      %v1267 = vunpack.c.h.b16 %v1131
      %v1268 = vunpack.c.l.b16 %v1132
      %v1269 = vunpack.c.h.b16 %v1132
      %v1270 = vunpack.c.l.b16 %v1133
      %v1271 = vunpack.c.h.b16 %v1133
      %v1272 = vunpack.c.l.b16 %v1134
      %v1273 = vunpack.c.h.b16 %v1134
      %v1274 = vunpack.c.l.b16 %v1135
      %v1275 = vunpack.c.h.b16 %v1135
      %v1276 = vunpack.c.l.b16 %v1136
      %v1277 = vunpack.c.h.b16 %v1136
      %v1278 = vunpack.c.l.b16 %v1137
      %v1279 = vunpack.c.h.b16 %v1137
      %v1280 = vunpack.c.l.b16 %v1138
      %v1281 = vunpack.c.h.b16 %v1138
      %v1282 = vunpack.c.l.b16 %v1139
      %v1283 = vunpack.c.h.b16 %v1139
      %v1284 = vunpack.c.l.b16 %v1140
      %v1285 = vunpack.c.h.b16 %v1140
      %v1286 = vunpack.c.l.b16 %v1141
      %v1287 = vunpack.c.h.b16 %v1141
      %v1288 = vunpack.c.l.b16 %v1142
      %v1289 = vunpack.c.h.b16 %v1142
      %v1290 = vunpack.c.l.b16 %v1143
      %v1291 = vunpack.c.h.b16 %v1143
      %v1292 = vunpack.c.l.b16 %v1144
      %v1293 = vunpack.c.h.b16 %v1144
      %v1294 = vunpack.c.l.b16 %v1145
      %v1295 = vunpack.c.h.b16 %v1145
      %v1296 = vunpack.c.l.b16 %v1146
      %v1297 = vunpack.c.h.b16 %v1146
      %v1298 = vunpack.c.l.b16 %v1147
      %v1299 = vunpack.c.h.b16 %v1147
      %v1300 = vunpack.c.l.b16 %v1148
      %v1301 = vunpack.c.h.b16 %v1148
      %v1302 = vunpack.c.l.b16 %v1149
      %v1303 = vunpack.c.h.b16 %v1149
      %v1304 = vunpack.c.l.b16 %v1150
      %v1305 = vunpack.c.h.b16 %v1150
      %v1306 = vunpack.c.l.b16 %v1151
      %v1307 = vunpack.c.h.b16 %v1151
      %v1308 = vunpack.c.l.b16 %v1152
      %v1309 = vunpack.c.h.b16 %v1152
      %v1310 = vunpack.c.l.b16 %v1153
      %v1311 = vunpack.c.h.b16 %v1153
      %v1312 = vunpack.c.l.b16 %v1154
      %v1313 = vunpack.c.h.b16 %v1154
      %v1314 = vunpack.c.l.b16 %v1155
      %v1315 = vunpack.c.h.b16 %v1155
      %v1316 = vunpack.c.l.b16 %v1156
      %v1317 = vunpack.c.h.b16 %v1156
      %v1318 = vunpack.c.l.b16 %v1157
      %v1319 = vunpack.c.h.b16 %v1157
      %v1320 = vunpack.c.l.b16 %v1158
      %v1321 = vunpack.c.h.b16 %v1158
      %v1322 = vunpack.c.l.b16 %v1159
      %v1323 = vunpack.c.h.b16 %v1159
      %v1324 = vunpack.c.l.b16 %v1160
      %v1325 = vunpack.c.h.b16 %v1160
      %v1326 = vunpack.c.l.b16 %v1161
      %v1327 = vunpack.c.h.b16 %v1161
      %v1328 = vunpack.c.l.b16 %v1162
      %v1329 = vunpack.c.h.b16 %v1162
      %v1330 = vunpack.c.l.b16 %v1163
      %v1331 = vunpack.c.h.b16 %v1163
      %v1332 = vunpack.c.l.b16 %v1164
      %v1333 = vunpack.c.h.b16 %v1164
      %v1334 = vunpack.c.l.b16 %v1165
      %v1335 = vunpack.c.h.b16 %v1165
      %v1336 = vunpack.c.l.b16 %v1166
      %v1337 = vunpack.c.h.b16 %v1166
      %v1338 = vunpack.c.l.b16 %v1167
      %v1339 = vunpack.c.h.b16 %v1167
      %v1340 = vunpack.c.l.b16 %v1168
      %v1341 = vunpack.c.h.b16 %v1168
      %v1342 = vunpack.c.l.b16 %v1169
      %v1343 = vunpack.c.h.b16 %v1169
      %v1344 = vunpack.c.l.b16 %v1170
      %v1345 = vunpack.c.h.b16 %v1170
      %v1346 = vunpack.c.l.b16 %v1171
      %v1347 = vunpack.c.h.b16 %v1171
      %v1348 = vunpack.c.l.b16 %v1172
      %v1349 = vunpack.c.h.b16 %v1172
      %v1350 = vunpack.c.l.b16 %v1173
      %v1351 = vunpack.c.h.b16 %v1173
      %v1352 = vunpack.c.l.b16 %v1174
      %v1353 = vunpack.c.h.b16 %v1174
      %v1354 = vunpack.c.l.b16 %v1175
      %v1355 = vunpack.c.h.b16 %v1175
      %v1356 = vunpack.c.l.b16 %v1176
      %v1357 = vunpack.c.h.b16 %v1176
      %v1358 = vunpack.c.l.b16 %v1177
      %v1359 = vunpack.c.h.b16 %v1177
      %v1360 = vunpack.c.l.b16 %v1178
      %v1361 = vunpack.c.h.b16 %v1178
      %v1362 = vunpack.c.l.b16 %v1179
      %v1363 = vunpack.c.h.b16 %v1179
      %v1364 = vunpack.c.l.b16 %v1180
      %v1365 = vunpack.c.h.b16 %v1180
      %v1366 = vunpack.c.l.b16 %v1181
      %v1367 = vunpack.c.h.b16 %v1181
      %v1368 = vunpack.c.l.b16 %v1182
      %v1369 = vunpack.c.h.b16 %v1182
      %v1370 = vunpack.c.l.b16 %v1183
      %v1371 = vunpack.c.h.b16 %v1183
      %v1372 = vunpack.c.l.b16 %v1184
      %v1373 = vunpack.c.h.b16 %v1184
      %v1374 = vunpack.c.l.b16 %v1185
      %v1375 = vunpack.c.h.b16 %v1185
      %v1376 = vunpack.c.l.b16 %v1186
      %v1377 = vunpack.c.h.b16 %v1186
      %v1378 = vunpack.c.l.b16 %v1187
      %v1379 = vunpack.c.h.b16 %v1187
      %v1380 = vpack.c.b16 %v1256, %v1252
      %v1381 = vpack.c.b16 %v1257, %v1253
      %v1382 = vpack.c.b16 %v1258, %v1254
      %v1383 = vpack.c.b16 %v1259, %v1255
      %v1384 = vpack.c.b16 %v1264, %v1260
      %v1385 = vpack.c.b16 %v1265, %v1261
      %v1386 = vpack.c.b16 %v1266, %v1262
      %v1387 = vpack.c.b16 %v1267, %v1263
      %v1388 = vpack.c.b16 %v1272, %v1268
      %v1389 = vpack.c.b16 %v1273, %v1269
      %v1390 = vpack.c.b16 %v1274, %v1270
      %v1391 = vpack.c.b16 %v1275, %v1271
      %v1392 = vpack.c.b16 %v1280, %v1276
      %v1393 = vpack.c.b16 %v1281, %v1277
      %v1394 = vpack.c.b16 %v1282, %v1278
      %v1395 = vpack.c.b16 %v1283, %v1279
      %v1396 = vpack.c.b16 %v1288, %v1284
      %v1397 = vpack.c.b16 %v1289, %v1285
      %v1398 = vpack.c.b16 %v1290, %v1286
      %v1399 = vpack.c.b16 %v1291, %v1287
      %v1400 = vpack.c.b16 %v1296, %v1292
      %v1401 = vpack.c.b16 %v1297, %v1293
      %v1402 = vpack.c.b16 %v1298, %v1294
      %v1403 = vpack.c.b16 %v1299, %v1295
      %v1404 = vpack.c.b16 %v1304, %v1300
      %v1405 = vpack.c.b16 %v1305, %v1301
      %v1406 = vpack.c.b16 %v1306, %v1302
      %v1407 = vpack.c.b16 %v1307, %v1303
      %v1408 = vpack.c.b16 %v1312, %v1308
      %v1409 = vpack.c.b16 %v1313, %v1309
      %v1410 = vpack.c.b16 %v1314, %v1310
      %v1411 = vpack.c.b16 %v1315, %v1311
      %v1412 = vpack.c.b16 %v1320, %v1316
      %v1413 = vpack.c.b16 %v1321, %v1317
      %v1414 = vpack.c.b16 %v1322, %v1318
      %v1415 = vpack.c.b16 %v1323, %v1319
      %v1416 = vpack.c.b16 %v1328, %v1324
      %v1417 = vpack.c.b16 %v1329, %v1325
      %v1418 = vpack.c.b16 %v1330, %v1326
      %v1419 = vpack.c.b16 %v1331, %v1327
      %v1420 = vpack.c.b16 %v1336, %v1332
      %v1421 = vpack.c.b16 %v1337, %v1333
      %v1422 = vpack.c.b16 %v1338, %v1334
      %v1423 = vpack.c.b16 %v1339, %v1335
      %v1424 = vpack.c.b16 %v1344, %v1340
      %v1425 = vpack.c.b16 %v1345, %v1341
      %v1426 = vpack.c.b16 %v1346, %v1342
      %v1427 = vpack.c.b16 %v1347, %v1343
      %v1428 = vpack.c.b16 %v1352, %v1348
      %v1429 = vpack.c.b16 %v1353, %v1349
      %v1430 = vpack.c.b16 %v1354, %v1350
      %v1431 = vpack.c.b16 %v1355, %v1351
      %v1432 = vpack.c.b16 %v1360, %v1356
      %v1433 = vpack.c.b16 %v1361, %v1357
      %v1434 = vpack.c.b16 %v1362, %v1358
      %v1435 = vpack.c.b16 %v1363, %v1359
      %v1436 = vpack.c.b16 %v1368, %v1364
      %v1437 = vpack.c.b16 %v1369, %v1365
      %v1438 = vpack.c.b16 %v1370, %v1366
      %v1439 = vpack.c.b16 %v1371, %v1367
      %v1440 = vpack.c.b16 %v1376, %v1372
      %v1441 = vpack.c.b16 %v1377, %v1373
      %v1442 = vpack.c.b16 %v1378, %v1374
      %v1443 = vpack.c.b16 %v1379, %v1375
      %1508 = vmatpush.bf16.msra.mxu0 %v1408
      %1509 = vmatpush.bf16.msra.mxu0 %v1404
      %1510 = vmatpush.bf16.msra.mxu0 %v1400
      %1511 = vmatpush.bf16.msra.mxu0 %v1396
      %1512 = vmatpush.bf16.msra.mxu0 %v1392
      %1513 = vmatpush.bf16.msra.mxu0 %v1388
      %1514 = vmatpush.bf16.msra.mxu0 %v1384
      %1515 = vmatpush.bf16.msra.mxu0 %v1380
      %1516 = vmatmul.bf16.gmra.mxu0 %v1121
      %v1517 = vpop.f32.mrf.mxu0
      %v1518 = vadd.f32 0.0, %v1517
      %v1519 = vpop.f32.mrf.mxu0
      %1520 = vdwg.mxu0
      %1521 = vmatpush.bf16.msra.mxu0 %v1440
      %1522 = vmatpush.bf16.msra.mxu0 %v1436
      %1523 = vmatpush.bf16.msra.mxu0 %v1432
      %1524 = vmatpush.bf16.msra.mxu0 %v1428
      %1525 = vmatpush.bf16.msra.mxu0 %v1424
      %1526 = vmatpush.bf16.msra.mxu0 %v1420
      %1527 = vmatpush.bf16.msra.mxu0 %v1416
      %1528 = vmatpush.bf16.msra.mxu0 %v1412
      %1529 = vmatmul.bf16.gmra.mxu0 %v1122
      %v1530 = vpop.f32.mrf.mxu0
      %v1531 = vadd.f32 %v1518, %v1530
      %v1532 = vpop.f32.mrf.mxu0
      %1533 = vdwg.mxu0
      %1534 = vmatpush.bf16.msra.mxu0 %v1409
      %1535 = vmatpush.bf16.msra.mxu0 %v1405
      %1536 = vmatpush.bf16.msra.mxu0 %v1401
      %1537 = vmatpush.bf16.msra.mxu0 %v1397
      %1538 = vmatpush.bf16.msra.mxu0 %v1393
      %1539 = vmatpush.bf16.msra.mxu0 %v1389
      %1540 = vmatpush.bf16.msra.mxu0 %v1385
      %1541 = vmatpush.bf16.msra.mxu0 %v1381
      %1542 = vmatmul.bf16.gmra.mxu0 %v1121
      %v1543 = vpop.f32.mrf.mxu0
      %v1544 = vadd.f32 0.0, %v1543
      %v1545 = vpop.f32.mrf.mxu0
      %1546 = vdwg.mxu0
      %1547 = vmatpush.bf16.msra.mxu0 %v1441
      %1548 = vmatpush.bf16.msra.mxu0 %v1437
      %1549 = vmatpush.bf16.msra.mxu0 %v1433
      %1550 = vmatpush.bf16.msra.mxu0 %v1429
      %1551 = vmatpush.bf16.msra.mxu0 %v1425
      %1552 = vmatpush.bf16.msra.mxu0 %v1421
      %1553 = vmatpush.bf16.msra.mxu0 %v1417
      %1554 = vmatpush.bf16.msra.mxu0 %v1413
      %1555 = vmatmul.bf16.gmra.mxu0 %v1122
      %v1556 = vpop.f32.mrf.mxu0
      %v1557 = vadd.f32 %v1544, %v1556
      %v1558 = vpop.f32.mrf.mxu0
      %1559 = vdwg.mxu0
      %1560 = vmatpush.bf16.msra.mxu0 %v1410
      %1561 = vmatpush.bf16.msra.mxu0 %v1406
      %1562 = vmatpush.bf16.msra.mxu0 %v1402
      %1563 = vmatpush.bf16.msra.mxu0 %v1398
      %1564 = vmatpush.bf16.msra.mxu0 %v1394
      %1565 = vmatpush.bf16.msra.mxu0 %v1390
      %1566 = vmatpush.bf16.msra.mxu0 %v1386
      %1567 = vmatpush.bf16.msra.mxu0 %v1382
      %1568 = vmatmul.bf16.gmra.mxu0 %v1121
      %v1569 = vpop.f32.mrf.mxu0
      %v1570 = vadd.f32 0.0, %v1569
      %v1571 = vpop.f32.mrf.mxu0
      %1572 = vdwg.mxu0
      %1573 = vmatpush.bf16.msra.mxu0 %v1442
      %1574 = vmatpush.bf16.msra.mxu0 %v1438
      %1575 = vmatpush.bf16.msra.mxu0 %v1434
      %1576 = vmatpush.bf16.msra.mxu0 %v1430
      %1577 = vmatpush.bf16.msra.mxu0 %v1426
      %1578 = vmatpush.bf16.msra.mxu0 %v1422
      %1579 = vmatpush.bf16.msra.mxu0 %v1418
      %1580 = vmatpush.bf16.msra.mxu0 %v1414
      %1581 = vmatmul.bf16.gmra.mxu0 %v1122
      %v1582 = vpop.f32.mrf.mxu0
      %v1583 = vadd.f32 %v1570, %v1582
      %v1584 = vpop.f32.mrf.mxu0
      %1585 = vdwg.mxu0
      %1586 = vmatpush.bf16.msra.mxu0 %v1411
      %1587 = vmatpush.bf16.msra.mxu0 %v1407
      %1588 = vmatpush.bf16.msra.mxu0 %v1403
      %1589 = vmatpush.bf16.msra.mxu0 %v1399
      %1590 = vmatpush.bf16.msra.mxu0 %v1395
      %1591 = vmatpush.bf16.msra.mxu0 %v1391
      %1592 = vmatpush.bf16.msra.mxu0 %v1387
      %1593 = vmatpush.bf16.msra.mxu0 %v1383
      %1594 = vmatmul.bf16.gmra.mxu0 %v1121
      %v1595 = vpop.f32.mrf.mxu0
      %v1596 = vadd.f32 0.0, %v1595
      %v1597 = vpop.f32.mrf.mxu0
      %1598 = vdwg.mxu0
      %1599 = vmatpush.bf16.msra.mxu0 %v1443
      %1600 = vmatpush.bf16.msra.mxu0 %v1439
      %1601 = vmatpush.bf16.msra.mxu0 %v1435
      %1602 = vmatpush.bf16.msra.mxu0 %v1431
      %1603 = vmatpush.bf16.msra.mxu0 %v1427
      %1604 = vmatpush.bf16.msra.mxu0 %v1423
      %1605 = vmatpush.bf16.msra.mxu0 %v1419
      %1606 = vmatpush.bf16.msra.mxu0 %v1415
      %1607 = vmatmul.bf16.gmra.mxu0 %v1122
      %v1608 = vpop.f32.mrf.mxu0
      %v1609 = vadd.f32 %v1596, %v1608
      %v1610 = vpop.f32.mrf.mxu0
      %1611 = vdwg.mxu0
      %v1612 = vadd.f32 %v1016, %v1531
      %v1613 = vadd.f32 %v1042, %v1557
      %v1614 = vadd.f32 %v1068, %v1583
      %v1615 = vadd.f32 %v1094, %v1609
      %v1616 = vpack.c.bf16 %v1613, %v1612
      %v1617 = vpack.c.bf16 %v1615, %v1614
      %v1620 = vrot.slane %v1616, 3
      %v1621 = vrot.slane %v1617, 6
      %v1622 = vrot.slane %v1617, 1
      %vm1623 = vcmask 1040384
      %v1626 = vsel %vm1623, %v1616, %v1620
      %vm1627 = vcmask 1042434
      %v1630 = vsel %vm1627, %v1621, %v1622
      %v1631 = vsel %vm64, %v1626, %v1630
      %s1633 = smul.u32 %s41, 4
      %s1634 = scalar_lea.vmem %s4, %s1633
      %1635 = vst [vmem:[%s1634] sm:$0xf] %v1631
      %v1636 = vsel %vm64, %v1612, 0.0
      %v1637 = vrot.slane %v1636, 4
      %v1638 = vadd.f32 %v1636, %v1637
      %v1639 = vrot.slane %v1638, 2
      %v1640 = vadd.f32 %v1638, %v1639
      %v1641 = vrot.slane %v1640, 1
      %v1642 = vadd.f32 %v1640, %v1641
      %v1643 = vsel %vm64, %v1613, 0.0
      %v1644 = vrot.slane %v1643, 4
      %v1645 = vadd.f32 %v1643, %v1644
      %v1646 = vrot.slane %v1645, 2
      %v1647 = vadd.f32 %v1645, %v1646
      %v1648 = vrot.slane %v1647, 1
      %v1649 = vadd.f32 %v1647, %v1648
      %v1650 = vsel %vm64, %v1614, 0.0
      %v1651 = vrot.slane %v1650, 4
      %v1652 = vadd.f32 %v1650, %v1651
      %v1653 = vrot.slane %v1652, 2
      %v1654 = vadd.f32 %v1652, %v1653
      %v1655 = vrot.slane %v1654, 1
      %v1656 = vadd.f32 %v1654, %v1655
      %v1657 = vsel %vm64, %v1615, 0.0
      %v1658 = vrot.slane %v1657, 4
      %v1659 = vadd.f32 %v1657, %v1658
      %v1660 = vrot.slane %v1659, 2
      %v1661 = vadd.f32 %v1659, %v1660
      %v1662 = vrot.slane %v1661, 1
      %v1663 = vadd.f32 %v1661, %v1662
      %v1664 = vadd.f32 %v46, %v1642
      %v1665 = vadd.f32 %v47, %v1649
      %v1666 = vadd.f32 %v48, %v1656
      %v1667 = vadd.f32 %v49, %v1663
      %v1668 = vmul.f32 %v1612, %v1612
      %v1669 = vmul.f32 %v1613, %v1613
      %v1670 = vmul.f32 %v1614, %v1614
      %v1671 = vmul.f32 %v1615, %v1615
      %v1672 = vsel %vm64, %v1668, 0.0
      %v1673 = vrot.slane %v1672, 4
      %v1674 = vadd.f32 %v1672, %v1673
      %v1675 = vrot.slane %v1674, 2
      %v1676 = vadd.f32 %v1674, %v1675
      %v1677 = vrot.slane %v1676, 1
      %v1678 = vadd.f32 %v1676, %v1677
      %v1679 = vsel %vm64, %v1669, 0.0
      %v1680 = vrot.slane %v1679, 4
      %v1681 = vadd.f32 %v1679, %v1680
      %v1682 = vrot.slane %v1681, 2
      %v1683 = vadd.f32 %v1681, %v1682
      %v1684 = vrot.slane %v1683, 1
      %v1685 = vadd.f32 %v1683, %v1684
      %v1686 = vsel %vm64, %v1670, 0.0
      %v1687 = vrot.slane %v1686, 4
      %v1688 = vadd.f32 %v1686, %v1687
      %v1689 = vrot.slane %v1688, 2
      %v1690 = vadd.f32 %v1688, %v1689
      %v1691 = vrot.slane %v1690, 1
      %v1692 = vadd.f32 %v1690, %v1691
      %v1693 = vsel %vm64, %v1671, 0.0
      %v1694 = vrot.slane %v1693, 4
      %v1695 = vadd.f32 %v1693, %v1694
      %v1696 = vrot.slane %v1695, 2
      %v1697 = vadd.f32 %v1695, %v1696
      %v1698 = vrot.slane %v1697, 1
      %v1699 = vadd.f32 %v1697, %v1698
      %v1700 = vadd.f32 %v50, %v1678
      %v1701 = vadd.f32 %v51, %v1685
      %v1702 = vadd.f32 %v52, %v1692
      %v1703 = vadd.f32 %v53, %v1699
    $region26: #{discriminator_forward.7} parent=1 // loop_footer
      %s45 = sadd.s32 1, %s41
    $region27: #{discriminator_forward.7} parent=1 // loop_footer_branch
      %40 = sbr.rel target = $region23
    $region28: #{discriminator_forward.7} parent=1 // loop_exit
      _
    %v1708 = vrot.slane %v47, 7
    %v1709 = vrot.slane %v48, 6
    %v1710 = vrot.slane %v49, 5
    %vm1711 = vcmask 1040384
    %v1712 = vsel %vm1711, %v46, %v1708
    %vm1713 = vcmask 1042434
    %v1714 = vsel %vm1713, %v1709, %v1710
    %vm1715 = vcmask 1041408
    %v1716 = vsel %vm1715, %v1712, %v1714
    %v1718 = vlaneseq
    %vm1719 = vcmp.ge.s32.totalorder %v1718, 0
    %vm1720 = vcmp.lt.s32.totalorder %v1718, 512
    %vm1721 = vmand %vm1719, %vm1720
    %1722 = vst.msk [vmem:[%s5] sm:$0xf] %vm1721, %v1716
    %v1727 = vrot.slane %v51, 7
    %v1728 = vrot.slane %v52, 6
    %v1729 = vrot.slane %v53, 5
    %v1730 = vsel %vm1711, %v50, %v1727
    %v1731 = vsel %vm1713, %v1728, %v1729
    %v1732 = vsel %vm1715, %v1730, %v1731
    %1734 = vst.msk [vmem:[%s6] sm:$0xf] %vm1721, %v1732
    // Predicated region
    $region29: #{discriminator_forward.7} parent=1 // pred_check
      _
    $region30: #{discriminator_forward.7} parent=1 // pred_check_branch
      %1736 = sbr.rel (0) target = $region32
    $region31: #{discriminator_forward.7} parent=1 // pred_region
      _
    $region32: #{discriminator_forward.7} parent=1 // pred_fallthru
      _
    // Predicated region
    $region33: #{discriminator_forward.7} parent=1 // pred_check
      _
    $region34: #{discriminator_forward.7} parent=1 // pred_check_branch
      %1738 = sbr.rel (0) target = $region36
    $region35: #{discriminator_forward.7} parent=1 // pred_region
      _
    $region36: #{discriminator_forward.7} parent=1 // pred_fallthru
      _
    // Predicated region
    $region37: #{discriminator_forward.7} parent=1 // pred_check
      _
    $region38: #{discriminator_forward.7} parent=1 // pred_check_branch
      %1740 = sbr.rel (0) target = $region40
    $region39: #{discriminator_forward.7} parent=1 // pred_region
      _
    $region40: #{discriminator_forward.7} parent=1 // pred_fallthru
      _
    // Predicated region
    $region41: #{discriminator_forward.7} parent=1 // pred_check
      _
    $region42: #{discriminator_forward.7} parent=1 // pred_check_branch
      %1742 = sbr.rel (0) target = $region44
    $region43: #{discriminator_forward.7} parent=1 // pred_region
      _
    $region44: #{discriminator_forward.7} parent=1 // pred_fallthru
      _
    // Predicated region
    $region45: #{discriminator_forward.7} parent=1 // pred_check
      _
    $region46: #{discriminator_forward.7} parent=1 // pred_check_branch
      %1744 = sbr.rel (0) target = $region48
    $region47: #{discriminator_forward.7} parent=1 // pred_region
      _
    $region48: #{discriminator_forward.7} parent=1 // pred_fallthru
      _
    // Predicated region
    $region49: #{discriminator_forward.7} parent=1 // pred_check
      _
    $region50: #{discriminator_forward.7} parent=1 // pred_check_branch
      %1746 = sbr.rel (0) target = $region52
    $region51: #{discriminator_forward.7} parent=1 // pred_region
      _
    $region52: #{discriminator_forward.7} parent=1 // pred_fallthru
      _
    %1747 = vsyncpa [#allocation3], 1

// kernel: discriminator_forward.8
$region0: #{discriminator_forward.8}
  #allocation0 [shape = 'u32[]', space=smem, size = 0x4, offset = 0x4, fixed_abs, tag = 'smem constant byte address 0x4 - core index']
  #allocation1 [shape = 'u32[72,128]{1,0:T(1,128)}', space=vmem, size = 0x9000, scoped, tag = 'internal scratch']
  %s0 = inlined_call_operand.vmem [shape: bf16[16,2,512], index: 0, kind: input, shape index: {}]
  %s1 = inlined_call_operand.hbm [shape: bf16[3,512,512], index: 1, kind: input, shape index: {}]
  %s2 = inlined_call_operand.vmem [shape: f32[1,512], index: 2, kind: input, shape index: {}]
  %s3 = inlined_call_operand.vmem [shape: f32[1,512], index: 3, kind: input, shape index: {}]
  %s4 = inlined_call_operand.vmem [shape: bf16[8,2,512], index: 4, kind: output, shape index: {0}]
  %s5 = inlined_call_operand.vmem [shape: f32[1,1,512], index: 5, kind: output, shape index: {1}]
  %s6 = inlined_call_operand.vmem [shape: f32[1,1,512], index: 6, kind: output, shape index: {2}]
  %7 = xla_tuple %s4, %s5, %s6
  %s8 = sld [smem:[#allocation0]]
  $region53: #{discriminator_forward.8} parent=0
    _
  %s10 = ssub.s32 1, %s8
  %s11 = scalar_select 0, %s10, %s8
  $region1: #{discriminator_forward.8} parent=0
    #allocation2 [shape = 'u8[1572864]{0}', space=vmem, size = 0x180000, scoped, tag = 'input window, operand 1, single buffered']
    #allocation3 [shape = 's32[1]{0}', space=sflag, size = 0x4, scoped, tag = 'scoped memory for discriminator_forward.8']
    %12 = vsyncpa [#allocation3], 0
    // Predicated region
    $region2: #{discriminator_forward.8} parent=1 // pred_check
      _
    $region3: #{discriminator_forward.8} parent=1 // pred_check_branch
      %14 = sbr.rel (0) target = $region5
    $region4: #{discriminator_forward.8} parent=1 // pred_region
      _
    $region5: #{discriminator_forward.8} parent=1 // pred_fallthru
      _
    // Predicated region
    $region6: #{discriminator_forward.8} parent=1 // pred_check
      _
    $region7: #{discriminator_forward.8} parent=1 // pred_check_branch
      %16 = sbr.rel (0) target = $region9
    $region8: #{discriminator_forward.8} parent=1 // pred_region
      %18 = vsyncadd [#allocation3], 0
      %s19 = sshll.u32 %s1, 4
      %s20 = int_to_ptr.hbm [resolvable:$true] %s19
      %s21 = sshll.u32 [#allocation2], 4
      %s22 = int_to_ptr.vmem [resolvable:$true] %s21
      %27 = dma.hbm_to_vmem [thread:$0]  %s20, 49152, %s22, [#allocation3], 256, 256, 16
    $region9: #{discriminator_forward.8} parent=1 // pred_fallthru
      _
    // Predicated region
    $region10: #{discriminator_forward.8} parent=1 // pred_check
      _
    $region11: #{discriminator_forward.8} parent=1 // pred_check_branch
      %29 = sbr.rel (0) target = $region13
    $region12: #{discriminator_forward.8} parent=1 // pred_region
      _
    $region13: #{discriminator_forward.8} parent=1 // pred_fallthru
      _
    // Predicated region
    $region14: #{discriminator_forward.8} parent=1 // pred_check
      _
    $region15: #{discriminator_forward.8} parent=1 // pred_check_branch
      %31 = sbr.rel (0) target = $region17
    $region16: #{discriminator_forward.8} parent=1 // pred_region
      _
    $region17: #{discriminator_forward.8} parent=1 // pred_fallthru
      _
    // Predicated region
    $region18: #{discriminator_forward.8} parent=1 // pred_check
      _
    $region19: #{discriminator_forward.8} parent=1 // pred_check_branch
      %33 = sbr.rel (0) target = $region21
    $region20: #{discriminator_forward.8} parent=1 // pred_region
      %35 = dma.done [#allocation3], 49152
    $region21: #{discriminator_forward.8} parent=1 // pred_fallthru
      _
    %s37 = scalar_lea.vmem %s4, 28
    %38 = vst [vmem:[%s37] sm:$0xf] 0
    loop: start=0, step=1, limit=7
    $region22: #{discriminator_forward.8} parent=1 // loop_pre_header
      _
    $region23: #{discriminator_forward.8} parent=1 // loop_header
      %s40 = sphi 0, %s44
      %p41 = scmp.ge.s32.totalorder %s40, 7
      %v45 = vphi 0.0, %v3160
      %v46 = vphi 0.0, %v3161
      %v47 = vphi 0.0, %v3162
      %v48 = vphi 0.0, %v3163
      %v49 = vphi 0.0, %v3196
      %v50 = vphi 0.0, %v3197
      %v51 = vphi 0.0, %v3198
      %v52 = vphi 0.0, %v3199
    $region24: #{discriminator_forward.8} parent=1 // loop_header_branch
      %43 = sbr.rel (%p41) target = $region28
    $region25: #{discriminator_forward.8} parent=1 // loop_body
      %s53 = smul.u32 %s40, 2
      %s54 = smul.u32 %s53, 4
      %s55 = scalar_lea.vmem %s0, %s54
      %v56 = vld [vmem:[%s55] sm:$0xf]
      %v57 = vunpack.c.l.bf16 %v56
      %v58 = vld [vmem:[%s2] sm:$0xf]
      %v60 = vperm.slane %v58, 0
      %v61 = vperm.slane %v58, 1
      %v62 = vperm.slane %v58, 2
      %v63 = vperm.slane %v58, 3
      %v64 = vrot.slane %v61, 6
      %v65 = vrot.slane %v62, 4
      %v66 = vrot.slane %v63, 2
      %vm67 = vcmask 1041408
      %v68 = vsel %vm67, %v60, %v64
      %vm69 = vcmask 1045508
      %v70 = vsel %vm69, %v65, %v66
      %vm71 = vcmask 1043456
      %v72 = vsel %vm71, %v68, %v70
      %v74 = vmul.f32 %v57, %v72
      %v75 = vld [vmem:[%s3] sm:$0xf]
      %v77 = vperm.slane %v75, 0
      %v78 = vperm.slane %v75, 1
      %v79 = vperm.slane %v75, 2
      %v80 = vperm.slane %v75, 3
      %v81 = vrot.slane %v78, 6
      %v82 = vrot.slane %v79, 4
      %v83 = vrot.slane %v80, 2
      %v84 = vsel %vm67, %v77, %v81
      %v85 = vsel %vm69, %v82, %v83
      %v86 = vsel %vm71, %v84, %v85
      %v88 = vadd.f32 %v74, %v86
      %vm89 = vcmp.ge.f32.partialorder %v88, 0.0
      %v90 = vmul.f32 %v88, 0.01
      %v91 = vsel %vm89, %v88, %v90
      %p92 = scmp.ge.s32.totalorder %s53, 1
      %p93 = scmp.le.s32.totalorder %s53, 14
      %p94 = pnand %p92, %p93
      %p95 = pneg %p94
      %s96 = scalar_select %p95, 1, 0
      %s97 = scvt.s32.f32 %s96
      %v98 = vstv %s97
      %v99 = vmul.f32 %v91, %v98
      %101 = vst [vmem:[#allocation1] ss:$4 sm:$0xff] %v99
      %v102 = vld.sshfl [vmem:[#allocation1] sm:$0xff pattern:$0x73625140]
      %v103 = vld.sshfl [vmem:[#allocation1 + $0x8] sm:$0xff pattern:$0x73625140]
      %v104 = vld.sshfl [vmem:[#allocation1 + $0x10] sm:$0xff pattern:$0x73625140]
      %v105 = vld.sshfl [vmem:[#allocation1 + $0x18] sm:$0xff pattern:$0x73625140]
      %v110 = vpack.c.bf16 %v102, %v102
      %v111 = vpack.c.bf16 %v103, %v103
      %v112 = vpack.c.bf16 %v104, %v104
      %v113 = vpack.c.bf16 %v105, %v105
      %v114 = vld [vmem:[#allocation2] sm:$0xff]
      %v115 = vld [vmem:[#allocation2 + $0x8] sm:$0xff]
      %v116 = vld [vmem:[#allocation2 + $0x10] sm:$0xff]
      %v117 = vld [vmem:[#allocation2 + $0x18] sm:$0xff]
      %v118 = vld [vmem:[#allocation2 + $0x20] sm:$0xff]
      %v119 = vld [vmem:[#allocation2 + $0x28] sm:$0xff]
      %v120 = vld [vmem:[#allocation2 + $0x30] sm:$0xff]
      %v121 = vld [vmem:[#allocation2 + $0x38] sm:$0xff]
      %v122 = vld [vmem:[#allocation2 + $0x40] sm:$0xff]
      %v123 = vld [vmem:[#allocation2 + $0x48] sm:$0xff]
      %v124 = vld [vmem:[#allocation2 + $0x50] sm:$0xff]
      %v125 = vld [vmem:[#allocation2 + $0x58] sm:$0xff]
      %v126 = vld [vmem:[#allocation2 + $0x60] sm:$0xff]
      %v127 = vld [vmem:[#allocation2 + $0x68] sm:$0xff]
      %v128 = vld [vmem:[#allocation2 + $0x70] sm:$0xff]
      %v129 = vld [vmem:[#allocation2 + $0x78] sm:$0xff]
      %v130 = vld [vmem:[#allocation2 + $0x80] sm:$0xff]
      %v131 = vld [vmem:[#allocation2 + $0x88] sm:$0xff]
      %v132 = vld [vmem:[#allocation2 + $0x90] sm:$0xff]
      %v133 = vld [vmem:[#allocation2 + $0x98] sm:$0xff]
      %v134 = vld [vmem:[#allocation2 + $0xa0] sm:$0xff]
      %v135 = vld [vmem:[#allocation2 + $0xa8] sm:$0xff]
      %v136 = vld [vmem:[#allocation2 + $0xb0] sm:$0xff]
      %v137 = vld [vmem:[#allocation2 + $0xb8] sm:$0xff]
      %v138 = vld [vmem:[#allocation2 + $0xc0] sm:$0xff]
      %v139 = vld [vmem:[#allocation2 + $0xc8] sm:$0xff]
      %v140 = vld [vmem:[#allocation2 + $0xd0] sm:$0xff]
      %v141 = vld [vmem:[#allocation2 + $0xd8] sm:$0xff]
      %v142 = vld [vmem:[#allocation2 + $0xe0] sm:$0xff]
      %v143 = vld [vmem:[#allocation2 + $0xe8] sm:$0xff]
      %v144 = vld [vmem:[#allocation2 + $0xf0] sm:$0xff]
      %v145 = vld [vmem:[#allocation2 + $0xf8] sm:$0xff]
      %v146 = vld [vmem:[#allocation2 + $0x100] sm:$0xff]
      %v147 = vld [vmem:[#allocation2 + $0x108] sm:$0xff]
      %v148 = vld [vmem:[#allocation2 + $0x110] sm:$0xff]
      %v149 = vld [vmem:[#allocation2 + $0x118] sm:$0xff]
      %v150 = vld [vmem:[#allocation2 + $0x120] sm:$0xff]
      %v151 = vld [vmem:[#allocation2 + $0x128] sm:$0xff]
      %v152 = vld [vmem:[#allocation2 + $0x130] sm:$0xff]
      %v153 = vld [vmem:[#allocation2 + $0x138] sm:$0xff]
      %v154 = vld [vmem:[#allocation2 + $0x140] sm:$0xff]
      %v155 = vld [vmem:[#allocation2 + $0x148] sm:$0xff]
      %v156 = vld [vmem:[#allocation2 + $0x150] sm:$0xff]
      %v157 = vld [vmem:[#allocation2 + $0x158] sm:$0xff]
      %v158 = vld [vmem:[#allocation2 + $0x160] sm:$0xff]
      %v159 = vld [vmem:[#allocation2 + $0x168] sm:$0xff]
      %v160 = vld [vmem:[#allocation2 + $0x170] sm:$0xff]
      %v161 = vld [vmem:[#allocation2 + $0x178] sm:$0xff]
      %v162 = vld [vmem:[#allocation2 + $0x180] sm:$0xff]
      %v163 = vld [vmem:[#allocation2 + $0x188] sm:$0xff]
      %v164 = vld [vmem:[#allocation2 + $0x190] sm:$0xff]
      %v165 = vld [vmem:[#allocation2 + $0x198] sm:$0xff]
      %v166 = vld [vmem:[#allocation2 + $0x1a0] sm:$0xff]
      %v167 = vld [vmem:[#allocation2 + $0x1a8] sm:$0xff]
      %v168 = vld [vmem:[#allocation2 + $0x1b0] sm:$0xff]
      %v169 = vld [vmem:[#allocation2 + $0x1b8] sm:$0xff]
      %v170 = vld [vmem:[#allocation2 + $0x1c0] sm:$0xff]
      %v171 = vld [vmem:[#allocation2 + $0x1c8] sm:$0xff]
      %v172 = vld [vmem:[#allocation2 + $0x1d0] sm:$0xff]
      %v173 = vld [vmem:[#allocation2 + $0x1d8] sm:$0xff]
      %v174 = vld [vmem:[#allocation2 + $0x1e0] sm:$0xff]
      %v175 = vld [vmem:[#allocation2 + $0x1e8] sm:$0xff]
      %v176 = vld [vmem:[#allocation2 + $0x1f0] sm:$0xff]
      %v177 = vld [vmem:[#allocation2 + $0x1f8] sm:$0xff]
      %v178 = vld [vmem:[#allocation2 + $0x200] sm:$0xff]
      %v179 = vld [vmem:[#allocation2 + $0x208] sm:$0xff]
      %v180 = vld [vmem:[#allocation2 + $0x210] sm:$0xff]
      %v181 = vld [vmem:[#allocation2 + $0x218] sm:$0xff]
      %v182 = vld [vmem:[#allocation2 + $0x220] sm:$0xff]
      %v183 = vld [vmem:[#allocation2 + $0x228] sm:$0xff]
      %v184 = vld [vmem:[#allocation2 + $0x230] sm:$0xff]
      %v185 = vld [vmem:[#allocation2 + $0x238] sm:$0xff]
      %v186 = vld [vmem:[#allocation2 + $0x240] sm:$0xff]
      %v187 = vld [vmem:[#allocation2 + $0x248] sm:$0xff]
      %v188 = vld [vmem:[#allocation2 + $0x250] sm:$0xff]
      %v189 = vld [vmem:[#allocation2 + $0x258] sm:$0xff]
      %v190 = vld [vmem:[#allocation2 + $0x260] sm:$0xff]
      %v191 = vld [vmem:[#allocation2 + $0x268] sm:$0xff]
      %v192 = vld [vmem:[#allocation2 + $0x270] sm:$0xff]
      %v193 = vld [vmem:[#allocation2 + $0x278] sm:$0xff]
      %v194 = vld [vmem:[#allocation2 + $0x280] sm:$0xff]
      %v195 = vld [vmem:[#allocation2 + $0x288] sm:$0xff]
      %v196 = vld [vmem:[#allocation2 + $0x290] sm:$0xff]
      %v197 = vld [vmem:[#allocation2 + $0x298] sm:$0xff]
      %v198 = vld [vmem:[#allocation2 + $0x2a0] sm:$0xff]
      %v199 = vld [vmem:[#allocation2 + $0x2a8] sm:$0xff]
      %v200 = vld [vmem:[#allocation2 + $0x2b0] sm:$0xff]
      %v201 = vld [vmem:[#allocation2 + $0x2b8] sm:$0xff]
      %v202 = vld [vmem:[#allocation2 + $0x2c0] sm:$0xff]
      %v203 = vld [vmem:[#allocation2 + $0x2c8] sm:$0xff]
      %v204 = vld [vmem:[#allocation2 + $0x2d0] sm:$0xff]
      %v205 = vld [vmem:[#allocation2 + $0x2d8] sm:$0xff]
      %v206 = vld [vmem:[#allocation2 + $0x2e0] sm:$0xff]
      %v207 = vld [vmem:[#allocation2 + $0x2e8] sm:$0xff]
      %v208 = vld [vmem:[#allocation2 + $0x2f0] sm:$0xff]
      %v209 = vld [vmem:[#allocation2 + $0x2f8] sm:$0xff]
      %v210 = vld [vmem:[#allocation2 + $0x300] sm:$0xff]
      %v211 = vld [vmem:[#allocation2 + $0x308] sm:$0xff]
      %v212 = vld [vmem:[#allocation2 + $0x310] sm:$0xff]
      %v213 = vld [vmem:[#allocation2 + $0x318] sm:$0xff]
      %v214 = vld [vmem:[#allocation2 + $0x320] sm:$0xff]
      %v215 = vld [vmem:[#allocation2 + $0x328] sm:$0xff]
      %v216 = vld [vmem:[#allocation2 + $0x330] sm:$0xff]
      %v217 = vld [vmem:[#allocation2 + $0x338] sm:$0xff]
      %v218 = vld [vmem:[#allocation2 + $0x340] sm:$0xff]
      %v219 = vld [vmem:[#allocation2 + $0x348] sm:$0xff]
      %v220 = vld [vmem:[#allocation2 + $0x350] sm:$0xff]
      %v221 = vld [vmem:[#allocation2 + $0x358] sm:$0xff]
      %v222 = vld [vmem:[#allocation2 + $0x360] sm:$0xff]
      %v223 = vld [vmem:[#allocation2 + $0x368] sm:$0xff]
      %v224 = vld [vmem:[#allocation2 + $0x370] sm:$0xff]
      %v225 = vld [vmem:[#allocation2 + $0x378] sm:$0xff]
      %v226 = vld [vmem:[#allocation2 + $0x380] sm:$0xff]
      %v227 = vld [vmem:[#allocation2 + $0x388] sm:$0xff]
      %v228 = vld [vmem:[#allocation2 + $0x390] sm:$0xff]
      %v229 = vld [vmem:[#allocation2 + $0x398] sm:$0xff]
      %v230 = vld [vmem:[#allocation2 + $0x3a0] sm:$0xff]
      %v231 = vld [vmem:[#allocation2 + $0x3a8] sm:$0xff]
      %v232 = vld [vmem:[#allocation2 + $0x3b0] sm:$0xff]
      %v233 = vld [vmem:[#allocation2 + $0x3b8] sm:$0xff]
      %v234 = vld [vmem:[#allocation2 + $0x3c0] sm:$0xff]
      %v235 = vld [vmem:[#allocation2 + $0x3c8] sm:$0xff]
      %v236 = vld [vmem:[#allocation2 + $0x3d0] sm:$0xff]
      %v237 = vld [vmem:[#allocation2 + $0x3d8] sm:$0xff]
      %v238 = vld [vmem:[#allocation2 + $0x3e0] sm:$0xff]
      %v239 = vld [vmem:[#allocation2 + $0x3e8] sm:$0xff]
      %v240 = vld [vmem:[#allocation2 + $0x3f0] sm:$0xff]
      %v241 = vld [vmem:[#allocation2 + $0x3f8] sm:$0xff]
      %s242 = sadd.s32 %s53, 1
      %s243 = smul.u32 %s242, 4
      %s244 = scalar_lea.vmem %s0, %s243
      %v245 = vld [vmem:[%s244] sm:$0xf]
      %v246 = vunpack.c.l.bf16 %v245
      %v247 = vmul.f32 %v246, %v72
      %v248 = vadd.f32 %v247, %v86
      %vm249 = vcmp.ge.f32.partialorder %v248, 0.0
      %v250 = vmul.f32 %v248, 0.01
      %v251 = vsel %vm249, %v248, %v250
      %p252 = scmp.ge.s32.totalorder %s242, 1
      %p253 = scmp.le.s32.totalorder %s242, 14
      %p254 = pnand %p252, %p253
      %p255 = pneg %p254
      %s256 = scalar_select %p255, 1, 0
      %s257 = scvt.s32.f32 %s256
      %v258 = vstv %s257
      %v259 = vmul.f32 %v251, %v258
      %261 = vst [vmem:[#allocation1] ss:$4 sm:$0xff] %v259
      %v262 = vld.sshfl [vmem:[#allocation1] sm:$0xff pattern:$0x73625140]
      %v263 = vld.sshfl [vmem:[#allocation1 + $0x8] sm:$0xff pattern:$0x73625140]
      %v264 = vld.sshfl [vmem:[#allocation1 + $0x10] sm:$0xff pattern:$0x73625140]
      %v265 = vld.sshfl [vmem:[#allocation1 + $0x18] sm:$0xff pattern:$0x73625140]
      %v270 = vpack.c.bf16 %v262, %v262
      %v271 = vpack.c.bf16 %v263, %v263
      %v272 = vpack.c.bf16 %v264, %v264
      %v273 = vpack.c.bf16 %v265, %v265
      %s274 = scalar_lea.vmem [#allocation2], 1024
      %v275 = vld [vmem:[%s274] sm:$0xff]
      %v276 = vld [vmem:[%s274 + $0x8] sm:$0xff]
      %v277 = vld [vmem:[%s274 + $0x10] sm:$0xff]
      %v278 = vld [vmem:[%s274 + $0x18] sm:$0xff]
      %v279 = vld [vmem:[%s274 + $0x20] sm:$0xff]
      %v280 = vld [vmem:[%s274 + $0x28] sm:$0xff]
      %v281 = vld [vmem:[%s274 + $0x30] sm:$0xff]
      %v282 = vld [vmem:[%s274 + $0x38] sm:$0xff]
      %v283 = vld [vmem:[%s274 + $0x40] sm:$0xff]
      %v284 = vld [vmem:[%s274 + $0x48] sm:$0xff]
      %v285 = vld [vmem:[%s274 + $0x50] sm:$0xff]
      %v286 = vld [vmem:[%s274 + $0x58] sm:$0xff]
      %v287 = vld [vmem:[%s274 + $0x60] sm:$0xff]
      %v288 = vld [vmem:[%s274 + $0x68] sm:$0xff]
      %v289 = vld [vmem:[%s274 + $0x70] sm:$0xff]
      %v290 = vld [vmem:[%s274 + $0x78] sm:$0xff]
      %v291 = vld [vmem:[%s274 + $0x80] sm:$0xff]
      %v292 = vld [vmem:[%s274 + $0x88] sm:$0xff]
      %v293 = vld [vmem:[%s274 + $0x90] sm:$0xff]
      %v294 = vld [vmem:[%s274 + $0x98] sm:$0xff]
      %v295 = vld [vmem:[%s274 + $0xa0] sm:$0xff]
      %v296 = vld [vmem:[%s274 + $0xa8] sm:$0xff]
      %v297 = vld [vmem:[%s274 + $0xb0] sm:$0xff]
      %v298 = vld [vmem:[%s274 + $0xb8] sm:$0xff]
      %v299 = vld [vmem:[%s274 + $0xc0] sm:$0xff]
      %v300 = vld [vmem:[%s274 + $0xc8] sm:$0xff]
      %v301 = vld [vmem:[%s274 + $0xd0] sm:$0xff]
      %v302 = vld [vmem:[%s274 + $0xd8] sm:$0xff]
      %v303 = vld [vmem:[%s274 + $0xe0] sm:$0xff]
      %v304 = vld [vmem:[%s274 + $0xe8] sm:$0xff]
      %v305 = vld [vmem:[%s274 + $0xf0] sm:$0xff]
      %v306 = vld [vmem:[%s274 + $0xf8] sm:$0xff]
      %v307 = vld [vmem:[%s274 + $0x100] sm:$0xff]
      %v308 = vld [vmem:[%s274 + $0x108] sm:$0xff]
      %v309 = vld [vmem:[%s274 + $0x110] sm:$0xff]
      %v310 = vld [vmem:[%s274 + $0x118] sm:$0xff]
      %v311 = vld [vmem:[%s274 + $0x120] sm:$0xff]
      %v312 = vld [vmem:[%s274 + $0x128] sm:$0xff]
      %v313 = vld [vmem:[%s274 + $0x130] sm:$0xff]
      %v314 = vld [vmem:[%s274 + $0x138] sm:$0xff]
      %v315 = vld [vmem:[%s274 + $0x140] sm:$0xff]
      %v316 = vld [vmem:[%s274 + $0x148] sm:$0xff]
      %v317 = vld [vmem:[%s274 + $0x150] sm:$0xff]
      %v318 = vld [vmem:[%s274 + $0x158] sm:$0xff]
      %v319 = vld [vmem:[%s274 + $0x160] sm:$0xff]
      %v320 = vld [vmem:[%s274 + $0x168] sm:$0xff]
      %v321 = vld [vmem:[%s274 + $0x170] sm:$0xff]
      %v322 = vld [vmem:[%s274 + $0x178] sm:$0xff]
      %v323 = vld [vmem:[%s274 + $0x180] sm:$0xff]
      %v324 = vld [vmem:[%s274 + $0x188] sm:$0xff]
      %v325 = vld [vmem:[%s274 + $0x190] sm:$0xff]
      %v326 = vld [vmem:[%s274 + $0x198] sm:$0xff]
      %v327 = vld [vmem:[%s274 + $0x1a0] sm:$0xff]
      %v328 = vld [vmem:[%s274 + $0x1a8] sm:$0xff]
      %v329 = vld [vmem:[%s274 + $0x1b0] sm:$0xff]
      %v330 = vld [vmem:[%s274 + $0x1b8] sm:$0xff]
      %v331 = vld [vmem:[%s274 + $0x1c0] sm:$0xff]
      %v332 = vld [vmem:[%s274 + $0x1c8] sm:$0xff]
      %v333 = vld [vmem:[%s274 + $0x1d0] sm:$0xff]
      %v334 = vld [vmem:[%s274 + $0x1d8] sm:$0xff]
      %v335 = vld [vmem:[%s274 + $0x1e0] sm:$0xff]
      %v336 = vld [vmem:[%s274 + $0x1e8] sm:$0xff]
      %v337 = vld [vmem:[%s274 + $0x1f0] sm:$0xff]
      %v338 = vld [vmem:[%s274 + $0x1f8] sm:$0xff]
      %v339 = vld [vmem:[%s274 + $0x200] sm:$0xff]
      %v340 = vld [vmem:[%s274 + $0x208] sm:$0xff]
      %v341 = vld [vmem:[%s274 + $0x210] sm:$0xff]
      %v342 = vld [vmem:[%s274 + $0x218] sm:$0xff]
      %v343 = vld [vmem:[%s274 + $0x220] sm:$0xff]
      %v344 = vld [vmem:[%s274 + $0x228] sm:$0xff]
      %v345 = vld [vmem:[%s274 + $0x230] sm:$0xff]
      %v346 = vld [vmem:[%s274 + $0x238] sm:$0xff]
      %v347 = vld [vmem:[%s274 + $0x240] sm:$0xff]
      %v348 = vld [vmem:[%s274 + $0x248] sm:$0xff]
      %v349 = vld [vmem:[%s274 + $0x250] sm:$0xff]
      %v350 = vld [vmem:[%s274 + $0x258] sm:$0xff]
      %v351 = vld [vmem:[%s274 + $0x260] sm:$0xff]
      %v352 = vld [vmem:[%s274 + $0x268] sm:$0xff]
      %v353 = vld [vmem:[%s274 + $0x270] sm:$0xff]
      %v354 = vld [vmem:[%s274 + $0x278] sm:$0xff]
      %v355 = vld [vmem:[%s274 + $0x280] sm:$0xff]
      %v356 = vld [vmem:[%s274 + $0x288] sm:$0xff]
      %v357 = vld [vmem:[%s274 + $0x290] sm:$0xff]
      %v358 = vld [vmem:[%s274 + $0x298] sm:$0xff]
      %v359 = vld [vmem:[%s274 + $0x2a0] sm:$0xff]
      %v360 = vld [vmem:[%s274 + $0x2a8] sm:$0xff]
      %v361 = vld [vmem:[%s274 + $0x2b0] sm:$0xff]
      %v362 = vld [vmem:[%s274 + $0x2b8] sm:$0xff]
      %v363 = vld [vmem:[%s274 + $0x2c0] sm:$0xff]
      %v364 = vld [vmem:[%s274 + $0x2c8] sm:$0xff]
      %v365 = vld [vmem:[%s274 + $0x2d0] sm:$0xff]
      %v366 = vld [vmem:[%s274 + $0x2d8] sm:$0xff]
      %v367 = vld [vmem:[%s274 + $0x2e0] sm:$0xff]
      %v368 = vld [vmem:[%s274 + $0x2e8] sm:$0xff]
      %v369 = vld [vmem:[%s274 + $0x2f0] sm:$0xff]
      %v370 = vld [vmem:[%s274 + $0x2f8] sm:$0xff]
      %v371 = vld [vmem:[%s274 + $0x300] sm:$0xff]
      %v372 = vld [vmem:[%s274 + $0x308] sm:$0xff]
      %v373 = vld [vmem:[%s274 + $0x310] sm:$0xff]
      %v374 = vld [vmem:[%s274 + $0x318] sm:$0xff]
      %v375 = vld [vmem:[%s274 + $0x320] sm:$0xff]
      %v376 = vld [vmem:[%s274 + $0x328] sm:$0xff]
      %v377 = vld [vmem:[%s274 + $0x330] sm:$0xff]
      %v378 = vld [vmem:[%s274 + $0x338] sm:$0xff]
      %v379 = vld [vmem:[%s274 + $0x340] sm:$0xff]
      %v380 = vld [vmem:[%s274 + $0x348] sm:$0xff]
      %v381 = vld [vmem:[%s274 + $0x350] sm:$0xff]
      %v382 = vld [vmem:[%s274 + $0x358] sm:$0xff]
      %v383 = vld [vmem:[%s274 + $0x360] sm:$0xff]
      %v384 = vld [vmem:[%s274 + $0x368] sm:$0xff]
      %v385 = vld [vmem:[%s274 + $0x370] sm:$0xff]
      %v386 = vld [vmem:[%s274 + $0x378] sm:$0xff]
      %v387 = vld [vmem:[%s274 + $0x380] sm:$0xff]
      %v388 = vld [vmem:[%s274 + $0x388] sm:$0xff]
      %v389 = vld [vmem:[%s274 + $0x390] sm:$0xff]
      %v390 = vld [vmem:[%s274 + $0x398] sm:$0xff]
      %v391 = vld [vmem:[%s274 + $0x3a0] sm:$0xff]
      %v392 = vld [vmem:[%s274 + $0x3a8] sm:$0xff]
      %v393 = vld [vmem:[%s274 + $0x3b0] sm:$0xff]
      %v394 = vld [vmem:[%s274 + $0x3b8] sm:$0xff]
      %v395 = vld [vmem:[%s274 + $0x3c0] sm:$0xff]
      %v396 = vld [vmem:[%s274 + $0x3c8] sm:$0xff]
      %v397 = vld [vmem:[%s274 + $0x3d0] sm:$0xff]
      %v398 = vld [vmem:[%s274 + $0x3d8] sm:$0xff]
      %v399 = vld [vmem:[%s274 + $0x3e0] sm:$0xff]
      %v400 = vld [vmem:[%s274 + $0x3e8] sm:$0xff]
      %v401 = vld [vmem:[%s274 + $0x3f0] sm:$0xff]
      %v402 = vld [vmem:[%s274 + $0x3f8] sm:$0xff]
      %v531 = vunpack.c.l.b16 %v275
      %v532 = vunpack.c.h.b16 %v275
      %v533 = vunpack.c.l.b16 %v276
      %v534 = vunpack.c.h.b16 %v276
      %v535 = vunpack.c.l.b16 %v277
      %v536 = vunpack.c.h.b16 %v277
      %v537 = vunpack.c.l.b16 %v278
      %v538 = vunpack.c.h.b16 %v278
      %v539 = vunpack.c.l.b16 %v279
      %v540 = vunpack.c.h.b16 %v279
      %v541 = vunpack.c.l.b16 %v280
      %v542 = vunpack.c.h.b16 %v280
      %v543 = vunpack.c.l.b16 %v281
      %v544 = vunpack.c.h.b16 %v281
      %v545 = vunpack.c.l.b16 %v282
      %v546 = vunpack.c.h.b16 %v282
      %v547 = vunpack.c.l.b16 %v283
      %v548 = vunpack.c.h.b16 %v283
      %v549 = vunpack.c.l.b16 %v284
      %v550 = vunpack.c.h.b16 %v284
      %v551 = vunpack.c.l.b16 %v285
      %v552 = vunpack.c.h.b16 %v285
      %v553 = vunpack.c.l.b16 %v286
      %v554 = vunpack.c.h.b16 %v286
      %v555 = vunpack.c.l.b16 %v287
      %v556 = vunpack.c.h.b16 %v287
      %v557 = vunpack.c.l.b16 %v288
      %v558 = vunpack.c.h.b16 %v288
      %v559 = vunpack.c.l.b16 %v289
      %v560 = vunpack.c.h.b16 %v289
      %v561 = vunpack.c.l.b16 %v290
      %v562 = vunpack.c.h.b16 %v290
      %v563 = vunpack.c.l.b16 %v291
      %v564 = vunpack.c.h.b16 %v291
      %v565 = vunpack.c.l.b16 %v292
      %v566 = vunpack.c.h.b16 %v292
      %v567 = vunpack.c.l.b16 %v293
      %v568 = vunpack.c.h.b16 %v293
      %v569 = vunpack.c.l.b16 %v294
      %v570 = vunpack.c.h.b16 %v294
      %v571 = vunpack.c.l.b16 %v295
      %v572 = vunpack.c.h.b16 %v295
      %v573 = vunpack.c.l.b16 %v296
      %v574 = vunpack.c.h.b16 %v296
      %v575 = vunpack.c.l.b16 %v297
      %v576 = vunpack.c.h.b16 %v297
      %v577 = vunpack.c.l.b16 %v298
      %v578 = vunpack.c.h.b16 %v298
      %v579 = vunpack.c.l.b16 %v299
      %v580 = vunpack.c.h.b16 %v299
      %v581 = vunpack.c.l.b16 %v300
      %v582 = vunpack.c.h.b16 %v300
      %v583 = vunpack.c.l.b16 %v301
      %v584 = vunpack.c.h.b16 %v301
      %v585 = vunpack.c.l.b16 %v302
      %v586 = vunpack.c.h.b16 %v302
      %v587 = vunpack.c.l.b16 %v303
      %v588 = vunpack.c.h.b16 %v303
      %v589 = vunpack.c.l.b16 %v304
      %v590 = vunpack.c.h.b16 %v304
      %v591 = vunpack.c.l.b16 %v305
      %v592 = vunpack.c.h.b16 %v305
      %v593 = vunpack.c.l.b16 %v306
      %v594 = vunpack.c.h.b16 %v306
      %v595 = vunpack.c.l.b16 %v307
      %v596 = vunpack.c.h.b16 %v307
      %v597 = vunpack.c.l.b16 %v308
      %v598 = vunpack.c.h.b16 %v308
      %v599 = vunpack.c.l.b16 %v309
      %v600 = vunpack.c.h.b16 %v309
      %v601 = vunpack.c.l.b16 %v310
      %v602 = vunpack.c.h.b16 %v310
      %v603 = vunpack.c.l.b16 %v311
      %v604 = vunpack.c.h.b16 %v311
      %v605 = vunpack.c.l.b16 %v312
      %v606 = vunpack.c.h.b16 %v312
      %v607 = vunpack.c.l.b16 %v313
      %v608 = vunpack.c.h.b16 %v313
      %v609 = vunpack.c.l.b16 %v314
      %v610 = vunpack.c.h.b16 %v314
      %v611 = vunpack.c.l.b16 %v315
      %v612 = vunpack.c.h.b16 %v315
      %v613 = vunpack.c.l.b16 %v316
      %v614 = vunpack.c.h.b16 %v316
      %v615 = vunpack.c.l.b16 %v317
      %v616 = vunpack.c.h.b16 %v317
      %v617 = vunpack.c.l.b16 %v318
      %v618 = vunpack.c.h.b16 %v318
      %v619 = vunpack.c.l.b16 %v319
      %v620 = vunpack.c.h.b16 %v319
      %v621 = vunpack.c.l.b16 %v320
      %v622 = vunpack.c.h.b16 %v320
      %v623 = vunpack.c.l.b16 %v321
      %v624 = vunpack.c.h.b16 %v321
      %v625 = vunpack.c.l.b16 %v322
      %v626 = vunpack.c.h.b16 %v322
      %v627 = vunpack.c.l.b16 %v323
      %v628 = vunpack.c.h.b16 %v323
      %v629 = vunpack.c.l.b16 %v324
      %v630 = vunpack.c.h.b16 %v324
      %v631 = vunpack.c.l.b16 %v325
      %v632 = vunpack.c.h.b16 %v325
      %v633 = vunpack.c.l.b16 %v326
      %v634 = vunpack.c.h.b16 %v326
      %v635 = vunpack.c.l.b16 %v327
      %v636 = vunpack.c.h.b16 %v327
      %v637 = vunpack.c.l.b16 %v328
      %v638 = vunpack.c.h.b16 %v328
      %v639 = vunpack.c.l.b16 %v329
      %v640 = vunpack.c.h.b16 %v329
      %v641 = vunpack.c.l.b16 %v330
      %v642 = vunpack.c.h.b16 %v330
      %v643 = vunpack.c.l.b16 %v331
      %v644 = vunpack.c.h.b16 %v331
      %v645 = vunpack.c.l.b16 %v332
      %v646 = vunpack.c.h.b16 %v332
      %v647 = vunpack.c.l.b16 %v333
      %v648 = vunpack.c.h.b16 %v333
      %v649 = vunpack.c.l.b16 %v334
      %v650 = vunpack.c.h.b16 %v334
      %v651 = vunpack.c.l.b16 %v335
      %v652 = vunpack.c.h.b16 %v335
      %v653 = vunpack.c.l.b16 %v336
      %v654 = vunpack.c.h.b16 %v336
      %v655 = vunpack.c.l.b16 %v337
      %v656 = vunpack.c.h.b16 %v337
      %v657 = vunpack.c.l.b16 %v338
      %v658 = vunpack.c.h.b16 %v338
      %v659 = vunpack.c.l.b16 %v339
      %v660 = vunpack.c.h.b16 %v339
      %v661 = vunpack.c.l.b16 %v340
      %v662 = vunpack.c.h.b16 %v340
      %v663 = vunpack.c.l.b16 %v341
      %v664 = vunpack.c.h.b16 %v341
      %v665 = vunpack.c.l.b16 %v342
      %v666 = vunpack.c.h.b16 %v342
      %v667 = vunpack.c.l.b16 %v343
      %v668 = vunpack.c.h.b16 %v343
      %v669 = vunpack.c.l.b16 %v344
      %v670 = vunpack.c.h.b16 %v344
      %v671 = vunpack.c.l.b16 %v345
      %v672 = vunpack.c.h.b16 %v345
      %v673 = vunpack.c.l.b16 %v346
      %v674 = vunpack.c.h.b16 %v346
      %v675 = vunpack.c.l.b16 %v347
      %v676 = vunpack.c.h.b16 %v347
      %v677 = vunpack.c.l.b16 %v348
      %v678 = vunpack.c.h.b16 %v348
      %v679 = vunpack.c.l.b16 %v349
      %v680 = vunpack.c.h.b16 %v349
      %v681 = vunpack.c.l.b16 %v350
      %v682 = vunpack.c.h.b16 %v350
      %v683 = vunpack.c.l.b16 %v351
      %v684 = vunpack.c.h.b16 %v351
      %v685 = vunpack.c.l.b16 %v352
      %v686 = vunpack.c.h.b16 %v352
      %v687 = vunpack.c.l.b16 %v353
      %v688 = vunpack.c.h.b16 %v353
      %v689 = vunpack.c.l.b16 %v354
      %v690 = vunpack.c.h.b16 %v354
      %v691 = vunpack.c.l.b16 %v355
      %v692 = vunpack.c.h.b16 %v355
      %v693 = vunpack.c.l.b16 %v356
      %v694 = vunpack.c.h.b16 %v356
      %v695 = vunpack.c.l.b16 %v357
      %v696 = vunpack.c.h.b16 %v357
      %v697 = vunpack.c.l.b16 %v358
      %v698 = vunpack.c.h.b16 %v358
      %v699 = vunpack.c.l.b16 %v359
      %v700 = vunpack.c.h.b16 %v359
      %v701 = vunpack.c.l.b16 %v360
      %v702 = vunpack.c.h.b16 %v360
      %v703 = vunpack.c.l.b16 %v361
      %v704 = vunpack.c.h.b16 %v361
      %v705 = vunpack.c.l.b16 %v362
      %v706 = vunpack.c.h.b16 %v362
      %v707 = vunpack.c.l.b16 %v363
      %v708 = vunpack.c.h.b16 %v363
      %v709 = vunpack.c.l.b16 %v364
      %v710 = vunpack.c.h.b16 %v364
      %v711 = vunpack.c.l.b16 %v365
      %v712 = vunpack.c.h.b16 %v365
      %v713 = vunpack.c.l.b16 %v366
      %v714 = vunpack.c.h.b16 %v366
      %v715 = vunpack.c.l.b16 %v367
      %v716 = vunpack.c.h.b16 %v367
      %v717 = vunpack.c.l.b16 %v368
      %v718 = vunpack.c.h.b16 %v368
      %v719 = vunpack.c.l.b16 %v369
      %v720 = vunpack.c.h.b16 %v369
      %v721 = vunpack.c.l.b16 %v370
      %v722 = vunpack.c.h.b16 %v370
      %v723 = vunpack.c.l.b16 %v371
      %v724 = vunpack.c.h.b16 %v371
      %v725 = vunpack.c.l.b16 %v372
      %v726 = vunpack.c.h.b16 %v372
      %v727 = vunpack.c.l.b16 %v373
      %v728 = vunpack.c.h.b16 %v373
      %v729 = vunpack.c.l.b16 %v374
      %v730 = vunpack.c.h.b16 %v374
      %v731 = vunpack.c.l.b16 %v375
      %v732 = vunpack.c.h.b16 %v375
      %v733 = vunpack.c.l.b16 %v376
      %v734 = vunpack.c.h.b16 %v376
      %v735 = vunpack.c.l.b16 %v377
      %v736 = vunpack.c.h.b16 %v377
      %v737 = vunpack.c.l.b16 %v378
      %v738 = vunpack.c.h.b16 %v378
      %v739 = vunpack.c.l.b16 %v379
      %v740 = vunpack.c.h.b16 %v379
      %v741 = vunpack.c.l.b16 %v380
      %v742 = vunpack.c.h.b16 %v380
      %v743 = vunpack.c.l.b16 %v381
      %v744 = vunpack.c.h.b16 %v381
      %v745 = vunpack.c.l.b16 %v382
      %v746 = vunpack.c.h.b16 %v382
      %v747 = vunpack.c.l.b16 %v383
      %v748 = vunpack.c.h.b16 %v383
      %v749 = vunpack.c.l.b16 %v384
      %v750 = vunpack.c.h.b16 %v384
      %v751 = vunpack.c.l.b16 %v385
      %v752 = vunpack.c.h.b16 %v385
      %v753 = vunpack.c.l.b16 %v386
      %v754 = vunpack.c.h.b16 %v386
      %v755 = vunpack.c.l.b16 %v387
      %v756 = vunpack.c.h.b16 %v387
      %v757 = vunpack.c.l.b16 %v388
      %v758 = vunpack.c.h.b16 %v388
      %v759 = vunpack.c.l.b16 %v389
      %v760 = vunpack.c.h.b16 %v389
      %v761 = vunpack.c.l.b16 %v390
      %v762 = vunpack.c.h.b16 %v390
      %v763 = vunpack.c.l.b16 %v391
      %v764 = vunpack.c.h.b16 %v391
      %v765 = vunpack.c.l.b16 %v392
      %v766 = vunpack.c.h.b16 %v392
      %v767 = vunpack.c.l.b16 %v393
      %v768 = vunpack.c.h.b16 %v393
      %v769 = vunpack.c.l.b16 %v394
      %v770 = vunpack.c.h.b16 %v394
      %v771 = vunpack.c.l.b16 %v395
      %v772 = vunpack.c.h.b16 %v395
      %v773 = vunpack.c.l.b16 %v396
      %v774 = vunpack.c.h.b16 %v396
      %v775 = vunpack.c.l.b16 %v397
      %v776 = vunpack.c.h.b16 %v397
      %v777 = vunpack.c.l.b16 %v398
      %v778 = vunpack.c.h.b16 %v398
      %v779 = vunpack.c.l.b16 %v399
      %v780 = vunpack.c.h.b16 %v399
      %v781 = vunpack.c.l.b16 %v400
      %v782 = vunpack.c.h.b16 %v400
      %v783 = vunpack.c.l.b16 %v401
      %v784 = vunpack.c.h.b16 %v401
      %v785 = vunpack.c.l.b16 %v402
      %v786 = vunpack.c.h.b16 %v402
      %v787 = vpack.c.b16 %v535, %v531
      %v788 = vpack.c.b16 %v536, %v532
      %v789 = vpack.c.b16 %v537, %v533
      %v790 = vpack.c.b16 %v538, %v534
      %v791 = vpack.c.b16 %v543, %v539
      %v792 = vpack.c.b16 %v544, %v540
      %v793 = vpack.c.b16 %v545, %v541
      %v794 = vpack.c.b16 %v546, %v542
      %v795 = vpack.c.b16 %v551, %v547
      %v796 = vpack.c.b16 %v552, %v548
      %v797 = vpack.c.b16 %v553, %v549
      %v798 = vpack.c.b16 %v554, %v550
      %v799 = vpack.c.b16 %v559, %v555
      %v800 = vpack.c.b16 %v560, %v556
      %v801 = vpack.c.b16 %v561, %v557
      %v802 = vpack.c.b16 %v562, %v558
      %v803 = vpack.c.b16 %v567, %v563
      %v804 = vpack.c.b16 %v568, %v564
      %v805 = vpack.c.b16 %v569, %v565
      %v806 = vpack.c.b16 %v570, %v566
      %v807 = vpack.c.b16 %v575, %v571
      %v808 = vpack.c.b16 %v576, %v572
      %v809 = vpack.c.b16 %v577, %v573
      %v810 = vpack.c.b16 %v578, %v574
      %v811 = vpack.c.b16 %v583, %v579
      %v812 = vpack.c.b16 %v584, %v580
      %v813 = vpack.c.b16 %v585, %v581
      %v814 = vpack.c.b16 %v586, %v582
      %v815 = vpack.c.b16 %v591, %v587
      %v816 = vpack.c.b16 %v592, %v588
      %v817 = vpack.c.b16 %v593, %v589
      %v818 = vpack.c.b16 %v594, %v590
      %v819 = vpack.c.b16 %v599, %v595
      %v820 = vpack.c.b16 %v600, %v596
      %v821 = vpack.c.b16 %v601, %v597
      %v822 = vpack.c.b16 %v602, %v598
      %v823 = vpack.c.b16 %v607, %v603
      %v824 = vpack.c.b16 %v608, %v604
      %v825 = vpack.c.b16 %v609, %v605
      %v826 = vpack.c.b16 %v610, %v606
      %v827 = vpack.c.b16 %v615, %v611
      %v828 = vpack.c.b16 %v616, %v612
      %v829 = vpack.c.b16 %v617, %v613
      %v830 = vpack.c.b16 %v618, %v614
      %v831 = vpack.c.b16 %v623, %v619
      %v832 = vpack.c.b16 %v624, %v620
      %v833 = vpack.c.b16 %v625, %v621
      %v834 = vpack.c.b16 %v626, %v622
      %v835 = vpack.c.b16 %v631, %v627
      %v836 = vpack.c.b16 %v632, %v628
      %v837 = vpack.c.b16 %v633, %v629
      %v838 = vpack.c.b16 %v634, %v630
      %v839 = vpack.c.b16 %v639, %v635
      %v840 = vpack.c.b16 %v640, %v636
      %v841 = vpack.c.b16 %v641, %v637
      %v842 = vpack.c.b16 %v642, %v638
      %v843 = vpack.c.b16 %v647, %v643
      %v844 = vpack.c.b16 %v648, %v644
      %v845 = vpack.c.b16 %v649, %v645
      %v846 = vpack.c.b16 %v650, %v646
      %v847 = vpack.c.b16 %v655, %v651
      %v848 = vpack.c.b16 %v656, %v652
      %v849 = vpack.c.b16 %v657, %v653
      %v850 = vpack.c.b16 %v658, %v654
      %v851 = vpack.c.b16 %v663, %v659
      %v852 = vpack.c.b16 %v664, %v660
      %v853 = vpack.c.b16 %v665, %v661
      %v854 = vpack.c.b16 %v666, %v662
      %v855 = vpack.c.b16 %v671, %v667
      %v856 = vpack.c.b16 %v672, %v668
      %v857 = vpack.c.b16 %v673, %v669
      %v858 = vpack.c.b16 %v674, %v670
      %v859 = vpack.c.b16 %v679, %v675
      %v860 = vpack.c.b16 %v680, %v676
      %v861 = vpack.c.b16 %v681, %v677
      %v862 = vpack.c.b16 %v682, %v678
      %v863 = vpack.c.b16 %v687, %v683
      %v864 = vpack.c.b16 %v688, %v684
      %v865 = vpack.c.b16 %v689, %v685
      %v866 = vpack.c.b16 %v690, %v686
      %v867 = vpack.c.b16 %v695, %v691
      %v868 = vpack.c.b16 %v696, %v692
      %v869 = vpack.c.b16 %v697, %v693
      %v870 = vpack.c.b16 %v698, %v694
      %v871 = vpack.c.b16 %v703, %v699
      %v872 = vpack.c.b16 %v704, %v700
      %v873 = vpack.c.b16 %v705, %v701
      %v874 = vpack.c.b16 %v706, %v702
      %v875 = vpack.c.b16 %v711, %v707
      %v876 = vpack.c.b16 %v712, %v708
      %v877 = vpack.c.b16 %v713, %v709
      %v878 = vpack.c.b16 %v714, %v710
      %v879 = vpack.c.b16 %v719, %v715
      %v880 = vpack.c.b16 %v720, %v716
      %v881 = vpack.c.b16 %v721, %v717
      %v882 = vpack.c.b16 %v722, %v718
      %v883 = vpack.c.b16 %v727, %v723
      %v884 = vpack.c.b16 %v728, %v724
      %v885 = vpack.c.b16 %v729, %v725
      %v886 = vpack.c.b16 %v730, %v726
      %v887 = vpack.c.b16 %v735, %v731
      %v888 = vpack.c.b16 %v736, %v732
      %v889 = vpack.c.b16 %v737, %v733
      %v890 = vpack.c.b16 %v738, %v734
      %v891 = vpack.c.b16 %v743, %v739
      %v892 = vpack.c.b16 %v744, %v740
      %v893 = vpack.c.b16 %v745, %v741
      %v894 = vpack.c.b16 %v746, %v742
      %v895 = vpack.c.b16 %v751, %v747
      %v896 = vpack.c.b16 %v752, %v748
      %v897 = vpack.c.b16 %v753, %v749
      %v898 = vpack.c.b16 %v754, %v750
      %v899 = vpack.c.b16 %v759, %v755
      %v900 = vpack.c.b16 %v760, %v756
      %v901 = vpack.c.b16 %v761, %v757
      %v902 = vpack.c.b16 %v762, %v758
      %v903 = vpack.c.b16 %v767, %v763
      %v904 = vpack.c.b16 %v768, %v764
      %v905 = vpack.c.b16 %v769, %v765
      %v906 = vpack.c.b16 %v770, %v766
      %v907 = vpack.c.b16 %v775, %v771
      %v908 = vpack.c.b16 %v776, %v772
      %v909 = vpack.c.b16 %v777, %v773
      %v910 = vpack.c.b16 %v778, %v774
      %v911 = vpack.c.b16 %v783, %v779
      %v912 = vpack.c.b16 %v784, %v780
      %v913 = vpack.c.b16 %v785, %v781
      %v914 = vpack.c.b16 %v786, %v782
      %1043 = vmatpush.bf16.msra.mxu0 %v815
      %1044 = vmatpush.bf16.msra.mxu0 %v811
      %1045 = vmatpush.bf16.msra.mxu0 %v807
      %1046 = vmatpush.bf16.msra.mxu0 %v803
      %1047 = vmatpush.bf16.msra.mxu0 %v799
      %1048 = vmatpush.bf16.msra.mxu0 %v795
      %1049 = vmatpush.bf16.msra.mxu0 %v791
      %1050 = vmatpush.bf16.msra.mxu0 %v787
      %1051 = vmatmul.bf16.gmra.mxu0 %v270
      %v1052 = vpop.f32.mrf.mxu0
      %v1053 = vadd.f32 0.0, %v1052
      %v1054 = vpop.f32.mrf.mxu0
      %1055 = vdwg.mxu0
      %1056 = vmatpush.bf16.msra.mxu0 %v847
      %1057 = vmatpush.bf16.msra.mxu0 %v843
      %1058 = vmatpush.bf16.msra.mxu0 %v839
      %1059 = vmatpush.bf16.msra.mxu0 %v835
      %1060 = vmatpush.bf16.msra.mxu0 %v831
      %1061 = vmatpush.bf16.msra.mxu0 %v827
      %1062 = vmatpush.bf16.msra.mxu0 %v823
      %1063 = vmatpush.bf16.msra.mxu0 %v819
      %1064 = vmatmul.bf16.gmra.mxu0 %v271
      %v1065 = vpop.f32.mrf.mxu0
      %v1066 = vadd.f32 %v1053, %v1065
      %v1067 = vpop.f32.mrf.mxu0
      %1068 = vdwg.mxu0
      %1069 = vmatpush.bf16.msra.mxu0 %v879
      %1070 = vmatpush.bf16.msra.mxu0 %v875
      %1071 = vmatpush.bf16.msra.mxu0 %v871
      %1072 = vmatpush.bf16.msra.mxu0 %v867
      %1073 = vmatpush.bf16.msra.mxu0 %v863
      %1074 = vmatpush.bf16.msra.mxu0 %v859
      %1075 = vmatpush.bf16.msra.mxu0 %v855
      %1076 = vmatpush.bf16.msra.mxu0 %v851
      %1077 = vmatmul.bf16.gmra.mxu0 %v272
      %v1078 = vpop.f32.mrf.mxu0
      %v1079 = vadd.f32 %v1066, %v1078
      %v1080 = vpop.f32.mrf.mxu0
      %1081 = vdwg.mxu0
      %1082 = vmatpush.bf16.msra.mxu0 %v911
      %1083 = vmatpush.bf16.msra.mxu0 %v907
      %1084 = vmatpush.bf16.msra.mxu0 %v903
      %1085 = vmatpush.bf16.msra.mxu0 %v899
      %1086 = vmatpush.bf16.msra.mxu0 %v895
      %1087 = vmatpush.bf16.msra.mxu0 %v891
      %1088 = vmatpush.bf16.msra.mxu0 %v887
      %1089 = vmatpush.bf16.msra.mxu0 %v883
      %1090 = vmatmul.bf16.gmra.mxu0 %v273
      %v1091 = vpop.f32.mrf.mxu0
      %v1092 = vadd.f32 %v1079, %v1091
      %v1093 = vpop.f32.mrf.mxu0
      %1094 = vdwg.mxu0
      %1095 = vmatpush.bf16.msra.mxu0 %v816
      %1096 = vmatpush.bf16.msra.mxu0 %v812
      %1097 = vmatpush.bf16.msra.mxu0 %v808
      %1098 = vmatpush.bf16.msra.mxu0 %v804
      %1099 = vmatpush.bf16.msra.mxu0 %v800
      %1100 = vmatpush.bf16.msra.mxu0 %v796
      %1101 = vmatpush.bf16.msra.mxu0 %v792
      %1102 = vmatpush.bf16.msra.mxu0 %v788
      %1103 = vmatmul.bf16.gmra.mxu0 %v270
      %v1104 = vpop.f32.mrf.mxu0
      %v1105 = vadd.f32 0.0, %v1104
      %v1106 = vpop.f32.mrf.mxu0
      %1107 = vdwg.mxu0
      %1108 = vmatpush.bf16.msra.mxu0 %v848
      %1109 = vmatpush.bf16.msra.mxu0 %v844
      %1110 = vmatpush.bf16.msra.mxu0 %v840
      %1111 = vmatpush.bf16.msra.mxu0 %v836
      %1112 = vmatpush.bf16.msra.mxu0 %v832
      %1113 = vmatpush.bf16.msra.mxu0 %v828
      %1114 = vmatpush.bf16.msra.mxu0 %v824
      %1115 = vmatpush.bf16.msra.mxu0 %v820
      %1116 = vmatmul.bf16.gmra.mxu0 %v271
      %v1117 = vpop.f32.mrf.mxu0
      %v1118 = vadd.f32 %v1105, %v1117
      %v1119 = vpop.f32.mrf.mxu0
      %1120 = vdwg.mxu0
      %1121 = vmatpush.bf16.msra.mxu0 %v880
      %1122 = vmatpush.bf16.msra.mxu0 %v876
      %1123 = vmatpush.bf16.msra.mxu0 %v872
      %1124 = vmatpush.bf16.msra.mxu0 %v868
      %1125 = vmatpush.bf16.msra.mxu0 %v864
      %1126 = vmatpush.bf16.msra.mxu0 %v860
      %1127 = vmatpush.bf16.msra.mxu0 %v856
      %1128 = vmatpush.bf16.msra.mxu0 %v852
      %1129 = vmatmul.bf16.gmra.mxu0 %v272
      %v1130 = vpop.f32.mrf.mxu0
      %v1131 = vadd.f32 %v1118, %v1130
      %v1132 = vpop.f32.mrf.mxu0
      %1133 = vdwg.mxu0
      %1134 = vmatpush.bf16.msra.mxu0 %v912
      %1135 = vmatpush.bf16.msra.mxu0 %v908
      %1136 = vmatpush.bf16.msra.mxu0 %v904
      %1137 = vmatpush.bf16.msra.mxu0 %v900
      %1138 = vmatpush.bf16.msra.mxu0 %v896
      %1139 = vmatpush.bf16.msra.mxu0 %v892
      %1140 = vmatpush.bf16.msra.mxu0 %v888
      %1141 = vmatpush.bf16.msra.mxu0 %v884
      %1142 = vmatmul.bf16.gmra.mxu0 %v273
      %v1143 = vpop.f32.mrf.mxu0
      %v1144 = vadd.f32 %v1131, %v1143
      %v1145 = vpop.f32.mrf.mxu0
      %1146 = vdwg.mxu0
      %1147 = vmatpush.bf16.msra.mxu0 %v817
      %1148 = vmatpush.bf16.msra.mxu0 %v813
      %1149 = vmatpush.bf16.msra.mxu0 %v809
      %1150 = vmatpush.bf16.msra.mxu0 %v805
      %1151 = vmatpush.bf16.msra.mxu0 %v801
      %1152 = vmatpush.bf16.msra.mxu0 %v797
      %1153 = vmatpush.bf16.msra.mxu0 %v793
      %1154 = vmatpush.bf16.msra.mxu0 %v789
      %1155 = vmatmul.bf16.gmra.mxu0 %v270
      %v1156 = vpop.f32.mrf.mxu0
      %v1157 = vadd.f32 0.0, %v1156
      %v1158 = vpop.f32.mrf.mxu0
      %1159 = vdwg.mxu0
      %1160 = vmatpush.bf16.msra.mxu0 %v849
      %1161 = vmatpush.bf16.msra.mxu0 %v845
      %1162 = vmatpush.bf16.msra.mxu0 %v841
      %1163 = vmatpush.bf16.msra.mxu0 %v837
      %1164 = vmatpush.bf16.msra.mxu0 %v833
      %1165 = vmatpush.bf16.msra.mxu0 %v829
      %1166 = vmatpush.bf16.msra.mxu0 %v825
      %1167 = vmatpush.bf16.msra.mxu0 %v821
      %1168 = vmatmul.bf16.gmra.mxu0 %v271
      %v1169 = vpop.f32.mrf.mxu0
      %v1170 = vadd.f32 %v1157, %v1169
      %v1171 = vpop.f32.mrf.mxu0
      %1172 = vdwg.mxu0
      %1173 = vmatpush.bf16.msra.mxu0 %v881
      %1174 = vmatpush.bf16.msra.mxu0 %v877
      %1175 = vmatpush.bf16.msra.mxu0 %v873
      %1176 = vmatpush.bf16.msra.mxu0 %v869
      %1177 = vmatpush.bf16.msra.mxu0 %v865
      %1178 = vmatpush.bf16.msra.mxu0 %v861
      %1179 = vmatpush.bf16.msra.mxu0 %v857
      %1180 = vmatpush.bf16.msra.mxu0 %v853
      %1181 = vmatmul.bf16.gmra.mxu0 %v272
      %v1182 = vpop.f32.mrf.mxu0
      %v1183 = vadd.f32 %v1170, %v1182
      %v1184 = vpop.f32.mrf.mxu0
      %1185 = vdwg.mxu0
      %1186 = vmatpush.bf16.msra.mxu0 %v913
      %1187 = vmatpush.bf16.msra.mxu0 %v909
      %1188 = vmatpush.bf16.msra.mxu0 %v905
      %1189 = vmatpush.bf16.msra.mxu0 %v901
      %1190 = vmatpush.bf16.msra.mxu0 %v897
      %1191 = vmatpush.bf16.msra.mxu0 %v893
      %1192 = vmatpush.bf16.msra.mxu0 %v889
      %1193 = vmatpush.bf16.msra.mxu0 %v885
      %1194 = vmatmul.bf16.gmra.mxu0 %v273
      %v1195 = vpop.f32.mrf.mxu0
      %v1196 = vadd.f32 %v1183, %v1195
      %v1197 = vpop.f32.mrf.mxu0
      %1198 = vdwg.mxu0
      %1199 = vmatpush.bf16.msra.mxu0 %v818
      %1200 = vmatpush.bf16.msra.mxu0 %v814
      %1201 = vmatpush.bf16.msra.mxu0 %v810
      %1202 = vmatpush.bf16.msra.mxu0 %v806
      %1203 = vmatpush.bf16.msra.mxu0 %v802
      %1204 = vmatpush.bf16.msra.mxu0 %v798
      %1205 = vmatpush.bf16.msra.mxu0 %v794
      %1206 = vmatpush.bf16.msra.mxu0 %v790
      %1207 = vmatmul.bf16.gmra.mxu0 %v270
      %v1208 = vpop.f32.mrf.mxu0
      %v1209 = vadd.f32 0.0, %v1208
      %v1210 = vpop.f32.mrf.mxu0
      %1211 = vdwg.mxu0
      %1212 = vmatpush.bf16.msra.mxu0 %v850
      %1213 = vmatpush.bf16.msra.mxu0 %v846
      %1214 = vmatpush.bf16.msra.mxu0 %v842
      %1215 = vmatpush.bf16.msra.mxu0 %v838
      %1216 = vmatpush.bf16.msra.mxu0 %v834
      %1217 = vmatpush.bf16.msra.mxu0 %v830
      %1218 = vmatpush.bf16.msra.mxu0 %v826
      %1219 = vmatpush.bf16.msra.mxu0 %v822
      %1220 = vmatmul.bf16.gmra.mxu0 %v271
      %v1221 = vpop.f32.mrf.mxu0
      %v1222 = vadd.f32 %v1209, %v1221
      %v1223 = vpop.f32.mrf.mxu0
      %1224 = vdwg.mxu0
      %1225 = vmatpush.bf16.msra.mxu0 %v882
      %1226 = vmatpush.bf16.msra.mxu0 %v878
      %1227 = vmatpush.bf16.msra.mxu0 %v874
      %1228 = vmatpush.bf16.msra.mxu0 %v870
      %1229 = vmatpush.bf16.msra.mxu0 %v866
      %1230 = vmatpush.bf16.msra.mxu0 %v862
      %1231 = vmatpush.bf16.msra.mxu0 %v858
      %1232 = vmatpush.bf16.msra.mxu0 %v854
      %1233 = vmatmul.bf16.gmra.mxu0 %v272
      %v1234 = vpop.f32.mrf.mxu0
      %v1235 = vadd.f32 %v1222, %v1234
      %v1236 = vpop.f32.mrf.mxu0
      %1237 = vdwg.mxu0
      %1238 = vmatpush.bf16.msra.mxu0 %v914
      %1239 = vmatpush.bf16.msra.mxu0 %v910
      %1240 = vmatpush.bf16.msra.mxu0 %v906
      %1241 = vmatpush.bf16.msra.mxu0 %v902
      %1242 = vmatpush.bf16.msra.mxu0 %v898
      %1243 = vmatpush.bf16.msra.mxu0 %v894
      %1244 = vmatpush.bf16.msra.mxu0 %v890
      %1245 = vmatpush.bf16.msra.mxu0 %v886
      %1246 = vmatmul.bf16.gmra.mxu0 %v273
      %v1247 = vpop.f32.mrf.mxu0
      %v1248 = vadd.f32 %v1235, %v1247
      %v1249 = vpop.f32.mrf.mxu0
      %1250 = vdwg.mxu0
      %v1379 = vunpack.c.l.b16 %v114
      %v1380 = vunpack.c.h.b16 %v114
      %v1381 = vunpack.c.l.b16 %v115
      %v1382 = vunpack.c.h.b16 %v115
      %v1383 = vunpack.c.l.b16 %v116
      %v1384 = vunpack.c.h.b16 %v116
      %v1385 = vunpack.c.l.b16 %v117
      %v1386 = vunpack.c.h.b16 %v117
      %v1387 = vunpack.c.l.b16 %v118
      %v1388 = vunpack.c.h.b16 %v118
      %v1389 = vunpack.c.l.b16 %v119
      %v1390 = vunpack.c.h.b16 %v119
      %v1391 = vunpack.c.l.b16 %v120
      %v1392 = vunpack.c.h.b16 %v120
      %v1393 = vunpack.c.l.b16 %v121
      %v1394 = vunpack.c.h.b16 %v121
      %v1395 = vunpack.c.l.b16 %v122
      %v1396 = vunpack.c.h.b16 %v122
      %v1397 = vunpack.c.l.b16 %v123
      %v1398 = vunpack.c.h.b16 %v123
      %v1399 = vunpack.c.l.b16 %v124
      %v1400 = vunpack.c.h.b16 %v124
      %v1401 = vunpack.c.l.b16 %v125
      %v1402 = vunpack.c.h.b16 %v125
      %v1403 = vunpack.c.l.b16 %v126
      %v1404 = vunpack.c.h.b16 %v126
      %v1405 = vunpack.c.l.b16 %v127
      %v1406 = vunpack.c.h.b16 %v127
      %v1407 = vunpack.c.l.b16 %v128
      %v1408 = vunpack.c.h.b16 %v128
      %v1409 = vunpack.c.l.b16 %v129
      %v1410 = vunpack.c.h.b16 %v129
      %v1411 = vunpack.c.l.b16 %v130
      %v1412 = vunpack.c.h.b16 %v130
      %v1413 = vunpack.c.l.b16 %v131
      %v1414 = vunpack.c.h.b16 %v131
      %v1415 = vunpack.c.l.b16 %v132
      %v1416 = vunpack.c.h.b16 %v132
      %v1417 = vunpack.c.l.b16 %v133
      %v1418 = vunpack.c.h.b16 %v133
      %v1419 = vunpack.c.l.b16 %v134
      %v1420 = vunpack.c.h.b16 %v134
      %v1421 = vunpack.c.l.b16 %v135
      %v1422 = vunpack.c.h.b16 %v135
      %v1423 = vunpack.c.l.b16 %v136
      %v1424 = vunpack.c.h.b16 %v136
      %v1425 = vunpack.c.l.b16 %v137
      %v1426 = vunpack.c.h.b16 %v137
      %v1427 = vunpack.c.l.b16 %v138
      %v1428 = vunpack.c.h.b16 %v138
      %v1429 = vunpack.c.l.b16 %v139
      %v1430 = vunpack.c.h.b16 %v139
      %v1431 = vunpack.c.l.b16 %v140
      %v1432 = vunpack.c.h.b16 %v140
      %v1433 = vunpack.c.l.b16 %v141
      %v1434 = vunpack.c.h.b16 %v141
      %v1435 = vunpack.c.l.b16 %v142
      %v1436 = vunpack.c.h.b16 %v142
      %v1437 = vunpack.c.l.b16 %v143
      %v1438 = vunpack.c.h.b16 %v143
      %v1439 = vunpack.c.l.b16 %v144
      %v1440 = vunpack.c.h.b16 %v144
      %v1441 = vunpack.c.l.b16 %v145
      %v1442 = vunpack.c.h.b16 %v145
      %v1443 = vunpack.c.l.b16 %v146
      %v1444 = vunpack.c.h.b16 %v146
      %v1445 = vunpack.c.l.b16 %v147
      %v1446 = vunpack.c.h.b16 %v147
      %v1447 = vunpack.c.l.b16 %v148
      %v1448 = vunpack.c.h.b16 %v148
      %v1449 = vunpack.c.l.b16 %v149
      %v1450 = vunpack.c.h.b16 %v149
      %v1451 = vunpack.c.l.b16 %v150
      %v1452 = vunpack.c.h.b16 %v150
      %v1453 = vunpack.c.l.b16 %v151
      %v1454 = vunpack.c.h.b16 %v151
      %v1455 = vunpack.c.l.b16 %v152
      %v1456 = vunpack.c.h.b16 %v152
      %v1457 = vunpack.c.l.b16 %v153
      %v1458 = vunpack.c.h.b16 %v153
      %v1459 = vunpack.c.l.b16 %v154
      %v1460 = vunpack.c.h.b16 %v154
      %v1461 = vunpack.c.l.b16 %v155
      %v1462 = vunpack.c.h.b16 %v155
      %v1463 = vunpack.c.l.b16 %v156
      %v1464 = vunpack.c.h.b16 %v156
      %v1465 = vunpack.c.l.b16 %v157
      %v1466 = vunpack.c.h.b16 %v157
      %v1467 = vunpack.c.l.b16 %v158
      %v1468 = vunpack.c.h.b16 %v158
      %v1469 = vunpack.c.l.b16 %v159
      %v1470 = vunpack.c.h.b16 %v159
      %v1471 = vunpack.c.l.b16 %v160
      %v1472 = vunpack.c.h.b16 %v160
      %v1473 = vunpack.c.l.b16 %v161
      %v1474 = vunpack.c.h.b16 %v161
      %v1475 = vunpack.c.l.b16 %v162
      %v1476 = vunpack.c.h.b16 %v162
      %v1477 = vunpack.c.l.b16 %v163
      %v1478 = vunpack.c.h.b16 %v163
      %v1479 = vunpack.c.l.b16 %v164
      %v1480 = vunpack.c.h.b16 %v164
      %v1481 = vunpack.c.l.b16 %v165
      %v1482 = vunpack.c.h.b16 %v165
      %v1483 = vunpack.c.l.b16 %v166
      %v1484 = vunpack.c.h.b16 %v166
      %v1485 = vunpack.c.l.b16 %v167
      %v1486 = vunpack.c.h.b16 %v167
      %v1487 = vunpack.c.l.b16 %v168
      %v1488 = vunpack.c.h.b16 %v168
      %v1489 = vunpack.c.l.b16 %v169
      %v1490 = vunpack.c.h.b16 %v169
      %v1491 = vunpack.c.l.b16 %v170
      %v1492 = vunpack.c.h.b16 %v170
      %v1493 = vunpack.c.l.b16 %v171
      %v1494 = vunpack.c.h.b16 %v171
      %v1495 = vunpack.c.l.b16 %v172
      %v1496 = vunpack.c.h.b16 %v172
      %v1497 = vunpack.c.l.b16 %v173
      %v1498 = vunpack.c.h.b16 %v173
      %v1499 = vunpack.c.l.b16 %v174
      %v1500 = vunpack.c.h.b16 %v174
      %v1501 = vunpack.c.l.b16 %v175
      %v1502 = vunpack.c.h.b16 %v175
      %v1503 = vunpack.c.l.b16 %v176
      %v1504 = vunpack.c.h.b16 %v176
      %v1505 = vunpack.c.l.b16 %v177
      %v1506 = vunpack.c.h.b16 %v177
      %v1507 = vunpack.c.l.b16 %v178
      %v1508 = vunpack.c.h.b16 %v178
      %v1509 = vunpack.c.l.b16 %v179
      %v1510 = vunpack.c.h.b16 %v179
      %v1511 = vunpack.c.l.b16 %v180
      %v1512 = vunpack.c.h.b16 %v180
      %v1513 = vunpack.c.l.b16 %v181
      %v1514 = vunpack.c.h.b16 %v181
      %v1515 = vunpack.c.l.b16 %v182
      %v1516 = vunpack.c.h.b16 %v182
      %v1517 = vunpack.c.l.b16 %v183
      %v1518 = vunpack.c.h.b16 %v183
      %v1519 = vunpack.c.l.b16 %v184
      %v1520 = vunpack.c.h.b16 %v184
      %v1521 = vunpack.c.l.b16 %v185
      %v1522 = vunpack.c.h.b16 %v185
      %v1523 = vunpack.c.l.b16 %v186
      %v1524 = vunpack.c.h.b16 %v186
      %v1525 = vunpack.c.l.b16 %v187
      %v1526 = vunpack.c.h.b16 %v187
      %v1527 = vunpack.c.l.b16 %v188
      %v1528 = vunpack.c.h.b16 %v188
      %v1529 = vunpack.c.l.b16 %v189
      %v1530 = vunpack.c.h.b16 %v189
      %v1531 = vunpack.c.l.b16 %v190
      %v1532 = vunpack.c.h.b16 %v190
      %v1533 = vunpack.c.l.b16 %v191
      %v1534 = vunpack.c.h.b16 %v191
      %v1535 = vunpack.c.l.b16 %v192
      %v1536 = vunpack.c.h.b16 %v192
      %v1537 = vunpack.c.l.b16 %v193
      %v1538 = vunpack.c.h.b16 %v193
      %v1539 = vunpack.c.l.b16 %v194
      %v1540 = vunpack.c.h.b16 %v194
      %v1541 = vunpack.c.l.b16 %v195
      %v1542 = vunpack.c.h.b16 %v195
      %v1543 = vunpack.c.l.b16 %v196
      %v1544 = vunpack.c.h.b16 %v196
      %v1545 = vunpack.c.l.b16 %v197
      %v1546 = vunpack.c.h.b16 %v197
      %v1547 = vunpack.c.l.b16 %v198
      %v1548 = vunpack.c.h.b16 %v198
      %v1549 = vunpack.c.l.b16 %v199
      %v1550 = vunpack.c.h.b16 %v199
      %v1551 = vunpack.c.l.b16 %v200
      %v1552 = vunpack.c.h.b16 %v200
      %v1553 = vunpack.c.l.b16 %v201
      %v1554 = vunpack.c.h.b16 %v201
      %v1555 = vunpack.c.l.b16 %v202
      %v1556 = vunpack.c.h.b16 %v202
      %v1557 = vunpack.c.l.b16 %v203
      %v1558 = vunpack.c.h.b16 %v203
      %v1559 = vunpack.c.l.b16 %v204
      %v1560 = vunpack.c.h.b16 %v204
      %v1561 = vunpack.c.l.b16 %v205
      %v1562 = vunpack.c.h.b16 %v205
      %v1563 = vunpack.c.l.b16 %v206
      %v1564 = vunpack.c.h.b16 %v206
      %v1565 = vunpack.c.l.b16 %v207
      %v1566 = vunpack.c.h.b16 %v207
      %v1567 = vunpack.c.l.b16 %v208
      %v1568 = vunpack.c.h.b16 %v208
      %v1569 = vunpack.c.l.b16 %v209
      %v1570 = vunpack.c.h.b16 %v209
      %v1571 = vunpack.c.l.b16 %v210
      %v1572 = vunpack.c.h.b16 %v210
      %v1573 = vunpack.c.l.b16 %v211
      %v1574 = vunpack.c.h.b16 %v211
      %v1575 = vunpack.c.l.b16 %v212
      %v1576 = vunpack.c.h.b16 %v212
      %v1577 = vunpack.c.l.b16 %v213
      %v1578 = vunpack.c.h.b16 %v213
      %v1579 = vunpack.c.l.b16 %v214
      %v1580 = vunpack.c.h.b16 %v214
      %v1581 = vunpack.c.l.b16 %v215
      %v1582 = vunpack.c.h.b16 %v215
      %v1583 = vunpack.c.l.b16 %v216
      %v1584 = vunpack.c.h.b16 %v216
      %v1585 = vunpack.c.l.b16 %v217
      %v1586 = vunpack.c.h.b16 %v217
      %v1587 = vunpack.c.l.b16 %v218
      %v1588 = vunpack.c.h.b16 %v218
      %v1589 = vunpack.c.l.b16 %v219
      %v1590 = vunpack.c.h.b16 %v219
      %v1591 = vunpack.c.l.b16 %v220
      %v1592 = vunpack.c.h.b16 %v220
      %v1593 = vunpack.c.l.b16 %v221
      %v1594 = vunpack.c.h.b16 %v221
      %v1595 = vunpack.c.l.b16 %v222
      %v1596 = vunpack.c.h.b16 %v222
      %v1597 = vunpack.c.l.b16 %v223
      %v1598 = vunpack.c.h.b16 %v223
      %v1599 = vunpack.c.l.b16 %v224
      %v1600 = vunpack.c.h.b16 %v224
      %v1601 = vunpack.c.l.b16 %v225
      %v1602 = vunpack.c.h.b16 %v225
      %v1603 = vunpack.c.l.b16 %v226
      %v1604 = vunpack.c.h.b16 %v226
      %v1605 = vunpack.c.l.b16 %v227
      %v1606 = vunpack.c.h.b16 %v227
      %v1607 = vunpack.c.l.b16 %v228
      %v1608 = vunpack.c.h.b16 %v228
      %v1609 = vunpack.c.l.b16 %v229
      %v1610 = vunpack.c.h.b16 %v229
      %v1611 = vunpack.c.l.b16 %v230
      %v1612 = vunpack.c.h.b16 %v230
      %v1613 = vunpack.c.l.b16 %v231
      %v1614 = vunpack.c.h.b16 %v231
      %v1615 = vunpack.c.l.b16 %v232
      %v1616 = vunpack.c.h.b16 %v232
      %v1617 = vunpack.c.l.b16 %v233
      %v1618 = vunpack.c.h.b16 %v233
      %v1619 = vunpack.c.l.b16 %v234
      %v1620 = vunpack.c.h.b16 %v234
      %v1621 = vunpack.c.l.b16 %v235
      %v1622 = vunpack.c.h.b16 %v235
      %v1623 = vunpack.c.l.b16 %v236
      %v1624 = vunpack.c.h.b16 %v236
      %v1625 = vunpack.c.l.b16 %v237
      %v1626 = vunpack.c.h.b16 %v237
      %v1627 = vunpack.c.l.b16 %v238
      %v1628 = vunpack.c.h.b16 %v238
      %v1629 = vunpack.c.l.b16 %v239
      %v1630 = vunpack.c.h.b16 %v239
      %v1631 = vunpack.c.l.b16 %v240
      %v1632 = vunpack.c.h.b16 %v240
      %v1633 = vunpack.c.l.b16 %v241
      %v1634 = vunpack.c.h.b16 %v241
      %v1635 = vpack.c.b16 %v1383, %v1379
      %v1636 = vpack.c.b16 %v1384, %v1380
      %v1637 = vpack.c.b16 %v1385, %v1381
      %v1638 = vpack.c.b16 %v1386, %v1382
      %v1639 = vpack.c.b16 %v1391, %v1387
      %v1640 = vpack.c.b16 %v1392, %v1388
      %v1641 = vpack.c.b16 %v1393, %v1389
      %v1642 = vpack.c.b16 %v1394, %v1390
      %v1643 = vpack.c.b16 %v1399, %v1395
      %v1644 = vpack.c.b16 %v1400, %v1396
      %v1645 = vpack.c.b16 %v1401, %v1397
      %v1646 = vpack.c.b16 %v1402, %v1398
      %v1647 = vpack.c.b16 %v1407, %v1403
      %v1648 = vpack.c.b16 %v1408, %v1404
      %v1649 = vpack.c.b16 %v1409, %v1405
      %v1650 = vpack.c.b16 %v1410, %v1406
      %v1651 = vpack.c.b16 %v1415, %v1411
      %v1652 = vpack.c.b16 %v1416, %v1412
      %v1653 = vpack.c.b16 %v1417, %v1413
      %v1654 = vpack.c.b16 %v1418, %v1414
      %v1655 = vpack.c.b16 %v1423, %v1419
      %v1656 = vpack.c.b16 %v1424, %v1420
      %v1657 = vpack.c.b16 %v1425, %v1421
      %v1658 = vpack.c.b16 %v1426, %v1422
      %v1659 = vpack.c.b16 %v1431, %v1427
      %v1660 = vpack.c.b16 %v1432, %v1428
      %v1661 = vpack.c.b16 %v1433, %v1429
      %v1662 = vpack.c.b16 %v1434, %v1430
      %v1663 = vpack.c.b16 %v1439, %v1435
      %v1664 = vpack.c.b16 %v1440, %v1436
      %v1665 = vpack.c.b16 %v1441, %v1437
      %v1666 = vpack.c.b16 %v1442, %v1438
      %v1667 = vpack.c.b16 %v1447, %v1443
      %v1668 = vpack.c.b16 %v1448, %v1444
      %v1669 = vpack.c.b16 %v1449, %v1445
      %v1670 = vpack.c.b16 %v1450, %v1446
      %v1671 = vpack.c.b16 %v1455, %v1451
      %v1672 = vpack.c.b16 %v1456, %v1452
      %v1673 = vpack.c.b16 %v1457, %v1453
      %v1674 = vpack.c.b16 %v1458, %v1454
      %v1675 = vpack.c.b16 %v1463, %v1459
      %v1676 = vpack.c.b16 %v1464, %v1460
      %v1677 = vpack.c.b16 %v1465, %v1461
      %v1678 = vpack.c.b16 %v1466, %v1462
      %v1679 = vpack.c.b16 %v1471, %v1467
      %v1680 = vpack.c.b16 %v1472, %v1468
      %v1681 = vpack.c.b16 %v1473, %v1469
      %v1682 = vpack.c.b16 %v1474, %v1470
      %v1683 = vpack.c.b16 %v1479, %v1475
      %v1684 = vpack.c.b16 %v1480, %v1476
      %v1685 = vpack.c.b16 %v1481, %v1477
      %v1686 = vpack.c.b16 %v1482, %v1478
      %v1687 = vpack.c.b16 %v1487, %v1483
      %v1688 = vpack.c.b16 %v1488, %v1484
      %v1689 = vpack.c.b16 %v1489, %v1485
      %v1690 = vpack.c.b16 %v1490, %v1486
      %v1691 = vpack.c.b16 %v1495, %v1491
      %v1692 = vpack.c.b16 %v1496, %v1492
      %v1693 = vpack.c.b16 %v1497, %v1493
      %v1694 = vpack.c.b16 %v1498, %v1494
      %v1695 = vpack.c.b16 %v1503, %v1499
      %v1696 = vpack.c.b16 %v1504, %v1500
      %v1697 = vpack.c.b16 %v1505, %v1501
      %v1698 = vpack.c.b16 %v1506, %v1502
      %v1699 = vpack.c.b16 %v1511, %v1507
      %v1700 = vpack.c.b16 %v1512, %v1508
      %v1701 = vpack.c.b16 %v1513, %v1509
      %v1702 = vpack.c.b16 %v1514, %v1510
      %v1703 = vpack.c.b16 %v1519, %v1515
      %v1704 = vpack.c.b16 %v1520, %v1516
      %v1705 = vpack.c.b16 %v1521, %v1517
      %v1706 = vpack.c.b16 %v1522, %v1518
      %v1707 = vpack.c.b16 %v1527, %v1523
      %v1708 = vpack.c.b16 %v1528, %v1524
      %v1709 = vpack.c.b16 %v1529, %v1525
      %v1710 = vpack.c.b16 %v1530, %v1526
      %v1711 = vpack.c.b16 %v1535, %v1531
      %v1712 = vpack.c.b16 %v1536, %v1532
      %v1713 = vpack.c.b16 %v1537, %v1533
      %v1714 = vpack.c.b16 %v1538, %v1534
      %v1715 = vpack.c.b16 %v1543, %v1539
      %v1716 = vpack.c.b16 %v1544, %v1540
      %v1717 = vpack.c.b16 %v1545, %v1541
      %v1718 = vpack.c.b16 %v1546, %v1542
      %v1719 = vpack.c.b16 %v1551, %v1547
      %v1720 = vpack.c.b16 %v1552, %v1548
      %v1721 = vpack.c.b16 %v1553, %v1549
      %v1722 = vpack.c.b16 %v1554, %v1550
      %v1723 = vpack.c.b16 %v1559, %v1555
      %v1724 = vpack.c.b16 %v1560, %v1556
      %v1725 = vpack.c.b16 %v1561, %v1557
      %v1726 = vpack.c.b16 %v1562, %v1558
      %v1727 = vpack.c.b16 %v1567, %v1563
      %v1728 = vpack.c.b16 %v1568, %v1564
      %v1729 = vpack.c.b16 %v1569, %v1565
      %v1730 = vpack.c.b16 %v1570, %v1566
      %v1731 = vpack.c.b16 %v1575, %v1571
      %v1732 = vpack.c.b16 %v1576, %v1572
      %v1733 = vpack.c.b16 %v1577, %v1573
      %v1734 = vpack.c.b16 %v1578, %v1574
      %v1735 = vpack.c.b16 %v1583, %v1579
      %v1736 = vpack.c.b16 %v1584, %v1580
      %v1737 = vpack.c.b16 %v1585, %v1581
      %v1738 = vpack.c.b16 %v1586, %v1582
      %v1739 = vpack.c.b16 %v1591, %v1587
      %v1740 = vpack.c.b16 %v1592, %v1588
      %v1741 = vpack.c.b16 %v1593, %v1589
      %v1742 = vpack.c.b16 %v1594, %v1590
      %v1743 = vpack.c.b16 %v1599, %v1595
      %v1744 = vpack.c.b16 %v1600, %v1596
      %v1745 = vpack.c.b16 %v1601, %v1597
      %v1746 = vpack.c.b16 %v1602, %v1598
      %v1747 = vpack.c.b16 %v1607, %v1603
      %v1748 = vpack.c.b16 %v1608, %v1604
      %v1749 = vpack.c.b16 %v1609, %v1605
      %v1750 = vpack.c.b16 %v1610, %v1606
      %v1751 = vpack.c.b16 %v1615, %v1611
      %v1752 = vpack.c.b16 %v1616, %v1612
      %v1753 = vpack.c.b16 %v1617, %v1613
      %v1754 = vpack.c.b16 %v1618, %v1614
      %v1755 = vpack.c.b16 %v1623, %v1619
      %v1756 = vpack.c.b16 %v1624, %v1620
      %v1757 = vpack.c.b16 %v1625, %v1621
      %v1758 = vpack.c.b16 %v1626, %v1622
      %v1759 = vpack.c.b16 %v1631, %v1627
      %v1760 = vpack.c.b16 %v1632, %v1628
      %v1761 = vpack.c.b16 %v1633, %v1629
      %v1762 = vpack.c.b16 %v1634, %v1630
      %1891 = vmatpush.bf16.msra.mxu0 %v1663
      %1892 = vmatpush.bf16.msra.mxu0 %v1659
      %1893 = vmatpush.bf16.msra.mxu0 %v1655
      %1894 = vmatpush.bf16.msra.mxu0 %v1651
      %1895 = vmatpush.bf16.msra.mxu0 %v1647
      %1896 = vmatpush.bf16.msra.mxu0 %v1643
      %1897 = vmatpush.bf16.msra.mxu0 %v1639
      %1898 = vmatpush.bf16.msra.mxu0 %v1635
      %1899 = vmatmul.bf16.gmra.mxu0 %v110
      %v1900 = vpop.f32.mrf.mxu0
      %v1901 = vadd.f32 %v1092, %v1900
      %v1902 = vpop.f32.mrf.mxu0
      %1903 = vdwg.mxu0
      %1904 = vmatpush.bf16.msra.mxu0 %v1695
      %1905 = vmatpush.bf16.msra.mxu0 %v1691
      %1906 = vmatpush.bf16.msra.mxu0 %v1687
      %1907 = vmatpush.bf16.msra.mxu0 %v1683
      %1908 = vmatpush.bf16.msra.mxu0 %v1679
      %1909 = vmatpush.bf16.msra.mxu0 %v1675
      %1910 = vmatpush.bf16.msra.mxu0 %v1671
      %1911 = vmatpush.bf16.msra.mxu0 %v1667
      %1912 = vmatmul.bf16.gmra.mxu0 %v111
      %v1913 = vpop.f32.mrf.mxu0
      %v1914 = vadd.f32 %v1901, %v1913
      %v1915 = vpop.f32.mrf.mxu0
      %1916 = vdwg.mxu0
      %1917 = vmatpush.bf16.msra.mxu0 %v1727
      %1918 = vmatpush.bf16.msra.mxu0 %v1723
      %1919 = vmatpush.bf16.msra.mxu0 %v1719
      %1920 = vmatpush.bf16.msra.mxu0 %v1715
      %1921 = vmatpush.bf16.msra.mxu0 %v1711
      %1922 = vmatpush.bf16.msra.mxu0 %v1707
      %1923 = vmatpush.bf16.msra.mxu0 %v1703
      %1924 = vmatpush.bf16.msra.mxu0 %v1699
      %1925 = vmatmul.bf16.gmra.mxu0 %v112
      %v1926 = vpop.f32.mrf.mxu0
      %v1927 = vadd.f32 %v1914, %v1926
      %v1928 = vpop.f32.mrf.mxu0
      %1929 = vdwg.mxu0
      %1930 = vmatpush.bf16.msra.mxu0 %v1759
      %1931 = vmatpush.bf16.msra.mxu0 %v1755
      %1932 = vmatpush.bf16.msra.mxu0 %v1751
      %1933 = vmatpush.bf16.msra.mxu0 %v1747
      %1934 = vmatpush.bf16.msra.mxu0 %v1743
      %1935 = vmatpush.bf16.msra.mxu0 %v1739
      %1936 = vmatpush.bf16.msra.mxu0 %v1735
      %1937 = vmatpush.bf16.msra.mxu0 %v1731
      %1938 = vmatmul.bf16.gmra.mxu0 %v113
      %v1939 = vpop.f32.mrf.mxu0
      %v1940 = vadd.f32 %v1927, %v1939
      %v1941 = vpop.f32.mrf.mxu0
      %1942 = vdwg.mxu0
      %1943 = vmatpush.bf16.msra.mxu0 %v1664
      %1944 = vmatpush.bf16.msra.mxu0 %v1660
      %1945 = vmatpush.bf16.msra.mxu0 %v1656
      %1946 = vmatpush.bf16.msra.mxu0 %v1652
      %1947 = vmatpush.bf16.msra.mxu0 %v1648
      %1948 = vmatpush.bf16.msra.mxu0 %v1644
      %1949 = vmatpush.bf16.msra.mxu0 %v1640
      %1950 = vmatpush.bf16.msra.mxu0 %v1636
      %1951 = vmatmul.bf16.gmra.mxu0 %v110
      %v1952 = vpop.f32.mrf.mxu0
      %v1953 = vadd.f32 %v1144, %v1952
      %v1954 = vpop.f32.mrf.mxu0
      %1955 = vdwg.mxu0
      %1956 = vmatpush.bf16.msra.mxu0 %v1696
      %1957 = vmatpush.bf16.msra.mxu0 %v1692
      %1958 = vmatpush.bf16.msra.mxu0 %v1688
      %1959 = vmatpush.bf16.msra.mxu0 %v1684
      %1960 = vmatpush.bf16.msra.mxu0 %v1680
      %1961 = vmatpush.bf16.msra.mxu0 %v1676
      %1962 = vmatpush.bf16.msra.mxu0 %v1672
      %1963 = vmatpush.bf16.msra.mxu0 %v1668
      %1964 = vmatmul.bf16.gmra.mxu0 %v111
      %v1965 = vpop.f32.mrf.mxu0
      %v1966 = vadd.f32 %v1953, %v1965
      %v1967 = vpop.f32.mrf.mxu0
      %1968 = vdwg.mxu0
      %1969 = vmatpush.bf16.msra.mxu0 %v1728
      %1970 = vmatpush.bf16.msra.mxu0 %v1724
      %1971 = vmatpush.bf16.msra.mxu0 %v1720
      %1972 = vmatpush.bf16.msra.mxu0 %v1716
      %1973 = vmatpush.bf16.msra.mxu0 %v1712
      %1974 = vmatpush.bf16.msra.mxu0 %v1708
      %1975 = vmatpush.bf16.msra.mxu0 %v1704
      %1976 = vmatpush.bf16.msra.mxu0 %v1700
      %1977 = vmatmul.bf16.gmra.mxu0 %v112
      %v1978 = vpop.f32.mrf.mxu0
      %v1979 = vadd.f32 %v1966, %v1978
      %v1980 = vpop.f32.mrf.mxu0
      %1981 = vdwg.mxu0
      %1982 = vmatpush.bf16.msra.mxu0 %v1760
      %1983 = vmatpush.bf16.msra.mxu0 %v1756
      %1984 = vmatpush.bf16.msra.mxu0 %v1752
      %1985 = vmatpush.bf16.msra.mxu0 %v1748
      %1986 = vmatpush.bf16.msra.mxu0 %v1744
      %1987 = vmatpush.bf16.msra.mxu0 %v1740
      %1988 = vmatpush.bf16.msra.mxu0 %v1736
      %1989 = vmatpush.bf16.msra.mxu0 %v1732
      %1990 = vmatmul.bf16.gmra.mxu0 %v113
      %v1991 = vpop.f32.mrf.mxu0
      %v1992 = vadd.f32 %v1979, %v1991
      %v1993 = vpop.f32.mrf.mxu0
      %1994 = vdwg.mxu0
      %1995 = vmatpush.bf16.msra.mxu0 %v1665
      %1996 = vmatpush.bf16.msra.mxu0 %v1661
      %1997 = vmatpush.bf16.msra.mxu0 %v1657
      %1998 = vmatpush.bf16.msra.mxu0 %v1653
      %1999 = vmatpush.bf16.msra.mxu0 %v1649
      %2000 = vmatpush.bf16.msra.mxu0 %v1645
      %2001 = vmatpush.bf16.msra.mxu0 %v1641
      %2002 = vmatpush.bf16.msra.mxu0 %v1637
      %2003 = vmatmul.bf16.gmra.mxu0 %v110
      %v2004 = vpop.f32.mrf.mxu0
      %v2005 = vadd.f32 %v1196, %v2004
      %v2006 = vpop.f32.mrf.mxu0
      %2007 = vdwg.mxu0
      %2008 = vmatpush.bf16.msra.mxu0 %v1697
      %2009 = vmatpush.bf16.msra.mxu0 %v1693
      %2010 = vmatpush.bf16.msra.mxu0 %v1689
      %2011 = vmatpush.bf16.msra.mxu0 %v1685
      %2012 = vmatpush.bf16.msra.mxu0 %v1681
      %2013 = vmatpush.bf16.msra.mxu0 %v1677
      %2014 = vmatpush.bf16.msra.mxu0 %v1673
      %2015 = vmatpush.bf16.msra.mxu0 %v1669
      %2016 = vmatmul.bf16.gmra.mxu0 %v111
      %v2017 = vpop.f32.mrf.mxu0
      %v2018 = vadd.f32 %v2005, %v2017
      %v2019 = vpop.f32.mrf.mxu0
      %2020 = vdwg.mxu0
      %2021 = vmatpush.bf16.msra.mxu0 %v1729
      %2022 = vmatpush.bf16.msra.mxu0 %v1725
      %2023 = vmatpush.bf16.msra.mxu0 %v1721
      %2024 = vmatpush.bf16.msra.mxu0 %v1717
      %2025 = vmatpush.bf16.msra.mxu0 %v1713
      %2026 = vmatpush.bf16.msra.mxu0 %v1709
      %2027 = vmatpush.bf16.msra.mxu0 %v1705
      %2028 = vmatpush.bf16.msra.mxu0 %v1701
      %2029 = vmatmul.bf16.gmra.mxu0 %v112
      %v2030 = vpop.f32.mrf.mxu0
      %v2031 = vadd.f32 %v2018, %v2030
      %v2032 = vpop.f32.mrf.mxu0
      %2033 = vdwg.mxu0
      %2034 = vmatpush.bf16.msra.mxu0 %v1761
      %2035 = vmatpush.bf16.msra.mxu0 %v1757
      %2036 = vmatpush.bf16.msra.mxu0 %v1753
      %2037 = vmatpush.bf16.msra.mxu0 %v1749
      %2038 = vmatpush.bf16.msra.mxu0 %v1745
      %2039 = vmatpush.bf16.msra.mxu0 %v1741
      %2040 = vmatpush.bf16.msra.mxu0 %v1737
      %2041 = vmatpush.bf16.msra.mxu0 %v1733
      %2042 = vmatmul.bf16.gmra.mxu0 %v113
      %v2043 = vpop.f32.mrf.mxu0
      %v2044 = vadd.f32 %v2031, %v2043
      %v2045 = vpop.f32.mrf.mxu0
      %2046 = vdwg.mxu0
      %2047 = vmatpush.bf16.msra.mxu0 %v1666
      %2048 = vmatpush.bf16.msra.mxu0 %v1662
      %2049 = vmatpush.bf16.msra.mxu0 %v1658
      %2050 = vmatpush.bf16.msra.mxu0 %v1654
      %2051 = vmatpush.bf16.msra.mxu0 %v1650
      %2052 = vmatpush.bf16.msra.mxu0 %v1646
      %2053 = vmatpush.bf16.msra.mxu0 %v1642
      %2054 = vmatpush.bf16.msra.mxu0 %v1638
      %2055 = vmatmul.bf16.gmra.mxu0 %v110
      %v2056 = vpop.f32.mrf.mxu0
      %v2057 = vadd.f32 %v1248, %v2056
      %v2058 = vpop.f32.mrf.mxu0
      %2059 = vdwg.mxu0
      %2060 = vmatpush.bf16.msra.mxu0 %v1698
      %2061 = vmatpush.bf16.msra.mxu0 %v1694
      %2062 = vmatpush.bf16.msra.mxu0 %v1690
      %2063 = vmatpush.bf16.msra.mxu0 %v1686
      %2064 = vmatpush.bf16.msra.mxu0 %v1682
      %2065 = vmatpush.bf16.msra.mxu0 %v1678
      %2066 = vmatpush.bf16.msra.mxu0 %v1674
      %2067 = vmatpush.bf16.msra.mxu0 %v1670
      %2068 = vmatmul.bf16.gmra.mxu0 %v111
      %v2069 = vpop.f32.mrf.mxu0
      %v2070 = vadd.f32 %v2057, %v2069
      %v2071 = vpop.f32.mrf.mxu0
      %2072 = vdwg.mxu0
      %2073 = vmatpush.bf16.msra.mxu0 %v1730
      %2074 = vmatpush.bf16.msra.mxu0 %v1726
      %2075 = vmatpush.bf16.msra.mxu0 %v1722
      %2076 = vmatpush.bf16.msra.mxu0 %v1718
      %2077 = vmatpush.bf16.msra.mxu0 %v1714
      %2078 = vmatpush.bf16.msra.mxu0 %v1710
      %2079 = vmatpush.bf16.msra.mxu0 %v1706
      %2080 = vmatpush.bf16.msra.mxu0 %v1702
      %2081 = vmatmul.bf16.gmra.mxu0 %v112
      %v2082 = vpop.f32.mrf.mxu0
      %v2083 = vadd.f32 %v2070, %v2082
      %v2084 = vpop.f32.mrf.mxu0
      %2085 = vdwg.mxu0
      %2086 = vmatpush.bf16.msra.mxu0 %v1762
      %2087 = vmatpush.bf16.msra.mxu0 %v1758
      %2088 = vmatpush.bf16.msra.mxu0 %v1754
      %2089 = vmatpush.bf16.msra.mxu0 %v1750
      %2090 = vmatpush.bf16.msra.mxu0 %v1746
      %2091 = vmatpush.bf16.msra.mxu0 %v1742
      %2092 = vmatpush.bf16.msra.mxu0 %v1738
      %2093 = vmatpush.bf16.msra.mxu0 %v1734
      %2094 = vmatmul.bf16.gmra.mxu0 %v113
      %v2095 = vpop.f32.mrf.mxu0
      %v2096 = vadd.f32 %v2083, %v2095
      %v2097 = vpop.f32.mrf.mxu0
      %2098 = vdwg.mxu0
      %s2099 = sadd.s32 %s53, 2
      %s2100 = smul.u32 %s2099, 4
      %s2101 = scalar_lea.vmem %s0, %s2100
      %v2102 = vld [vmem:[%s2101] sm:$0xf]
      %v2103 = vunpack.c.l.bf16 %v2102
      %v2104 = vmul.f32 %v2103, %v72
      %v2105 = vadd.f32 %v2104, %v86
      %vm2106 = vcmp.ge.f32.partialorder %v2105, 0.0
      %v2107 = vmul.f32 %v2105, 0.01
      %v2108 = vsel %vm2106, %v2105, %v2107
      %p2109 = scmp.ge.s32.totalorder %s2099, 1
      %p2110 = scmp.le.s32.totalorder %s2099, 14
      %p2111 = pnand %p2109, %p2110
      %p2112 = pneg %p2111
      %s2113 = scalar_select %p2112, 1, 0
      %s2114 = scvt.s32.f32 %s2113
      %v2115 = vstv %s2114
      %v2116 = vmul.f32 %v2108, %v2115
      %2118 = vst [vmem:[#allocation1] ss:$4 sm:$0xff] %v2116
      %v2119 = vld.sshfl [vmem:[#allocation1] sm:$0xff pattern:$0x73625140]
      %v2120 = vld.sshfl [vmem:[#allocation1 + $0x8] sm:$0xff pattern:$0x73625140]
      %v2121 = vld.sshfl [vmem:[#allocation1 + $0x10] sm:$0xff pattern:$0x73625140]
      %v2122 = vld.sshfl [vmem:[#allocation1 + $0x18] sm:$0xff pattern:$0x73625140]
      %v2127 = vpack.c.bf16 %v2119, %v2119
      %v2128 = vpack.c.bf16 %v2120, %v2120
      %v2129 = vpack.c.bf16 %v2121, %v2121
      %v2130 = vpack.c.bf16 %v2122, %v2122
      %s2131 = scalar_lea.vmem [#allocation2], 2048
      %v2132 = vld [vmem:[%s2131] sm:$0xff]
      %v2133 = vld [vmem:[%s2131 + $0x8] sm:$0xff]
      %v2134 = vld [vmem:[%s2131 + $0x10] sm:$0xff]
      %v2135 = vld [vmem:[%s2131 + $0x18] sm:$0xff]
      %v2136 = vld [vmem:[%s2131 + $0x20] sm:$0xff]
      %v2137 = vld [vmem:[%s2131 + $0x28] sm:$0xff]
      %v2138 = vld [vmem:[%s2131 + $0x30] sm:$0xff]
      %v2139 = vld [vmem:[%s2131 + $0x38] sm:$0xff]
      %v2140 = vld [vmem:[%s2131 + $0x40] sm:$0xff]
      %v2141 = vld [vmem:[%s2131 + $0x48] sm:$0xff]
      %v2142 = vld [vmem:[%s2131 + $0x50] sm:$0xff]
      %v2143 = vld [vmem:[%s2131 + $0x58] sm:$0xff]
      %v2144 = vld [vmem:[%s2131 + $0x60] sm:$0xff]
      %v2145 = vld [vmem:[%s2131 + $0x68] sm:$0xff]
      %v2146 = vld [vmem:[%s2131 + $0x70] sm:$0xff]
      %v2147 = vld [vmem:[%s2131 + $0x78] sm:$0xff]
      %v2148 = vld [vmem:[%s2131 + $0x80] sm:$0xff]
      %v2149 = vld [vmem:[%s2131 + $0x88] sm:$0xff]
      %v2150 = vld [vmem:[%s2131 + $0x90] sm:$0xff]
      %v2151 = vld [vmem:[%s2131 + $0x98] sm:$0xff]
      %v2152 = vld [vmem:[%s2131 + $0xa0] sm:$0xff]
      %v2153 = vld [vmem:[%s2131 + $0xa8] sm:$0xff]
      %v2154 = vld [vmem:[%s2131 + $0xb0] sm:$0xff]
      %v2155 = vld [vmem:[%s2131 + $0xb8] sm:$0xff]
      %v2156 = vld [vmem:[%s2131 + $0xc0] sm:$0xff]
      %v2157 = vld [vmem:[%s2131 + $0xc8] sm:$0xff]
      %v2158 = vld [vmem:[%s2131 + $0xd0] sm:$0xff]
      %v2159 = vld [vmem:[%s2131 + $0xd8] sm:$0xff]
      %v2160 = vld [vmem:[%s2131 + $0xe0] sm:$0xff]
      %v2161 = vld [vmem:[%s2131 + $0xe8] sm:$0xff]
      %v2162 = vld [vmem:[%s2131 + $0xf0] sm:$0xff]
      %v2163 = vld [vmem:[%s2131 + $0xf8] sm:$0xff]
      %v2164 = vld [vmem:[%s2131 + $0x100] sm:$0xff]
      %v2165 = vld [vmem:[%s2131 + $0x108] sm:$0xff]
      %v2166 = vld [vmem:[%s2131 + $0x110] sm:$0xff]
      %v2167 = vld [vmem:[%s2131 + $0x118] sm:$0xff]
      %v2168 = vld [vmem:[%s2131 + $0x120] sm:$0xff]
      %v2169 = vld [vmem:[%s2131 + $0x128] sm:$0xff]
      %v2170 = vld [vmem:[%s2131 + $0x130] sm:$0xff]
      %v2171 = vld [vmem:[%s2131 + $0x138] sm:$0xff]
      %v2172 = vld [vmem:[%s2131 + $0x140] sm:$0xff]
      %v2173 = vld [vmem:[%s2131 + $0x148] sm:$0xff]
      %v2174 = vld [vmem:[%s2131 + $0x150] sm:$0xff]
      %v2175 = vld [vmem:[%s2131 + $0x158] sm:$0xff]
      %v2176 = vld [vmem:[%s2131 + $0x160] sm:$0xff]
      %v2177 = vld [vmem:[%s2131 + $0x168] sm:$0xff]
      %v2178 = vld [vmem:[%s2131 + $0x170] sm:$0xff]
      %v2179 = vld [vmem:[%s2131 + $0x178] sm:$0xff]
      %v2180 = vld [vmem:[%s2131 + $0x180] sm:$0xff]
      %v2181 = vld [vmem:[%s2131 + $0x188] sm:$0xff]
      %v2182 = vld [vmem:[%s2131 + $0x190] sm:$0xff]
      %v2183 = vld [vmem:[%s2131 + $0x198] sm:$0xff]
      %v2184 = vld [vmem:[%s2131 + $0x1a0] sm:$0xff]
      %v2185 = vld [vmem:[%s2131 + $0x1a8] sm:$0xff]
      %v2186 = vld [vmem:[%s2131 + $0x1b0] sm:$0xff]
      %v2187 = vld [vmem:[%s2131 + $0x1b8] sm:$0xff]
      %v2188 = vld [vmem:[%s2131 + $0x1c0] sm:$0xff]
      %v2189 = vld [vmem:[%s2131 + $0x1c8] sm:$0xff]
      %v2190 = vld [vmem:[%s2131 + $0x1d0] sm:$0xff]
      %v2191 = vld [vmem:[%s2131 + $0x1d8] sm:$0xff]
      %v2192 = vld [vmem:[%s2131 + $0x1e0] sm:$0xff]
      %v2193 = vld [vmem:[%s2131 + $0x1e8] sm:$0xff]
      %v2194 = vld [vmem:[%s2131 + $0x1f0] sm:$0xff]
      %v2195 = vld [vmem:[%s2131 + $0x1f8] sm:$0xff]
      %v2196 = vld [vmem:[%s2131 + $0x200] sm:$0xff]
      %v2197 = vld [vmem:[%s2131 + $0x208] sm:$0xff]
      %v2198 = vld [vmem:[%s2131 + $0x210] sm:$0xff]
      %v2199 = vld [vmem:[%s2131 + $0x218] sm:$0xff]
      %v2200 = vld [vmem:[%s2131 + $0x220] sm:$0xff]
      %v2201 = vld [vmem:[%s2131 + $0x228] sm:$0xff]
      %v2202 = vld [vmem:[%s2131 + $0x230] sm:$0xff]
      %v2203 = vld [vmem:[%s2131 + $0x238] sm:$0xff]
      %v2204 = vld [vmem:[%s2131 + $0x240] sm:$0xff]
      %v2205 = vld [vmem:[%s2131 + $0x248] sm:$0xff]
      %v2206 = vld [vmem:[%s2131 + $0x250] sm:$0xff]
      %v2207 = vld [vmem:[%s2131 + $0x258] sm:$0xff]
      %v2208 = vld [vmem:[%s2131 + $0x260] sm:$0xff]
      %v2209 = vld [vmem:[%s2131 + $0x268] sm:$0xff]
      %v2210 = vld [vmem:[%s2131 + $0x270] sm:$0xff]
      %v2211 = vld [vmem:[%s2131 + $0x278] sm:$0xff]
      %v2212 = vld [vmem:[%s2131 + $0x280] sm:$0xff]
      %v2213 = vld [vmem:[%s2131 + $0x288] sm:$0xff]
      %v2214 = vld [vmem:[%s2131 + $0x290] sm:$0xff]
      %v2215 = vld [vmem:[%s2131 + $0x298] sm:$0xff]
      %v2216 = vld [vmem:[%s2131 + $0x2a0] sm:$0xff]
      %v2217 = vld [vmem:[%s2131 + $0x2a8] sm:$0xff]
      %v2218 = vld [vmem:[%s2131 + $0x2b0] sm:$0xff]
      %v2219 = vld [vmem:[%s2131 + $0x2b8] sm:$0xff]
      %v2220 = vld [vmem:[%s2131 + $0x2c0] sm:$0xff]
      %v2221 = vld [vmem:[%s2131 + $0x2c8] sm:$0xff]
      %v2222 = vld [vmem:[%s2131 + $0x2d0] sm:$0xff]
      %v2223 = vld [vmem:[%s2131 + $0x2d8] sm:$0xff]
      %v2224 = vld [vmem:[%s2131 + $0x2e0] sm:$0xff]
      %v2225 = vld [vmem:[%s2131 + $0x2e8] sm:$0xff]
      %v2226 = vld [vmem:[%s2131 + $0x2f0] sm:$0xff]
      %v2227 = vld [vmem:[%s2131 + $0x2f8] sm:$0xff]
      %v2228 = vld [vmem:[%s2131 + $0x300] sm:$0xff]
      %v2229 = vld [vmem:[%s2131 + $0x308] sm:$0xff]
      %v2230 = vld [vmem:[%s2131 + $0x310] sm:$0xff]
      %v2231 = vld [vmem:[%s2131 + $0x318] sm:$0xff]
      %v2232 = vld [vmem:[%s2131 + $0x320] sm:$0xff]
      %v2233 = vld [vmem:[%s2131 + $0x328] sm:$0xff]
      %v2234 = vld [vmem:[%s2131 + $0x330] sm:$0xff]
      %v2235 = vld [vmem:[%s2131 + $0x338] sm:$0xff]
      %v2236 = vld [vmem:[%s2131 + $0x340] sm:$0xff]
      %v2237 = vld [vmem:[%s2131 + $0x348] sm:$0xff]
      %v2238 = vld [vmem:[%s2131 + $0x350] sm:$0xff]
      %v2239 = vld [vmem:[%s2131 + $0x358] sm:$0xff]
      %v2240 = vld [vmem:[%s2131 + $0x360] sm:$0xff]
      %v2241 = vld [vmem:[%s2131 + $0x368] sm:$0xff]
      %v2242 = vld [vmem:[%s2131 + $0x370] sm:$0xff]
      %v2243 = vld [vmem:[%s2131 + $0x378] sm:$0xff]
      %v2244 = vld [vmem:[%s2131 + $0x380] sm:$0xff]
      %v2245 = vld [vmem:[%s2131 + $0x388] sm:$0xff]
      %v2246 = vld [vmem:[%s2131 + $0x390] sm:$0xff]
      %v2247 = vld [vmem:[%s2131 + $0x398] sm:$0xff]
      %v2248 = vld [vmem:[%s2131 + $0x3a0] sm:$0xff]
      %v2249 = vld [vmem:[%s2131 + $0x3a8] sm:$0xff]
      %v2250 = vld [vmem:[%s2131 + $0x3b0] sm:$0xff]
      %v2251 = vld [vmem:[%s2131 + $0x3b8] sm:$0xff]
      %v2252 = vld [vmem:[%s2131 + $0x3c0] sm:$0xff]
      %v2253 = vld [vmem:[%s2131 + $0x3c8] sm:$0xff]
      %v2254 = vld [vmem:[%s2131 + $0x3d0] sm:$0xff]
      %v2255 = vld [vmem:[%s2131 + $0x3d8] sm:$0xff]
      %v2256 = vld [vmem:[%s2131 + $0x3e0] sm:$0xff]
      %v2257 = vld [vmem:[%s2131 + $0x3e8] sm:$0xff]
      %v2258 = vld [vmem:[%s2131 + $0x3f0] sm:$0xff]
      %v2259 = vld [vmem:[%s2131 + $0x3f8] sm:$0xff]
      %v2388 = vunpack.c.l.b16 %v2132
      %v2389 = vunpack.c.h.b16 %v2132
      %v2390 = vunpack.c.l.b16 %v2133
      %v2391 = vunpack.c.h.b16 %v2133
      %v2392 = vunpack.c.l.b16 %v2134
      %v2393 = vunpack.c.h.b16 %v2134
      %v2394 = vunpack.c.l.b16 %v2135
      %v2395 = vunpack.c.h.b16 %v2135
      %v2396 = vunpack.c.l.b16 %v2136
      %v2397 = vunpack.c.h.b16 %v2136
      %v2398 = vunpack.c.l.b16 %v2137
      %v2399 = vunpack.c.h.b16 %v2137
      %v2400 = vunpack.c.l.b16 %v2138
      %v2401 = vunpack.c.h.b16 %v2138
      %v2402 = vunpack.c.l.b16 %v2139
      %v2403 = vunpack.c.h.b16 %v2139
      %v2404 = vunpack.c.l.b16 %v2140
      %v2405 = vunpack.c.h.b16 %v2140
      %v2406 = vunpack.c.l.b16 %v2141
      %v2407 = vunpack.c.h.b16 %v2141
      %v2408 = vunpack.c.l.b16 %v2142
      %v2409 = vunpack.c.h.b16 %v2142
      %v2410 = vunpack.c.l.b16 %v2143
      %v2411 = vunpack.c.h.b16 %v2143
      %v2412 = vunpack.c.l.b16 %v2144
      %v2413 = vunpack.c.h.b16 %v2144
      %v2414 = vunpack.c.l.b16 %v2145
      %v2415 = vunpack.c.h.b16 %v2145
      %v2416 = vunpack.c.l.b16 %v2146
      %v2417 = vunpack.c.h.b16 %v2146
      %v2418 = vunpack.c.l.b16 %v2147
      %v2419 = vunpack.c.h.b16 %v2147
      %v2420 = vunpack.c.l.b16 %v2148
      %v2421 = vunpack.c.h.b16 %v2148
      %v2422 = vunpack.c.l.b16 %v2149
      %v2423 = vunpack.c.h.b16 %v2149
      %v2424 = vunpack.c.l.b16 %v2150
      %v2425 = vunpack.c.h.b16 %v2150
      %v2426 = vunpack.c.l.b16 %v2151
      %v2427 = vunpack.c.h.b16 %v2151
      %v2428 = vunpack.c.l.b16 %v2152
      %v2429 = vunpack.c.h.b16 %v2152
      %v2430 = vunpack.c.l.b16 %v2153
      %v2431 = vunpack.c.h.b16 %v2153
      %v2432 = vunpack.c.l.b16 %v2154
      %v2433 = vunpack.c.h.b16 %v2154
      %v2434 = vunpack.c.l.b16 %v2155
      %v2435 = vunpack.c.h.b16 %v2155
      %v2436 = vunpack.c.l.b16 %v2156
      %v2437 = vunpack.c.h.b16 %v2156
      %v2438 = vunpack.c.l.b16 %v2157
      %v2439 = vunpack.c.h.b16 %v2157
      %v2440 = vunpack.c.l.b16 %v2158
      %v2441 = vunpack.c.h.b16 %v2158
      %v2442 = vunpack.c.l.b16 %v2159
      %v2443 = vunpack.c.h.b16 %v2159
      %v2444 = vunpack.c.l.b16 %v2160
      %v2445 = vunpack.c.h.b16 %v2160
      %v2446 = vunpack.c.l.b16 %v2161
      %v2447 = vunpack.c.h.b16 %v2161
      %v2448 = vunpack.c.l.b16 %v2162
      %v2449 = vunpack.c.h.b16 %v2162
      %v2450 = vunpack.c.l.b16 %v2163
      %v2451 = vunpack.c.h.b16 %v2163
      %v2452 = vunpack.c.l.b16 %v2164
      %v2453 = vunpack.c.h.b16 %v2164
      %v2454 = vunpack.c.l.b16 %v2165
      %v2455 = vunpack.c.h.b16 %v2165
      %v2456 = vunpack.c.l.b16 %v2166
      %v2457 = vunpack.c.h.b16 %v2166
      %v2458 = vunpack.c.l.b16 %v2167
      %v2459 = vunpack.c.h.b16 %v2167
      %v2460 = vunpack.c.l.b16 %v2168
      %v2461 = vunpack.c.h.b16 %v2168
      %v2462 = vunpack.c.l.b16 %v2169
      %v2463 = vunpack.c.h.b16 %v2169
      %v2464 = vunpack.c.l.b16 %v2170
      %v2465 = vunpack.c.h.b16 %v2170
      %v2466 = vunpack.c.l.b16 %v2171
      %v2467 = vunpack.c.h.b16 %v2171
      %v2468 = vunpack.c.l.b16 %v2172
      %v2469 = vunpack.c.h.b16 %v2172
      %v2470 = vunpack.c.l.b16 %v2173
      %v2471 = vunpack.c.h.b16 %v2173
      %v2472 = vunpack.c.l.b16 %v2174
      %v2473 = vunpack.c.h.b16 %v2174
      %v2474 = vunpack.c.l.b16 %v2175
      %v2475 = vunpack.c.h.b16 %v2175
      %v2476 = vunpack.c.l.b16 %v2176
      %v2477 = vunpack.c.h.b16 %v2176
      %v2478 = vunpack.c.l.b16 %v2177
      %v2479 = vunpack.c.h.b16 %v2177
      %v2480 = vunpack.c.l.b16 %v2178
      %v2481 = vunpack.c.h.b16 %v2178
      %v2482 = vunpack.c.l.b16 %v2179
      %v2483 = vunpack.c.h.b16 %v2179
      %v2484 = vunpack.c.l.b16 %v2180
      %v2485 = vunpack.c.h.b16 %v2180
      %v2486 = vunpack.c.l.b16 %v2181
      %v2487 = vunpack.c.h.b16 %v2181
      %v2488 = vunpack.c.l.b16 %v2182
      %v2489 = vunpack.c.h.b16 %v2182
      %v2490 = vunpack.c.l.b16 %v2183
      %v2491 = vunpack.c.h.b16 %v2183
      %v2492 = vunpack.c.l.b16 %v2184
      %v2493 = vunpack.c.h.b16 %v2184
      %v2494 = vunpack.c.l.b16 %v2185
      %v2495 = vunpack.c.h.b16 %v2185
      %v2496 = vunpack.c.l.b16 %v2186
      %v2497 = vunpack.c.h.b16 %v2186
      %v2498 = vunpack.c.l.b16 %v2187
      %v2499 = vunpack.c.h.b16 %v2187
      %v2500 = vunpack.c.l.b16 %v2188
      %v2501 = vunpack.c.h.b16 %v2188
      %v2502 = vunpack.c.l.b16 %v2189
      %v2503 = vunpack.c.h.b16 %v2189
      %v2504 = vunpack.c.l.b16 %v2190
      %v2505 = vunpack.c.h.b16 %v2190
      %v2506 = vunpack.c.l.b16 %v2191
      %v2507 = vunpack.c.h.b16 %v2191
      %v2508 = vunpack.c.l.b16 %v2192
      %v2509 = vunpack.c.h.b16 %v2192
      %v2510 = vunpack.c.l.b16 %v2193
      %v2511 = vunpack.c.h.b16 %v2193
      %v2512 = vunpack.c.l.b16 %v2194
      %v2513 = vunpack.c.h.b16 %v2194
      %v2514 = vunpack.c.l.b16 %v2195
      %v2515 = vunpack.c.h.b16 %v2195
      %v2516 = vunpack.c.l.b16 %v2196
      %v2517 = vunpack.c.h.b16 %v2196
      %v2518 = vunpack.c.l.b16 %v2197
      %v2519 = vunpack.c.h.b16 %v2197
      %v2520 = vunpack.c.l.b16 %v2198
      %v2521 = vunpack.c.h.b16 %v2198
      %v2522 = vunpack.c.l.b16 %v2199
      %v2523 = vunpack.c.h.b16 %v2199
      %v2524 = vunpack.c.l.b16 %v2200
      %v2525 = vunpack.c.h.b16 %v2200
      %v2526 = vunpack.c.l.b16 %v2201
      %v2527 = vunpack.c.h.b16 %v2201
      %v2528 = vunpack.c.l.b16 %v2202
      %v2529 = vunpack.c.h.b16 %v2202
      %v2530 = vunpack.c.l.b16 %v2203
      %v2531 = vunpack.c.h.b16 %v2203
      %v2532 = vunpack.c.l.b16 %v2204
      %v2533 = vunpack.c.h.b16 %v2204
      %v2534 = vunpack.c.l.b16 %v2205
      %v2535 = vunpack.c.h.b16 %v2205
      %v2536 = vunpack.c.l.b16 %v2206
      %v2537 = vunpack.c.h.b16 %v2206
      %v2538 = vunpack.c.l.b16 %v2207
      %v2539 = vunpack.c.h.b16 %v2207
      %v2540 = vunpack.c.l.b16 %v2208
      %v2541 = vunpack.c.h.b16 %v2208
      %v2542 = vunpack.c.l.b16 %v2209
      %v2543 = vunpack.c.h.b16 %v2209
      %v2544 = vunpack.c.l.b16 %v2210
      %v2545 = vunpack.c.h.b16 %v2210
      %v2546 = vunpack.c.l.b16 %v2211
      %v2547 = vunpack.c.h.b16 %v2211
      %v2548 = vunpack.c.l.b16 %v2212
      %v2549 = vunpack.c.h.b16 %v2212
      %v2550 = vunpack.c.l.b16 %v2213
      %v2551 = vunpack.c.h.b16 %v2213
      %v2552 = vunpack.c.l.b16 %v2214
      %v2553 = vunpack.c.h.b16 %v2214
      %v2554 = vunpack.c.l.b16 %v2215
      %v2555 = vunpack.c.h.b16 %v2215
      %v2556 = vunpack.c.l.b16 %v2216
      %v2557 = vunpack.c.h.b16 %v2216
      %v2558 = vunpack.c.l.b16 %v2217
      %v2559 = vunpack.c.h.b16 %v2217
      %v2560 = vunpack.c.l.b16 %v2218
      %v2561 = vunpack.c.h.b16 %v2218
      %v2562 = vunpack.c.l.b16 %v2219
      %v2563 = vunpack.c.h.b16 %v2219
      %v2564 = vunpack.c.l.b16 %v2220
      %v2565 = vunpack.c.h.b16 %v2220
      %v2566 = vunpack.c.l.b16 %v2221
      %v2567 = vunpack.c.h.b16 %v2221
      %v2568 = vunpack.c.l.b16 %v2222
      %v2569 = vunpack.c.h.b16 %v2222
      %v2570 = vunpack.c.l.b16 %v2223
      %v2571 = vunpack.c.h.b16 %v2223
      %v2572 = vunpack.c.l.b16 %v2224
      %v2573 = vunpack.c.h.b16 %v2224
      %v2574 = vunpack.c.l.b16 %v2225
      %v2575 = vunpack.c.h.b16 %v2225
      %v2576 = vunpack.c.l.b16 %v2226
      %v2577 = vunpack.c.h.b16 %v2226
      %v2578 = vunpack.c.l.b16 %v2227
      %v2579 = vunpack.c.h.b16 %v2227
      %v2580 = vunpack.c.l.b16 %v2228
      %v2581 = vunpack.c.h.b16 %v2228
      %v2582 = vunpack.c.l.b16 %v2229
      %v2583 = vunpack.c.h.b16 %v2229
      %v2584 = vunpack.c.l.b16 %v2230
      %v2585 = vunpack.c.h.b16 %v2230
      %v2586 = vunpack.c.l.b16 %v2231
      %v2587 = vunpack.c.h.b16 %v2231
      %v2588 = vunpack.c.l.b16 %v2232
      %v2589 = vunpack.c.h.b16 %v2232
      %v2590 = vunpack.c.l.b16 %v2233
      %v2591 = vunpack.c.h.b16 %v2233
      %v2592 = vunpack.c.l.b16 %v2234
      %v2593 = vunpack.c.h.b16 %v2234
      %v2594 = vunpack.c.l.b16 %v2235
      %v2595 = vunpack.c.h.b16 %v2235
      %v2596 = vunpack.c.l.b16 %v2236
      %v2597 = vunpack.c.h.b16 %v2236
      %v2598 = vunpack.c.l.b16 %v2237
      %v2599 = vunpack.c.h.b16 %v2237
      %v2600 = vunpack.c.l.b16 %v2238
      %v2601 = vunpack.c.h.b16 %v2238
      %v2602 = vunpack.c.l.b16 %v2239
      %v2603 = vunpack.c.h.b16 %v2239
      %v2604 = vunpack.c.l.b16 %v2240
      %v2605 = vunpack.c.h.b16 %v2240
      %v2606 = vunpack.c.l.b16 %v2241
      %v2607 = vunpack.c.h.b16 %v2241
      %v2608 = vunpack.c.l.b16 %v2242
      %v2609 = vunpack.c.h.b16 %v2242
      %v2610 = vunpack.c.l.b16 %v2243
      %v2611 = vunpack.c.h.b16 %v2243
      %v2612 = vunpack.c.l.b16 %v2244
      %v2613 = vunpack.c.h.b16 %v2244
      %v2614 = vunpack.c.l.b16 %v2245
      %v2615 = vunpack.c.h.b16 %v2245
      %v2616 = vunpack.c.l.b16 %v2246
      %v2617 = vunpack.c.h.b16 %v2246
      %v2618 = vunpack.c.l.b16 %v2247
      %v2619 = vunpack.c.h.b16 %v2247
      %v2620 = vunpack.c.l.b16 %v2248
      %v2621 = vunpack.c.h.b16 %v2248
      %v2622 = vunpack.c.l.b16 %v2249
      %v2623 = vunpack.c.h.b16 %v2249
      %v2624 = vunpack.c.l.b16 %v2250
      %v2625 = vunpack.c.h.b16 %v2250
      %v2626 = vunpack.c.l.b16 %v2251
      %v2627 = vunpack.c.h.b16 %v2251
      %v2628 = vunpack.c.l.b16 %v2252
      %v2629 = vunpack.c.h.b16 %v2252
      %v2630 = vunpack.c.l.b16 %v2253
      %v2631 = vunpack.c.h.b16 %v2253
      %v2632 = vunpack.c.l.b16 %v2254
      %v2633 = vunpack.c.h.b16 %v2254
      %v2634 = vunpack.c.l.b16 %v2255
      %v2635 = vunpack.c.h.b16 %v2255
      %v2636 = vunpack.c.l.b16 %v2256
      %v2637 = vunpack.c.h.b16 %v2256
      %v2638 = vunpack.c.l.b16 %v2257
      %v2639 = vunpack.c.h.b16 %v2257
      %v2640 = vunpack.c.l.b16 %v2258
      %v2641 = vunpack.c.h.b16 %v2258
      %v2642 = vunpack.c.l.b16 %v2259
      %v2643 = vunpack.c.h.b16 %v2259
      %v2644 = vpack.c.b16 %v2392, %v2388
      %v2645 = vpack.c.b16 %v2393, %v2389
      %v2646 = vpack.c.b16 %v2394, %v2390
      %v2647 = vpack.c.b16 %v2395, %v2391
      %v2648 = vpack.c.b16 %v2400, %v2396
      %v2649 = vpack.c.b16 %v2401, %v2397
      %v2650 = vpack.c.b16 %v2402, %v2398
      %v2651 = vpack.c.b16 %v2403, %v2399
      %v2652 = vpack.c.b16 %v2408, %v2404
      %v2653 = vpack.c.b16 %v2409, %v2405
      %v2654 = vpack.c.b16 %v2410, %v2406
      %v2655 = vpack.c.b16 %v2411, %v2407
      %v2656 = vpack.c.b16 %v2416, %v2412
      %v2657 = vpack.c.b16 %v2417, %v2413
      %v2658 = vpack.c.b16 %v2418, %v2414
      %v2659 = vpack.c.b16 %v2419, %v2415
      %v2660 = vpack.c.b16 %v2424, %v2420
      %v2661 = vpack.c.b16 %v2425, %v2421
      %v2662 = vpack.c.b16 %v2426, %v2422
      %v2663 = vpack.c.b16 %v2427, %v2423
      %v2664 = vpack.c.b16 %v2432, %v2428
      %v2665 = vpack.c.b16 %v2433, %v2429
      %v2666 = vpack.c.b16 %v2434, %v2430
      %v2667 = vpack.c.b16 %v2435, %v2431
      %v2668 = vpack.c.b16 %v2440, %v2436
      %v2669 = vpack.c.b16 %v2441, %v2437
      %v2670 = vpack.c.b16 %v2442, %v2438
      %v2671 = vpack.c.b16 %v2443, %v2439
      %v2672 = vpack.c.b16 %v2448, %v2444
      %v2673 = vpack.c.b16 %v2449, %v2445
      %v2674 = vpack.c.b16 %v2450, %v2446
      %v2675 = vpack.c.b16 %v2451, %v2447
      %v2676 = vpack.c.b16 %v2456, %v2452
      %v2677 = vpack.c.b16 %v2457, %v2453
      %v2678 = vpack.c.b16 %v2458, %v2454
      %v2679 = vpack.c.b16 %v2459, %v2455
      %v2680 = vpack.c.b16 %v2464, %v2460
      %v2681 = vpack.c.b16 %v2465, %v2461
      %v2682 = vpack.c.b16 %v2466, %v2462
      %v2683 = vpack.c.b16 %v2467, %v2463
      %v2684 = vpack.c.b16 %v2472, %v2468
      %v2685 = vpack.c.b16 %v2473, %v2469
      %v2686 = vpack.c.b16 %v2474, %v2470
      %v2687 = vpack.c.b16 %v2475, %v2471
      %v2688 = vpack.c.b16 %v2480, %v2476
      %v2689 = vpack.c.b16 %v2481, %v2477
      %v2690 = vpack.c.b16 %v2482, %v2478
      %v2691 = vpack.c.b16 %v2483, %v2479
      %v2692 = vpack.c.b16 %v2488, %v2484
      %v2693 = vpack.c.b16 %v2489, %v2485
      %v2694 = vpack.c.b16 %v2490, %v2486
      %v2695 = vpack.c.b16 %v2491, %v2487
      %v2696 = vpack.c.b16 %v2496, %v2492
      %v2697 = vpack.c.b16 %v2497, %v2493
      %v2698 = vpack.c.b16 %v2498, %v2494
      %v2699 = vpack.c.b16 %v2499, %v2495
      %v2700 = vpack.c.b16 %v2504, %v2500
      %v2701 = vpack.c.b16 %v2505, %v2501
      %v2702 = vpack.c.b16 %v2506, %v2502
      %v2703 = vpack.c.b16 %v2507, %v2503
      %v2704 = vpack.c.b16 %v2512, %v2508
      %v2705 = vpack.c.b16 %v2513, %v2509
      %v2706 = vpack.c.b16 %v2514, %v2510
      %v2707 = vpack.c.b16 %v2515, %v2511
      %v2708 = vpack.c.b16 %v2520, %v2516
      %v2709 = vpack.c.b16 %v2521, %v2517
      %v2710 = vpack.c.b16 %v2522, %v2518
      %v2711 = vpack.c.b16 %v2523, %v2519
      %v2712 = vpack.c.b16 %v2528, %v2524
      %v2713 = vpack.c.b16 %v2529, %v2525
      %v2714 = vpack.c.b16 %v2530, %v2526
      %v2715 = vpack.c.b16 %v2531, %v2527
      %v2716 = vpack.c.b16 %v2536, %v2532
      %v2717 = vpack.c.b16 %v2537, %v2533
      %v2718 = vpack.c.b16 %v2538, %v2534
      %v2719 = vpack.c.b16 %v2539, %v2535
      %v2720 = vpack.c.b16 %v2544, %v2540
      %v2721 = vpack.c.b16 %v2545, %v2541
      %v2722 = vpack.c.b16 %v2546, %v2542
      %v2723 = vpack.c.b16 %v2547, %v2543
      %v2724 = vpack.c.b16 %v2552, %v2548
      %v2725 = vpack.c.b16 %v2553, %v2549
      %v2726 = vpack.c.b16 %v2554, %v2550
      %v2727 = vpack.c.b16 %v2555, %v2551
      %v2728 = vpack.c.b16 %v2560, %v2556
      %v2729 = vpack.c.b16 %v2561, %v2557
      %v2730 = vpack.c.b16 %v2562, %v2558
      %v2731 = vpack.c.b16 %v2563, %v2559
      %v2732 = vpack.c.b16 %v2568, %v2564
      %v2733 = vpack.c.b16 %v2569, %v2565
      %v2734 = vpack.c.b16 %v2570, %v2566
      %v2735 = vpack.c.b16 %v2571, %v2567
      %v2736 = vpack.c.b16 %v2576, %v2572
      %v2737 = vpack.c.b16 %v2577, %v2573
      %v2738 = vpack.c.b16 %v2578, %v2574
      %v2739 = vpack.c.b16 %v2579, %v2575
      %v2740 = vpack.c.b16 %v2584, %v2580
      %v2741 = vpack.c.b16 %v2585, %v2581
      %v2742 = vpack.c.b16 %v2586, %v2582
      %v2743 = vpack.c.b16 %v2587, %v2583
      %v2744 = vpack.c.b16 %v2592, %v2588
      %v2745 = vpack.c.b16 %v2593, %v2589
      %v2746 = vpack.c.b16 %v2594, %v2590
      %v2747 = vpack.c.b16 %v2595, %v2591
      %v2748 = vpack.c.b16 %v2600, %v2596
      %v2749 = vpack.c.b16 %v2601, %v2597
      %v2750 = vpack.c.b16 %v2602, %v2598
      %v2751 = vpack.c.b16 %v2603, %v2599
      %v2752 = vpack.c.b16 %v2608, %v2604
      %v2753 = vpack.c.b16 %v2609, %v2605
      %v2754 = vpack.c.b16 %v2610, %v2606
      %v2755 = vpack.c.b16 %v2611, %v2607
      %v2756 = vpack.c.b16 %v2616, %v2612
      %v2757 = vpack.c.b16 %v2617, %v2613
      %v2758 = vpack.c.b16 %v2618, %v2614
      %v2759 = vpack.c.b16 %v2619, %v2615
      %v2760 = vpack.c.b16 %v2624, %v2620
      %v2761 = vpack.c.b16 %v2625, %v2621
      %v2762 = vpack.c.b16 %v2626, %v2622
      %v2763 = vpack.c.b16 %v2627, %v2623
      %v2764 = vpack.c.b16 %v2632, %v2628
      %v2765 = vpack.c.b16 %v2633, %v2629
      %v2766 = vpack.c.b16 %v2634, %v2630
      %v2767 = vpack.c.b16 %v2635, %v2631
      %v2768 = vpack.c.b16 %v2640, %v2636
      %v2769 = vpack.c.b16 %v2641, %v2637
      %v2770 = vpack.c.b16 %v2642, %v2638
      %v2771 = vpack.c.b16 %v2643, %v2639
      %2900 = vmatpush.bf16.msra.mxu0 %v2672
      %2901 = vmatpush.bf16.msra.mxu0 %v2668
      %2902 = vmatpush.bf16.msra.mxu0 %v2664
      %2903 = vmatpush.bf16.msra.mxu0 %v2660
      %2904 = vmatpush.bf16.msra.mxu0 %v2656
      %2905 = vmatpush.bf16.msra.mxu0 %v2652
      %2906 = vmatpush.bf16.msra.mxu0 %v2648
      %2907 = vmatpush.bf16.msra.mxu0 %v2644
      %2908 = vmatmul.bf16.gmra.mxu0 %v2127
      %v2909 = vpop.f32.mrf.mxu0
      %v2910 = vadd.f32 0.0, %v2909
      %v2911 = vpop.f32.mrf.mxu0
      %2912 = vdwg.mxu0
      %2913 = vmatpush.bf16.msra.mxu0 %v2704
      %2914 = vmatpush.bf16.msra.mxu0 %v2700
      %2915 = vmatpush.bf16.msra.mxu0 %v2696
      %2916 = vmatpush.bf16.msra.mxu0 %v2692
      %2917 = vmatpush.bf16.msra.mxu0 %v2688
      %2918 = vmatpush.bf16.msra.mxu0 %v2684
      %2919 = vmatpush.bf16.msra.mxu0 %v2680
      %2920 = vmatpush.bf16.msra.mxu0 %v2676
      %2921 = vmatmul.bf16.gmra.mxu0 %v2128
      %v2922 = vpop.f32.mrf.mxu0
      %v2923 = vadd.f32 %v2910, %v2922
      %v2924 = vpop.f32.mrf.mxu0
      %2925 = vdwg.mxu0
      %2926 = vmatpush.bf16.msra.mxu0 %v2736
      %2927 = vmatpush.bf16.msra.mxu0 %v2732
      %2928 = vmatpush.bf16.msra.mxu0 %v2728
      %2929 = vmatpush.bf16.msra.mxu0 %v2724
      %2930 = vmatpush.bf16.msra.mxu0 %v2720
      %2931 = vmatpush.bf16.msra.mxu0 %v2716
      %2932 = vmatpush.bf16.msra.mxu0 %v2712
      %2933 = vmatpush.bf16.msra.mxu0 %v2708
      %2934 = vmatmul.bf16.gmra.mxu0 %v2129
      %v2935 = vpop.f32.mrf.mxu0
      %v2936 = vadd.f32 %v2923, %v2935
      %v2937 = vpop.f32.mrf.mxu0
      %2938 = vdwg.mxu0
      %2939 = vmatpush.bf16.msra.mxu0 %v2768
      %2940 = vmatpush.bf16.msra.mxu0 %v2764
      %2941 = vmatpush.bf16.msra.mxu0 %v2760
      %2942 = vmatpush.bf16.msra.mxu0 %v2756
      %2943 = vmatpush.bf16.msra.mxu0 %v2752
      %2944 = vmatpush.bf16.msra.mxu0 %v2748
      %2945 = vmatpush.bf16.msra.mxu0 %v2744
      %2946 = vmatpush.bf16.msra.mxu0 %v2740
      %2947 = vmatmul.bf16.gmra.mxu0 %v2130
      %v2948 = vpop.f32.mrf.mxu0
      %v2949 = vadd.f32 %v2936, %v2948
      %v2950 = vpop.f32.mrf.mxu0
      %2951 = vdwg.mxu0
      %2952 = vmatpush.bf16.msra.mxu0 %v2673
      %2953 = vmatpush.bf16.msra.mxu0 %v2669
      %2954 = vmatpush.bf16.msra.mxu0 %v2665
      %2955 = vmatpush.bf16.msra.mxu0 %v2661
      %2956 = vmatpush.bf16.msra.mxu0 %v2657
      %2957 = vmatpush.bf16.msra.mxu0 %v2653
      %2958 = vmatpush.bf16.msra.mxu0 %v2649
      %2959 = vmatpush.bf16.msra.mxu0 %v2645
      %2960 = vmatmul.bf16.gmra.mxu0 %v2127
      %v2961 = vpop.f32.mrf.mxu0
      %v2962 = vadd.f32 0.0, %v2961
      %v2963 = vpop.f32.mrf.mxu0
      %2964 = vdwg.mxu0
      %2965 = vmatpush.bf16.msra.mxu0 %v2705
      %2966 = vmatpush.bf16.msra.mxu0 %v2701
      %2967 = vmatpush.bf16.msra.mxu0 %v2697
      %2968 = vmatpush.bf16.msra.mxu0 %v2693
      %2969 = vmatpush.bf16.msra.mxu0 %v2689
      %2970 = vmatpush.bf16.msra.mxu0 %v2685
      %2971 = vmatpush.bf16.msra.mxu0 %v2681
      %2972 = vmatpush.bf16.msra.mxu0 %v2677
      %2973 = vmatmul.bf16.gmra.mxu0 %v2128
      %v2974 = vpop.f32.mrf.mxu0
      %v2975 = vadd.f32 %v2962, %v2974
      %v2976 = vpop.f32.mrf.mxu0
      %2977 = vdwg.mxu0
      %2978 = vmatpush.bf16.msra.mxu0 %v2737
      %2979 = vmatpush.bf16.msra.mxu0 %v2733
      %2980 = vmatpush.bf16.msra.mxu0 %v2729
      %2981 = vmatpush.bf16.msra.mxu0 %v2725
      %2982 = vmatpush.bf16.msra.mxu0 %v2721
      %2983 = vmatpush.bf16.msra.mxu0 %v2717
      %2984 = vmatpush.bf16.msra.mxu0 %v2713
      %2985 = vmatpush.bf16.msra.mxu0 %v2709
      %2986 = vmatmul.bf16.gmra.mxu0 %v2129
      %v2987 = vpop.f32.mrf.mxu0
      %v2988 = vadd.f32 %v2975, %v2987
      %v2989 = vpop.f32.mrf.mxu0
      %2990 = vdwg.mxu0
      %2991 = vmatpush.bf16.msra.mxu0 %v2769
      %2992 = vmatpush.bf16.msra.mxu0 %v2765
      %2993 = vmatpush.bf16.msra.mxu0 %v2761
      %2994 = vmatpush.bf16.msra.mxu0 %v2757
      %2995 = vmatpush.bf16.msra.mxu0 %v2753
      %2996 = vmatpush.bf16.msra.mxu0 %v2749
      %2997 = vmatpush.bf16.msra.mxu0 %v2745
      %2998 = vmatpush.bf16.msra.mxu0 %v2741
      %2999 = vmatmul.bf16.gmra.mxu0 %v2130
      %v3000 = vpop.f32.mrf.mxu0
      %v3001 = vadd.f32 %v2988, %v3000
      %v3002 = vpop.f32.mrf.mxu0
      %3003 = vdwg.mxu0
      %3004 = vmatpush.bf16.msra.mxu0 %v2674
      %3005 = vmatpush.bf16.msra.mxu0 %v2670
      %3006 = vmatpush.bf16.msra.mxu0 %v2666
      %3007 = vmatpush.bf16.msra.mxu0 %v2662
      %3008 = vmatpush.bf16.msra.mxu0 %v2658
      %3009 = vmatpush.bf16.msra.mxu0 %v2654
      %3010 = vmatpush.bf16.msra.mxu0 %v2650
      %3011 = vmatpush.bf16.msra.mxu0 %v2646
      %3012 = vmatmul.bf16.gmra.mxu0 %v2127
      %v3013 = vpop.f32.mrf.mxu0
      %v3014 = vadd.f32 0.0, %v3013
      %v3015 = vpop.f32.mrf.mxu0
      %3016 = vdwg.mxu0
      %3017 = vmatpush.bf16.msra.mxu0 %v2706
      %3018 = vmatpush.bf16.msra.mxu0 %v2702
      %3019 = vmatpush.bf16.msra.mxu0 %v2698
      %3020 = vmatpush.bf16.msra.mxu0 %v2694
      %3021 = vmatpush.bf16.msra.mxu0 %v2690
      %3022 = vmatpush.bf16.msra.mxu0 %v2686
      %3023 = vmatpush.bf16.msra.mxu0 %v2682
      %3024 = vmatpush.bf16.msra.mxu0 %v2678
      %3025 = vmatmul.bf16.gmra.mxu0 %v2128
      %v3026 = vpop.f32.mrf.mxu0
      %v3027 = vadd.f32 %v3014, %v3026
      %v3028 = vpop.f32.mrf.mxu0
      %3029 = vdwg.mxu0
      %3030 = vmatpush.bf16.msra.mxu0 %v2738
      %3031 = vmatpush.bf16.msra.mxu0 %v2734
      %3032 = vmatpush.bf16.msra.mxu0 %v2730
      %3033 = vmatpush.bf16.msra.mxu0 %v2726
      %3034 = vmatpush.bf16.msra.mxu0 %v2722
      %3035 = vmatpush.bf16.msra.mxu0 %v2718
      %3036 = vmatpush.bf16.msra.mxu0 %v2714
      %3037 = vmatpush.bf16.msra.mxu0 %v2710
      %3038 = vmatmul.bf16.gmra.mxu0 %v2129
      %v3039 = vpop.f32.mrf.mxu0
      %v3040 = vadd.f32 %v3027, %v3039
      %v3041 = vpop.f32.mrf.mxu0
      %3042 = vdwg.mxu0
      %3043 = vmatpush.bf16.msra.mxu0 %v2770
      %3044 = vmatpush.bf16.msra.mxu0 %v2766
      %3045 = vmatpush.bf16.msra.mxu0 %v2762
      %3046 = vmatpush.bf16.msra.mxu0 %v2758
      %3047 = vmatpush.bf16.msra.mxu0 %v2754
      %3048 = vmatpush.bf16.msra.mxu0 %v2750
      %3049 = vmatpush.bf16.msra.mxu0 %v2746
      %3050 = vmatpush.bf16.msra.mxu0 %v2742
      %3051 = vmatmul.bf16.gmra.mxu0 %v2130
      %v3052 = vpop.f32.mrf.mxu0
      %v3053 = vadd.f32 %v3040, %v3052
      %v3054 = vpop.f32.mrf.mxu0
      %3055 = vdwg.mxu0
      %3056 = vmatpush.bf16.msra.mxu0 %v2675
      %3057 = vmatpush.bf16.msra.mxu0 %v2671
      %3058 = vmatpush.bf16.msra.mxu0 %v2667
      %3059 = vmatpush.bf16.msra.mxu0 %v2663
      %3060 = vmatpush.bf16.msra.mxu0 %v2659
      %3061 = vmatpush.bf16.msra.mxu0 %v2655
      %3062 = vmatpush.bf16.msra.mxu0 %v2651
      %3063 = vmatpush.bf16.msra.mxu0 %v2647
      %3064 = vmatmul.bf16.gmra.mxu0 %v2127
      %v3065 = vpop.f32.mrf.mxu0
      %v3066 = vadd.f32 0.0, %v3065
      %v3067 = vpop.f32.mrf.mxu0
      %3068 = vdwg.mxu0
      %3069 = vmatpush.bf16.msra.mxu0 %v2707
      %3070 = vmatpush.bf16.msra.mxu0 %v2703
      %3071 = vmatpush.bf16.msra.mxu0 %v2699
      %3072 = vmatpush.bf16.msra.mxu0 %v2695
      %3073 = vmatpush.bf16.msra.mxu0 %v2691
      %3074 = vmatpush.bf16.msra.mxu0 %v2687
      %3075 = vmatpush.bf16.msra.mxu0 %v2683
      %3076 = vmatpush.bf16.msra.mxu0 %v2679
      %3077 = vmatmul.bf16.gmra.mxu0 %v2128
      %v3078 = vpop.f32.mrf.mxu0
      %v3079 = vadd.f32 %v3066, %v3078
      %v3080 = vpop.f32.mrf.mxu0
      %3081 = vdwg.mxu0
      %3082 = vmatpush.bf16.msra.mxu0 %v2739
      %3083 = vmatpush.bf16.msra.mxu0 %v2735
      %3084 = vmatpush.bf16.msra.mxu0 %v2731
      %3085 = vmatpush.bf16.msra.mxu0 %v2727
      %3086 = vmatpush.bf16.msra.mxu0 %v2723
      %3087 = vmatpush.bf16.msra.mxu0 %v2719
      %3088 = vmatpush.bf16.msra.mxu0 %v2715
      %3089 = vmatpush.bf16.msra.mxu0 %v2711
      %3090 = vmatmul.bf16.gmra.mxu0 %v2129
      %v3091 = vpop.f32.mrf.mxu0
      %v3092 = vadd.f32 %v3079, %v3091
      %v3093 = vpop.f32.mrf.mxu0
      %3094 = vdwg.mxu0
      %3095 = vmatpush.bf16.msra.mxu0 %v2771
      %3096 = vmatpush.bf16.msra.mxu0 %v2767
      %3097 = vmatpush.bf16.msra.mxu0 %v2763
      %3098 = vmatpush.bf16.msra.mxu0 %v2759
      %3099 = vmatpush.bf16.msra.mxu0 %v2755
      %3100 = vmatpush.bf16.msra.mxu0 %v2751
      %3101 = vmatpush.bf16.msra.mxu0 %v2747
      %3102 = vmatpush.bf16.msra.mxu0 %v2743
      %3103 = vmatmul.bf16.gmra.mxu0 %v2130
      %v3104 = vpop.f32.mrf.mxu0
      %v3105 = vadd.f32 %v3092, %v3104
      %v3106 = vpop.f32.mrf.mxu0
      %3107 = vdwg.mxu0
      %v3108 = vadd.f32 %v1940, %v2949
      %v3109 = vadd.f32 %v1992, %v3001
      %v3110 = vadd.f32 %v2044, %v3053
      %v3111 = vadd.f32 %v2096, %v3105
      %v3112 = vpack.c.bf16 %v3109, %v3108
      %v3113 = vpack.c.bf16 %v3111, %v3110
      %v3116 = vrot.slane %v3112, 3
      %v3117 = vrot.slane %v3113, 6
      %v3118 = vrot.slane %v3113, 1
      %vm3119 = vcmask 1040384
      %v3122 = vsel %vm3119, %v3112, %v3116
      %vm3123 = vcmask 1042434
      %v3126 = vsel %vm3123, %v3117, %v3118
      %v3127 = vsel %vm67, %v3122, %v3126
      %s3129 = smul.u32 %s40, 4
      %s3130 = scalar_lea.vmem %s4, %s3129
      %3131 = vst [vmem:[%s3130] sm:$0xf] %v3127
      %v3132 = vsel %vm67, %v3108, 0.0
      %v3133 = vrot.slane %v3132, 4
      %v3134 = vadd.f32 %v3132, %v3133
      %v3135 = vrot.slane %v3134, 2
      %v3136 = vadd.f32 %v3134, %v3135
      %v3137 = vrot.slane %v3136, 1
      %v3138 = vadd.f32 %v3136, %v3137
      %v3139 = vsel %vm67, %v3109, 0.0
      %v3140 = vrot.slane %v3139, 4
      %v3141 = vadd.f32 %v3139, %v3140
      %v3142 = vrot.slane %v3141, 2
      %v3143 = vadd.f32 %v3141, %v3142
      %v3144 = vrot.slane %v3143, 1
      %v3145 = vadd.f32 %v3143, %v3144
      %v3146 = vsel %vm67, %v3110, 0.0
      %v3147 = vrot.slane %v3146, 4
      %v3148 = vadd.f32 %v3146, %v3147
      %v3149 = vrot.slane %v3148, 2
      %v3150 = vadd.f32 %v3148, %v3149
      %v3151 = vrot.slane %v3150, 1
      %v3152 = vadd.f32 %v3150, %v3151
      %v3153 = vsel %vm67, %v3111, 0.0
      %v3154 = vrot.slane %v3153, 4
      %v3155 = vadd.f32 %v3153, %v3154
      %v3156 = vrot.slane %v3155, 2
      %v3157 = vadd.f32 %v3155, %v3156
      %v3158 = vrot.slane %v3157, 1
      %v3159 = vadd.f32 %v3157, %v3158
      %v3160 = vadd.f32 %v45, %v3138
      %v3161 = vadd.f32 %v46, %v3145
      %v3162 = vadd.f32 %v47, %v3152
      %v3163 = vadd.f32 %v48, %v3159
      %v3164 = vmul.f32 %v3108, %v3108
      %v3165 = vmul.f32 %v3109, %v3109
      %v3166 = vmul.f32 %v3110, %v3110
      %v3167 = vmul.f32 %v3111, %v3111
      %v3168 = vsel %vm67, %v3164, 0.0
      %v3169 = vrot.slane %v3168, 4
      %v3170 = vadd.f32 %v3168, %v3169
      %v3171 = vrot.slane %v3170, 2
      %v3172 = vadd.f32 %v3170, %v3171
      %v3173 = vrot.slane %v3172, 1
      %v3174 = vadd.f32 %v3172, %v3173
      %v3175 = vsel %vm67, %v3165, 0.0
      %v3176 = vrot.slane %v3175, 4
      %v3177 = vadd.f32 %v3175, %v3176
      %v3178 = vrot.slane %v3177, 2
      %v3179 = vadd.f32 %v3177, %v3178
      %v3180 = vrot.slane %v3179, 1
      %v3181 = vadd.f32 %v3179, %v3180
      %v3182 = vsel %vm67, %v3166, 0.0
      %v3183 = vrot.slane %v3182, 4
      %v3184 = vadd.f32 %v3182, %v3183
      %v3185 = vrot.slane %v3184, 2
      %v3186 = vadd.f32 %v3184, %v3185
      %v3187 = vrot.slane %v3186, 1
      %v3188 = vadd.f32 %v3186, %v3187
      %v3189 = vsel %vm67, %v3167, 0.0
      %v3190 = vrot.slane %v3189, 4
      %v3191 = vadd.f32 %v3189, %v3190
      %v3192 = vrot.slane %v3191, 2
      %v3193 = vadd.f32 %v3191, %v3192
      %v3194 = vrot.slane %v3193, 1
      %v3195 = vadd.f32 %v3193, %v3194
      %v3196 = vadd.f32 %v49, %v3174
      %v3197 = vadd.f32 %v50, %v3181
      %v3198 = vadd.f32 %v51, %v3188
      %v3199 = vadd.f32 %v52, %v3195
    $region26: #{discriminator_forward.8} parent=1 // loop_footer
      %s44 = sadd.s32 1, %s40
    $region27: #{discriminator_forward.8} parent=1 // loop_footer_branch
      %39 = sbr.rel target = $region23
    $region28: #{discriminator_forward.8} parent=1 // loop_exit
      _
    %v3204 = vrot.slane %v46, 7
    %v3205 = vrot.slane %v47, 6
    %v3206 = vrot.slane %v48, 5
    %vm3207 = vcmask 1040384
    %v3208 = vsel %vm3207, %v45, %v3204
    %vm3209 = vcmask 1042434
    %v3210 = vsel %vm3209, %v3205, %v3206
    %vm3211 = vcmask 1041408
    %v3212 = vsel %vm3211, %v3208, %v3210
    %v3214 = vlaneseq
    %vm3215 = vcmp.ge.s32.totalorder %v3214, 0
    %vm3216 = vcmp.lt.s32.totalorder %v3214, 512
    %vm3217 = vmand %vm3215, %vm3216
    %3218 = vst.msk [vmem:[%s5] sm:$0xf] %vm3217, %v3212
    %v3223 = vrot.slane %v50, 7
    %v3224 = vrot.slane %v51, 6
    %v3225 = vrot.slane %v52, 5
    %v3226 = vsel %vm3207, %v49, %v3223
    %v3227 = vsel %vm3209, %v3224, %v3225
    %v3228 = vsel %vm3211, %v3226, %v3227
    %3230 = vst.msk [vmem:[%s6] sm:$0xf] %vm3217, %v3228
    // Predicated region
    $region29: #{discriminator_forward.8} parent=1 // pred_check
      _
    $region30: #{discriminator_forward.8} parent=1 // pred_check_branch
      %3232 = sbr.rel (0) target = $region32
    $region31: #{discriminator_forward.8} parent=1 // pred_region
      _
    $region32: #{discriminator_forward.8} parent=1 // pred_fallthru
      _
    // Predicated region
    $region33: #{discriminator_forward.8} parent=1 // pred_check
      _
    $region34: #{discriminator_forward.8} parent=1 // pred_check_branch
      %3234 = sbr.rel (0) target = $region36
    $region35: #{discriminator_forward.8} parent=1 // pred_region
      _
    $region36: #{discriminator_forward.8} parent=1 // pred_fallthru
      _
    // Predicated region
    $region37: #{discriminator_forward.8} parent=1 // pred_check
      _
    $region38: #{discriminator_forward.8} parent=1 // pred_check_branch
      %3236 = sbr.rel (0) target = $region40
    $region39: #{discriminator_forward.8} parent=1 // pred_region
      _
    $region40: #{discriminator_forward.8} parent=1 // pred_fallthru
      _
    // Predicated region
    $region41: #{discriminator_forward.8} parent=1 // pred_check
      _
    $region42: #{discriminator_forward.8} parent=1 // pred_check_branch
      %3238 = sbr.rel (0) target = $region44
    $region43: #{discriminator_forward.8} parent=1 // pred_region
      _
    $region44: #{discriminator_forward.8} parent=1 // pred_fallthru
      _
    // Predicated region
    $region45: #{discriminator_forward.8} parent=1 // pred_check
      _
    $region46: #{discriminator_forward.8} parent=1 // pred_check_branch
      %3240 = sbr.rel (0) target = $region48
    $region47: #{discriminator_forward.8} parent=1 // pred_region
      _
    $region48: #{discriminator_forward.8} parent=1 // pred_fallthru
      _
    // Predicated region
    $region49: #{discriminator_forward.8} parent=1 // pred_check
      _
    $region50: #{discriminator_forward.8} parent=1 // pred_check_branch
      %3242 = sbr.rel (0) target = $region52
    $region51: #{discriminator_forward.8} parent=1 // pred_region
      _
    $region52: #{discriminator_forward.8} parent=1 // pred_fallthru
      _
    %3243 = vsyncpa [#allocation3], 1

// kernel: discriminator_forward.9
$region0: #{discriminator_forward.9}
  #allocation0 [shape = 'u32[]', space=smem, size = 0x4, offset = 0x4, fixed_abs, tag = 'smem constant byte address 0x4 - core index']
  #allocation1 [shape = 'u32[72,128]{1,0:T(1,128)}', space=vmem, size = 0x9000, scoped, tag = 'internal scratch']
  #allocation2 [shape = 'f32[1,1]{1,0:T(1,128)S(1)}', space=vmem, size = 0x200, scoped, tag = 'scoped memory for discriminator_forward.9']
  %s0 = inlined_call_operand.vmem [shape: bf16[8,2,512], index: 0, kind: input, shape index: {}]
  %s1 = inlined_call_operand.vmem [shape: bf16[8,512,1], index: 1, kind: input, shape index: {}]
  %s2 = inlined_call_operand.vmem [shape: f32[1,512], index: 2, kind: input, shape index: {}]
  %s3 = inlined_call_operand.vmem [shape: f32[1,512], index: 3, kind: input, shape index: {}]
  %s4 = inlined_call_operand.<no memory space> [shape: f32[1,1], index: 4, kind: input, shape index: {}]
  %s5 = inlined_call_operand.vmem [shape: f32[2,1], index: 5, kind: output, shape index: {}]
  %s6 = sld [smem:[#allocation0]]
  $region30: #{discriminator_forward.9} parent=0
    _
  %s8 = ssub.s32 1, %s6
  %s9 = scalar_select 0, %s8, %s6
  %v10 = vstv %s4
  %11 = vst [vmem:[#allocation2] sm:$0x1] %v10
  // Predicated region
  $region2: #{discriminator_forward.9} parent=0 // pred_check
    _
  $region3: #{discriminator_forward.9} parent=0 // pred_check_branch
    %13 = sbr.rel (0) target = $region5
  $region4: #{discriminator_forward.9} parent=0 // pred_region
    _
  $region5: #{discriminator_forward.9} parent=0 // pred_fallthru
    _
  // Predicated region
  $region6: #{discriminator_forward.9} parent=0 // pred_check
    _
  $region7: #{discriminator_forward.9} parent=0 // pred_check_branch
    %15 = sbr.rel (0) target = $region9
  $region8: #{discriminator_forward.9} parent=0 // pred_region
    _
  $region9: #{discriminator_forward.9} parent=0 // pred_fallthru
    _
  // Predicated region
  $region10: #{discriminator_forward.9} parent=0 // pred_check
    _
  $region11: #{discriminator_forward.9} parent=0 // pred_check_branch
    %17 = sbr.rel (0) target = $region13
  $region12: #{discriminator_forward.9} parent=0 // pred_region
    _
  $region13: #{discriminator_forward.9} parent=0 // pred_fallthru
    _
  // Predicated region
  $region14: #{discriminator_forward.9} parent=0 // pred_check
    _
  $region15: #{discriminator_forward.9} parent=0 // pred_check_branch
    %19 = sbr.rel (0) target = $region17
  $region16: #{discriminator_forward.9} parent=0 // pred_region
    _
  $region17: #{discriminator_forward.9} parent=0 // pred_fallthru
    _
  // Predicated region
  $region18: #{discriminator_forward.9} parent=0 // pred_check
    _
  $region19: #{discriminator_forward.9} parent=0 // pred_check_branch
    %21 = sbr.rel (0) target = $region21
  $region20: #{discriminator_forward.9} parent=0 // pred_region
    _
  $region21: #{discriminator_forward.9} parent=0 // pred_fallthru
    _
  %v22 = vld [vmem:[%s0] sm:$0xf]
  %v23 = vunpack.c.l.bf16 %v22
  %v24 = vld [vmem:[%s2] sm:$0xf]
  %v26 = vperm.slane %v24, 0
  %v27 = vperm.slane %v24, 1
  %v28 = vperm.slane %v24, 2
  %v29 = vperm.slane %v24, 3
  %v30 = vrot.slane %v27, 6
  %v31 = vrot.slane %v28, 4
  %v32 = vrot.slane %v29, 2
  %vm33 = vcmask 1041408
  %v34 = vsel %vm33, %v26, %v30
  %vm35 = vcmask 1045508
  %v36 = vsel %vm35, %v31, %v32
  %vm37 = vcmask 1043456
  %v38 = vsel %vm37, %v34, %v36
  %v40 = vmul.f32 %v23, %v38
  %v41 = vld [vmem:[%s3] sm:$0xf]
  %v43 = vperm.slane %v41, 0
  %v44 = vperm.slane %v41, 1
  %v45 = vperm.slane %v41, 2
  %v46 = vperm.slane %v41, 3
  %v47 = vrot.slane %v44, 6
  %v48 = vrot.slane %v45, 4
  %v49 = vrot.slane %v46, 2
  %v50 = vsel %vm33, %v43, %v47
  %v51 = vsel %vm35, %v48, %v49
  %v52 = vsel %vm37, %v50, %v51
  %v54 = vadd.f32 %v40, %v52
  %vm55 = vcmp.ge.f32.partialorder %v54, 0.0
  %v56 = vmul.f32 %v54, 0.01
  %v57 = vsel %vm55, %v54, %v56
  %59 = vst [vmem:[#allocation1] ss:$4 sm:$0xff] %v57
  %v60 = vld.sshfl [vmem:[#allocation1] sm:$0xff pattern:$0x73625140]
  %v61 = vld.sshfl [vmem:[#allocation1 + $0x8] sm:$0xff pattern:$0x73625140]
  %v62 = vld.sshfl [vmem:[#allocation1 + $0x10] sm:$0xff pattern:$0x73625140]
  %v63 = vld.sshfl [vmem:[#allocation1 + $0x18] sm:$0xff pattern:$0x73625140]
  %v68 = vpack.c.bf16 %v60, %v60
  %v69 = vpack.c.bf16 %v61, %v61
  %v70 = vpack.c.bf16 %v62, %v62
  %v71 = vpack.c.bf16 %v63, %v63
  %v72 = vld [vmem:[%s1] sm:$0xf]
  %v73 = vld [vmem:[%s1 + $0x4] sm:$0xf]
  %v74 = vld [vmem:[%s1 + $0x8] sm:$0xf]
  %v75 = vld [vmem:[%s1 + $0xc] sm:$0xf]
  %v76 = vld [vmem:[%s1 + $0x10] sm:$0xf]
  %v77 = vld [vmem:[%s1 + $0x14] sm:$0xf]
  %v78 = vld [vmem:[%s1 + $0x18] sm:$0xf]
  %v79 = vld [vmem:[%s1 + $0x1c] sm:$0xf]
  %v80 = vld [vmem:[%s1 + $0x20] sm:$0xf]
  %v81 = vld [vmem:[%s1 + $0x24] sm:$0xf]
  %v82 = vld [vmem:[%s1 + $0x28] sm:$0xf]
  %v83 = vld [vmem:[%s1 + $0x2c] sm:$0xf]
  %v84 = vld [vmem:[%s1 + $0x30] sm:$0xf]
  %v85 = vld [vmem:[%s1 + $0x34] sm:$0xf]
  %v86 = vld [vmem:[%s1 + $0x38] sm:$0xf]
  %v87 = vld [vmem:[%s1 + $0x3c] sm:$0xf]
  %v88 = vld [vmem:[%s1 + $0x40] sm:$0xf]
  %v89 = vld [vmem:[%s1 + $0x44] sm:$0xf]
  %v90 = vld [vmem:[%s1 + $0x48] sm:$0xf]
  %v91 = vld [vmem:[%s1 + $0x4c] sm:$0xf]
  %v92 = vld [vmem:[%s1 + $0x50] sm:$0xf]
  %v93 = vld [vmem:[%s1 + $0x54] sm:$0xf]
  %v94 = vld [vmem:[%s1 + $0x58] sm:$0xf]
  %v95 = vld [vmem:[%s1 + $0x5c] sm:$0xf]
  %v96 = vld [vmem:[%s1 + $0x60] sm:$0xf]
  %v97 = vld [vmem:[%s1 + $0x64] sm:$0xf]
  %v98 = vld [vmem:[%s1 + $0x68] sm:$0xf]
  %v99 = vld [vmem:[%s1 + $0x6c] sm:$0xf]
  %v100 = vld [vmem:[%s1 + $0x70] sm:$0xf]
  %v101 = vld [vmem:[%s1 + $0x74] sm:$0xf]
  %v102 = vld [vmem:[%s1 + $0x78] sm:$0xf]
  %v103 = vld [vmem:[%s1 + $0x7c] sm:$0xf]
  %v104 = vld [vmem:[%s1 + $0x80] sm:$0xf]
  %v105 = vld [vmem:[%s1 + $0x84] sm:$0xf]
  %v106 = vld [vmem:[%s1 + $0x88] sm:$0xf]
  %v107 = vld [vmem:[%s1 + $0x8c] sm:$0xf]
  %v108 = vld [vmem:[%s1 + $0x90] sm:$0xf]
  %v109 = vld [vmem:[%s1 + $0x94] sm:$0xf]
  %v110 = vld [vmem:[%s1 + $0x98] sm:$0xf]
  %v111 = vld [vmem:[%s1 + $0x9c] sm:$0xf]
  %v112 = vld [vmem:[%s1 + $0xa0] sm:$0xf]
  %v113 = vld [vmem:[%s1 + $0xa4] sm:$0xf]
  %v114 = vld [vmem:[%s1 + $0xa8] sm:$0xf]
  %v115 = vld [vmem:[%s1 + $0xac] sm:$0xf]
  %v116 = vld [vmem:[%s1 + $0xb0] sm:$0xf]
  %v117 = vld [vmem:[%s1 + $0xb4] sm:$0xf]
  %v118 = vld [vmem:[%s1 + $0xb8] sm:$0xf]
  %v119 = vld [vmem:[%s1 + $0xbc] sm:$0xf]
  %v120 = vld [vmem:[%s1 + $0xc0] sm:$0xf]
  %v121 = vld [vmem:[%s1 + $0xc4] sm:$0xf]
  %v122 = vld [vmem:[%s1 + $0xc8] sm:$0xf]
  %v123 = vld [vmem:[%s1 + $0xcc] sm:$0xf]
  %v124 = vld [vmem:[%s1 + $0xd0] sm:$0xf]
  %v125 = vld [vmem:[%s1 + $0xd4] sm:$0xf]
  %v126 = vld [vmem:[%s1 + $0xd8] sm:$0xf]
  %v127 = vld [vmem:[%s1 + $0xdc] sm:$0xf]
  %v128 = vld [vmem:[%s1 + $0xe0] sm:$0xf]
  %v129 = vld [vmem:[%s1 + $0xe4] sm:$0xf]
  %v130 = vld [vmem:[%s1 + $0xe8] sm:$0xf]
  %v131 = vld [vmem:[%s1 + $0xec] sm:$0xf]
  %v132 = vld [vmem:[%s1 + $0xf0] sm:$0xf]
  %v133 = vld [vmem:[%s1 + $0xf4] sm:$0xf]
  %v134 = vld [vmem:[%s1 + $0xf8] sm:$0xf]
  %v135 = vld [vmem:[%s1 + $0xfc] sm:$0xf]
  %s136 = scalar_lea.vmem %s0, 4
  %v137 = vld [vmem:[%s136] sm:$0xf]
  %v138 = vunpack.c.l.bf16 %v137
  %v139 = vmul.f32 %v138, %v38
  %v140 = vadd.f32 %v139, %v52
  %vm141 = vcmp.ge.f32.partialorder %v140, 0.0
  %v142 = vmul.f32 %v140, 0.01
  %v143 = vsel %vm141, %v140, %v142
  %145 = vst [vmem:[#allocation1] ss:$4 sm:$0xff] %v143
  %v146 = vld.sshfl [vmem:[#allocation1] sm:$0xff pattern:$0x73625140]
  %v147 = vld.sshfl [vmem:[#allocation1 + $0x8] sm:$0xff pattern:$0x73625140]
  %v148 = vld.sshfl [vmem:[#allocation1 + $0x10] sm:$0xff pattern:$0x73625140]
  %v149 = vld.sshfl [vmem:[#allocation1 + $0x18] sm:$0xff pattern:$0x73625140]
  %v154 = vpack.c.bf16 %v146, %v146
  %v155 = vpack.c.bf16 %v147, %v147
  %v156 = vpack.c.bf16 %v148, %v148
  %v157 = vpack.c.bf16 %v149, %v149
  %s158 = scalar_lea.vmem %s1, 256
  %v159 = vld [vmem:[%s158] sm:$0xf]
  %v160 = vld [vmem:[%s158 + $0x4] sm:$0xf]
  %v161 = vld [vmem:[%s158 + $0x8] sm:$0xf]
  %v162 = vld [vmem:[%s158 + $0xc] sm:$0xf]
  %v163 = vld [vmem:[%s158 + $0x10] sm:$0xf]
  %v164 = vld [vmem:[%s158 + $0x14] sm:$0xf]
  %v165 = vld [vmem:[%s158 + $0x18] sm:$0xf]
  %v166 = vld [vmem:[%s158 + $0x1c] sm:$0xf]
  %v167 = vld [vmem:[%s158 + $0x20] sm:$0xf]
  %v168 = vld [vmem:[%s158 + $0x24] sm:$0xf]
  %v169 = vld [vmem:[%s158 + $0x28] sm:$0xf]
  %v170 = vld [vmem:[%s158 + $0x2c] sm:$0xf]
  %v171 = vld [vmem:[%s158 + $0x30] sm:$0xf]
  %v172 = vld [vmem:[%s158 + $0x34] sm:$0xf]
  %v173 = vld [vmem:[%s158 + $0x38] sm:$0xf]
  %v174 = vld [vmem:[%s158 + $0x3c] sm:$0xf]
  %v175 = vld [vmem:[%s158 + $0x40] sm:$0xf]
  %v176 = vld [vmem:[%s158 + $0x44] sm:$0xf]
  %v177 = vld [vmem:[%s158 + $0x48] sm:$0xf]
  %v178 = vld [vmem:[%s158 + $0x4c] sm:$0xf]
  %v179 = vld [vmem:[%s158 + $0x50] sm:$0xf]
  %v180 = vld [vmem:[%s158 + $0x54] sm:$0xf]
  %v181 = vld [vmem:[%s158 + $0x58] sm:$0xf]
  %v182 = vld [vmem:[%s158 + $0x5c] sm:$0xf]
  %v183 = vld [vmem:[%s158 + $0x60] sm:$0xf]
  %v184 = vld [vmem:[%s158 + $0x64] sm:$0xf]
  %v185 = vld [vmem:[%s158 + $0x68] sm:$0xf]
  %v186 = vld [vmem:[%s158 + $0x6c] sm:$0xf]
  %v187 = vld [vmem:[%s158 + $0x70] sm:$0xf]
  %v188 = vld [vmem:[%s158 + $0x74] sm:$0xf]
  %v189 = vld [vmem:[%s158 + $0x78] sm:$0xf]
  %v190 = vld [vmem:[%s158 + $0x7c] sm:$0xf]
  %v191 = vld [vmem:[%s158 + $0x80] sm:$0xf]
  %v192 = vld [vmem:[%s158 + $0x84] sm:$0xf]
  %v193 = vld [vmem:[%s158 + $0x88] sm:$0xf]
  %v194 = vld [vmem:[%s158 + $0x8c] sm:$0xf]
  %v195 = vld [vmem:[%s158 + $0x90] sm:$0xf]
  %v196 = vld [vmem:[%s158 + $0x94] sm:$0xf]
  %v197 = vld [vmem:[%s158 + $0x98] sm:$0xf]
  %v198 = vld [vmem:[%s158 + $0x9c] sm:$0xf]
  %v199 = vld [vmem:[%s158 + $0xa0] sm:$0xf]
  %v200 = vld [vmem:[%s158 + $0xa4] sm:$0xf]
  %v201 = vld [vmem:[%s158 + $0xa8] sm:$0xf]
  %v202 = vld [vmem:[%s158 + $0xac] sm:$0xf]
  %v203 = vld [vmem:[%s158 + $0xb0] sm:$0xf]
  %v204 = vld [vmem:[%s158 + $0xb4] sm:$0xf]
  %v205 = vld [vmem:[%s158 + $0xb8] sm:$0xf]
  %v206 = vld [vmem:[%s158 + $0xbc] sm:$0xf]
  %v207 = vld [vmem:[%s158 + $0xc0] sm:$0xf]
  %v208 = vld [vmem:[%s158 + $0xc4] sm:$0xf]
  %v209 = vld [vmem:[%s158 + $0xc8] sm:$0xf]
  %v210 = vld [vmem:[%s158 + $0xcc] sm:$0xf]
  %v211 = vld [vmem:[%s158 + $0xd0] sm:$0xf]
  %v212 = vld [vmem:[%s158 + $0xd4] sm:$0xf]
  %v213 = vld [vmem:[%s158 + $0xd8] sm:$0xf]
  %v214 = vld [vmem:[%s158 + $0xdc] sm:$0xf]
  %v215 = vld [vmem:[%s158 + $0xe0] sm:$0xf]
  %v216 = vld [vmem:[%s158 + $0xe4] sm:$0xf]
  %v217 = vld [vmem:[%s158 + $0xe8] sm:$0xf]
  %v218 = vld [vmem:[%s158 + $0xec] sm:$0xf]
  %v219 = vld [vmem:[%s158 + $0xf0] sm:$0xf]
  %v220 = vld [vmem:[%s158 + $0xf4] sm:$0xf]
  %v221 = vld [vmem:[%s158 + $0xf8] sm:$0xf]
  %v222 = vld [vmem:[%s158 + $0xfc] sm:$0xf]
  %v287 = vunpack.c.l.b16 %v159
  %v288 = vunpack.c.l.b16 %v160
  %v289 = vunpack.c.l.b16 %v161
  %v290 = vunpack.c.l.b16 %v162
  %v291 = vunpack.c.l.b16 %v163
  %v292 = vunpack.c.l.b16 %v164
  %v293 = vunpack.c.l.b16 %v165
  %v294 = vunpack.c.l.b16 %v166
  %v295 = vunpack.c.l.b16 %v167
  %v296 = vunpack.c.l.b16 %v168
  %v297 = vunpack.c.l.b16 %v169
  %v298 = vunpack.c.l.b16 %v170
  %v299 = vunpack.c.l.b16 %v171
  %v300 = vunpack.c.l.b16 %v172
  %v301 = vunpack.c.l.b16 %v173
  %v302 = vunpack.c.l.b16 %v174
  %v303 = vunpack.c.l.b16 %v175
  %v304 = vunpack.c.l.b16 %v176
  %v305 = vunpack.c.l.b16 %v177
  %v306 = vunpack.c.l.b16 %v178
  %v307 = vunpack.c.l.b16 %v179
  %v308 = vunpack.c.l.b16 %v180
  %v309 = vunpack.c.l.b16 %v181
  %v310 = vunpack.c.l.b16 %v182
  %v311 = vunpack.c.l.b16 %v183
  %v312 = vunpack.c.l.b16 %v184
  %v313 = vunpack.c.l.b16 %v185
  %v314 = vunpack.c.l.b16 %v186
  %v315 = vunpack.c.l.b16 %v187
  %v316 = vunpack.c.l.b16 %v188
  %v317 = vunpack.c.l.b16 %v189
  %v318 = vunpack.c.l.b16 %v190
  %v319 = vunpack.c.l.b16 %v191
  %v320 = vunpack.c.l.b16 %v192
  %v321 = vunpack.c.l.b16 %v193
  %v322 = vunpack.c.l.b16 %v194
  %v323 = vunpack.c.l.b16 %v195
  %v324 = vunpack.c.l.b16 %v196
  %v325 = vunpack.c.l.b16 %v197
  %v326 = vunpack.c.l.b16 %v198
  %v327 = vunpack.c.l.b16 %v199
  %v328 = vunpack.c.l.b16 %v200
  %v329 = vunpack.c.l.b16 %v201
  %v330 = vunpack.c.l.b16 %v202
  %v331 = vunpack.c.l.b16 %v203
  %v332 = vunpack.c.l.b16 %v204
  %v333 = vunpack.c.l.b16 %v205
  %v334 = vunpack.c.l.b16 %v206
  %v335 = vunpack.c.l.b16 %v207
  %v336 = vunpack.c.l.b16 %v208
  %v337 = vunpack.c.l.b16 %v209
  %v338 = vunpack.c.l.b16 %v210
  %v339 = vunpack.c.l.b16 %v211
  %v340 = vunpack.c.l.b16 %v212
  %v341 = vunpack.c.l.b16 %v213
  %v342 = vunpack.c.l.b16 %v214
  %v343 = vunpack.c.l.b16 %v215
  %v344 = vunpack.c.l.b16 %v216
  %v345 = vunpack.c.l.b16 %v217
  %v346 = vunpack.c.l.b16 %v218
  %v347 = vunpack.c.l.b16 %v219
  %v348 = vunpack.c.l.b16 %v220
  %v349 = vunpack.c.l.b16 %v221
  %v350 = vunpack.c.l.b16 %v222
  %v351 = vpack.c.b16 %v288, %v287
  %v352 = vpack.c.b16 %v290, %v289
  %v353 = vpack.c.b16 %v292, %v291
  %v354 = vpack.c.b16 %v294, %v293
  %v355 = vpack.c.b16 %v296, %v295
  %v356 = vpack.c.b16 %v298, %v297
  %v357 = vpack.c.b16 %v300, %v299
  %v358 = vpack.c.b16 %v302, %v301
  %v359 = vpack.c.b16 %v304, %v303
  %v360 = vpack.c.b16 %v306, %v305
  %v361 = vpack.c.b16 %v308, %v307
  %v362 = vpack.c.b16 %v310, %v309
  %v363 = vpack.c.b16 %v312, %v311
  %v364 = vpack.c.b16 %v314, %v313
  %v365 = vpack.c.b16 %v316, %v315
  %v366 = vpack.c.b16 %v318, %v317
  %v367 = vpack.c.b16 %v320, %v319
  %v368 = vpack.c.b16 %v322, %v321
  %v369 = vpack.c.b16 %v324, %v323
  %v370 = vpack.c.b16 %v326, %v325
  %v371 = vpack.c.b16 %v328, %v327
  %v372 = vpack.c.b16 %v330, %v329
  %v373 = vpack.c.b16 %v332, %v331
  %v374 = vpack.c.b16 %v334, %v333
  %v375 = vpack.c.b16 %v336, %v335
  %v376 = vpack.c.b16 %v338, %v337
  %v377 = vpack.c.b16 %v340, %v339
  %v378 = vpack.c.b16 %v342, %v341
  %v379 = vpack.c.b16 %v344, %v343
  %v380 = vpack.c.b16 %v346, %v345
  %v381 = vpack.c.b16 %v348, %v347
  %v382 = vpack.c.b16 %v350, %v349
  %415 = vmatpush.bf16.msra.mxu0 %v358
  %416 = vmatpush.bf16.msra.mxu0 %v357
  %417 = vmatpush.bf16.msra.mxu0 %v356
  %418 = vmatpush.bf16.msra.mxu0 %v355
  %419 = vmatpush.bf16.msra.mxu0 %v354
  %420 = vmatpush.bf16.msra.mxu0 %v353
  %421 = vmatpush.bf16.msra.mxu0 %v352
  %422 = vmatpush.bf16.msra.mxu0 %v351
  %423 = vmatmul.bf16.gmra.mxu0 %v154
  %v424 = vpop.f32.mrf.mxu0
  %v425 = vadd.f32 0.0, %v424
  %v426 = vpop.f32.mrf.mxu0
  %427 = vdwg.mxu0
  %428 = vmatpush.bf16.msra.mxu0 %v366
  %429 = vmatpush.bf16.msra.mxu0 %v365
  %430 = vmatpush.bf16.msra.mxu0 %v364
  %431 = vmatpush.bf16.msra.mxu0 %v363
  %432 = vmatpush.bf16.msra.mxu0 %v362
  %433 = vmatpush.bf16.msra.mxu0 %v361
  %434 = vmatpush.bf16.msra.mxu0 %v360
  %435 = vmatpush.bf16.msra.mxu0 %v359
  %436 = vmatmul.bf16.gmra.mxu0 %v155
  %v437 = vpop.f32.mrf.mxu0
  %v438 = vadd.f32 %v425, %v437
  %v439 = vpop.f32.mrf.mxu0
  %440 = vdwg.mxu0
  %441 = vmatpush.bf16.msra.mxu0 %v374
  %442 = vmatpush.bf16.msra.mxu0 %v373
  %443 = vmatpush.bf16.msra.mxu0 %v372
  %444 = vmatpush.bf16.msra.mxu0 %v371
  %445 = vmatpush.bf16.msra.mxu0 %v370
  %446 = vmatpush.bf16.msra.mxu0 %v369
  %447 = vmatpush.bf16.msra.mxu0 %v368
  %448 = vmatpush.bf16.msra.mxu0 %v367
  %449 = vmatmul.bf16.gmra.mxu0 %v156
  %v450 = vpop.f32.mrf.mxu0
  %v451 = vadd.f32 %v438, %v450
  %v452 = vpop.f32.mrf.mxu0
  %453 = vdwg.mxu0
  %454 = vmatpush.bf16.msra.mxu0 %v382
  %455 = vmatpush.bf16.msra.mxu0 %v381
  %456 = vmatpush.bf16.msra.mxu0 %v380
  %457 = vmatpush.bf16.msra.mxu0 %v379
  %458 = vmatpush.bf16.msra.mxu0 %v378
  %459 = vmatpush.bf16.msra.mxu0 %v377
  %460 = vmatpush.bf16.msra.mxu0 %v376
  %461 = vmatpush.bf16.msra.mxu0 %v375
  %462 = vmatmul.bf16.gmra.mxu0 %v157
  %v463 = vpop.f32.mrf.mxu0
  %v464 = vadd.f32 %v451, %v463
  %v465 = vpop.f32.mrf.mxu0
  %466 = vdwg.mxu0
  %v531 = vunpack.c.l.b16 %v72
  %v532 = vunpack.c.l.b16 %v73
  %v533 = vunpack.c.l.b16 %v74
  %v534 = vunpack.c.l.b16 %v75
  %v535 = vunpack.c.l.b16 %v76
  %v536 = vunpack.c.l.b16 %v77
  %v537 = vunpack.c.l.b16 %v78
  %v538 = vunpack.c.l.b16 %v79
  %v539 = vunpack.c.l.b16 %v80
  %v540 = vunpack.c.l.b16 %v81
  %v541 = vunpack.c.l.b16 %v82
  %v542 = vunpack.c.l.b16 %v83
  %v543 = vunpack.c.l.b16 %v84
  %v544 = vunpack.c.l.b16 %v85
  %v545 = vunpack.c.l.b16 %v86
  %v546 = vunpack.c.l.b16 %v87
  %v547 = vunpack.c.l.b16 %v88
  %v548 = vunpack.c.l.b16 %v89
  %v549 = vunpack.c.l.b16 %v90
  %v550 = vunpack.c.l.b16 %v91
  %v551 = vunpack.c.l.b16 %v92
  %v552 = vunpack.c.l.b16 %v93
  %v553 = vunpack.c.l.b16 %v94
  %v554 = vunpack.c.l.b16 %v95
  %v555 = vunpack.c.l.b16 %v96
  %v556 = vunpack.c.l.b16 %v97
  %v557 = vunpack.c.l.b16 %v98
  %v558 = vunpack.c.l.b16 %v99
  %v559 = vunpack.c.l.b16 %v100
  %v560 = vunpack.c.l.b16 %v101
  %v561 = vunpack.c.l.b16 %v102
  %v562 = vunpack.c.l.b16 %v103
  %v563 = vunpack.c.l.b16 %v104
  %v564 = vunpack.c.l.b16 %v105
  %v565 = vunpack.c.l.b16 %v106
  %v566 = vunpack.c.l.b16 %v107
  %v567 = vunpack.c.l.b16 %v108
  %v568 = vunpack.c.l.b16 %v109
  %v569 = vunpack.c.l.b16 %v110
  %v570 = vunpack.c.l.b16 %v111
  %v571 = vunpack.c.l.b16 %v112
  %v572 = vunpack.c.l.b16 %v113
  %v573 = vunpack.c.l.b16 %v114
  %v574 = vunpack.c.l.b16 %v115
  %v575 = vunpack.c.l.b16 %v116
  %v576 = vunpack.c.l.b16 %v117
  %v577 = vunpack.c.l.b16 %v118
  %v578 = vunpack.c.l.b16 %v119
  %v579 = vunpack.c.l.b16 %v120
  %v580 = vunpack.c.l.b16 %v121
  %v581 = vunpack.c.l.b16 %v122
  %v582 = vunpack.c.l.b16 %v123
  %v583 = vunpack.c.l.b16 %v124
  %v584 = vunpack.c.l.b16 %v125
  %v585 = vunpack.c.l.b16 %v126
  %v586 = vunpack.c.l.b16 %v127
  %v587 = vunpack.c.l.b16 %v128
  %v588 = vunpack.c.l.b16 %v129
  %v589 = vunpack.c.l.b16 %v130
  %v590 = vunpack.c.l.b16 %v131
  %v591 = vunpack.c.l.b16 %v132
  %v592 = vunpack.c.l.b16 %v133
  %v593 = vunpack.c.l.b16 %v134
  %v594 = vunpack.c.l.b16 %v135
  %v595 = vpack.c.b16 %v532, %v531
  %v596 = vpack.c.b16 %v534, %v533
  %v597 = vpack.c.b16 %v536, %v535
  %v598 = vpack.c.b16 %v538, %v537
  %v599 = vpack.c.b16 %v540, %v539
  %v600 = vpack.c.b16 %v542, %v541
  %v601 = vpack.c.b16 %v544, %v543
  %v602 = vpack.c.b16 %v546, %v545
  %v603 = vpack.c.b16 %v548, %v547
  %v604 = vpack.c.b16 %v550, %v549
  %v605 = vpack.c.b16 %v552, %v551
  %v606 = vpack.c.b16 %v554, %v553
  %v607 = vpack.c.b16 %v556, %v555
  %v608 = vpack.c.b16 %v558, %v557
  %v609 = vpack.c.b16 %v560, %v559
  %v610 = vpack.c.b16 %v562, %v561
  %v611 = vpack.c.b16 %v564, %v563
  %v612 = vpack.c.b16 %v566, %v565
  %v613 = vpack.c.b16 %v568, %v567
  %v614 = vpack.c.b16 %v570, %v569
  %v615 = vpack.c.b16 %v572, %v571
  %v616 = vpack.c.b16 %v574, %v573
  %v617 = vpack.c.b16 %v576, %v575
  %v618 = vpack.c.b16 %v578, %v577
  %v619 = vpack.c.b16 %v580, %v579
  %v620 = vpack.c.b16 %v582, %v581
  %v621 = vpack.c.b16 %v584, %v583
  %v622 = vpack.c.b16 %v586, %v585
  %v623 = vpack.c.b16 %v588, %v587
  %v624 = vpack.c.b16 %v590, %v589
  %v625 = vpack.c.b16 %v592, %v591
  %v626 = vpack.c.b16 %v594, %v593
  %659 = vmatpush.bf16.msra.mxu0 %v602
  %660 = vmatpush.bf16.msra.mxu0 %v601
  %661 = vmatpush.bf16.msra.mxu0 %v600
  %662 = vmatpush.bf16.msra.mxu0 %v599
  %663 = vmatpush.bf16.msra.mxu0 %v598
  %664 = vmatpush.bf16.msra.mxu0 %v597
  %665 = vmatpush.bf16.msra.mxu0 %v596
  %666 = vmatpush.bf16.msra.mxu0 %v595
  %667 = vmatmul.bf16.gmra.mxu0 %v68
  %v668 = vpop.f32.mrf.mxu0
  %v669 = vadd.f32 %v464, %v668
  %v670 = vpop.f32.mrf.mxu0
  %671 = vdwg.mxu0
  %672 = vmatpush.bf16.msra.mxu0 %v610
  %673 = vmatpush.bf16.msra.mxu0 %v609
  %674 = vmatpush.bf16.msra.mxu0 %v608
  %675 = vmatpush.bf16.msra.mxu0 %v607
  %676 = vmatpush.bf16.msra.mxu0 %v606
  %677 = vmatpush.bf16.msra.mxu0 %v605
  %678 = vmatpush.bf16.msra.mxu0 %v604
  %679 = vmatpush.bf16.msra.mxu0 %v603
  %680 = vmatmul.bf16.gmra.mxu0 %v69
  %v681 = vpop.f32.mrf.mxu0
  %v682 = vadd.f32 %v669, %v681
  %v683 = vpop.f32.mrf.mxu0
  %684 = vdwg.mxu0
  %685 = vmatpush.bf16.msra.mxu0 %v618
  %686 = vmatpush.bf16.msra.mxu0 %v617
  %687 = vmatpush.bf16.msra.mxu0 %v616
  %688 = vmatpush.bf16.msra.mxu0 %v615
  %689 = vmatpush.bf16.msra.mxu0 %v614
  %690 = vmatpush.bf16.msra.mxu0 %v613
  %691 = vmatpush.bf16.msra.mxu0 %v612
  %692 = vmatpush.bf16.msra.mxu0 %v611
  %693 = vmatmul.bf16.gmra.mxu0 %v70
  %v694 = vpop.f32.mrf.mxu0
  %v695 = vadd.f32 %v682, %v694
  %v696 = vpop.f32.mrf.mxu0
  %697 = vdwg.mxu0
  %698 = vmatpush.bf16.msra.mxu0 %v626
  %699 = vmatpush.bf16.msra.mxu0 %v625
  %700 = vmatpush.bf16.msra.mxu0 %v624
  %701 = vmatpush.bf16.msra.mxu0 %v623
  %702 = vmatpush.bf16.msra.mxu0 %v622
  %703 = vmatpush.bf16.msra.mxu0 %v621
  %704 = vmatpush.bf16.msra.mxu0 %v620
  %705 = vmatpush.bf16.msra.mxu0 %v619
  %706 = vmatmul.bf16.gmra.mxu0 %v71
  %v707 = vpop.f32.mrf.mxu0
  %v708 = vadd.f32 %v695, %v707
  %v709 = vpop.f32.mrf.mxu0
  %710 = vdwg.mxu0
  %s711 = scalar_lea.vmem %s0, 8
  %v712 = vld [vmem:[%s711] sm:$0xf]
  %v713 = vunpack.c.l.bf16 %v712
  %v714 = vmul.f32 %v713, %v38
  %v715 = vadd.f32 %v714, %v52
  %vm716 = vcmp.ge.f32.partialorder %v715, 0.0
  %v717 = vmul.f32 %v715, 0.01
  %v718 = vsel %vm716, %v715, %v717
  %720 = vst [vmem:[#allocation1] ss:$4 sm:$0xff] %v718
  %v721 = vld.sshfl [vmem:[#allocation1] sm:$0xff pattern:$0x73625140]
  %v722 = vld.sshfl [vmem:[#allocation1 + $0x8] sm:$0xff pattern:$0x73625140]
  %v723 = vld.sshfl [vmem:[#allocation1 + $0x10] sm:$0xff pattern:$0x73625140]
  %v724 = vld.sshfl [vmem:[#allocation1 + $0x18] sm:$0xff pattern:$0x73625140]
  %v729 = vpack.c.bf16 %v721, %v721
  %v730 = vpack.c.bf16 %v722, %v722
  %v731 = vpack.c.bf16 %v723, %v723
  %v732 = vpack.c.bf16 %v724, %v724
  %s733 = scalar_lea.vmem %s1, 512
  %v734 = vld [vmem:[%s733] sm:$0xf]
  %v735 = vld [vmem:[%s733 + $0x4] sm:$0xf]
  %v736 = vld [vmem:[%s733 + $0x8] sm:$0xf]
  %v737 = vld [vmem:[%s733 + $0xc] sm:$0xf]
  %v738 = vld [vmem:[%s733 + $0x10] sm:$0xf]
  %v739 = vld [vmem:[%s733 + $0x14] sm:$0xf]
  %v740 = vld [vmem:[%s733 + $0x18] sm:$0xf]
  %v741 = vld [vmem:[%s733 + $0x1c] sm:$0xf]
  %v742 = vld [vmem:[%s733 + $0x20] sm:$0xf]
  %v743 = vld [vmem:[%s733 + $0x24] sm:$0xf]
  %v744 = vld [vmem:[%s733 + $0x28] sm:$0xf]
  %v745 = vld [vmem:[%s733 + $0x2c] sm:$0xf]
  %v746 = vld [vmem:[%s733 + $0x30] sm:$0xf]
  %v747 = vld [vmem:[%s733 + $0x34] sm:$0xf]
  %v748 = vld [vmem:[%s733 + $0x38] sm:$0xf]
  %v749 = vld [vmem:[%s733 + $0x3c] sm:$0xf]
  %v750 = vld [vmem:[%s733 + $0x40] sm:$0xf]
  %v751 = vld [vmem:[%s733 + $0x44] sm:$0xf]
  %v752 = vld [vmem:[%s733 + $0x48] sm:$0xf]
  %v753 = vld [vmem:[%s733 + $0x4c] sm:$0xf]
  %v754 = vld [vmem:[%s733 + $0x50] sm:$0xf]
  %v755 = vld [vmem:[%s733 + $0x54] sm:$0xf]
  %v756 = vld [vmem:[%s733 + $0x58] sm:$0xf]
  %v757 = vld [vmem:[%s733 + $0x5c] sm:$0xf]
  %v758 = vld [vmem:[%s733 + $0x60] sm:$0xf]
  %v759 = vld [vmem:[%s733 + $0x64] sm:$0xf]
  %v760 = vld [vmem:[%s733 + $0x68] sm:$0xf]
  %v761 = vld [vmem:[%s733 + $0x6c] sm:$0xf]
  %v762 = vld [vmem:[%s733 + $0x70] sm:$0xf]
  %v763 = vld [vmem:[%s733 + $0x74] sm:$0xf]
  %v764 = vld [vmem:[%s733 + $0x78] sm:$0xf]
  %v765 = vld [vmem:[%s733 + $0x7c] sm:$0xf]
  %v766 = vld [vmem:[%s733 + $0x80] sm:$0xf]
  %v767 = vld [vmem:[%s733 + $0x84] sm:$0xf]
  %v768 = vld [vmem:[%s733 + $0x88] sm:$0xf]
  %v769 = vld [vmem:[%s733 + $0x8c] sm:$0xf]
  %v770 = vld [vmem:[%s733 + $0x90] sm:$0xf]
  %v771 = vld [vmem:[%s733 + $0x94] sm:$0xf]
  %v772 = vld [vmem:[%s733 + $0x98] sm:$0xf]
  %v773 = vld [vmem:[%s733 + $0x9c] sm:$0xf]
  %v774 = vld [vmem:[%s733 + $0xa0] sm:$0xf]
  %v775 = vld [vmem:[%s733 + $0xa4] sm:$0xf]
  %v776 = vld [vmem:[%s733 + $0xa8] sm:$0xf]
  %v777 = vld [vmem:[%s733 + $0xac] sm:$0xf]
  %v778 = vld [vmem:[%s733 + $0xb0] sm:$0xf]
  %v779 = vld [vmem:[%s733 + $0xb4] sm:$0xf]
  %v780 = vld [vmem:[%s733 + $0xb8] sm:$0xf]
  %v781 = vld [vmem:[%s733 + $0xbc] sm:$0xf]
  %v782 = vld [vmem:[%s733 + $0xc0] sm:$0xf]
  %v783 = vld [vmem:[%s733 + $0xc4] sm:$0xf]
  %v784 = vld [vmem:[%s733 + $0xc8] sm:$0xf]
  %v785 = vld [vmem:[%s733 + $0xcc] sm:$0xf]
  %v786 = vld [vmem:[%s733 + $0xd0] sm:$0xf]
  %v787 = vld [vmem:[%s733 + $0xd4] sm:$0xf]
  %v788 = vld [vmem:[%s733 + $0xd8] sm:$0xf]
  %v789 = vld [vmem:[%s733 + $0xdc] sm:$0xf]
  %v790 = vld [vmem:[%s733 + $0xe0] sm:$0xf]
  %v791 = vld [vmem:[%s733 + $0xe4] sm:$0xf]
  %v792 = vld [vmem:[%s733 + $0xe8] sm:$0xf]
  %v793 = vld [vmem:[%s733 + $0xec] sm:$0xf]
  %v794 = vld [vmem:[%s733 + $0xf0] sm:$0xf]
  %v795 = vld [vmem:[%s733 + $0xf4] sm:$0xf]
  %v796 = vld [vmem:[%s733 + $0xf8] sm:$0xf]
  %v797 = vld [vmem:[%s733 + $0xfc] sm:$0xf]
  %v862 = vunpack.c.l.b16 %v734
  %v863 = vunpack.c.l.b16 %v735
  %v864 = vunpack.c.l.b16 %v736
  %v865 = vunpack.c.l.b16 %v737
  %v866 = vunpack.c.l.b16 %v738
  %v867 = vunpack.c.l.b16 %v739
  %v868 = vunpack.c.l.b16 %v740
  %v869 = vunpack.c.l.b16 %v741
  %v870 = vunpack.c.l.b16 %v742
  %v871 = vunpack.c.l.b16 %v743
  %v872 = vunpack.c.l.b16 %v744
  %v873 = vunpack.c.l.b16 %v745
  %v874 = vunpack.c.l.b16 %v746
  %v875 = vunpack.c.l.b16 %v747
  %v876 = vunpack.c.l.b16 %v748
  %v877 = vunpack.c.l.b16 %v749
  %v878 = vunpack.c.l.b16 %v750
  %v879 = vunpack.c.l.b16 %v751
  %v880 = vunpack.c.l.b16 %v752
  %v881 = vunpack.c.l.b16 %v753
  %v882 = vunpack.c.l.b16 %v754
  %v883 = vunpack.c.l.b16 %v755
  %v884 = vunpack.c.l.b16 %v756
  %v885 = vunpack.c.l.b16 %v757
  %v886 = vunpack.c.l.b16 %v758
  %v887 = vunpack.c.l.b16 %v759
  %v888 = vunpack.c.l.b16 %v760
  %v889 = vunpack.c.l.b16 %v761
  %v890 = vunpack.c.l.b16 %v762
  %v891 = vunpack.c.l.b16 %v763
  %v892 = vunpack.c.l.b16 %v764
  %v893 = vunpack.c.l.b16 %v765
  %v894 = vunpack.c.l.b16 %v766
  %v895 = vunpack.c.l.b16 %v767
  %v896 = vunpack.c.l.b16 %v768
  %v897 = vunpack.c.l.b16 %v769
  %v898 = vunpack.c.l.b16 %v770
  %v899 = vunpack.c.l.b16 %v771
  %v900 = vunpack.c.l.b16 %v772
  %v901 = vunpack.c.l.b16 %v773
  %v902 = vunpack.c.l.b16 %v774
  %v903 = vunpack.c.l.b16 %v775
  %v904 = vunpack.c.l.b16 %v776
  %v905 = vunpack.c.l.b16 %v777
  %v906 = vunpack.c.l.b16 %v778
  %v907 = vunpack.c.l.b16 %v779
  %v908 = vunpack.c.l.b16 %v780
  %v909 = vunpack.c.l.b16 %v781
  %v910 = vunpack.c.l.b16 %v782
  %v911 = vunpack.c.l.b16 %v783
  %v912 = vunpack.c.l.b16 %v784
  %v913 = vunpack.c.l.b16 %v785
  %v914 = vunpack.c.l.b16 %v786
  %v915 = vunpack.c.l.b16 %v787
  %v916 = vunpack.c.l.b16 %v788
  %v917 = vunpack.c.l.b16 %v789
  %v918 = vunpack.c.l.b16 %v790
  %v919 = vunpack.c.l.b16 %v791
  %v920 = vunpack.c.l.b16 %v792
  %v921 = vunpack.c.l.b16 %v793
  %v922 = vunpack.c.l.b16 %v794
  %v923 = vunpack.c.l.b16 %v795
  %v924 = vunpack.c.l.b16 %v796
  %v925 = vunpack.c.l.b16 %v797
  %v926 = vpack.c.b16 %v863, %v862
  %v927 = vpack.c.b16 %v865, %v864
  %v928 = vpack.c.b16 %v867, %v866
  %v929 = vpack.c.b16 %v869, %v868
  %v930 = vpack.c.b16 %v871, %v870
  %v931 = vpack.c.b16 %v873, %v872
  %v932 = vpack.c.b16 %v875, %v874
  %v933 = vpack.c.b16 %v877, %v876
  %v934 = vpack.c.b16 %v879, %v878
  %v935 = vpack.c.b16 %v881, %v880
  %v936 = vpack.c.b16 %v883, %v882
  %v937 = vpack.c.b16 %v885, %v884
  %v938 = vpack.c.b16 %v887, %v886
  %v939 = vpack.c.b16 %v889, %v888
  %v940 = vpack.c.b16 %v891, %v890
  %v941 = vpack.c.b16 %v893, %v892
  %v942 = vpack.c.b16 %v895, %v894
  %v943 = vpack.c.b16 %v897, %v896
  %v944 = vpack.c.b16 %v899, %v898
  %v945 = vpack.c.b16 %v901, %v900
  %v946 = vpack.c.b16 %v903, %v902
  %v947 = vpack.c.b16 %v905, %v904
  %v948 = vpack.c.b16 %v907, %v906
  %v949 = vpack.c.b16 %v909, %v908
  %v950 = vpack.c.b16 %v911, %v910
  %v951 = vpack.c.b16 %v913, %v912
  %v952 = vpack.c.b16 %v915, %v914
  %v953 = vpack.c.b16 %v917, %v916
  %v954 = vpack.c.b16 %v919, %v918
  %v955 = vpack.c.b16 %v921, %v920
  %v956 = vpack.c.b16 %v923, %v922
  %v957 = vpack.c.b16 %v925, %v924
  %990 = vmatpush.bf16.msra.mxu0 %v933
  %991 = vmatpush.bf16.msra.mxu0 %v932
  %992 = vmatpush.bf16.msra.mxu0 %v931
  %993 = vmatpush.bf16.msra.mxu0 %v930
  %994 = vmatpush.bf16.msra.mxu0 %v929
  %995 = vmatpush.bf16.msra.mxu0 %v928
  %996 = vmatpush.bf16.msra.mxu0 %v927
  %997 = vmatpush.bf16.msra.mxu0 %v926
  %998 = vmatmul.bf16.gmra.mxu0 %v729
  %v999 = vpop.f32.mrf.mxu0
  %v1000 = vadd.f32 0.0, %v999
  %v1001 = vpop.f32.mrf.mxu0
  %1002 = vdwg.mxu0
  %1003 = vmatpush.bf16.msra.mxu0 %v941
  %1004 = vmatpush.bf16.msra.mxu0 %v940
  %1005 = vmatpush.bf16.msra.mxu0 %v939
  %1006 = vmatpush.bf16.msra.mxu0 %v938
  %1007 = vmatpush.bf16.msra.mxu0 %v937
  %1008 = vmatpush.bf16.msra.mxu0 %v936
  %1009 = vmatpush.bf16.msra.mxu0 %v935
  %1010 = vmatpush.bf16.msra.mxu0 %v934
  %1011 = vmatmul.bf16.gmra.mxu0 %v730
  %v1012 = vpop.f32.mrf.mxu0
  %v1013 = vadd.f32 %v1000, %v1012
  %v1014 = vpop.f32.mrf.mxu0
  %1015 = vdwg.mxu0
  %1016 = vmatpush.bf16.msra.mxu0 %v949
  %1017 = vmatpush.bf16.msra.mxu0 %v948
  %1018 = vmatpush.bf16.msra.mxu0 %v947
  %1019 = vmatpush.bf16.msra.mxu0 %v946
  %1020 = vmatpush.bf16.msra.mxu0 %v945
  %1021 = vmatpush.bf16.msra.mxu0 %v944
  %1022 = vmatpush.bf16.msra.mxu0 %v943
  %1023 = vmatpush.bf16.msra.mxu0 %v942
  %1024 = vmatmul.bf16.gmra.mxu0 %v731
  %v1025 = vpop.f32.mrf.mxu0
  %v1026 = vadd.f32 %v1013, %v1025
  %v1027 = vpop.f32.mrf.mxu0
  %1028 = vdwg.mxu0
  %1029 = vmatpush.bf16.msra.mxu0 %v957
  %1030 = vmatpush.bf16.msra.mxu0 %v956
  %1031 = vmatpush.bf16.msra.mxu0 %v955
  %1032 = vmatpush.bf16.msra.mxu0 %v954
  %1033 = vmatpush.bf16.msra.mxu0 %v953
  %1034 = vmatpush.bf16.msra.mxu0 %v952
  %1035 = vmatpush.bf16.msra.mxu0 %v951
  %1036 = vmatpush.bf16.msra.mxu0 %v950
  %1037 = vmatmul.bf16.gmra.mxu0 %v732
  %v1038 = vpop.f32.mrf.mxu0
  %v1039 = vadd.f32 %v1026, %v1038
  %v1040 = vpop.f32.mrf.mxu0
  %1041 = vdwg.mxu0
  %v1042 = vadd.f32 %v708, %v1039
  %s1043 = scalar_lea.vmem %s0, 12
  %v1044 = vld [vmem:[%s1043] sm:$0xf]
  %v1045 = vunpack.c.l.bf16 %v1044
  %v1046 = vmul.f32 %v1045, %v38
  %v1047 = vadd.f32 %v1046, %v52
  %vm1048 = vcmp.ge.f32.partialorder %v1047, 0.0
  %v1049 = vmul.f32 %v1047, 0.01
  %v1050 = vsel %vm1048, %v1047, %v1049
  %1052 = vst [vmem:[#allocation1] ss:$4 sm:$0xff] %v1050
  %v1053 = vld.sshfl [vmem:[#allocation1] sm:$0xff pattern:$0x73625140]
  %v1054 = vld.sshfl [vmem:[#allocation1 + $0x8] sm:$0xff pattern:$0x73625140]
  %v1055 = vld.sshfl [vmem:[#allocation1 + $0x10] sm:$0xff pattern:$0x73625140]
  %v1056 = vld.sshfl [vmem:[#allocation1 + $0x18] sm:$0xff pattern:$0x73625140]
  %v1061 = vpack.c.bf16 %v1053, %v1053
  %v1062 = vpack.c.bf16 %v1054, %v1054
  %v1063 = vpack.c.bf16 %v1055, %v1055
  %v1064 = vpack.c.bf16 %v1056, %v1056
  %s1065 = scalar_lea.vmem %s1, 768
  %v1066 = vld [vmem:[%s1065] sm:$0xf]
  %v1067 = vld [vmem:[%s1065 + $0x4] sm:$0xf]
  %v1068 = vld [vmem:[%s1065 + $0x8] sm:$0xf]
  %v1069 = vld [vmem:[%s1065 + $0xc] sm:$0xf]
  %v1070 = vld [vmem:[%s1065 + $0x10] sm:$0xf]
  %v1071 = vld [vmem:[%s1065 + $0x14] sm:$0xf]
  %v1072 = vld [vmem:[%s1065 + $0x18] sm:$0xf]
  %v1073 = vld [vmem:[%s1065 + $0x1c] sm:$0xf]
  %v1074 = vld [vmem:[%s1065 + $0x20] sm:$0xf]
  %v1075 = vld [vmem:[%s1065 + $0x24] sm:$0xf]
  %v1076 = vld [vmem:[%s1065 + $0x28] sm:$0xf]
  %v1077 = vld [vmem:[%s1065 + $0x2c] sm:$0xf]
  %v1078 = vld [vmem:[%s1065 + $0x30] sm:$0xf]
  %v1079 = vld [vmem:[%s1065 + $0x34] sm:$0xf]
  %v1080 = vld [vmem:[%s1065 + $0x38] sm:$0xf]
  %v1081 = vld [vmem:[%s1065 + $0x3c] sm:$0xf]
  %v1082 = vld [vmem:[%s1065 + $0x40] sm:$0xf]
  %v1083 = vld [vmem:[%s1065 + $0x44] sm:$0xf]
  %v1084 = vld [vmem:[%s1065 + $0x48] sm:$0xf]
  %v1085 = vld [vmem:[%s1065 + $0x4c] sm:$0xf]
  %v1086 = vld [vmem:[%s1065 + $0x50] sm:$0xf]
  %v1087 = vld [vmem:[%s1065 + $0x54] sm:$0xf]
  %v1088 = vld [vmem:[%s1065 + $0x58] sm:$0xf]
  %v1089 = vld [vmem:[%s1065 + $0x5c] sm:$0xf]
  %v1090 = vld [vmem:[%s1065 + $0x60] sm:$0xf]
  %v1091 = vld [vmem:[%s1065 + $0x64] sm:$0xf]
  %v1092 = vld [vmem:[%s1065 + $0x68] sm:$0xf]
  %v1093 = vld [vmem:[%s1065 + $0x6c] sm:$0xf]
  %v1094 = vld [vmem:[%s1065 + $0x70] sm:$0xf]
  %v1095 = vld [vmem:[%s1065 + $0x74] sm:$0xf]
  %v1096 = vld [vmem:[%s1065 + $0x78] sm:$0xf]
  %v1097 = vld [vmem:[%s1065 + $0x7c] sm:$0xf]
  %v1098 = vld [vmem:[%s1065 + $0x80] sm:$0xf]
  %v1099 = vld [vmem:[%s1065 + $0x84] sm:$0xf]
  %v1100 = vld [vmem:[%s1065 + $0x88] sm:$0xf]
  %v1101 = vld [vmem:[%s1065 + $0x8c] sm:$0xf]
  %v1102 = vld [vmem:[%s1065 + $0x90] sm:$0xf]
  %v1103 = vld [vmem:[%s1065 + $0x94] sm:$0xf]
  %v1104 = vld [vmem:[%s1065 + $0x98] sm:$0xf]
  %v1105 = vld [vmem:[%s1065 + $0x9c] sm:$0xf]
  %v1106 = vld [vmem:[%s1065 + $0xa0] sm:$0xf]
  %v1107 = vld [vmem:[%s1065 + $0xa4] sm:$0xf]
  %v1108 = vld [vmem:[%s1065 + $0xa8] sm:$0xf]
  %v1109 = vld [vmem:[%s1065 + $0xac] sm:$0xf]
  %v1110 = vld [vmem:[%s1065 + $0xb0] sm:$0xf]
  %v1111 = vld [vmem:[%s1065 + $0xb4] sm:$0xf]
  %v1112 = vld [vmem:[%s1065 + $0xb8] sm:$0xf]
  %v1113 = vld [vmem:[%s1065 + $0xbc] sm:$0xf]
  %v1114 = vld [vmem:[%s1065 + $0xc0] sm:$0xf]
  %v1115 = vld [vmem:[%s1065 + $0xc4] sm:$0xf]
  %v1116 = vld [vmem:[%s1065 + $0xc8] sm:$0xf]
  %v1117 = vld [vmem:[%s1065 + $0xcc] sm:$0xf]
  %v1118 = vld [vmem:[%s1065 + $0xd0] sm:$0xf]
  %v1119 = vld [vmem:[%s1065 + $0xd4] sm:$0xf]
  %v1120 = vld [vmem:[%s1065 + $0xd8] sm:$0xf]
  %v1121 = vld [vmem:[%s1065 + $0xdc] sm:$0xf]
  %v1122 = vld [vmem:[%s1065 + $0xe0] sm:$0xf]
  %v1123 = vld [vmem:[%s1065 + $0xe4] sm:$0xf]
  %v1124 = vld [vmem:[%s1065 + $0xe8] sm:$0xf]
  %v1125 = vld [vmem:[%s1065 + $0xec] sm:$0xf]
  %v1126 = vld [vmem:[%s1065 + $0xf0] sm:$0xf]
  %v1127 = vld [vmem:[%s1065 + $0xf4] sm:$0xf]
  %v1128 = vld [vmem:[%s1065 + $0xf8] sm:$0xf]
  %v1129 = vld [vmem:[%s1065 + $0xfc] sm:$0xf]
  %v1194 = vunpack.c.l.b16 %v1066
  %v1195 = vunpack.c.l.b16 %v1067
  %v1196 = vunpack.c.l.b16 %v1068
  %v1197 = vunpack.c.l.b16 %v1069
  %v1198 = vunpack.c.l.b16 %v1070
  %v1199 = vunpack.c.l.b16 %v1071
  %v1200 = vunpack.c.l.b16 %v1072
  %v1201 = vunpack.c.l.b16 %v1073
  %v1202 = vunpack.c.l.b16 %v1074
  %v1203 = vunpack.c.l.b16 %v1075
  %v1204 = vunpack.c.l.b16 %v1076
  %v1205 = vunpack.c.l.b16 %v1077
  %v1206 = vunpack.c.l.b16 %v1078
  %v1207 = vunpack.c.l.b16 %v1079
  %v1208 = vunpack.c.l.b16 %v1080
  %v1209 = vunpack.c.l.b16 %v1081
  %v1210 = vunpack.c.l.b16 %v1082
  %v1211 = vunpack.c.l.b16 %v1083
  %v1212 = vunpack.c.l.b16 %v1084
  %v1213 = vunpack.c.l.b16 %v1085
  %v1214 = vunpack.c.l.b16 %v1086
  %v1215 = vunpack.c.l.b16 %v1087
  %v1216 = vunpack.c.l.b16 %v1088
  %v1217 = vunpack.c.l.b16 %v1089
  %v1218 = vunpack.c.l.b16 %v1090
  %v1219 = vunpack.c.l.b16 %v1091
  %v1220 = vunpack.c.l.b16 %v1092
  %v1221 = vunpack.c.l.b16 %v1093
  %v1222 = vunpack.c.l.b16 %v1094
  %v1223 = vunpack.c.l.b16 %v1095
  %v1224 = vunpack.c.l.b16 %v1096
  %v1225 = vunpack.c.l.b16 %v1097
  %v1226 = vunpack.c.l.b16 %v1098
  %v1227 = vunpack.c.l.b16 %v1099
  %v1228 = vunpack.c.l.b16 %v1100
  %v1229 = vunpack.c.l.b16 %v1101
  %v1230 = vunpack.c.l.b16 %v1102
  %v1231 = vunpack.c.l.b16 %v1103
  %v1232 = vunpack.c.l.b16 %v1104
  %v1233 = vunpack.c.l.b16 %v1105
  %v1234 = vunpack.c.l.b16 %v1106
  %v1235 = vunpack.c.l.b16 %v1107
  %v1236 = vunpack.c.l.b16 %v1108
  %v1237 = vunpack.c.l.b16 %v1109
  %v1238 = vunpack.c.l.b16 %v1110
  %v1239 = vunpack.c.l.b16 %v1111
  %v1240 = vunpack.c.l.b16 %v1112
  %v1241 = vunpack.c.l.b16 %v1113
  %v1242 = vunpack.c.l.b16 %v1114
  %v1243 = vunpack.c.l.b16 %v1115
  %v1244 = vunpack.c.l.b16 %v1116
  %v1245 = vunpack.c.l.b16 %v1117
  %v1246 = vunpack.c.l.b16 %v1118
  %v1247 = vunpack.c.l.b16 %v1119
  %v1248 = vunpack.c.l.b16 %v1120
  %v1249 = vunpack.c.l.b16 %v1121
  %v1250 = vunpack.c.l.b16 %v1122
  %v1251 = vunpack.c.l.b16 %v1123
  %v1252 = vunpack.c.l.b16 %v1124
  %v1253 = vunpack.c.l.b16 %v1125
  %v1254 = vunpack.c.l.b16 %v1126
  %v1255 = vunpack.c.l.b16 %v1127
  %v1256 = vunpack.c.l.b16 %v1128
  %v1257 = vunpack.c.l.b16 %v1129
  %v1258 = vpack.c.b16 %v1195, %v1194
  %v1259 = vpack.c.b16 %v1197, %v1196
  %v1260 = vpack.c.b16 %v1199, %v1198
  %v1261 = vpack.c.b16 %v1201, %v1200
  %v1262 = vpack.c.b16 %v1203, %v1202
  %v1263 = vpack.c.b16 %v1205, %v1204
  %v1264 = vpack.c.b16 %v1207, %v1206
  %v1265 = vpack.c.b16 %v1209, %v1208
  %v1266 = vpack.c.b16 %v1211, %v1210
  %v1267 = vpack.c.b16 %v1213, %v1212
  %v1268 = vpack.c.b16 %v1215, %v1214
  %v1269 = vpack.c.b16 %v1217, %v1216
  %v1270 = vpack.c.b16 %v1219, %v1218
  %v1271 = vpack.c.b16 %v1221, %v1220
  %v1272 = vpack.c.b16 %v1223, %v1222
  %v1273 = vpack.c.b16 %v1225, %v1224
  %v1274 = vpack.c.b16 %v1227, %v1226
  %v1275 = vpack.c.b16 %v1229, %v1228
  %v1276 = vpack.c.b16 %v1231, %v1230
  %v1277 = vpack.c.b16 %v1233, %v1232
  %v1278 = vpack.c.b16 %v1235, %v1234
  %v1279 = vpack.c.b16 %v1237, %v1236
  %v1280 = vpack.c.b16 %v1239, %v1238
  %v1281 = vpack.c.b16 %v1241, %v1240
  %v1282 = vpack.c.b16 %v1243, %v1242
  %v1283 = vpack.c.b16 %v1245, %v1244
  %v1284 = vpack.c.b16 %v1247, %v1246
  %v1285 = vpack.c.b16 %v1249, %v1248
  %v1286 = vpack.c.b16 %v1251, %v1250
  %v1287 = vpack.c.b16 %v1253, %v1252
  %v1288 = vpack.c.b16 %v1255, %v1254
  %v1289 = vpack.c.b16 %v1257, %v1256
  %1322 = vmatpush.bf16.msra.mxu0 %v1265
  %1323 = vmatpush.bf16.msra.mxu0 %v1264
  %1324 = vmatpush.bf16.msra.mxu0 %v1263
  %1325 = vmatpush.bf16.msra.mxu0 %v1262
  %1326 = vmatpush.bf16.msra.mxu0 %v1261
  %1327 = vmatpush.bf16.msra.mxu0 %v1260
  %1328 = vmatpush.bf16.msra.mxu0 %v1259
  %1329 = vmatpush.bf16.msra.mxu0 %v1258
  %1330 = vmatmul.bf16.gmra.mxu0 %v1061
  %v1331 = vpop.f32.mrf.mxu0
  %v1332 = vadd.f32 0.0, %v1331
  %v1333 = vpop.f32.mrf.mxu0
  %1334 = vdwg.mxu0
  %1335 = vmatpush.bf16.msra.mxu0 %v1273
  %1336 = vmatpush.bf16.msra.mxu0 %v1272
  %1337 = vmatpush.bf16.msra.mxu0 %v1271
  %1338 = vmatpush.bf16.msra.mxu0 %v1270
  %1339 = vmatpush.bf16.msra.mxu0 %v1269
  %1340 = vmatpush.bf16.msra.mxu0 %v1268
  %1341 = vmatpush.bf16.msra.mxu0 %v1267
  %1342 = vmatpush.bf16.msra.mxu0 %v1266
  %1343 = vmatmul.bf16.gmra.mxu0 %v1062
  %v1344 = vpop.f32.mrf.mxu0
  %v1345 = vadd.f32 %v1332, %v1344
  %v1346 = vpop.f32.mrf.mxu0
  %1347 = vdwg.mxu0
  %1348 = vmatpush.bf16.msra.mxu0 %v1281
  %1349 = vmatpush.bf16.msra.mxu0 %v1280
  %1350 = vmatpush.bf16.msra.mxu0 %v1279
  %1351 = vmatpush.bf16.msra.mxu0 %v1278
  %1352 = vmatpush.bf16.msra.mxu0 %v1277
  %1353 = vmatpush.bf16.msra.mxu0 %v1276
  %1354 = vmatpush.bf16.msra.mxu0 %v1275
  %1355 = vmatpush.bf16.msra.mxu0 %v1274
  %1356 = vmatmul.bf16.gmra.mxu0 %v1063
  %v1357 = vpop.f32.mrf.mxu0
  %v1358 = vadd.f32 %v1345, %v1357
  %v1359 = vpop.f32.mrf.mxu0
  %1360 = vdwg.mxu0
  %1361 = vmatpush.bf16.msra.mxu0 %v1289
  %1362 = vmatpush.bf16.msra.mxu0 %v1288
  %1363 = vmatpush.bf16.msra.mxu0 %v1287
  %1364 = vmatpush.bf16.msra.mxu0 %v1286
  %1365 = vmatpush.bf16.msra.mxu0 %v1285
  %1366 = vmatpush.bf16.msra.mxu0 %v1284
  %1367 = vmatpush.bf16.msra.mxu0 %v1283
  %1368 = vmatpush.bf16.msra.mxu0 %v1282
  %1369 = vmatmul.bf16.gmra.mxu0 %v1064
  %v1370 = vpop.f32.mrf.mxu0
  %v1371 = vadd.f32 %v1358, %v1370
  %v1372 = vpop.f32.mrf.mxu0
  %1373 = vdwg.mxu0
  %v1374 = vadd.f32 %v1042, %v1371
  %s1375 = scalar_lea.vmem %s0, 16
  %v1376 = vld [vmem:[%s1375] sm:$0xf]
  %v1377 = vunpack.c.l.bf16 %v1376
  %v1378 = vmul.f32 %v1377, %v38
  %v1379 = vadd.f32 %v1378, %v52
  %vm1380 = vcmp.ge.f32.partialorder %v1379, 0.0
  %v1381 = vmul.f32 %v1379, 0.01
  %v1382 = vsel %vm1380, %v1379, %v1381
  %1384 = vst [vmem:[#allocation1] ss:$4 sm:$0xff] %v1382
  %v1385 = vld.sshfl [vmem:[#allocation1] sm:$0xff pattern:$0x73625140]
  %v1386 = vld.sshfl [vmem:[#allocation1 + $0x8] sm:$0xff pattern:$0x73625140]
  %v1387 = vld.sshfl [vmem:[#allocation1 + $0x10] sm:$0xff pattern:$0x73625140]
  %v1388 = vld.sshfl [vmem:[#allocation1 + $0x18] sm:$0xff pattern:$0x73625140]
  %v1393 = vpack.c.bf16 %v1385, %v1385
  %v1394 = vpack.c.bf16 %v1386, %v1386
  %v1395 = vpack.c.bf16 %v1387, %v1387
  %v1396 = vpack.c.bf16 %v1388, %v1388
  %s1397 = scalar_lea.vmem %s1, 1024
  %v1398 = vld [vmem:[%s1397] sm:$0xf]
  %v1399 = vld [vmem:[%s1397 + $0x4] sm:$0xf]
  %v1400 = vld [vmem:[%s1397 + $0x8] sm:$0xf]
  %v1401 = vld [vmem:[%s1397 + $0xc] sm:$0xf]
  %v1402 = vld [vmem:[%s1397 + $0x10] sm:$0xf]
  %v1403 = vld [vmem:[%s1397 + $0x14] sm:$0xf]
  %v1404 = vld [vmem:[%s1397 + $0x18] sm:$0xf]
  %v1405 = vld [vmem:[%s1397 + $0x1c] sm:$0xf]
  %v1406 = vld [vmem:[%s1397 + $0x20] sm:$0xf]
  %v1407 = vld [vmem:[%s1397 + $0x24] sm:$0xf]
  %v1408 = vld [vmem:[%s1397 + $0x28] sm:$0xf]
  %v1409 = vld [vmem:[%s1397 + $0x2c] sm:$0xf]
  %v1410 = vld [vmem:[%s1397 + $0x30] sm:$0xf]
  %v1411 = vld [vmem:[%s1397 + $0x34] sm:$0xf]
  %v1412 = vld [vmem:[%s1397 + $0x38] sm:$0xf]
  %v1413 = vld [vmem:[%s1397 + $0x3c] sm:$0xf]
  %v1414 = vld [vmem:[%s1397 + $0x40] sm:$0xf]
  %v1415 = vld [vmem:[%s1397 + $0x44] sm:$0xf]
  %v1416 = vld [vmem:[%s1397 + $0x48] sm:$0xf]
  %v1417 = vld [vmem:[%s1397 + $0x4c] sm:$0xf]
  %v1418 = vld [vmem:[%s1397 + $0x50] sm:$0xf]
  %v1419 = vld [vmem:[%s1397 + $0x54] sm:$0xf]
  %v1420 = vld [vmem:[%s1397 + $0x58] sm:$0xf]
  %v1421 = vld [vmem:[%s1397 + $0x5c] sm:$0xf]
  %v1422 = vld [vmem:[%s1397 + $0x60] sm:$0xf]
  %v1423 = vld [vmem:[%s1397 + $0x64] sm:$0xf]
  %v1424 = vld [vmem:[%s1397 + $0x68] sm:$0xf]
  %v1425 = vld [vmem:[%s1397 + $0x6c] sm:$0xf]
  %v1426 = vld [vmem:[%s1397 + $0x70] sm:$0xf]
  %v1427 = vld [vmem:[%s1397 + $0x74] sm:$0xf]
  %v1428 = vld [vmem:[%s1397 + $0x78] sm:$0xf]
  %v1429 = vld [vmem:[%s1397 + $0x7c] sm:$0xf]
  %v1430 = vld [vmem:[%s1397 + $0x80] sm:$0xf]
  %v1431 = vld [vmem:[%s1397 + $0x84] sm:$0xf]
  %v1432 = vld [vmem:[%s1397 + $0x88] sm:$0xf]
  %v1433 = vld [vmem:[%s1397 + $0x8c] sm:$0xf]
  %v1434 = vld [vmem:[%s1397 + $0x90] sm:$0xf]
  %v1435 = vld [vmem:[%s1397 + $0x94] sm:$0xf]
  %v1436 = vld [vmem:[%s1397 + $0x98] sm:$0xf]
  %v1437 = vld [vmem:[%s1397 + $0x9c] sm:$0xf]
  %v1438 = vld [vmem:[%s1397 + $0xa0] sm:$0xf]
  %v1439 = vld [vmem:[%s1397 + $0xa4] sm:$0xf]
  %v1440 = vld [vmem:[%s1397 + $0xa8] sm:$0xf]
  %v1441 = vld [vmem:[%s1397 + $0xac] sm:$0xf]
  %v1442 = vld [vmem:[%s1397 + $0xb0] sm:$0xf]
  %v1443 = vld [vmem:[%s1397 + $0xb4] sm:$0xf]
  %v1444 = vld [vmem:[%s1397 + $0xb8] sm:$0xf]
  %v1445 = vld [vmem:[%s1397 + $0xbc] sm:$0xf]
  %v1446 = vld [vmem:[%s1397 + $0xc0] sm:$0xf]
  %v1447 = vld [vmem:[%s1397 + $0xc4] sm:$0xf]
  %v1448 = vld [vmem:[%s1397 + $0xc8] sm:$0xf]
  %v1449 = vld [vmem:[%s1397 + $0xcc] sm:$0xf]
  %v1450 = vld [vmem:[%s1397 + $0xd0] sm:$0xf]
  %v1451 = vld [vmem:[%s1397 + $0xd4] sm:$0xf]
  %v1452 = vld [vmem:[%s1397 + $0xd8] sm:$0xf]
  %v1453 = vld [vmem:[%s1397 + $0xdc] sm:$0xf]
  %v1454 = vld [vmem:[%s1397 + $0xe0] sm:$0xf]
  %v1455 = vld [vmem:[%s1397 + $0xe4] sm:$0xf]
  %v1456 = vld [vmem:[%s1397 + $0xe8] sm:$0xf]
  %v1457 = vld [vmem:[%s1397 + $0xec] sm:$0xf]
  %v1458 = vld [vmem:[%s1397 + $0xf0] sm:$0xf]
  %v1459 = vld [vmem:[%s1397 + $0xf4] sm:$0xf]
  %v1460 = vld [vmem:[%s1397 + $0xf8] sm:$0xf]
  %v1461 = vld [vmem:[%s1397 + $0xfc] sm:$0xf]
  %v1526 = vunpack.c.l.b16 %v1398
  %v1527 = vunpack.c.l.b16 %v1399
  %v1528 = vunpack.c.l.b16 %v1400
  %v1529 = vunpack.c.l.b16 %v1401
  %v1530 = vunpack.c.l.b16 %v1402
  %v1531 = vunpack.c.l.b16 %v1403
  %v1532 = vunpack.c.l.b16 %v1404
  %v1533 = vunpack.c.l.b16 %v1405
  %v1534 = vunpack.c.l.b16 %v1406
  %v1535 = vunpack.c.l.b16 %v1407
  %v1536 = vunpack.c.l.b16 %v1408
  %v1537 = vunpack.c.l.b16 %v1409
  %v1538 = vunpack.c.l.b16 %v1410
  %v1539 = vunpack.c.l.b16 %v1411
  %v1540 = vunpack.c.l.b16 %v1412
  %v1541 = vunpack.c.l.b16 %v1413
  %v1542 = vunpack.c.l.b16 %v1414
  %v1543 = vunpack.c.l.b16 %v1415
  %v1544 = vunpack.c.l.b16 %v1416
  %v1545 = vunpack.c.l.b16 %v1417
  %v1546 = vunpack.c.l.b16 %v1418
  %v1547 = vunpack.c.l.b16 %v1419
  %v1548 = vunpack.c.l.b16 %v1420
  %v1549 = vunpack.c.l.b16 %v1421
  %v1550 = vunpack.c.l.b16 %v1422
  %v1551 = vunpack.c.l.b16 %v1423
  %v1552 = vunpack.c.l.b16 %v1424
  %v1553 = vunpack.c.l.b16 %v1425
  %v1554 = vunpack.c.l.b16 %v1426
  %v1555 = vunpack.c.l.b16 %v1427
  %v1556 = vunpack.c.l.b16 %v1428
  %v1557 = vunpack.c.l.b16 %v1429
  %v1558 = vunpack.c.l.b16 %v1430
  %v1559 = vunpack.c.l.b16 %v1431
  %v1560 = vunpack.c.l.b16 %v1432
  %v1561 = vunpack.c.l.b16 %v1433
  %v1562 = vunpack.c.l.b16 %v1434
  %v1563 = vunpack.c.l.b16 %v1435
  %v1564 = vunpack.c.l.b16 %v1436
  %v1565 = vunpack.c.l.b16 %v1437
  %v1566 = vunpack.c.l.b16 %v1438
  %v1567 = vunpack.c.l.b16 %v1439
  %v1568 = vunpack.c.l.b16 %v1440
  %v1569 = vunpack.c.l.b16 %v1441
  %v1570 = vunpack.c.l.b16 %v1442
  %v1571 = vunpack.c.l.b16 %v1443
  %v1572 = vunpack.c.l.b16 %v1444
  %v1573 = vunpack.c.l.b16 %v1445
  %v1574 = vunpack.c.l.b16 %v1446
  %v1575 = vunpack.c.l.b16 %v1447
  %v1576 = vunpack.c.l.b16 %v1448
  %v1577 = vunpack.c.l.b16 %v1449
  %v1578 = vunpack.c.l.b16 %v1450
  %v1579 = vunpack.c.l.b16 %v1451
  %v1580 = vunpack.c.l.b16 %v1452
  %v1581 = vunpack.c.l.b16 %v1453
  %v1582 = vunpack.c.l.b16 %v1454
  %v1583 = vunpack.c.l.b16 %v1455
  %v1584 = vunpack.c.l.b16 %v1456
  %v1585 = vunpack.c.l.b16 %v1457
  %v1586 = vunpack.c.l.b16 %v1458
  %v1587 = vunpack.c.l.b16 %v1459
  %v1588 = vunpack.c.l.b16 %v1460
  %v1589 = vunpack.c.l.b16 %v1461
  %v1590 = vpack.c.b16 %v1527, %v1526
  %v1591 = vpack.c.b16 %v1529, %v1528
  %v1592 = vpack.c.b16 %v1531, %v1530
  %v1593 = vpack.c.b16 %v1533, %v1532
  %v1594 = vpack.c.b16 %v1535, %v1534
  %v1595 = vpack.c.b16 %v1537, %v1536
  %v1596 = vpack.c.b16 %v1539, %v1538
  %v1597 = vpack.c.b16 %v1541, %v1540
  %v1598 = vpack.c.b16 %v1543, %v1542
  %v1599 = vpack.c.b16 %v1545, %v1544
  %v1600 = vpack.c.b16 %v1547, %v1546
  %v1601 = vpack.c.b16 %v1549, %v1548
  %v1602 = vpack.c.b16 %v1551, %v1550
  %v1603 = vpack.c.b16 %v1553, %v1552
  %v1604 = vpack.c.b16 %v1555, %v1554
  %v1605 = vpack.c.b16 %v1557, %v1556
  %v1606 = vpack.c.b16 %v1559, %v1558
  %v1607 = vpack.c.b16 %v1561, %v1560
  %v1608 = vpack.c.b16 %v1563, %v1562
  %v1609 = vpack.c.b16 %v1565, %v1564
  %v1610 = vpack.c.b16 %v1567, %v1566
  %v1611 = vpack.c.b16 %v1569, %v1568
  %v1612 = vpack.c.b16 %v1571, %v1570
  %v1613 = vpack.c.b16 %v1573, %v1572
  %v1614 = vpack.c.b16 %v1575, %v1574
  %v1615 = vpack.c.b16 %v1577, %v1576
  %v1616 = vpack.c.b16 %v1579, %v1578
  %v1617 = vpack.c.b16 %v1581, %v1580
  %v1618 = vpack.c.b16 %v1583, %v1582
  %v1619 = vpack.c.b16 %v1585, %v1584
  %v1620 = vpack.c.b16 %v1587, %v1586
  %v1621 = vpack.c.b16 %v1589, %v1588
  %1654 = vmatpush.bf16.msra.mxu0 %v1597
  %1655 = vmatpush.bf16.msra.mxu0 %v1596
  %1656 = vmatpush.bf16.msra.mxu0 %v1595
  %1657 = vmatpush.bf16.msra.mxu0 %v1594
  %1658 = vmatpush.bf16.msra.mxu0 %v1593
  %1659 = vmatpush.bf16.msra.mxu0 %v1592
  %1660 = vmatpush.bf16.msra.mxu0 %v1591
  %1661 = vmatpush.bf16.msra.mxu0 %v1590
  %1662 = vmatmul.bf16.gmra.mxu0 %v1393
  %v1663 = vpop.f32.mrf.mxu0
  %v1664 = vadd.f32 0.0, %v1663
  %v1665 = vpop.f32.mrf.mxu0
  %1666 = vdwg.mxu0
  %1667 = vmatpush.bf16.msra.mxu0 %v1605
  %1668 = vmatpush.bf16.msra.mxu0 %v1604
  %1669 = vmatpush.bf16.msra.mxu0 %v1603
  %1670 = vmatpush.bf16.msra.mxu0 %v1602
  %1671 = vmatpush.bf16.msra.mxu0 %v1601
  %1672 = vmatpush.bf16.msra.mxu0 %v1600
  %1673 = vmatpush.bf16.msra.mxu0 %v1599
  %1674 = vmatpush.bf16.msra.mxu0 %v1598
  %1675 = vmatmul.bf16.gmra.mxu0 %v1394
  %v1676 = vpop.f32.mrf.mxu0
  %v1677 = vadd.f32 %v1664, %v1676
  %v1678 = vpop.f32.mrf.mxu0
  %1679 = vdwg.mxu0
  %1680 = vmatpush.bf16.msra.mxu0 %v1613
  %1681 = vmatpush.bf16.msra.mxu0 %v1612
  %1682 = vmatpush.bf16.msra.mxu0 %v1611
  %1683 = vmatpush.bf16.msra.mxu0 %v1610
  %1684 = vmatpush.bf16.msra.mxu0 %v1609
  %1685 = vmatpush.bf16.msra.mxu0 %v1608
  %1686 = vmatpush.bf16.msra.mxu0 %v1607
  %1687 = vmatpush.bf16.msra.mxu0 %v1606
  %1688 = vmatmul.bf16.gmra.mxu0 %v1395
  %v1689 = vpop.f32.mrf.mxu0
  %v1690 = vadd.f32 %v1677, %v1689
  %v1691 = vpop.f32.mrf.mxu0
  %1692 = vdwg.mxu0
  %1693 = vmatpush.bf16.msra.mxu0 %v1621
  %1694 = vmatpush.bf16.msra.mxu0 %v1620
  %1695 = vmatpush.bf16.msra.mxu0 %v1619
  %1696 = vmatpush.bf16.msra.mxu0 %v1618
  %1697 = vmatpush.bf16.msra.mxu0 %v1617
  %1698 = vmatpush.bf16.msra.mxu0 %v1616
  %1699 = vmatpush.bf16.msra.mxu0 %v1615
  %1700 = vmatpush.bf16.msra.mxu0 %v1614
  %1701 = vmatmul.bf16.gmra.mxu0 %v1396
  %v1702 = vpop.f32.mrf.mxu0
  %v1703 = vadd.f32 %v1690, %v1702
  %v1704 = vpop.f32.mrf.mxu0
  %1705 = vdwg.mxu0
  %v1706 = vadd.f32 %v1374, %v1703
  %s1707 = scalar_lea.vmem %s0, 20
  %v1708 = vld [vmem:[%s1707] sm:$0xf]
  %v1709 = vunpack.c.l.bf16 %v1708
  %v1710 = vmul.f32 %v1709, %v38
  %v1711 = vadd.f32 %v1710, %v52
  %vm1712 = vcmp.ge.f32.partialorder %v1711, 0.0
  %v1713 = vmul.f32 %v1711, 0.01
  %v1714 = vsel %vm1712, %v1711, %v1713
  %1716 = vst [vmem:[#allocation1] ss:$4 sm:$0xff] %v1714
  %v1717 = vld.sshfl [vmem:[#allocation1] sm:$0xff pattern:$0x73625140]
  %v1718 = vld.sshfl [vmem:[#allocation1 + $0x8] sm:$0xff pattern:$0x73625140]
  %v1719 = vld.sshfl [vmem:[#allocation1 + $0x10] sm:$0xff pattern:$0x73625140]
  %v1720 = vld.sshfl [vmem:[#allocation1 + $0x18] sm:$0xff pattern:$0x73625140]
  %v1725 = vpack.c.bf16 %v1717, %v1717
  %v1726 = vpack.c.bf16 %v1718, %v1718
  %v1727 = vpack.c.bf16 %v1719, %v1719
  %v1728 = vpack.c.bf16 %v1720, %v1720
  %s1729 = scalar_lea.vmem %s1, 1280
  %v1730 = vld [vmem:[%s1729] sm:$0xf]
  %v1731 = vld [vmem:[%s1729 + $0x4] sm:$0xf]
  %v1732 = vld [vmem:[%s1729 + $0x8] sm:$0xf]
  %v1733 = vld [vmem:[%s1729 + $0xc] sm:$0xf]
  %v1734 = vld [vmem:[%s1729 + $0x10] sm:$0xf]
  %v1735 = vld [vmem:[%s1729 + $0x14] sm:$0xf]
  %v1736 = vld [vmem:[%s1729 + $0x18] sm:$0xf]
  %v1737 = vld [vmem:[%s1729 + $0x1c] sm:$0xf]
  %v1738 = vld [vmem:[%s1729 + $0x20] sm:$0xf]
  %v1739 = vld [vmem:[%s1729 + $0x24] sm:$0xf]
  %v1740 = vld [vmem:[%s1729 + $0x28] sm:$0xf]
  %v1741 = vld [vmem:[%s1729 + $0x2c] sm:$0xf]
  %v1742 = vld [vmem:[%s1729 + $0x30] sm:$0xf]
  %v1743 = vld [vmem:[%s1729 + $0x34] sm:$0xf]
  %v1744 = vld [vmem:[%s1729 + $0x38] sm:$0xf]
  %v1745 = vld [vmem:[%s1729 + $0x3c] sm:$0xf]
  %v1746 = vld [vmem:[%s1729 + $0x40] sm:$0xf]
  %v1747 = vld [vmem:[%s1729 + $0x44] sm:$0xf]
  %v1748 = vld [vmem:[%s1729 + $0x48] sm:$0xf]
  %v1749 = vld [vmem:[%s1729 + $0x4c] sm:$0xf]
  %v1750 = vld [vmem:[%s1729 + $0x50] sm:$0xf]
  %v1751 = vld [vmem:[%s1729 + $0x54] sm:$0xf]
  %v1752 = vld [vmem:[%s1729 + $0x58] sm:$0xf]
  %v1753 = vld [vmem:[%s1729 + $0x5c] sm:$0xf]
  %v1754 = vld [vmem:[%s1729 + $0x60] sm:$0xf]
  %v1755 = vld [vmem:[%s1729 + $0x64] sm:$0xf]
  %v1756 = vld [vmem:[%s1729 + $0x68] sm:$0xf]
  %v1757 = vld [vmem:[%s1729 + $0x6c] sm:$0xf]
  %v1758 = vld [vmem:[%s1729 + $0x70] sm:$0xf]
  %v1759 = vld [vmem:[%s1729 + $0x74] sm:$0xf]
  %v1760 = vld [vmem:[%s1729 + $0x78] sm:$0xf]
  %v1761 = vld [vmem:[%s1729 + $0x7c] sm:$0xf]
  %v1762 = vld [vmem:[%s1729 + $0x80] sm:$0xf]
  %v1763 = vld [vmem:[%s1729 + $0x84] sm:$0xf]
  %v1764 = vld [vmem:[%s1729 + $0x88] sm:$0xf]
  %v1765 = vld [vmem:[%s1729 + $0x8c] sm:$0xf]
  %v1766 = vld [vmem:[%s1729 + $0x90] sm:$0xf]
  %v1767 = vld [vmem:[%s1729 + $0x94] sm:$0xf]
  %v1768 = vld [vmem:[%s1729 + $0x98] sm:$0xf]
  %v1769 = vld [vmem:[%s1729 + $0x9c] sm:$0xf]
  %v1770 = vld [vmem:[%s1729 + $0xa0] sm:$0xf]
  %v1771 = vld [vmem:[%s1729 + $0xa4] sm:$0xf]
  %v1772 = vld [vmem:[%s1729 + $0xa8] sm:$0xf]
  %v1773 = vld [vmem:[%s1729 + $0xac] sm:$0xf]
  %v1774 = vld [vmem:[%s1729 + $0xb0] sm:$0xf]
  %v1775 = vld [vmem:[%s1729 + $0xb4] sm:$0xf]
  %v1776 = vld [vmem:[%s1729 + $0xb8] sm:$0xf]
  %v1777 = vld [vmem:[%s1729 + $0xbc] sm:$0xf]
  %v1778 = vld [vmem:[%s1729 + $0xc0] sm:$0xf]
  %v1779 = vld [vmem:[%s1729 + $0xc4] sm:$0xf]
  %v1780 = vld [vmem:[%s1729 + $0xc8] sm:$0xf]
  %v1781 = vld [vmem:[%s1729 + $0xcc] sm:$0xf]
  %v1782 = vld [vmem:[%s1729 + $0xd0] sm:$0xf]
  %v1783 = vld [vmem:[%s1729 + $0xd4] sm:$0xf]
  %v1784 = vld [vmem:[%s1729 + $0xd8] sm:$0xf]
  %v1785 = vld [vmem:[%s1729 + $0xdc] sm:$0xf]
  %v1786 = vld [vmem:[%s1729 + $0xe0] sm:$0xf]
  %v1787 = vld [vmem:[%s1729 + $0xe4] sm:$0xf]
  %v1788 = vld [vmem:[%s1729 + $0xe8] sm:$0xf]
  %v1789 = vld [vmem:[%s1729 + $0xec] sm:$0xf]
  %v1790 = vld [vmem:[%s1729 + $0xf0] sm:$0xf]
  %v1791 = vld [vmem:[%s1729 + $0xf4] sm:$0xf]
  %v1792 = vld [vmem:[%s1729 + $0xf8] sm:$0xf]
  %v1793 = vld [vmem:[%s1729 + $0xfc] sm:$0xf]
  %v1858 = vunpack.c.l.b16 %v1730
  %v1859 = vunpack.c.l.b16 %v1731
  %v1860 = vunpack.c.l.b16 %v1732
  %v1861 = vunpack.c.l.b16 %v1733
  %v1862 = vunpack.c.l.b16 %v1734
  %v1863 = vunpack.c.l.b16 %v1735
  %v1864 = vunpack.c.l.b16 %v1736
  %v1865 = vunpack.c.l.b16 %v1737
  %v1866 = vunpack.c.l.b16 %v1738
  %v1867 = vunpack.c.l.b16 %v1739
  %v1868 = vunpack.c.l.b16 %v1740
  %v1869 = vunpack.c.l.b16 %v1741
  %v1870 = vunpack.c.l.b16 %v1742
  %v1871 = vunpack.c.l.b16 %v1743
  %v1872 = vunpack.c.l.b16 %v1744
  %v1873 = vunpack.c.l.b16 %v1745
  %v1874 = vunpack.c.l.b16 %v1746
  %v1875 = vunpack.c.l.b16 %v1747
  %v1876 = vunpack.c.l.b16 %v1748
  %v1877 = vunpack.c.l.b16 %v1749
  %v1878 = vunpack.c.l.b16 %v1750
  %v1879 = vunpack.c.l.b16 %v1751
  %v1880 = vunpack.c.l.b16 %v1752
  %v1881 = vunpack.c.l.b16 %v1753
  %v1882 = vunpack.c.l.b16 %v1754
  %v1883 = vunpack.c.l.b16 %v1755
  %v1884 = vunpack.c.l.b16 %v1756
  %v1885 = vunpack.c.l.b16 %v1757
  %v1886 = vunpack.c.l.b16 %v1758
  %v1887 = vunpack.c.l.b16 %v1759
  %v1888 = vunpack.c.l.b16 %v1760
  %v1889 = vunpack.c.l.b16 %v1761
  %v1890 = vunpack.c.l.b16 %v1762
  %v1891 = vunpack.c.l.b16 %v1763
  %v1892 = vunpack.c.l.b16 %v1764
  %v1893 = vunpack.c.l.b16 %v1765
  %v1894 = vunpack.c.l.b16 %v1766
  %v1895 = vunpack.c.l.b16 %v1767
  %v1896 = vunpack.c.l.b16 %v1768
  %v1897 = vunpack.c.l.b16 %v1769
  %v1898 = vunpack.c.l.b16 %v1770
  %v1899 = vunpack.c.l.b16 %v1771
  %v1900 = vunpack.c.l.b16 %v1772
  %v1901 = vunpack.c.l.b16 %v1773
  %v1902 = vunpack.c.l.b16 %v1774
  %v1903 = vunpack.c.l.b16 %v1775
  %v1904 = vunpack.c.l.b16 %v1776
  %v1905 = vunpack.c.l.b16 %v1777
  %v1906 = vunpack.c.l.b16 %v1778
  %v1907 = vunpack.c.l.b16 %v1779
  %v1908 = vunpack.c.l.b16 %v1780
  %v1909 = vunpack.c.l.b16 %v1781
  %v1910 = vunpack.c.l.b16 %v1782
  %v1911 = vunpack.c.l.b16 %v1783
  %v1912 = vunpack.c.l.b16 %v1784
  %v1913 = vunpack.c.l.b16 %v1785
  %v1914 = vunpack.c.l.b16 %v1786
  %v1915 = vunpack.c.l.b16 %v1787
  %v1916 = vunpack.c.l.b16 %v1788
  %v1917 = vunpack.c.l.b16 %v1789
  %v1918 = vunpack.c.l.b16 %v1790
  %v1919 = vunpack.c.l.b16 %v1791
  %v1920 = vunpack.c.l.b16 %v1792
  %v1921 = vunpack.c.l.b16 %v1793
  %v1922 = vpack.c.b16 %v1859, %v1858
  %v1923 = vpack.c.b16 %v1861, %v1860
  %v1924 = vpack.c.b16 %v1863, %v1862
  %v1925 = vpack.c.b16 %v1865, %v1864
  %v1926 = vpack.c.b16 %v1867, %v1866
  %v1927 = vpack.c.b16 %v1869, %v1868
  %v1928 = vpack.c.b16 %v1871, %v1870
  %v1929 = vpack.c.b16 %v1873, %v1872
  %v1930 = vpack.c.b16 %v1875, %v1874
  %v1931 = vpack.c.b16 %v1877, %v1876
  %v1932 = vpack.c.b16 %v1879, %v1878
  %v1933 = vpack.c.b16 %v1881, %v1880
  %v1934 = vpack.c.b16 %v1883, %v1882
  %v1935 = vpack.c.b16 %v1885, %v1884
  %v1936 = vpack.c.b16 %v1887, %v1886
  %v1937 = vpack.c.b16 %v1889, %v1888
  %v1938 = vpack.c.b16 %v1891, %v1890
  %v1939 = vpack.c.b16 %v1893, %v1892
  %v1940 = vpack.c.b16 %v1895, %v1894
  %v1941 = vpack.c.b16 %v1897, %v1896
  %v1942 = vpack.c.b16 %v1899, %v1898
  %v1943 = vpack.c.b16 %v1901, %v1900
  %v1944 = vpack.c.b16 %v1903, %v1902
  %v1945 = vpack.c.b16 %v1905, %v1904
  %v1946 = vpack.c.b16 %v1907, %v1906
  %v1947 = vpack.c.b16 %v1909, %v1908
  %v1948 = vpack.c.b16 %v1911, %v1910
  %v1949 = vpack.c.b16 %v1913, %v1912
  %v1950 = vpack.c.b16 %v1915, %v1914
  %v1951 = vpack.c.b16 %v1917, %v1916
  %v1952 = vpack.c.b16 %v1919, %v1918
  %v1953 = vpack.c.b16 %v1921, %v1920
  %1986 = vmatpush.bf16.msra.mxu0 %v1929
  %1987 = vmatpush.bf16.msra.mxu0 %v1928
  %1988 = vmatpush.bf16.msra.mxu0 %v1927
  %1989 = vmatpush.bf16.msra.mxu0 %v1926
  %1990 = vmatpush.bf16.msra.mxu0 %v1925
  %1991 = vmatpush.bf16.msra.mxu0 %v1924
  %1992 = vmatpush.bf16.msra.mxu0 %v1923
  %1993 = vmatpush.bf16.msra.mxu0 %v1922
  %1994 = vmatmul.bf16.gmra.mxu0 %v1725
  %v1995 = vpop.f32.mrf.mxu0
  %v1996 = vadd.f32 0.0, %v1995
  %v1997 = vpop.f32.mrf.mxu0
  %1998 = vdwg.mxu0
  %1999 = vmatpush.bf16.msra.mxu0 %v1937
  %2000 = vmatpush.bf16.msra.mxu0 %v1936
  %2001 = vmatpush.bf16.msra.mxu0 %v1935
  %2002 = vmatpush.bf16.msra.mxu0 %v1934
  %2003 = vmatpush.bf16.msra.mxu0 %v1933
  %2004 = vmatpush.bf16.msra.mxu0 %v1932
  %2005 = vmatpush.bf16.msra.mxu0 %v1931
  %2006 = vmatpush.bf16.msra.mxu0 %v1930
  %2007 = vmatmul.bf16.gmra.mxu0 %v1726
  %v2008 = vpop.f32.mrf.mxu0
  %v2009 = vadd.f32 %v1996, %v2008
  %v2010 = vpop.f32.mrf.mxu0
  %2011 = vdwg.mxu0
  %2012 = vmatpush.bf16.msra.mxu0 %v1945
  %2013 = vmatpush.bf16.msra.mxu0 %v1944
  %2014 = vmatpush.bf16.msra.mxu0 %v1943
  %2015 = vmatpush.bf16.msra.mxu0 %v1942
  %2016 = vmatpush.bf16.msra.mxu0 %v1941
  %2017 = vmatpush.bf16.msra.mxu0 %v1940
  %2018 = vmatpush.bf16.msra.mxu0 %v1939
  %2019 = vmatpush.bf16.msra.mxu0 %v1938
  %2020 = vmatmul.bf16.gmra.mxu0 %v1727
  %v2021 = vpop.f32.mrf.mxu0
  %v2022 = vadd.f32 %v2009, %v2021
  %v2023 = vpop.f32.mrf.mxu0
  %2024 = vdwg.mxu0
  %2025 = vmatpush.bf16.msra.mxu0 %v1953
  %2026 = vmatpush.bf16.msra.mxu0 %v1952
  %2027 = vmatpush.bf16.msra.mxu0 %v1951
  %2028 = vmatpush.bf16.msra.mxu0 %v1950
  %2029 = vmatpush.bf16.msra.mxu0 %v1949
  %2030 = vmatpush.bf16.msra.mxu0 %v1948
  %2031 = vmatpush.bf16.msra.mxu0 %v1947
  %2032 = vmatpush.bf16.msra.mxu0 %v1946
  %2033 = vmatmul.bf16.gmra.mxu0 %v1728
  %v2034 = vpop.f32.mrf.mxu0
  %v2035 = vadd.f32 %v2022, %v2034
  %v2036 = vpop.f32.mrf.mxu0
  %2037 = vdwg.mxu0
  %v2038 = vadd.f32 %v1706, %v2035
  %s2039 = scalar_lea.vmem %s0, 24
  %v2040 = vld [vmem:[%s2039] sm:$0xf]
  %v2041 = vunpack.c.l.bf16 %v2040
  %v2042 = vmul.f32 %v2041, %v38
  %v2043 = vadd.f32 %v2042, %v52
  %vm2044 = vcmp.ge.f32.partialorder %v2043, 0.0
  %v2045 = vmul.f32 %v2043, 0.01
  %v2046 = vsel %vm2044, %v2043, %v2045
  %2048 = vst [vmem:[#allocation1] ss:$4 sm:$0xff] %v2046
  %v2049 = vld.sshfl [vmem:[#allocation1] sm:$0xff pattern:$0x73625140]
  %v2050 = vld.sshfl [vmem:[#allocation1 + $0x8] sm:$0xff pattern:$0x73625140]
  %v2051 = vld.sshfl [vmem:[#allocation1 + $0x10] sm:$0xff pattern:$0x73625140]
  %v2052 = vld.sshfl [vmem:[#allocation1 + $0x18] sm:$0xff pattern:$0x73625140]
  %v2057 = vpack.c.bf16 %v2049, %v2049
  %v2058 = vpack.c.bf16 %v2050, %v2050
  %v2059 = vpack.c.bf16 %v2051, %v2051
  %v2060 = vpack.c.bf16 %v2052, %v2052
  %s2061 = scalar_lea.vmem %s1, 1536
  %v2062 = vld [vmem:[%s2061] sm:$0xf]
  %v2063 = vld [vmem:[%s2061 + $0x4] sm:$0xf]
  %v2064 = vld [vmem:[%s2061 + $0x8] sm:$0xf]
  %v2065 = vld [vmem:[%s2061 + $0xc] sm:$0xf]
  %v2066 = vld [vmem:[%s2061 + $0x10] sm:$0xf]
  %v2067 = vld [vmem:[%s2061 + $0x14] sm:$0xf]
  %v2068 = vld [vmem:[%s2061 + $0x18] sm:$0xf]
  %v2069 = vld [vmem:[%s2061 + $0x1c] sm:$0xf]
  %v2070 = vld [vmem:[%s2061 + $0x20] sm:$0xf]
  %v2071 = vld [vmem:[%s2061 + $0x24] sm:$0xf]
  %v2072 = vld [vmem:[%s2061 + $0x28] sm:$0xf]
  %v2073 = vld [vmem:[%s2061 + $0x2c] sm:$0xf]
  %v2074 = vld [vmem:[%s2061 + $0x30] sm:$0xf]
  %v2075 = vld [vmem:[%s2061 + $0x34] sm:$0xf]
  %v2076 = vld [vmem:[%s2061 + $0x38] sm:$0xf]
  %v2077 = vld [vmem:[%s2061 + $0x3c] sm:$0xf]
  %v2078 = vld [vmem:[%s2061 + $0x40] sm:$0xf]
  %v2079 = vld [vmem:[%s2061 + $0x44] sm:$0xf]
  %v2080 = vld [vmem:[%s2061 + $0x48] sm:$0xf]
  %v2081 = vld [vmem:[%s2061 + $0x4c] sm:$0xf]
  %v2082 = vld [vmem:[%s2061 + $0x50] sm:$0xf]
  %v2083 = vld [vmem:[%s2061 + $0x54] sm:$0xf]
  %v2084 = vld [vmem:[%s2061 + $0x58] sm:$0xf]
  %v2085 = vld [vmem:[%s2061 + $0x5c] sm:$0xf]
  %v2086 = vld [vmem:[%s2061 + $0x60] sm:$0xf]
  %v2087 = vld [vmem:[%s2061 + $0x64] sm:$0xf]
  %v2088 = vld [vmem:[%s2061 + $0x68] sm:$0xf]
  %v2089 = vld [vmem:[%s2061 + $0x6c] sm:$0xf]
  %v2090 = vld [vmem:[%s2061 + $0x70] sm:$0xf]
  %v2091 = vld [vmem:[%s2061 + $0x74] sm:$0xf]
  %v2092 = vld [vmem:[%s2061 + $0x78] sm:$0xf]
  %v2093 = vld [vmem:[%s2061 + $0x7c] sm:$0xf]
  %v2094 = vld [vmem:[%s2061 + $0x80] sm:$0xf]
  %v2095 = vld [vmem:[%s2061 + $0x84] sm:$0xf]
  %v2096 = vld [vmem:[%s2061 + $0x88] sm:$0xf]
  %v2097 = vld [vmem:[%s2061 + $0x8c] sm:$0xf]
  %v2098 = vld [vmem:[%s2061 + $0x90] sm:$0xf]
  %v2099 = vld [vmem:[%s2061 + $0x94] sm:$0xf]
  %v2100 = vld [vmem:[%s2061 + $0x98] sm:$0xf]
  %v2101 = vld [vmem:[%s2061 + $0x9c] sm:$0xf]
  %v2102 = vld [vmem:[%s2061 + $0xa0] sm:$0xf]
  %v2103 = vld [vmem:[%s2061 + $0xa4] sm:$0xf]
  %v2104 = vld [vmem:[%s2061 + $0xa8] sm:$0xf]
  %v2105 = vld [vmem:[%s2061 + $0xac] sm:$0xf]
  %v2106 = vld [vmem:[%s2061 + $0xb0] sm:$0xf]
  %v2107 = vld [vmem:[%s2061 + $0xb4] sm:$0xf]
  %v2108 = vld [vmem:[%s2061 + $0xb8] sm:$0xf]
  %v2109 = vld [vmem:[%s2061 + $0xbc] sm:$0xf]
  %v2110 = vld [vmem:[%s2061 + $0xc0] sm:$0xf]
  %v2111 = vld [vmem:[%s2061 + $0xc4] sm:$0xf]
  %v2112 = vld [vmem:[%s2061 + $0xc8] sm:$0xf]
  %v2113 = vld [vmem:[%s2061 + $0xcc] sm:$0xf]
  %v2114 = vld [vmem:[%s2061 + $0xd0] sm:$0xf]
  %v2115 = vld [vmem:[%s2061 + $0xd4] sm:$0xf]
  %v2116 = vld [vmem:[%s2061 + $0xd8] sm:$0xf]
  %v2117 = vld [vmem:[%s2061 + $0xdc] sm:$0xf]
  %v2118 = vld [vmem:[%s2061 + $0xe0] sm:$0xf]
  %v2119 = vld [vmem:[%s2061 + $0xe4] sm:$0xf]
  %v2120 = vld [vmem:[%s2061 + $0xe8] sm:$0xf]
  %v2121 = vld [vmem:[%s2061 + $0xec] sm:$0xf]
  %v2122 = vld [vmem:[%s2061 + $0xf0] sm:$0xf]
  %v2123 = vld [vmem:[%s2061 + $0xf4] sm:$0xf]
  %v2124 = vld [vmem:[%s2061 + $0xf8] sm:$0xf]
  %v2125 = vld [vmem:[%s2061 + $0xfc] sm:$0xf]
  %v2190 = vunpack.c.l.b16 %v2062
  %v2191 = vunpack.c.l.b16 %v2063
  %v2192 = vunpack.c.l.b16 %v2064
  %v2193 = vunpack.c.l.b16 %v2065
  %v2194 = vunpack.c.l.b16 %v2066
  %v2195 = vunpack.c.l.b16 %v2067
  %v2196 = vunpack.c.l.b16 %v2068
  %v2197 = vunpack.c.l.b16 %v2069
  %v2198 = vunpack.c.l.b16 %v2070
  %v2199 = vunpack.c.l.b16 %v2071
  %v2200 = vunpack.c.l.b16 %v2072
  %v2201 = vunpack.c.l.b16 %v2073
  %v2202 = vunpack.c.l.b16 %v2074
  %v2203 = vunpack.c.l.b16 %v2075
  %v2204 = vunpack.c.l.b16 %v2076
  %v2205 = vunpack.c.l.b16 %v2077
  %v2206 = vunpack.c.l.b16 %v2078
  %v2207 = vunpack.c.l.b16 %v2079
  %v2208 = vunpack.c.l.b16 %v2080
  %v2209 = vunpack.c.l.b16 %v2081
  %v2210 = vunpack.c.l.b16 %v2082
  %v2211 = vunpack.c.l.b16 %v2083
  %v2212 = vunpack.c.l.b16 %v2084
  %v2213 = vunpack.c.l.b16 %v2085
  %v2214 = vunpack.c.l.b16 %v2086
  %v2215 = vunpack.c.l.b16 %v2087
  %v2216 = vunpack.c.l.b16 %v2088
  %v2217 = vunpack.c.l.b16 %v2089
  %v2218 = vunpack.c.l.b16 %v2090
  %v2219 = vunpack.c.l.b16 %v2091
  %v2220 = vunpack.c.l.b16 %v2092
  %v2221 = vunpack.c.l.b16 %v2093
  %v2222 = vunpack.c.l.b16 %v2094
  %v2223 = vunpack.c.l.b16 %v2095
  %v2224 = vunpack.c.l.b16 %v2096
  %v2225 = vunpack.c.l.b16 %v2097
  %v2226 = vunpack.c.l.b16 %v2098
  %v2227 = vunpack.c.l.b16 %v2099
  %v2228 = vunpack.c.l.b16 %v2100
  %v2229 = vunpack.c.l.b16 %v2101
  %v2230 = vunpack.c.l.b16 %v2102
  %v2231 = vunpack.c.l.b16 %v2103
  %v2232 = vunpack.c.l.b16 %v2104
  %v2233 = vunpack.c.l.b16 %v2105
  %v2234 = vunpack.c.l.b16 %v2106
  %v2235 = vunpack.c.l.b16 %v2107
  %v2236 = vunpack.c.l.b16 %v2108
  %v2237 = vunpack.c.l.b16 %v2109
  %v2238 = vunpack.c.l.b16 %v2110
  %v2239 = vunpack.c.l.b16 %v2111
  %v2240 = vunpack.c.l.b16 %v2112
  %v2241 = vunpack.c.l.b16 %v2113
  %v2242 = vunpack.c.l.b16 %v2114
  %v2243 = vunpack.c.l.b16 %v2115
  %v2244 = vunpack.c.l.b16 %v2116
  %v2245 = vunpack.c.l.b16 %v2117
  %v2246 = vunpack.c.l.b16 %v2118
  %v2247 = vunpack.c.l.b16 %v2119
  %v2248 = vunpack.c.l.b16 %v2120
  %v2249 = vunpack.c.l.b16 %v2121
  %v2250 = vunpack.c.l.b16 %v2122
  %v2251 = vunpack.c.l.b16 %v2123
  %v2252 = vunpack.c.l.b16 %v2124
  %v2253 = vunpack.c.l.b16 %v2125
  %v2254 = vpack.c.b16 %v2191, %v2190
  %v2255 = vpack.c.b16 %v2193, %v2192
  %v2256 = vpack.c.b16 %v2195, %v2194
  %v2257 = vpack.c.b16 %v2197, %v2196
  %v2258 = vpack.c.b16 %v2199, %v2198
  %v2259 = vpack.c.b16 %v2201, %v2200
  %v2260 = vpack.c.b16 %v2203, %v2202
  %v2261 = vpack.c.b16 %v2205, %v2204
  %v2262 = vpack.c.b16 %v2207, %v2206
  %v2263 = vpack.c.b16 %v2209, %v2208
  %v2264 = vpack.c.b16 %v2211, %v2210
  %v2265 = vpack.c.b16 %v2213, %v2212
  %v2266 = vpack.c.b16 %v2215, %v2214
  %v2267 = vpack.c.b16 %v2217, %v2216
  %v2268 = vpack.c.b16 %v2219, %v2218
  %v2269 = vpack.c.b16 %v2221, %v2220
  %v2270 = vpack.c.b16 %v2223, %v2222
  %v2271 = vpack.c.b16 %v2225, %v2224
  %v2272 = vpack.c.b16 %v2227, %v2226
  %v2273 = vpack.c.b16 %v2229, %v2228
  %v2274 = vpack.c.b16 %v2231, %v2230
  %v2275 = vpack.c.b16 %v2233, %v2232
  %v2276 = vpack.c.b16 %v2235, %v2234
  %v2277 = vpack.c.b16 %v2237, %v2236
  %v2278 = vpack.c.b16 %v2239, %v2238
  %v2279 = vpack.c.b16 %v2241, %v2240
  %v2280 = vpack.c.b16 %v2243, %v2242
  %v2281 = vpack.c.b16 %v2245, %v2244
  %v2282 = vpack.c.b16 %v2247, %v2246
  %v2283 = vpack.c.b16 %v2249, %v2248
  %v2284 = vpack.c.b16 %v2251, %v2250
  %v2285 = vpack.c.b16 %v2253, %v2252
  %2318 = vmatpush.bf16.msra.mxu0 %v2261
  %2319 = vmatpush.bf16.msra.mxu0 %v2260
  %2320 = vmatpush.bf16.msra.mxu0 %v2259
  %2321 = vmatpush.bf16.msra.mxu0 %v2258
  %2322 = vmatpush.bf16.msra.mxu0 %v2257
  %2323 = vmatpush.bf16.msra.mxu0 %v2256
  %2324 = vmatpush.bf16.msra.mxu0 %v2255
  %2325 = vmatpush.bf16.msra.mxu0 %v2254
  %2326 = vmatmul.bf16.gmra.mxu0 %v2057
  %v2327 = vpop.f32.mrf.mxu0
  %v2328 = vadd.f32 0.0, %v2327
  %v2329 = vpop.f32.mrf.mxu0
  %2330 = vdwg.mxu0
  %2331 = vmatpush.bf16.msra.mxu0 %v2269
  %2332 = vmatpush.bf16.msra.mxu0 %v2268
  %2333 = vmatpush.bf16.msra.mxu0 %v2267
  %2334 = vmatpush.bf16.msra.mxu0 %v2266
  %2335 = vmatpush.bf16.msra.mxu0 %v2265
  %2336 = vmatpush.bf16.msra.mxu0 %v2264
  %2337 = vmatpush.bf16.msra.mxu0 %v2263
  %2338 = vmatpush.bf16.msra.mxu0 %v2262
  %2339 = vmatmul.bf16.gmra.mxu0 %v2058
  %v2340 = vpop.f32.mrf.mxu0
  %v2341 = vadd.f32 %v2328, %v2340
  %v2342 = vpop.f32.mrf.mxu0
  %2343 = vdwg.mxu0
  %2344 = vmatpush.bf16.msra.mxu0 %v2277
  %2345 = vmatpush.bf16.msra.mxu0 %v2276
  %2346 = vmatpush.bf16.msra.mxu0 %v2275
  %2347 = vmatpush.bf16.msra.mxu0 %v2274
  %2348 = vmatpush.bf16.msra.mxu0 %v2273
  %2349 = vmatpush.bf16.msra.mxu0 %v2272
  %2350 = vmatpush.bf16.msra.mxu0 %v2271
  %2351 = vmatpush.bf16.msra.mxu0 %v2270
  %2352 = vmatmul.bf16.gmra.mxu0 %v2059
  %v2353 = vpop.f32.mrf.mxu0
  %v2354 = vadd.f32 %v2341, %v2353
  %v2355 = vpop.f32.mrf.mxu0
  %2356 = vdwg.mxu0
  %2357 = vmatpush.bf16.msra.mxu0 %v2285
  %2358 = vmatpush.bf16.msra.mxu0 %v2284
  %2359 = vmatpush.bf16.msra.mxu0 %v2283
  %2360 = vmatpush.bf16.msra.mxu0 %v2282
  %2361 = vmatpush.bf16.msra.mxu0 %v2281
  %2362 = vmatpush.bf16.msra.mxu0 %v2280
  %2363 = vmatpush.bf16.msra.mxu0 %v2279
  %2364 = vmatpush.bf16.msra.mxu0 %v2278
  %2365 = vmatmul.bf16.gmra.mxu0 %v2060
  %v2366 = vpop.f32.mrf.mxu0
  %v2367 = vadd.f32 %v2354, %v2366
  %v2368 = vpop.f32.mrf.mxu0
  %2369 = vdwg.mxu0
  %v2370 = vadd.f32 %v2038, %v2367
  %s2371 = scalar_lea.vmem %s0, 28
  %v2372 = vld [vmem:[%s2371] sm:$0xf]
  %v2373 = vunpack.c.l.bf16 %v2372
  %v2374 = vmul.f32 %v2373, %v38
  %v2375 = vadd.f32 %v2374, %v52
  %vm2376 = vcmp.ge.f32.partialorder %v2375, 0.0
  %v2377 = vmul.f32 %v2375, 0.01
  %v2378 = vsel %vm2376, %v2375, %v2377
  %2380 = vst [vmem:[#allocation1] ss:$4 sm:$0xff] %v2378
  %v2381 = vld.sshfl [vmem:[#allocation1] sm:$0xff pattern:$0x73625140]
  %v2382 = vld.sshfl [vmem:[#allocation1 + $0x8] sm:$0xff pattern:$0x73625140]
  %v2383 = vld.sshfl [vmem:[#allocation1 + $0x10] sm:$0xff pattern:$0x73625140]
  %v2384 = vld.sshfl [vmem:[#allocation1 + $0x18] sm:$0xff pattern:$0x73625140]
  %v2389 = vpack.c.bf16 %v2381, %v2381
  %v2390 = vpack.c.bf16 %v2382, %v2382
  %v2391 = vpack.c.bf16 %v2383, %v2383
  %v2392 = vpack.c.bf16 %v2384, %v2384
  %s2393 = scalar_lea.vmem %s1, 1792
  %v2394 = vld [vmem:[%s2393] sm:$0xf]
  %v2395 = vld [vmem:[%s2393 + $0x4] sm:$0xf]
  %v2396 = vld [vmem:[%s2393 + $0x8] sm:$0xf]
  %v2397 = vld [vmem:[%s2393 + $0xc] sm:$0xf]
  %v2398 = vld [vmem:[%s2393 + $0x10] sm:$0xf]
  %v2399 = vld [vmem:[%s2393 + $0x14] sm:$0xf]
  %v2400 = vld [vmem:[%s2393 + $0x18] sm:$0xf]
  %v2401 = vld [vmem:[%s2393 + $0x1c] sm:$0xf]
  %v2402 = vld [vmem:[%s2393 + $0x20] sm:$0xf]
  %v2403 = vld [vmem:[%s2393 + $0x24] sm:$0xf]
  %v2404 = vld [vmem:[%s2393 + $0x28] sm:$0xf]
  %v2405 = vld [vmem:[%s2393 + $0x2c] sm:$0xf]
  %v2406 = vld [vmem:[%s2393 + $0x30] sm:$0xf]
  %v2407 = vld [vmem:[%s2393 + $0x34] sm:$0xf]
  %v2408 = vld [vmem:[%s2393 + $0x38] sm:$0xf]
  %v2409 = vld [vmem:[%s2393 + $0x3c] sm:$0xf]
  %v2410 = vld [vmem:[%s2393 + $0x40] sm:$0xf]
  %v2411 = vld [vmem:[%s2393 + $0x44] sm:$0xf]
  %v2412 = vld [vmem:[%s2393 + $0x48] sm:$0xf]
  %v2413 = vld [vmem:[%s2393 + $0x4c] sm:$0xf]
  %v2414 = vld [vmem:[%s2393 + $0x50] sm:$0xf]
  %v2415 = vld [vmem:[%s2393 + $0x54] sm:$0xf]
  %v2416 = vld [vmem:[%s2393 + $0x58] sm:$0xf]
  %v2417 = vld [vmem:[%s2393 + $0x5c] sm:$0xf]
  %v2418 = vld [vmem:[%s2393 + $0x60] sm:$0xf]
  %v2419 = vld [vmem:[%s2393 + $0x64] sm:$0xf]
  %v2420 = vld [vmem:[%s2393 + $0x68] sm:$0xf]
  %v2421 = vld [vmem:[%s2393 + $0x6c] sm:$0xf]
  %v2422 = vld [vmem:[%s2393 + $0x70] sm:$0xf]
  %v2423 = vld [vmem:[%s2393 + $0x74] sm:$0xf]
  %v2424 = vld [vmem:[%s2393 + $0x78] sm:$0xf]
  %v2425 = vld [vmem:[%s2393 + $0x7c] sm:$0xf]
  %v2426 = vld [vmem:[%s2393 + $0x80] sm:$0xf]
  %v2427 = vld [vmem:[%s2393 + $0x84] sm:$0xf]
  %v2428 = vld [vmem:[%s2393 + $0x88] sm:$0xf]
  %v2429 = vld [vmem:[%s2393 + $0x8c] sm:$0xf]
  %v2430 = vld [vmem:[%s2393 + $0x90] sm:$0xf]
  %v2431 = vld [vmem:[%s2393 + $0x94] sm:$0xf]
  %v2432 = vld [vmem:[%s2393 + $0x98] sm:$0xf]
  %v2433 = vld [vmem:[%s2393 + $0x9c] sm:$0xf]
  %v2434 = vld [vmem:[%s2393 + $0xa0] sm:$0xf]
  %v2435 = vld [vmem:[%s2393 + $0xa4] sm:$0xf]
  %v2436 = vld [vmem:[%s2393 + $0xa8] sm:$0xf]
  %v2437 = vld [vmem:[%s2393 + $0xac] sm:$0xf]
  %v2438 = vld [vmem:[%s2393 + $0xb0] sm:$0xf]
  %v2439 = vld [vmem:[%s2393 + $0xb4] sm:$0xf]
  %v2440 = vld [vmem:[%s2393 + $0xb8] sm:$0xf]
  %v2441 = vld [vmem:[%s2393 + $0xbc] sm:$0xf]
  %v2442 = vld [vmem:[%s2393 + $0xc0] sm:$0xf]
  %v2443 = vld [vmem:[%s2393 + $0xc4] sm:$0xf]
  %v2444 = vld [vmem:[%s2393 + $0xc8] sm:$0xf]
  %v2445 = vld [vmem:[%s2393 + $0xcc] sm:$0xf]
  %v2446 = vld [vmem:[%s2393 + $0xd0] sm:$0xf]
  %v2447 = vld [vmem:[%s2393 + $0xd4] sm:$0xf]
  %v2448 = vld [vmem:[%s2393 + $0xd8] sm:$0xf]
  %v2449 = vld [vmem:[%s2393 + $0xdc] sm:$0xf]
  %v2450 = vld [vmem:[%s2393 + $0xe0] sm:$0xf]
  %v2451 = vld [vmem:[%s2393 + $0xe4] sm:$0xf]
  %v2452 = vld [vmem:[%s2393 + $0xe8] sm:$0xf]
  %v2453 = vld [vmem:[%s2393 + $0xec] sm:$0xf]
  %v2454 = vld [vmem:[%s2393 + $0xf0] sm:$0xf]
  %v2455 = vld [vmem:[%s2393 + $0xf4] sm:$0xf]
  %v2456 = vld [vmem:[%s2393 + $0xf8] sm:$0xf]
  %v2457 = vld [vmem:[%s2393 + $0xfc] sm:$0xf]
  %v2522 = vunpack.c.l.b16 %v2394
  %v2523 = vunpack.c.l.b16 %v2395
  %v2524 = vunpack.c.l.b16 %v2396
  %v2525 = vunpack.c.l.b16 %v2397
  %v2526 = vunpack.c.l.b16 %v2398
  %v2527 = vunpack.c.l.b16 %v2399
  %v2528 = vunpack.c.l.b16 %v2400
  %v2529 = vunpack.c.l.b16 %v2401
  %v2530 = vunpack.c.l.b16 %v2402
  %v2531 = vunpack.c.l.b16 %v2403
  %v2532 = vunpack.c.l.b16 %v2404
  %v2533 = vunpack.c.l.b16 %v2405
  %v2534 = vunpack.c.l.b16 %v2406
  %v2535 = vunpack.c.l.b16 %v2407
  %v2536 = vunpack.c.l.b16 %v2408
  %v2537 = vunpack.c.l.b16 %v2409
  %v2538 = vunpack.c.l.b16 %v2410
  %v2539 = vunpack.c.l.b16 %v2411
  %v2540 = vunpack.c.l.b16 %v2412
  %v2541 = vunpack.c.l.b16 %v2413
  %v2542 = vunpack.c.l.b16 %v2414
  %v2543 = vunpack.c.l.b16 %v2415
  %v2544 = vunpack.c.l.b16 %v2416
  %v2545 = vunpack.c.l.b16 %v2417
  %v2546 = vunpack.c.l.b16 %v2418
  %v2547 = vunpack.c.l.b16 %v2419
  %v2548 = vunpack.c.l.b16 %v2420
  %v2549 = vunpack.c.l.b16 %v2421
  %v2550 = vunpack.c.l.b16 %v2422
  %v2551 = vunpack.c.l.b16 %v2423
  %v2552 = vunpack.c.l.b16 %v2424
  %v2553 = vunpack.c.l.b16 %v2425
  %v2554 = vunpack.c.l.b16 %v2426
  %v2555 = vunpack.c.l.b16 %v2427
  %v2556 = vunpack.c.l.b16 %v2428
  %v2557 = vunpack.c.l.b16 %v2429
  %v2558 = vunpack.c.l.b16 %v2430
  %v2559 = vunpack.c.l.b16 %v2431
  %v2560 = vunpack.c.l.b16 %v2432
  %v2561 = vunpack.c.l.b16 %v2433
  %v2562 = vunpack.c.l.b16 %v2434
  %v2563 = vunpack.c.l.b16 %v2435
  %v2564 = vunpack.c.l.b16 %v2436
  %v2565 = vunpack.c.l.b16 %v2437
  %v2566 = vunpack.c.l.b16 %v2438
  %v2567 = vunpack.c.l.b16 %v2439
  %v2568 = vunpack.c.l.b16 %v2440
  %v2569 = vunpack.c.l.b16 %v2441
  %v2570 = vunpack.c.l.b16 %v2442
  %v2571 = vunpack.c.l.b16 %v2443
  %v2572 = vunpack.c.l.b16 %v2444
  %v2573 = vunpack.c.l.b16 %v2445
  %v2574 = vunpack.c.l.b16 %v2446
  %v2575 = vunpack.c.l.b16 %v2447
  %v2576 = vunpack.c.l.b16 %v2448
  %v2577 = vunpack.c.l.b16 %v2449
  %v2578 = vunpack.c.l.b16 %v2450
  %v2579 = vunpack.c.l.b16 %v2451
  %v2580 = vunpack.c.l.b16 %v2452
  %v2581 = vunpack.c.l.b16 %v2453
  %v2582 = vunpack.c.l.b16 %v2454
  %v2583 = vunpack.c.l.b16 %v2455
  %v2584 = vunpack.c.l.b16 %v2456
  %v2585 = vunpack.c.l.b16 %v2457
  %v2586 = vpack.c.b16 %v2523, %v2522
  %v2587 = vpack.c.b16 %v2525, %v2524
  %v2588 = vpack.c.b16 %v2527, %v2526
  %v2589 = vpack.c.b16 %v2529, %v2528
  %v2590 = vpack.c.b16 %v2531, %v2530
  %v2591 = vpack.c.b16 %v2533, %v2532
  %v2592 = vpack.c.b16 %v2535, %v2534
  %v2593 = vpack.c.b16 %v2537, %v2536
  %v2594 = vpack.c.b16 %v2539, %v2538
  %v2595 = vpack.c.b16 %v2541, %v2540
  %v2596 = vpack.c.b16 %v2543, %v2542
  %v2597 = vpack.c.b16 %v2545, %v2544
  %v2598 = vpack.c.b16 %v2547, %v2546
  %v2599 = vpack.c.b16 %v2549, %v2548
  %v2600 = vpack.c.b16 %v2551, %v2550
  %v2601 = vpack.c.b16 %v2553, %v2552
  %v2602 = vpack.c.b16 %v2555, %v2554
  %v2603 = vpack.c.b16 %v2557, %v2556
  %v2604 = vpack.c.b16 %v2559, %v2558
  %v2605 = vpack.c.b16 %v2561, %v2560
  %v2606 = vpack.c.b16 %v2563, %v2562
  %v2607 = vpack.c.b16 %v2565, %v2564
  %v2608 = vpack.c.b16 %v2567, %v2566
  %v2609 = vpack.c.b16 %v2569, %v2568
  %v2610 = vpack.c.b16 %v2571, %v2570
  %v2611 = vpack.c.b16 %v2573, %v2572
  %v2612 = vpack.c.b16 %v2575, %v2574
  %v2613 = vpack.c.b16 %v2577, %v2576
  %v2614 = vpack.c.b16 %v2579, %v2578
  %v2615 = vpack.c.b16 %v2581, %v2580
  %v2616 = vpack.c.b16 %v2583, %v2582
  %v2617 = vpack.c.b16 %v2585, %v2584
  %2650 = vmatpush.bf16.msra.mxu0 %v2593
  %2651 = vmatpush.bf16.msra.mxu0 %v2592
  %2652 = vmatpush.bf16.msra.mxu0 %v2591
  %2653 = vmatpush.bf16.msra.mxu0 %v2590
  %2654 = vmatpush.bf16.msra.mxu0 %v2589
  %2655 = vmatpush.bf16.msra.mxu0 %v2588
  %2656 = vmatpush.bf16.msra.mxu0 %v2587
  %2657 = vmatpush.bf16.msra.mxu0 %v2586
  %2658 = vmatmul.bf16.gmra.mxu0 %v2389
  %v2659 = vpop.f32.mrf.mxu0
  %v2660 = vadd.f32 0.0, %v2659
  %v2661 = vpop.f32.mrf.mxu0
  %2662 = vdwg.mxu0
  %2663 = vmatpush.bf16.msra.mxu0 %v2601
  %2664 = vmatpush.bf16.msra.mxu0 %v2600
  %2665 = vmatpush.bf16.msra.mxu0 %v2599
  %2666 = vmatpush.bf16.msra.mxu0 %v2598
  %2667 = vmatpush.bf16.msra.mxu0 %v2597
  %2668 = vmatpush.bf16.msra.mxu0 %v2596
  %2669 = vmatpush.bf16.msra.mxu0 %v2595
  %2670 = vmatpush.bf16.msra.mxu0 %v2594
  %2671 = vmatmul.bf16.gmra.mxu0 %v2390
  %v2672 = vpop.f32.mrf.mxu0
  %v2673 = vadd.f32 %v2660, %v2672
  %v2674 = vpop.f32.mrf.mxu0
  %2675 = vdwg.mxu0
  %2676 = vmatpush.bf16.msra.mxu0 %v2609
  %2677 = vmatpush.bf16.msra.mxu0 %v2608
  %2678 = vmatpush.bf16.msra.mxu0 %v2607
  %2679 = vmatpush.bf16.msra.mxu0 %v2606
  %2680 = vmatpush.bf16.msra.mxu0 %v2605
  %2681 = vmatpush.bf16.msra.mxu0 %v2604
  %2682 = vmatpush.bf16.msra.mxu0 %v2603
  %2683 = vmatpush.bf16.msra.mxu0 %v2602
  %2684 = vmatmul.bf16.gmra.mxu0 %v2391
  %v2685 = vpop.f32.mrf.mxu0
  %v2686 = vadd.f32 %v2673, %v2685
  %v2687 = vpop.f32.mrf.mxu0
  %2688 = vdwg.mxu0
  %2689 = vmatpush.bf16.msra.mxu0 %v2617
  %2690 = vmatpush.bf16.msra.mxu0 %v2616
  %2691 = vmatpush.bf16.msra.mxu0 %v2615
  %2692 = vmatpush.bf16.msra.mxu0 %v2614
  %2693 = vmatpush.bf16.msra.mxu0 %v2613
  %2694 = vmatpush.bf16.msra.mxu0 %v2612
  %2695 = vmatpush.bf16.msra.mxu0 %v2611
  %2696 = vmatpush.bf16.msra.mxu0 %v2610
  %2697 = vmatmul.bf16.gmra.mxu0 %v2392
  %v2698 = vpop.f32.mrf.mxu0
  %v2699 = vadd.f32 %v2686, %v2698
  %v2700 = vpop.f32.mrf.mxu0
  %2701 = vdwg.mxu0
  %v2702 = vadd.f32 %v2370, %v2699
  %v2703 = vld [vmem:[#allocation2] sm:$0x1]
  %v2705 = vperm.slane %v2703, 0
  %v2707 = vadd.f32 %v2702, %v2705
  %v2708 = vsub.f32 0.0, %v2707
  %v2709 = vmul.f32 %v2708, 1.442695
  %v2710 = vpow.pop %v2709
  %v2711 = vadd.f32 %v2710, 1.0
  %v2712 = vrcp.pop %v2711
  %v2713 = vmul.f32 %v2711, %v2712
  %v2714 = vsub.f32 1.0, %v2713
  %v2715 = vmul.f32 %v2712, %v2714
  %v2716 = vadd.f32 %v2712, %v2715
  %vm2717 = vweird.f32 %v2711
  %vm2718 = vweird.f32 %v2712
  %vm2719 = vmor %vm2717, %vm2718
  %v2720 = vsel %vm2719, %v2712, %v2716
  %v2721 = vand.u32 2147483647, %v2711
  %vm2722 = vcmp.eq.f32.partialorder %v2721, 8.507059e+37
  %v2723 = vand.u32 %v2711, 2147483648
  %v2724 = vor.u32 1.1754944e-38, %v2723
  %v2725 = vsel %vm2722, %v2724, %v2720
  %v2726 = vmul.f32 1.0, %v2725
  %vm2727 = vcmask 1024
  %2728 = vst.msk [vmem:[%s5] sm:$0x3] %vm2727, %v2726
  // Predicated region
  $region22: #{discriminator_forward.9} parent=0 // pred_check
    _
  $region23: #{discriminator_forward.9} parent=0 // pred_check_branch
    %2730 = sbr.rel (0) target = $region25
  $region24: #{discriminator_forward.9} parent=0 // pred_region
    _
  $region25: #{discriminator_forward.9} parent=0 // pred_fallthru
    _
  // Predicated region
  $region26: #{discriminator_forward.9} parent=0 // pred_check
    _
  $region27: #{discriminator_forward.9} parent=0 // pred_check_branch
    %2732 = sbr.rel (0) target = $region29
  $region28: #{discriminator_forward.9} parent=0 // pred_region
    _
  $region29: #{discriminator_forward.9} parent=0 // pred_fallthru
    _

</llo_original>
